<compile_context>
chip_gen: v7x
topology: tpu7x:2x2x1
jax: 0.10.0
libtpu: 0.0.40
codegen_flags: <defaults>
</compile_context>

<pallas_src>
import functools
import math

import jax
import jax.numpy as jnp
from jax.experimental import pallas as pl
from jax.experimental.pallas import tpu as pltpu


# ----------------------------------------------------------------------------
# Fused multi-layer encoder kernel
# ----------------------------------------------------------------------------
def encoder_stack_kernel(x_ref, bias_ref,
                         wq_ref, bq_ref, wk_ref, bk_ref, wv_ref, bv_ref,
                         wo_ref, bo_ref, w1_ref, b1_ref, w2_ref, b2_ref,
                         g1_ref, be1_ref, g2_ref, be2_ref,
                         out_ref, attn_ref, *, n_layers, n_head):
    """All n_layers post-norm encoder layers for one block of TB sequences.

    x_ref:    (M, D) rows of TB sequences (each padded to s_pad tokens), f32
    bias_ref: (1, M, M) additive attention bias: -1e9 at padded keys and at
              cross-sequence positions (block-diagonal attention), f32
    weights:  stacked over layers, matmul weights in bf16, biases/LN in f32
    attn_ref: (M, D) f32 VMEM scratch accumulating per-head contexts
    """
    M, D = x_ref.shape
    assert D % n_head == 0
    dh = D // n_head
    scale = 1.0 / math.sqrt(dh)

    x = x_ref[...]            # (M, D) f32 residual stream
    bias = bias_ref[0]        # (M, M) f32

    for l in range(n_layers):                      # static: weights resident
        # ---- QKV projections on the full M rows (bf16 in, f32 acc) --------
        xb = x.astype(jnp.bfloat16)
        q = jnp.dot(xb, wq_ref[l], preferred_element_type=jnp.float32) + bq_ref[l]
        k = jnp.dot(xb, wk_ref[l], preferred_element_type=jnp.float32) + bk_ref[l]
        v = jnp.dot(xb, wv_ref[l], preferred_element_type=jnp.float32) + bv_ref[l]

        # ---- attention, heads via static lane slices; contexts go straight
        # ---- into the VMEM accumulator (no concatenate) --------------------
        for h in range(n_head):
            lo = h * dh
            qh = q[:, lo:lo + dh]                  # (M, dh)
            kh = k[:, lo:lo + dh]
            vh = v[:, lo:lo + dh]
            s = jnp.dot(qh, kh.T, preferred_element_type=jnp.float32) * scale
            s = s + bias                           # masks pads + other seqs
            s = s - jnp.max(s, axis=-1, keepdims=True)
            p = jnp.exp(s)
            p = p * pl.reciprocal(jnp.sum(p, axis=-1, keepdims=True), approx=True)
            attn_ref[:, lo:lo + dh] = jnp.dot(p, vh,
                                              preferred_element_type=jnp.float32)

        attn = jnp.dot(attn_ref[...].astype(jnp.bfloat16), wo_ref[l],
                       preferred_element_type=jnp.float32) + bo_ref[l]

        # ---- residual + LayerNorm 1 (f32) ----------------------------------
        y = x + attn
        mu = jnp.mean(y, axis=-1, keepdims=True)
        var = jnp.mean((y - mu) ** 2, axis=-1, keepdims=True)
        y = (y - mu) * jax.lax.rsqrt(var + 1e-5) * g1_ref[l] + be1_ref[l]

        # ---- FFN (ReLU), bf16 in / f32 acc ---------------------------------
        # TODO(synk): at realistic d_hid (>=2048) tile w1/w2 over d_hid and set
        # vmem_limit_bytes for v7x's 64 MiB VMEM; fully resident is fine here.
        h1 = jnp.dot(y.astype(jnp.bfloat16), w1_ref[l],
                     preferred_element_type=jnp.float32) + b1_ref[l]
        h1 = jnp.maximum(h1, 0.0)
        h2 = jnp.dot(h1.astype(jnp.bfloat16), w2_ref[l],
                     preferred_element_type=jnp.float32) + b2_ref[l]

        # ---- residual + LayerNorm 2 (f32) ----------------------------------
        z = y + h2
        mu = jnp.mean(z, axis=-1, keepdims=True)
        var = jnp.mean((z - mu) ** 2, axis=-1, keepdims=True)
        x = (z - mu) * jax.lax.rsqrt(var + 1e-5) * g2_ref[l] + be2_ref[l]

    out_ref[...] = x


# ----------------------------------------------------------------------------
# Wrapper: pick block batch, pad sequences, build bias, call pallas
# ----------------------------------------------------------------------------
def choose_block_batch(n_seq, s_pad, d, max_block_bytes=1 << 20):
    """Largest divisor of n_seq that (a) leaves >= 2 grid steps (so both v7x
    TensorCores get work) and (b) keeps activation + attention-bias block
    comfortably small."""
    best = 1
    for tb in range(1, n_seq + 1):
        if n_seq % tb:
            continue
        m = tb * s_pad
        blk_bytes = m * d * 4 + m * m * 4
        if blk_bytes <= max_block_bytes and (n_seq // tb) >= 2:
            best = tb
    return best


def encoder_stack(x, key_mask, weights, *, n_head, n_layers):
    """x: [N, S, D] f32, key_mask: [N, S] bool (True = padded key). -> [N, S, D]."""
    N, S, D = x.shape
    s_pad = ((S + 7) // 8) * 8                 # pad seq len to sublane multiple
    tb = choose_block_batch(N, s_pad, D)
    grid_n = N // tb
    M = tb * s_pad

    # zero-pad sequences and flatten to 2-D rows (lane dim = D)
    if s_pad != S:
        x = jnp.concatenate([x, jnp.zeros((N, s_pad - S, D), x.dtype)], axis=1)
        key_mask = jnp.concatenate(
            [key_mask, jnp.ones((N, s_pad - S), bool)], axis=1)
    x2 = x.reshape(N * s_pad, D).astype(jnp.float32)

    # precomputed additive bias: -1e9 at padded keys and cross-sequence keys
    key_pad = key_mask.reshape(grid_n, M)
    seq_id = jnp.repeat(jnp.arange(tb, dtype=jnp.int32), s_pad)       # (M,)
    cross = seq_id[:, None] != seq_id[None, :]                        # (M, M)
    bias = jnp.where(cross[None] | key_pad[:, None, :], -1e9, 0.0)
    bias = bias.astype(jnp.float32)                                   # (G, M, M)

    # matmul weights in bf16, biases / LayerNorm params in f32
    matmul_idx = {0, 2, 4, 6, 8, 10}   # wq, wk, wv, wo, w1, w2
    wts = tuple(w.astype(jnp.bfloat16) if i in matmul_idx else w.astype(jnp.float32)
                for i, w in enumerate(weights))

    def full_spec(arr):
        rank = arr.ndim
        return pl.BlockSpec(arr.shape, lambda g, _r=rank: (0,) * _r)

    in_specs = ([pl.BlockSpec((M, D), lambda g: (g, 0)),
                 pl.BlockSpec((1, M, M), lambda g: (g, 0, 0))]
                + [full_spec(w) for w in wts])

    # TODO(synk): D=32 fills only 32/128 lanes; if real deployments keep
    # d_model < 128, pack sequences along the feature axis for lane-dense IO.
    out = pl.pallas_call(
        functools.partial(encoder_stack_kernel, n_layers=n_layers, n_head=n_head),
        out_shape=jax.ShapeDtypeStruct((N * s_pad, D), jnp.float32),
        grid=(grid_n,),
        in_specs=in_specs,
        out_specs=pl.BlockSpec((M, D), lambda g: (g, 0)),
        scratch_shapes=[pltpu.VMEM((M, D), jnp.float32)],
        compiler_params=pltpu.CompilerParams(
            dimension_semantics=("parallel",)),
    )(x2, bias, *wts)

    return out.reshape(N, s_pad, D)[:, :S, :]


# ----------------------------------------------------------------------------
# Parameter construction (deterministic, in-script)
# ----------------------------------------------------------------------------
def sinusoidal_pos_embedding(max_len, d_model):
    pos = jnp.arange(max_len, dtype=jnp.float32)[:, None]
    i = jnp.arange(0, d_model, 2, dtype=jnp.float32)
    div = jnp.exp(-i * (math.log(10000.0) / d_model))
    pe = jnp.zeros((max_len, d_model), jnp.float32)
    pe = pe.at[:, 0::2].set(jnp.sin(pos * div))
    pe = pe.at[:, 1::2].set(jnp.cos(pos * div))
    return pe


def init_encoder_layer(key, d_model, d_hid):
    ks = jax.random.split(key, 6)
    s = 0.02
    wq = jax.random.normal(ks[0], (d_model, d_model), jnp.float32) * s
    wk = jax.random.normal(ks[1], (d_model, d_model), jnp.float32) * s
    wv = jax.random.normal(ks[2], (d_model, d_model), jnp.float32) * s
    wo = jax.random.normal(ks[3], (d_model, d_model), jnp.float32) * s
    w1 = jax.random.normal(ks[4], (d_model, d_hid), jnp.float32) * s
    w2 = jax.random.normal(ks[5], (d_hid, d_model), jnp.float32) * s
    z_d = jnp.zeros((1, d_model), jnp.float32)
    z_h = jnp.zeros((1, d_hid), jnp.float32)
    one_d = jnp.ones((1, d_model), jnp.float32)
    # order must match encoder_stack_kernel signature
    return (wq, z_d, wk, z_d, wv, z_d, wo, z_d,
            w1, z_h, w2, z_d,
            one_d, z_d, one_d, z_d)


def init_encoder_stack(key, n_layers, d_model, d_hid):
    keys = jax.random.split(key, n_layers)
    per_layer = [init_encoder_layer(k, d_model, d_hid) for k in keys]
    # stack each weight across layers -> leading layer axis
    return tuple(jnp.stack(ws, axis=0) for ws in zip(*per_layer))


def init_model(key, params):
    d_model, d_hid = params['d_model'], params['d_hid']
    n_layers = params['n_layers']
    keys = jax.random.split(key, 6)
    return {
        'embedding': jax.random.normal(
            keys[0], (params['n_tokens'], d_model), jnp.float32) * 0.02,
        'line_token': jax.random.normal(keys[1], (d_model,), jnp.float32),
        'lines_token': jax.random.normal(keys[2], (d_model,), jnp.float32),
        'linear_w': jax.random.normal(
            keys[3], (d_model, params['n_classes']), jnp.float32) * 0.02,
        'linear_b': jnp.zeros((1, params['n_classes']), jnp.float32),
        'pos': sinusoidal_pos_embedding(512, d_model),
        'line_stack': init_encoder_stack(keys[4], n_layers, d_model, d_hid),
        'lines_stack': init_encoder_stack(keys[5], n_layers, d_model, d_hid),
    }


# ----------------------------------------------------------------------------
# Forward pass (glue in plain JAX, encoder stacks in Pallas)
# ----------------------------------------------------------------------------
def code_change_transformer_forward(model, params, src, src_lines_key_mask):
    """src: [B, L, T] int32 token ids, src_lines_key_mask: [B, L] bool."""
    B, L, T = src.shape
    d_model = params['d_model']
    n_head = params['n_head']
    n_layers = params['n_layers']
    pad_id = params['pad_id']
    sqrt_d = math.sqrt(d_model)

    # token embedding + positional embedding
    # TODO(synk): dropout layers are omitted (inference semantics).
    emb = jnp.take(model['embedding'], src, axis=0)            # [B, L, T, D]
    pos = model['pos'][:T][None, None, :, :]                   # [1, 1, T, D]
    out = (emb + pos) * sqrt_d                                 # [B, L, T, D]

    # prepend per-line CLS token
    line_tok = (model['line_token'] * sqrt_d)[None, None, None, :]
    line_tok = jnp.broadcast_to(line_tok, (B, L, 1, d_model))
    out = jnp.concatenate([line_tok, out], axis=2)             # [B, L, T+1, D]

    # token-level key padding mask (CLS never masked)
    tok_mask = (src == pad_id)
    tok_mask = jnp.concatenate(
        [jnp.zeros((B, L, 1), bool), tok_mask], axis=2)        # [B, L, T+1]

    # line encoder over tokens within each line (fused n_layers, Pallas)
    S1 = T + 1
    x = out.reshape(B * L, S1, d_model).astype(jnp.float32)
    m = tok_mask.reshape(B * L, S1)
    x = encoder_stack(x, m, model['line_stack'],
                      n_head=n_head, n_layers=n_layers)
    x = x.reshape(B, L, S1, d_model)[:, :, 0, :]               # [B, L, D]

    # prepend global CLS token over lines
    lines_tok = (model['lines_token'] * sqrt_d)[None, None, :]
    lines_tok = jnp.broadcast_to(lines_tok, (B, 1, d_model))
    out = jnp.concatenate([lines_tok, x], axis=1)              # [B, L+1, D]

    lines_mask = jnp.concatenate(
        [jnp.zeros((B, 1), bool), src_lines_key_mask], axis=1)  # [B, L+1]

    # lines encoder over lines within each sample (fused n_layers, Pallas)
    out = encoder_stack(out, lines_mask, model['lines_stack'],
                        n_head=n_head, n_layers=n_layers)

    cls = out[:, 0, :]                                         # [B, D]
    # tiny final projection: plain XLA matmul (a dedicated pallas_call for a
    # [B, D] x [D, n_classes] product would be pure launch overhead).
    logits = jnp.dot(cls, model['linear_w']) + model['linear_b']
    return logits


# ----------------------------------------------------------------------------
if __name__ == "__main__":
    params = dict(n_tokens=50, d_model=32, n_head=4, d_hid=64,
                  n_layers=2, n_classes=3, dropout=0.1, pad_id=0)

    B, L, T = 2, 4, 8
    key = jax.random.PRNGKey(0)
    k_model, k_src = jax.random.split(key)

    model = init_model(k_model, params)

    # deterministic inputs: token ids with some trailing padding per line
    src = jax.random.randint(k_src, (B, L, T), 1, params['n_tokens'],
                             dtype=jnp.int32)
    src = src.at[:, :, T - 2:].set(params['pad_id'])            # pad last 2 tokens
    src_lines_key_mask = jnp.zeros((B, L), bool).at[:, L - 1].set(True)

    logits = code_change_transformer_forward(model, params, src,
                                             src_lines_key_mask)
    logits = jax.block_until_ready(logits)
    assert logits.shape == (B, params['n_classes'])
    assert bool(jnp.all(jnp.isfinite(logits)))
    print("KERNEL_OK")
</pallas_src>

<mosaic_0001>
module attributes {stable_mosaic.version = 11 : i64} {
  func.func @encoder_stack_kernel(%arg0: i32, %arg1: memref<64x32xf32, #tpu.memory_space<vmem>>, %arg2: memref<1x64x64xf32, #tpu.memory_space<vmem>>, %arg3: memref<2x32x32xbf16, #tpu.memory_space<vmem>>, %arg4: memref<2x1x32xf32, #tpu.memory_space<vmem>>, %arg5: memref<2x32x32xbf16, #tpu.memory_space<vmem>>, %arg6: memref<2x1x32xf32, #tpu.memory_space<vmem>>, %arg7: memref<2x32x32xbf16, #tpu.memory_space<vmem>>, %arg8: memref<2x1x32xf32, #tpu.memory_space<vmem>>, %arg9: memref<2x32x32xbf16, #tpu.memory_space<vmem>>, %arg10: memref<2x1x32xf32, #tpu.memory_space<vmem>>, %arg11: memref<2x32x64xbf16, #tpu.memory_space<vmem>>, %arg12: memref<2x1x64xf32, #tpu.memory_space<vmem>>, %arg13: memref<2x64x32xbf16, #tpu.memory_space<vmem>>, %arg14: memref<2x1x32xf32, #tpu.memory_space<vmem>>, %arg15: memref<2x1x32xf32, #tpu.memory_space<vmem>>, %arg16: memref<2x1x32xf32, #tpu.memory_space<vmem>>, %arg17: memref<2x1x32xf32, #tpu.memory_space<vmem>>, %arg18: memref<2x1x32xf32, #tpu.memory_space<vmem>>, %arg19: memref<64x32xf32, #tpu.memory_space<vmem>>, %arg20: memref<64x32xf32, #tpu.memory_space<vmem>>) attributes {dimension_semantics = [#tpu.dimension_semantics<parallel>], iteration_bounds = array<i64: 2>, scalar_prefetch = 0 : i64, scratch_operands = 1 : i64, tpu.core_type = #tpu.core_type<tc>, window_params = [{transform_indices = @transform_0, window_bounds = array<i64: 64, 32>}, {transform_indices = @transform_1, window_bounds = array<i64: 1, 64, 64>}, {pipeline_mode = #tpu.pipeline_mode<synchronous>, transform_indices = @transform_2, window_bounds = array<i64: 2, 32, 32>}, {pipeline_mode = #tpu.pipeline_mode<synchronous>, transform_indices = @transform_3, window_bounds = array<i64: 2, 1, 32>}, {pipeline_mode = #tpu.pipeline_mode<synchronous>, transform_indices = @transform_4, window_bounds = array<i64: 2, 32, 32>}, {pipeline_mode = #tpu.pipeline_mode<synchronous>, transform_indices = @transform_5, window_bounds = array<i64: 2, 1, 32>}, {pipeline_mode = #tpu.pipeline_mode<synchronous>, transform_indices = @transform_6, window_bounds = array<i64: 2, 32, 32>}, {pipeline_mode = #tpu.pipeline_mode<synchronous>, transform_indices = @transform_7, window_bounds = array<i64: 2, 1, 32>}, {pipeline_mode = #tpu.pipeline_mode<synchronous>, transform_indices = @transform_8, window_bounds = array<i64: 2, 32, 32>}, {pipeline_mode = #tpu.pipeline_mode<synchronous>, transform_indices = @transform_9, window_bounds = array<i64: 2, 1, 32>}, {pipeline_mode = #tpu.pipeline_mode<synchronous>, transform_indices = @transform_10, window_bounds = array<i64: 2, 32, 64>}, {pipeline_mode = #tpu.pipeline_mode<synchronous>, transform_indices = @transform_11, window_bounds = array<i64: 2, 1, 64>}, {pipeline_mode = #tpu.pipeline_mode<synchronous>, transform_indices = @transform_12, window_bounds = array<i64: 2, 64, 32>}, {pipeline_mode = #tpu.pipeline_mode<synchronous>, transform_indices = @transform_13, window_bounds = array<i64: 2, 1, 32>}, {pipeline_mode = #tpu.pipeline_mode<synchronous>, transform_indices = @transform_14, window_bounds = array<i64: 2, 1, 32>}, {pipeline_mode = #tpu.pipeline_mode<synchronous>, transform_indices = @transform_15, window_bounds = array<i64: 2, 1, 32>}, {pipeline_mode = #tpu.pipeline_mode<synchronous>, transform_indices = @transform_16, window_bounds = array<i64: 2, 1, 32>}, {pipeline_mode = #tpu.pipeline_mode<synchronous>, transform_indices = @transform_17, window_bounds = array<i64: 2, 1, 32>}, {transform_indices = @transform_18, window_bounds = array<i64: 64, 32>}]} {
    %c0 = arith.constant 0 : index
    %c0_0 = arith.constant 0 : index
    %0 = vector.load %arg1[%c0, %c0_0] : memref<64x32xf32, #tpu.memory_space<vmem>>, vector<64x32xf32>
    %c0_1 = arith.constant 0 : index
    %c0_2 = arith.constant 0 : index
    %c0_3 = arith.constant 0 : index
    %1 = vector.load %arg2[%c0_1, %c0_2, %c0_3] : memref<1x64x64xf32, #tpu.memory_space<vmem>>, vector<1x64x64xf32>
    %2 = vector.shape_cast %1 : vector<1x64x64xf32> to vector<64x64xf32>
    %3 = arith.truncf %0 : vector<64x32xf32> to vector<64x32xbf16>
    %c0_4 = arith.constant 0 : index
    %c0_5 = arith.constant 0 : index
    %c0_6 = arith.constant 0 : index
    %4 = vector.load %arg3[%c0_4, %c0_5, %c0_6] : memref<2x32x32xbf16, #tpu.memory_space<vmem>>, vector<1x32x32xbf16>
    %5 = vector.shape_cast %4 : vector<1x32x32xbf16> to vector<32x32xbf16>
    %cst = arith.constant dense<0.000000e+00> : vector<64x32xf32>
    %6 = tpu.matmul %3, %5, %cst {dimension_numbers = #tpu.dot_dimension_numbers<[1], [0], [0], [1], [0, 0, 1, 1], [], []>} : vector<64x32xbf16>, vector<32x32xbf16>, vector<64x32xf32> -> vector<64x32xf32>
    %c0_7 = arith.constant 0 : index
    %c0_8 = arith.constant 0 : index
    %c0_9 = arith.constant 0 : index
    %7 = vector.load %arg4[%c0_7, %c0_8, %c0_9] : memref<2x1x32xf32, #tpu.memory_space<vmem>>, vector<1x1x32xf32>
    %8 = vector.shape_cast %7 : vector<1x1x32xf32> to vector<1x32xf32>
    %9 = vector.broadcast %8 : vector<1x32xf32> to vector<64x32xf32>
    %10 = arith.addf %6, %9 : vector<64x32xf32>
    %c0_10 = arith.constant 0 : index
    %c0_11 = arith.constant 0 : index
    %c0_12 = arith.constant 0 : index
    %11 = vector.load %arg5[%c0_10, %c0_11, %c0_12] : memref<2x32x32xbf16, #tpu.memory_space<vmem>>, vector<1x32x32xbf16>
    %12 = vector.shape_cast %11 : vector<1x32x32xbf16> to vector<32x32xbf16>
    %cst_13 = arith.constant dense<0.000000e+00> : vector<64x32xf32>
    %13 = tpu.matmul %3, %12, %cst_13 {dimension_numbers = #tpu.dot_dimension_numbers<[1], [0], [0], [1], [0, 0, 1, 1], [], []>} : vector<64x32xbf16>, vector<32x32xbf16>, vector<64x32xf32> -> vector<64x32xf32>
    %c0_14 = arith.constant 0 : index
    %c0_15 = arith.constant 0 : index
    %c0_16 = arith.constant 0 : index
    %14 = vector.load %arg6[%c0_14, %c0_15, %c0_16] : memref<2x1x32xf32, #tpu.memory_space<vmem>>, vector<1x1x32xf32>
    %15 = vector.shape_cast %14 : vector<1x1x32xf32> to vector<1x32xf32>
    %16 = vector.broadcast %15 : vector<1x32xf32> to vector<64x32xf32>
    %17 = arith.addf %13, %16 : vector<64x32xf32>
    %c0_17 = arith.constant 0 : index
    %c0_18 = arith.constant 0 : index
    %c0_19 = arith.constant 0 : index
    %18 = vector.load %arg7[%c0_17, %c0_18, %c0_19] : memref<2x32x32xbf16, #tpu.memory_space<vmem>>, vector<1x32x32xbf16>
    %19 = vector.shape_cast %18 : vector<1x32x32xbf16> to vector<32x32xbf16>
    %cst_20 = arith.constant dense<0.000000e+00> : vector<64x32xf32>
    %20 = tpu.matmul %3, %19, %cst_20 {dimension_numbers = #tpu.dot_dimension_numbers<[1], [0], [0], [1], [0, 0, 1, 1], [], []>} : vector<64x32xbf16>, vector<32x32xbf16>, vector<64x32xf32> -> vector<64x32xf32>
    %c0_21 = arith.constant 0 : index
    %c0_22 = arith.constant 0 : index
    %c0_23 = arith.constant 0 : index
    %21 = vector.load %arg8[%c0_21, %c0_22, %c0_23] : memref<2x1x32xf32, #tpu.memory_space<vmem>>, vector<1x1x32xf32>
    %22 = vector.shape_cast %21 : vector<1x1x32xf32> to vector<1x32xf32>
    %23 = vector.broadcast %22 : vector<1x32xf32> to vector<64x32xf32>
    %24 = arith.addf %20, %23 : vector<64x32xf32>
    %25 = vector.extract_strided_slice %10 {offsets = [0, 0], sizes = [64, 8], strides = [1, 1]} : vector<64x32xf32> to vector<64x8xf32>
    %26 = vector.extract_strided_slice %17 {offsets = [0, 0], sizes = [64, 8], strides = [1, 1]} : vector<64x32xf32> to vector<64x8xf32>
    %27 = vector.extract_strided_slice %24 {offsets = [0, 0], sizes = [64, 8], strides = [1, 1]} : vector<64x32xf32> to vector<64x8xf32>
    %28 = tpu.transpose %26, [1, 0] : vector<64x8xf32> -> vector<8x64xf32>
    %cst_24 = arith.constant dense<0.000000e+00> : vector<64x64xf32>
    %29 = tpu.matmul %25, %28, %cst_24 {dimension_numbers = #tpu.dot_dimension_numbers<[1], [0], [0], [1], [0, 0, 1, 1], [], []>} : vector<64x8xf32>, vector<8x64xf32>, vector<64x64xf32> -> vector<64x64xf32>
    %cst_25 = arith.constant 0.353553385 : f32
    %30 = vector.broadcast %cst_25 : f32 to vector<64x64xf32>
    %31 = arith.mulf %29, %30 : vector<64x64xf32>
    %32 = arith.addf %31, %2 : vector<64x64xf32>
    %cst_26 = arith.constant dense<0xFF800000> : vector<64xf32>
    %33 = vector.multi_reduction <maximumf>, %32, %cst_26 [1] : vector<64x64xf32> to vector<64xf32>
    %34 = vector.shape_cast %33 : vector<64xf32> to vector<64x1xf32>
    %35 = vector.broadcast %34 : vector<64x1xf32> to vector<64x64xf32>
    %36 = arith.subf %32, %35 : vector<64x64xf32>
    %37 = math.exp %36 : vector<64x64xf32>
    %cst_27 = arith.constant dense<0.000000e+00> : vector<64xf32>
    %38 = vector.multi_reduction <add>, %37, %cst_27 [1] : vector<64x64xf32> to vector<64xf32>
    %39 = vector.shape_cast %38 : vector<64xf32> to vector<64x1xf32>
    %40 = tpu.reciprocal %39 {approx = true} : vector<64x1xf32> -> vector<64x1xf32>
    %41 = vector.broadcast %40 : vector<64x1xf32> to vector<64x64xf32>
    %42 = arith.mulf %37, %41 : vector<64x64xf32>
    %cst_28 = arith.constant dense<0.000000e+00> : vector<64x8xf32>
    %43 = tpu.matmul %42, %27, %cst_28 {dimension_numbers = #tpu.dot_dimension_numbers<[1], [0], [0], [1], [0, 0, 1, 1], [], []>} : vector<64x64xf32>, vector<64x8xf32>, vector<64x8xf32> -> vector<64x8xf32>
    %c0_29 = arith.constant 0 : index
    %c0_30 = arith.constant 0 : index
    %44 = vector.load %arg20[%c0_29, %c0_30] : memref<64x32xf32, #tpu.memory_space<vmem>>, vector<64x8xf32>
    tpu.vector_store %arg20[%c0_29, %c0_30], %43 {strides = array<i32>} : memref<64x32xf32, #tpu.memory_space<vmem>>, vector<64x8xf32>,
    %45 = vector.extract_strided_slice %10 {offsets = [0, 8], sizes = [64, 8], strides = [1, 1]} : vector<64x32xf32> to vector<64x8xf32>
    %46 = vector.extract_strided_slice %17 {offsets = [0, 8], sizes = [64, 8], strides = [1, 1]} : vector<64x32xf32> to vector<64x8xf32>
    %47 = vector.extract_strided_slice %24 {offsets = [0, 8], sizes = [64, 8], strides = [1, 1]} : vector<64x32xf32> to vector<64x8xf32>
    %48 = tpu.transpose %46, [1, 0] : vector<64x8xf32> -> vector<8x64xf32>
    %cst_31 = arith.constant dense<0.000000e+00> : vector<64x64xf32>
    %49 = tpu.matmul %45, %48, %cst_31 {dimension_numbers = #tpu.dot_dimension_numbers<[1], [0], [0], [1], [0, 0, 1, 1], [], []>} : vector<64x8xf32>, vector<8x64xf32>, vector<64x64xf32> -> vector<64x64xf32>
    %cst_32 = arith.constant 0.353553385 : f32
    %50 = vector.broadcast %cst_32 : f32 to vector<64x64xf32>
    %51 = arith.mulf %49, %50 : vector<64x64xf32>
    %52 = arith.addf %51, %2 : vector<64x64xf32>
    %cst_33 = arith.constant dense<0xFF800000> : vector<64xf32>
    %53 = vector.multi_reduction <maximumf>, %52, %cst_33 [1] : vector<64x64xf32> to vector<64xf32>
    %54 = vector.shape_cast %53 : vector<64xf32> to vector<64x1xf32>
    %55 = vector.broadcast %54 : vector<64x1xf32> to vector<64x64xf32>
    %56 = arith.subf %52, %55 : vector<64x64xf32>
    %57 = math.exp %56 : vector<64x64xf32>
    %cst_34 = arith.constant dense<0.000000e+00> : vector<64xf32>
    %58 = vector.multi_reduction <add>, %57, %cst_34 [1] : vector<64x64xf32> to vector<64xf32>
    %59 = vector.shape_cast %58 : vector<64xf32> to vector<64x1xf32>
    %60 = tpu.reciprocal %59 {approx = true} : vector<64x1xf32> -> vector<64x1xf32>
    %61 = vector.broadcast %60 : vector<64x1xf32> to vector<64x64xf32>
    %62 = arith.mulf %57, %61 : vector<64x64xf32>
    %cst_35 = arith.constant dense<0.000000e+00> : vector<64x8xf32>
    %63 = tpu.matmul %62, %47, %cst_35 {dimension_numbers = #tpu.dot_dimension_numbers<[1], [0], [0], [1], [0, 0, 1, 1], [], []>} : vector<64x64xf32>, vector<64x8xf32>, vector<64x8xf32> -> vector<64x8xf32>
    %c0_36 = arith.constant 0 : index
    %c8 = arith.constant 8 : index
    %64 = vector.load %arg20[%c0_36, %c8] : memref<64x32xf32, #tpu.memory_space<vmem>>, vector<64x8xf32>
    tpu.vector_store %arg20[%c0_36, %c8], %63 {strides = array<i32>} : memref<64x32xf32, #tpu.memory_space<vmem>>, vector<64x8xf32>,
    %65 = vector.extract_strided_slice %10 {offsets = [0, 16], sizes = [64, 8], strides = [1, 1]} : vector<64x32xf32> to vector<64x8xf32>
    %66 = vector.extract_strided_slice %17 {offsets = [0, 16], sizes = [64, 8], strides = [1, 1]} : vector<64x32xf32> to vector<64x8xf32>
    %67 = vector.extract_strided_slice %24 {offsets = [0, 16], sizes = [64, 8], strides = [1, 1]} : vector<64x32xf32> to vector<64x8xf32>
    %68 = tpu.transpose %66, [1, 0] : vector<64x8xf32> -> vector<8x64xf32>
    %cst_37 = arith.constant dense<0.000000e+00> : vector<64x64xf32>
    %69 = tpu.matmul %65, %68, %cst_37 {dimension_numbers = #tpu.dot_dimension_numbers<[1], [0], [0], [1], [0, 0, 1, 1], [], []>} : vector<64x8xf32>, vector<8x64xf32>, vector<64x64xf32> -> vector<64x64xf32>
    %cst_38 = arith.constant 0.353553385 : f32
    %70 = vector.broadcast %cst_38 : f32 to vector<64x64xf32>
    %71 = arith.mulf %69, %70 : vector<64x64xf32>
    %72 = arith.addf %71, %2 : vector<64x64xf32>
    %cst_39 = arith.constant dense<0xFF800000> : vector<64xf32>
    %73 = vector.multi_reduction <maximumf>, %72, %cst_39 [1] : vector<64x64xf32> to vector<64xf32>
    %74 = vector.shape_cast %73 : vector<64xf32> to vector<64x1xf32>
    %75 = vector.broadcast %74 : vector<64x1xf32> to vector<64x64xf32>
    %76 = arith.subf %72, %75 : vector<64x64xf32>
    %77 = math.exp %76 : vector<64x64xf32>
    %cst_40 = arith.constant dense<0.000000e+00> : vector<64xf32>
    %78 = vector.multi_reduction <add>, %77, %cst_40 [1] : vector<64x64xf32> to vector<64xf32>
    %79 = vector.shape_cast %78 : vector<64xf32> to vector<64x1xf32>
    %80 = tpu.reciprocal %79 {approx = true} : vector<64x1xf32> -> vector<64x1xf32>
    %81 = vector.broadcast %80 : vector<64x1xf32> to vector<64x64xf32>
    %82 = arith.mulf %77, %81 : vector<64x64xf32>
    %cst_41 = arith.constant dense<0.000000e+00> : vector<64x8xf32>
    %83 = tpu.matmul %82, %67, %cst_41 {dimension_numbers = #tpu.dot_dimension_numbers<[1], [0], [0], [1], [0, 0, 1, 1], [], []>} : vector<64x64xf32>, vector<64x8xf32>, vector<64x8xf32> -> vector<64x8xf32>
    %c0_42 = arith.constant 0 : index
    %c16 = arith.constant 16 : index
    %84 = vector.load %arg20[%c0_42, %c16] : memref<64x32xf32, #tpu.memory_space<vmem>>, vector<64x8xf32>
    tpu.vector_store %arg20[%c0_42, %c16], %83 {strides = array<i32>} : memref<64x32xf32, #tpu.memory_space<vmem>>, vector<64x8xf32>,
    %85 = vector.extract_strided_slice %10 {offsets = [0, 24], sizes = [64, 8], strides = [1, 1]} : vector<64x32xf32> to vector<64x8xf32>
    %86 = vector.extract_strided_slice %17 {offsets = [0, 24], sizes = [64, 8], strides = [1, 1]} : vector<64x32xf32> to vector<64x8xf32>
    %87 = vector.extract_strided_slice %24 {offsets = [0, 24], sizes = [64, 8], strides = [1, 1]} : vector<64x32xf32> to vector<64x8xf32>
    %88 = tpu.transpose %86, [1, 0] : vector<64x8xf32> -> vector<8x64xf32>
    %cst_43 = arith.constant dense<0.000000e+00> : vector<64x64xf32>
    %89 = tpu.matmul %85, %88, %cst_43 {dimension_numbers = #tpu.dot_dimension_numbers<[1], [0], [0], [1], [0, 0, 1, 1], [], []>} : vector<64x8xf32>, vector<8x64xf32>, vector<64x64xf32> -> vector<64x64xf32>
    %cst_44 = arith.constant 0.353553385 : f32
    %90 = vector.broadcast %cst_44 : f32 to vector<64x64xf32>
    %91 = arith.mulf %89, %90 : vector<64x64xf32>
    %92 = arith.addf %91, %2 : vector<64x64xf32>
    %cst_45 = arith.constant dense<0xFF800000> : vector<64xf32>
    %93 = vector.multi_reduction <maximumf>, %92, %cst_45 [1] : vector<64x64xf32> to vector<64xf32>
    %94 = vector.shape_cast %93 : vector<64xf32> to vector<64x1xf32>
    %95 = vector.broadcast %94 : vector<64x1xf32> to vector<64x64xf32>
    %96 = arith.subf %92, %95 : vector<64x64xf32>
    %97 = math.exp %96 : vector<64x64xf32>
    %cst_46 = arith.constant dense<0.000000e+00> : vector<64xf32>
    %98 = vector.multi_reduction <add>, %97, %cst_46 [1] : vector<64x64xf32> to vector<64xf32>
    %99 = vector.shape_cast %98 : vector<64xf32> to vector<64x1xf32>
    %100 = tpu.reciprocal %99 {approx = true} : vector<64x1xf32> -> vector<64x1xf32>
    %101 = vector.broadcast %100 : vector<64x1xf32> to vector<64x64xf32>
    %102 = arith.mulf %97, %101 : vector<64x64xf32>
    %cst_47 = arith.constant dense<0.000000e+00> : vector<64x8xf32>
    %103 = tpu.matmul %102, %87, %cst_47 {dimension_numbers = #tpu.dot_dimension_numbers<[1], [0], [0], [1], [0, 0, 1, 1], [], []>} : vector<64x64xf32>, vector<64x8xf32>, vector<64x8xf32> -> vector<64x8xf32>
    %c0_48 = arith.constant 0 : index
    %c24 = arith.constant 24 : index
    %104 = vector.load %arg20[%c0_48, %c24] : memref<64x32xf32, #tpu.memory_space<vmem>>, vector<64x8xf32>
    tpu.vector_store %arg20[%c0_48, %c24], %103 {strides = array<i32>} : memref<64x32xf32, #tpu.memory_space<vmem>>, vector<64x8xf32>,
    %c0_49 = arith.constant 0 : index
    %c0_50 = arith.constant 0 : index
    %105 = vector.load %arg20[%c0_49, %c0_50] : memref<64x32xf32, #tpu.memory_space<vmem>>, vector<64x32xf32>
    %106 = arith.truncf %105 : vector<64x32xf32> to vector<64x32xbf16>
    %c0_51 = arith.constant 0 : index
    %c0_52 = arith.constant 0 : index
    %c0_53 = arith.constant 0 : index
    %107 = vector.load %arg9[%c0_51, %c0_52, %c0_53] : memref<2x32x32xbf16, #tpu.memory_space<vmem>>, vector<1x32x32xbf16>
    %108 = vector.shape_cast %107 : vector<1x32x32xbf16> to vector<32x32xbf16>
    %cst_54 = arith.constant dense<0.000000e+00> : vector<64x32xf32>
    %109 = tpu.matmul %106, %108, %cst_54 {dimension_numbers = #tpu.dot_dimension_numbers<[1], [0], [0], [1], [0, 0, 1, 1], [], []>} : vector<64x32xbf16>, vector<32x32xbf16>, vector<64x32xf32> -> vector<64x32xf32>
    %c0_55 = arith.constant 0 : index
    %c0_56 = arith.constant 0 : index
    %c0_57 = arith.constant 0 : index
    %110 = vector.load %arg10[%c0_55, %c0_56, %c0_57] : memref<2x1x32xf32, #tpu.memory_space<vmem>>, vector<1x1x32xf32>
    %111 = vector.shape_cast %110 : vector<1x1x32xf32> to vector<1x32xf32>
    %112 = vector.broadcast %111 : vector<1x32xf32> to vector<64x32xf32>
    %113 = arith.addf %109, %112 : vector<64x32xf32>
    %114 = arith.addf %0, %113 : vector<64x32xf32>
    %cst_58 = arith.constant dense<0.000000e+00> : vector<64xf32>
    %115 = vector.multi_reduction <add>, %114, %cst_58 [1] : vector<64x32xf32> to vector<64xf32>
    %116 = vector.shape_cast %115 : vector<64xf32> to vector<64x1xf32>
    %cst_59 = arith.constant 3.200000e+01 : f32
    %117 = vector.broadcast %cst_59 : f32 to vector<64x1xf32>
    %118 = arith.divf %116, %117 : vector<64x1xf32>
    %119 = vector.broadcast %118 : vector<64x1xf32> to vector<64x32xf32>
    %120 = arith.subf %114, %119 : vector<64x32xf32>
    %121 = arith.mulf %120, %120 : vector<64x32xf32>
    %cst_60 = arith.constant dense<0.000000e+00> : vector<64xf32>
    %122 = vector.multi_reduction <add>, %121, %cst_60 [1] : vector<64x32xf32> to vector<64xf32>
    %123 = vector.shape_cast %122 : vector<64xf32> to vector<64x1xf32>
    %cst_61 = arith.constant 3.200000e+01 : f32
    %124 = vector.broadcast %cst_61 : f32 to vector<64x1xf32>
    %125 = arith.divf %123, %124 : vector<64x1xf32>
    %126 = vector.broadcast %118 : vector<64x1xf32> to vector<64x32xf32>
    %127 = arith.subf %114, %126 : vector<64x32xf32>
    %cst_62 = arith.constant 9.99999974E-6 : f32
    %128 = vector.broadcast %cst_62 : f32 to vector<64x1xf32>
    %129 = arith.addf %125, %128 : vector<64x1xf32>
    %130 = math.rsqrt %129 : vector<64x1xf32>
    %131 = vector.broadcast %130 : vector<64x1xf32> to vector<64x32xf32>
    %132 = arith.mulf %127, %131 : vector<64x32xf32>
    %c0_63 = arith.constant 0 : index
    %c0_64 = arith.constant 0 : index
    %c0_65 = arith.constant 0 : index
    %133 = vector.load %arg15[%c0_63, %c0_64, %c0_65] : memref<2x1x32xf32, #tpu.memory_space<vmem>>, vector<1x1x32xf32>
    %134 = vector.shape_cast %133 : vector<1x1x32xf32> to vector<1x32xf32>
    %135 = vector.broadcast %134 : vector<1x32xf32> to vector<64x32xf32>
    %136 = arith.mulf %132, %135 : vector<64x32xf32>
    %c0_66 = arith.constant 0 : index
    %c0_67 = arith.constant 0 : index
    %c0_68 = arith.constant 0 : index
    %137 = vector.load %arg16[%c0_66, %c0_67, %c0_68] : memref<2x1x32xf32, #tpu.memory_space<vmem>>, vector<1x1x32xf32>
    %138 = vector.shape_cast %137 : vector<1x1x32xf32> to vector<1x32xf32>
    %139 = vector.broadcast %138 : vector<1x32xf32> to vector<64x32xf32>
    %140 = arith.addf %136, %139 : vector<64x32xf32>
    %141 = arith.truncf %140 : vector<64x32xf32> to vector<64x32xbf16>
    %c0_69 = arith.constant 0 : index
    %c0_70 = arith.constant 0 : index
    %c0_71 = arith.constant 0 : index
    %142 = vector.load %arg11[%c0_69, %c0_70, %c0_71] : memref<2x32x64xbf16, #tpu.memory_space<vmem>>, vector<1x32x64xbf16>
    %143 = vector.shape_cast %142 : vector<1x32x64xbf16> to vector<32x64xbf16>
    %cst_72 = arith.constant dense<0.000000e+00> : vector<64x64xf32>
    %144 = tpu.matmul %141, %143, %cst_72 {dimension_numbers = #tpu.dot_dimension_numbers<[1], [0], [0], [1], [0, 0, 1, 1], [], []>} : vector<64x32xbf16>, vector<32x64xbf16>, vector<64x64xf32> -> vector<64x64xf32>
    %c0_73 = arith.constant 0 : index
    %c0_74 = arith.constant 0 : index
    %c0_75 = arith.constant 0 : index
    %145 = vector.load %arg12[%c0_73, %c0_74, %c0_75] : memref<2x1x64xf32, #tpu.memory_space<vmem>>, vector<1x1x64xf32>
    %146 = vector.shape_cast %145 : vector<1x1x64xf32> to vector<1x64xf32>
    %147 = vector.broadcast %146 : vector<1x64xf32> to vector<64x64xf32>
    %148 = arith.addf %144, %147 : vector<64x64xf32>
    %cst_76 = arith.constant 0.000000e+00 : f32
    %149 = vector.broadcast %cst_76 : f32 to vector<64x64xf32>
    %150 = arith.maximumf %148, %149 : vector<64x64xf32>
    %151 = arith.truncf %150 : vector<64x64xf32> to vector<64x64xbf16>
    %c0_77 = arith.constant 0 : index
    %c0_78 = arith.constant 0 : index
    %c0_79 = arith.constant 0 : index
    %152 = vector.load %arg13[%c0_77, %c0_78, %c0_79] : memref<2x64x32xbf16, #tpu.memory_space<vmem>>, vector<1x64x32xbf16>
    %153 = vector.shape_cast %152 : vector<1x64x32xbf16> to vector<64x32xbf16>
    %cst_80 = arith.constant dense<0.000000e+00> : vector<64x32xf32>
    %154 = tpu.matmul %151, %153, %cst_80 {dimension_numbers = #tpu.dot_dimension_numbers<[1], [0], [0], [1], [0, 0, 1, 1], [], []>} : vector<64x64xbf16>, vector<64x32xbf16>, vector<64x32xf32> -> vector<64x32xf32>
    %c0_81 = arith.constant 0 : index
    %c0_82 = arith.constant 0 : index
    %c0_83 = arith.constant 0 : index
    %155 = vector.load %arg14[%c0_81, %c0_82, %c0_83] : memref<2x1x32xf32, #tpu.memory_space<vmem>>, vector<1x1x32xf32>
    %156 = vector.shape_cast %155 : vector<1x1x32xf32> to vector<1x32xf32>
    %157 = vector.broadcast %156 : vector<1x32xf32> to vector<64x32xf32>
    %158 = arith.addf %154, %157 : vector<64x32xf32>
    %159 = arith.addf %140, %158 : vector<64x32xf32>
    %cst_84 = arith.constant dense<0.000000e+00> : vector<64xf32>
    %160 = vector.multi_reduction <add>, %159, %cst_84 [1] : vector<64x32xf32> to vector<64xf32>
    %161 = vector.shape_cast %160 : vector<64xf32> to vector<64x1xf32>
    %cst_85 = arith.constant 3.200000e+01 : f32
    %162 = vector.broadcast %cst_85 : f32 to vector<64x1xf32>
    %163 = arith.divf %161, %162 : vector<64x1xf32>
    %164 = vector.broadcast %163 : vector<64x1xf32> to vector<64x32xf32>
    %165 = arith.subf %159, %164 : vector<64x32xf32>
    %166 = arith.mulf %165, %165 : vector<64x32xf32>
    %cst_86 = arith.constant dense<0.000000e+00> : vector<64xf32>
    %167 = vector.multi_reduction <add>, %166, %cst_86 [1] : vector<64x32xf32> to vector<64xf32>
    %168 = vector.shape_cast %167 : vector<64xf32> to vector<64x1xf32>
    %cst_87 = arith.constant 3.200000e+01 : f32
    %169 = vector.broadcast %cst_87 : f32 to vector<64x1xf32>
    %170 = arith.divf %168, %169 : vector<64x1xf32>
    %171 = vector.broadcast %163 : vector<64x1xf32> to vector<64x32xf32>
    %172 = arith.subf %159, %171 : vector<64x32xf32>
    %cst_88 = arith.constant 9.99999974E-6 : f32
    %173 = vector.broadcast %cst_88 : f32 to vector<64x1xf32>
    %174 = arith.addf %170, %173 : vector<64x1xf32>
    %175 = math.rsqrt %174 : vector<64x1xf32>
    %176 = vector.broadcast %175 : vector<64x1xf32> to vector<64x32xf32>
    %177 = arith.mulf %172, %176 : vector<64x32xf32>
    %c0_89 = arith.constant 0 : index
    %c0_90 = arith.constant 0 : index
    %c0_91 = arith.constant 0 : index
    %178 = vector.load %arg17[%c0_89, %c0_90, %c0_91] : memref<2x1x32xf32, #tpu.memory_space<vmem>>, vector<1x1x32xf32>
    %179 = vector.shape_cast %178 : vector<1x1x32xf32> to vector<1x32xf32>
    %180 = vector.broadcast %179 : vector<1x32xf32> to vector<64x32xf32>
    %181 = arith.mulf %177, %180 : vector<64x32xf32>
    %c0_92 = arith.constant 0 : index
    %c0_93 = arith.constant 0 : index
    %c0_94 = arith.constant 0 : index
    %182 = vector.load %arg18[%c0_92, %c0_93, %c0_94] : memref<2x1x32xf32, #tpu.memory_space<vmem>>, vector<1x1x32xf32>
    %183 = vector.shape_cast %182 : vector<1x1x32xf32> to vector<1x32xf32>
    %184 = vector.broadcast %183 : vector<1x32xf32> to vector<64x32xf32>
    %185 = arith.addf %181, %184 : vector<64x32xf32>
    %186 = arith.truncf %185 : vector<64x32xf32> to vector<64x32xbf16>
    %c1 = arith.constant 1 : index
    %c0_95 = arith.constant 0 : index
    %c0_96 = arith.constant 0 : index
    %187 = vector.load %arg3[%c1, %c0_95, %c0_96] : memref<2x32x32xbf16, #tpu.memory_space<vmem>>, vector<1x32x32xbf16>
    %188 = vector.shape_cast %187 : vector<1x32x32xbf16> to vector<32x32xbf16>
    %cst_97 = arith.constant dense<0.000000e+00> : vector<64x32xf32>
    %189 = tpu.matmul %186, %188, %cst_97 {dimension_numbers = #tpu.dot_dimension_numbers<[1], [0], [0], [1], [0, 0, 1, 1], [], []>} : vector<64x32xbf16>, vector<32x32xbf16>, vector<64x32xf32> -> vector<64x32xf32>
    %c1_98 = arith.constant 1 : index
    %c0_99 = arith.constant 0 : index
    %c0_100 = arith.constant 0 : index
    %190 = vector.load %arg4[%c1_98, %c0_99, %c0_100] : memref<2x1x32xf32, #tpu.memory_space<vmem>>, vector<1x1x32xf32>
    %191 = vector.shape_cast %190 : vector<1x1x32xf32> to vector<1x32xf32>
    %192 = vector.broadcast %191 : vector<1x32xf32> to vector<64x32xf32>
    %193 = arith.addf %189, %192 : vector<64x32xf32>
    %c1_101 = arith.constant 1 : index
    %c0_102 = arith.constant 0 : index
    %c0_103 = arith.constant 0 : index
    %194 = vector.load %arg5[%c1_101, %c0_102, %c0_103] : memref<2x32x32xbf16, #tpu.memory_space<vmem>>, vector<1x32x32xbf16>
    %195 = vector.shape_cast %194 : vector<1x32x32xbf16> to vector<32x32xbf16>
    %cst_104 = arith.constant dense<0.000000e+00> : vector<64x32xf32>
    %196 = tpu.matmul %186, %195, %cst_104 {dimension_numbers = #tpu.dot_dimension_numbers<[1], [0], [0], [1], [0, 0, 1, 1], [], []>} : vector<64x32xbf16>, vector<32x32xbf16>, vector<64x32xf32> -> vector<64x32xf32>
    %c1_105 = arith.constant 1 : index
    %c0_106 = arith.constant 0 : index
    %c0_107 = arith.constant 0 : index
    %197 = vector.load %arg6[%c1_105, %c0_106, %c0_107] : memref<2x1x32xf32, #tpu.memory_space<vmem>>, vector<1x1x32xf32>
    %198 = vector.shape_cast %197 : vector<1x1x32xf32> to vector<1x32xf32>
    %199 = vector.broadcast %198 : vector<1x32xf32> to vector<64x32xf32>
    %200 = arith.addf %196, %199 : vector<64x32xf32>
    %c1_108 = arith.constant 1 : index
    %c0_109 = arith.constant 0 : index
    %c0_110 = arith.constant 0 : index
    %201 = vector.load %arg7[%c1_108, %c0_109, %c0_110] : memref<2x32x32xbf16, #tpu.memory_space<vmem>>, vector<1x32x32xbf16>
    %202 = vector.shape_cast %201 : vector<1x32x32xbf16> to vector<32x32xbf16>
    %cst_111 = arith.constant dense<0.000000e+00> : vector<64x32xf32>
    %203 = tpu.matmul %186, %202, %cst_111 {dimension_numbers = #tpu.dot_dimension_numbers<[1], [0], [0], [1], [0, 0, 1, 1], [], []>} : vector<64x32xbf16>, vector<32x32xbf16>, vector<64x32xf32> -> vector<64x32xf32>
    %c1_112 = arith.constant 1 : index
    %c0_113 = arith.constant 0 : index
    %c0_114 = arith.constant 0 : index
    %204 = vector.load %arg8[%c1_112, %c0_113, %c0_114] : memref<2x1x32xf32, #tpu.memory_space<vmem>>, vector<1x1x32xf32>
    %205 = vector.shape_cast %204 : vector<1x1x32xf32> to vector<1x32xf32>
    %206 = vector.broadcast %205 : vector<1x32xf32> to vector<64x32xf32>
    %207 = arith.addf %203, %206 : vector<64x32xf32>
    %208 = vector.extract_strided_slice %193 {offsets = [0, 0], sizes = [64, 8], strides = [1, 1]} : vector<64x32xf32> to vector<64x8xf32>
    %209 = vector.extract_strided_slice %200 {offsets = [0, 0], sizes = [64, 8], strides = [1, 1]} : vector<64x32xf32> to vector<64x8xf32>
    %210 = vector.extract_strided_slice %207 {offsets = [0, 0], sizes = [64, 8], strides = [1, 1]} : vector<64x32xf32> to vector<64x8xf32>
    %211 = tpu.transpose %209, [1, 0] : vector<64x8xf32> -> vector<8x64xf32>
    %cst_115 = arith.constant dense<0.000000e+00> : vector<64x64xf32>
    %212 = tpu.matmul %208, %211, %cst_115 {dimension_numbers = #tpu.dot_dimension_numbers<[1], [0], [0], [1], [0, 0, 1, 1], [], []>} : vector<64x8xf32>, vector<8x64xf32>, vector<64x64xf32> -> vector<64x64xf32>
    %cst_116 = arith.constant 0.353553385 : f32
    %213 = vector.broadcast %cst_116 : f32 to vector<64x64xf32>
    %214 = arith.mulf %212, %213 : vector<64x64xf32>
    %215 = arith.addf %214, %2 : vector<64x64xf32>
    %cst_117 = arith.constant dense<0xFF800000> : vector<64xf32>
    %216 = vector.multi_reduction <maximumf>, %215, %cst_117 [1] : vector<64x64xf32> to vector<64xf32>
    %217 = vector.shape_cast %216 : vector<64xf32> to vector<64x1xf32>
    %218 = vector.broadcast %217 : vector<64x1xf32> to vector<64x64xf32>
    %219 = arith.subf %215, %218 : vector<64x64xf32>
    %220 = math.exp %219 : vector<64x64xf32>
    %cst_118 = arith.constant dense<0.000000e+00> : vector<64xf32>
    %221 = vector.multi_reduction <add>, %220, %cst_118 [1] : vector<64x64xf32> to vector<64xf32>
    %222 = vector.shape_cast %221 : vector<64xf32> to vector<64x1xf32>
    %223 = tpu.reciprocal %222 {approx = true} : vector<64x1xf32> -> vector<64x1xf32>
    %224 = vector.broadcast %223 : vector<64x1xf32> to vector<64x64xf32>
    %225 = arith.mulf %220, %224 : vector<64x64xf32>
    %cst_119 = arith.constant dense<0.000000e+00> : vector<64x8xf32>
    %226 = tpu.matmul %225, %210, %cst_119 {dimension_numbers = #tpu.dot_dimension_numbers<[1], [0], [0], [1], [0, 0, 1, 1], [], []>} : vector<64x64xf32>, vector<64x8xf32>, vector<64x8xf32> -> vector<64x8xf32>
    %c0_120 = arith.constant 0 : index
    %c0_121 = arith.constant 0 : index
    %227 = vector.load %arg20[%c0_120, %c0_121] : memref<64x32xf32, #tpu.memory_space<vmem>>, vector<64x8xf32>
    tpu.vector_store %arg20[%c0_120, %c0_121], %226 {strides = array<i32>} : memref<64x32xf32, #tpu.memory_space<vmem>>, vector<64x8xf32>,
    %228 = vector.extract_strided_slice %193 {offsets = [0, 8], sizes = [64, 8], strides = [1, 1]} : vector<64x32xf32> to vector<64x8xf32>
    %229 = vector.extract_strided_slice %200 {offsets = [0, 8], sizes = [64, 8], strides = [1, 1]} : vector<64x32xf32> to vector<64x8xf32>
    %230 = vector.extract_strided_slice %207 {offsets = [0, 8], sizes = [64, 8], strides = [1, 1]} : vector<64x32xf32> to vector<64x8xf32>
    %231 = tpu.transpose %229, [1, 0] : vector<64x8xf32> -> vector<8x64xf32>
    %cst_122 = arith.constant dense<0.000000e+00> : vector<64x64xf32>
    %232 = tpu.matmul %228, %231, %cst_122 {dimension_numbers = #tpu.dot_dimension_numbers<[1], [0], [0], [1], [0, 0, 1, 1], [], []>} : vector<64x8xf32>, vector<8x64xf32>, vector<64x64xf32> -> vector<64x64xf32>
    %cst_123 = arith.constant 0.353553385 : f32
    %233 = vector.broadcast %cst_123 : f32 to vector<64x64xf32>
    %234 = arith.mulf %232, %233 : vector<64x64xf32>
    %235 = arith.addf %234, %2 : vector<64x64xf32>
    %cst_124 = arith.constant dense<0xFF800000> : vector<64xf32>
    %236 = vector.multi_reduction <maximumf>, %235, %cst_124 [1] : vector<64x64xf32> to vector<64xf32>
    %237 = vector.shape_cast %236 : vector<64xf32> to vector<64x1xf32>
    %238 = vector.broadcast %237 : vector<64x1xf32> to vector<64x64xf32>
    %239 = arith.subf %235, %238 : vector<64x64xf32>
    %240 = math.exp %239 : vector<64x64xf32>
    %cst_125 = arith.constant dense<0.000000e+00> : vector<64xf32>
    %241 = vector.multi_reduction <add>, %240, %cst_125 [1] : vector<64x64xf32> to vector<64xf32>
    %242 = vector.shape_cast %241 : vector<64xf32> to vector<64x1xf32>
    %243 = tpu.reciprocal %242 {approx = true} : vector<64x1xf32> -> vector<64x1xf32>
    %244 = vector.broadcast %243 : vector<64x1xf32> to vector<64x64xf32>
    %245 = arith.mulf %240, %244 : vector<64x64xf32>
    %cst_126 = arith.constant dense<0.000000e+00> : vector<64x8xf32>
    %246 = tpu.matmul %245, %230, %cst_126 {dimension_numbers = #tpu.dot_dimension_numbers<[1], [0], [0], [1], [0, 0, 1, 1], [], []>} : vector<64x64xf32>, vector<64x8xf32>, vector<64x8xf32> -> vector<64x8xf32>
    %c0_127 = arith.constant 0 : index
    %c8_128 = arith.constant 8 : index
    %247 = vector.load %arg20[%c0_127, %c8_128] : memref<64x32xf32, #tpu.memory_space<vmem>>, vector<64x8xf32>
    tpu.vector_store %arg20[%c0_127, %c8_128], %246 {strides = array<i32>} : memref<64x32xf32, #tpu.memory_space<vmem>>, vector<64x8xf32>,
    %248 = vector.extract_strided_slice %193 {offsets = [0, 16], sizes = [64, 8], strides = [1, 1]} : vector<64x32xf32> to vector<64x8xf32>
    %249 = vector.extract_strided_slice %200 {offsets = [0, 16], sizes = [64, 8], strides = [1, 1]} : vector<64x32xf32> to vector<64x8xf32>
    %250 = vector.extract_strided_slice %207 {offsets = [0, 16], sizes = [64, 8], strides = [1, 1]} : vector<64x32xf32> to vector<64x8xf32>
    %251 = tpu.transpose %249, [1, 0] : vector<64x8xf32> -> vector<8x64xf32>
    %cst_129 = arith.constant dense<0.000000e+00> : vector<64x64xf32>
    %252 = tpu.matmul %248, %251, %cst_129 {dimension_numbers = #tpu.dot_dimension_numbers<[1], [0], [0], [1], [0, 0, 1, 1], [], []>} : vector<64x8xf32>, vector<8x64xf32>, vector<64x64xf32> -> vector<64x64xf32>
    %cst_130 = arith.constant 0.353553385 : f32
    %253 = vector.broadcast %cst_130 : f32 to vector<64x64xf32>
    %254 = arith.mulf %252, %253 : vector<64x64xf32>
    %255 = arith.addf %254, %2 : vector<64x64xf32>
    %cst_131 = arith.constant dense<0xFF800000> : vector<64xf32>
    %256 = vector.multi_reduction <maximumf>, %255, %cst_131 [1] : vector<64x64xf32> to vector<64xf32>
    %257 = vector.shape_cast %256 : vector<64xf32> to vector<64x1xf32>
    %258 = vector.broadcast %257 : vector<64x1xf32> to vector<64x64xf32>
    %259 = arith.subf %255, %258 : vector<64x64xf32>
    %260 = math.exp %259 : vector<64x64xf32>
    %cst_132 = arith.constant dense<0.000000e+00> : vector<64xf32>
    %261 = vector.multi_reduction <add>, %260, %cst_132 [1] : vector<64x64xf32> to vector<64xf32>
    %262 = vector.shape_cast %261 : vector<64xf32> to vector<64x1xf32>
    %263 = tpu.reciprocal %262 {approx = true} : vector<64x1xf32> -> vector<64x1xf32>
    %264 = vector.broadcast %263 : vector<64x1xf32> to vector<64x64xf32>
    %265 = arith.mulf %260, %264 : vector<64x64xf32>
    %cst_133 = arith.constant dense<0.000000e+00> : vector<64x8xf32>
    %266 = tpu.matmul %265, %250, %cst_133 {dimension_numbers = #tpu.dot_dimension_numbers<[1], [0], [0], [1], [0, 0, 1, 1], [], []>} : vector<64x64xf32>, vector<64x8xf32>, vector<64x8xf32> -> vector<64x8xf32>
    %c0_134 = arith.constant 0 : index
    %c16_135 = arith.constant 16 : index
    %267 = vector.load %arg20[%c0_134, %c16_135] : memref<64x32xf32, #tpu.memory_space<vmem>>, vector<64x8xf32>
    tpu.vector_store %arg20[%c0_134, %c16_135], %266 {strides = array<i32>} : memref<64x32xf32, #tpu.memory_space<vmem>>, vector<64x8xf32>,
    %268 = vector.extract_strided_slice %193 {offsets = [0, 24], sizes = [64, 8], strides = [1, 1]} : vector<64x32xf32> to vector<64x8xf32>
    %269 = vector.extract_strided_slice %200 {offsets = [0, 24], sizes = [64, 8], strides = [1, 1]} : vector<64x32xf32> to vector<64x8xf32>
    %270 = vector.extract_strided_slice %207 {offsets = [0, 24], sizes = [64, 8], strides = [1, 1]} : vector<64x32xf32> to vector<64x8xf32>
    %271 = tpu.transpose %269, [1, 0] : vector<64x8xf32> -> vector<8x64xf32>
    %cst_136 = arith.constant dense<0.000000e+00> : vector<64x64xf32>
    %272 = tpu.matmul %268, %271, %cst_136 {dimension_numbers = #tpu.dot_dimension_numbers<[1], [0], [0], [1], [0, 0, 1, 1], [], []>} : vector<64x8xf32>, vector<8x64xf32>, vector<64x64xf32> -> vector<64x64xf32>
    %cst_137 = arith.constant 0.353553385 : f32
    %273 = vector.broadcast %cst_137 : f32 to vector<64x64xf32>
    %274 = arith.mulf %272, %273 : vector<64x64xf32>
    %275 = arith.addf %274, %2 : vector<64x64xf32>
    %cst_138 = arith.constant dense<0xFF800000> : vector<64xf32>
    %276 = vector.multi_reduction <maximumf>, %275, %cst_138 [1] : vector<64x64xf32> to vector<64xf32>
    %277 = vector.shape_cast %276 : vector<64xf32> to vector<64x1xf32>
    %278 = vector.broadcast %277 : vector<64x1xf32> to vector<64x64xf32>
    %279 = arith.subf %275, %278 : vector<64x64xf32>
    %280 = math.exp %279 : vector<64x64xf32>
    %cst_139 = arith.constant dense<0.000000e+00> : vector<64xf32>
    %281 = vector.multi_reduction <add>, %280, %cst_139 [1] : vector<64x64xf32> to vector<64xf32>
    %282 = vector.shape_cast %281 : vector<64xf32> to vector<64x1xf32>
    %283 = tpu.reciprocal %282 {approx = true} : vector<64x1xf32> -> vector<64x1xf32>
    %284 = vector.broadcast %283 : vector<64x1xf32> to vector<64x64xf32>
    %285 = arith.mulf %280, %284 : vector<64x64xf32>
    %cst_140 = arith.constant dense<0.000000e+00> : vector<64x8xf32>
    %286 = tpu.matmul %285, %270, %cst_140 {dimension_numbers = #tpu.dot_dimension_numbers<[1], [0], [0], [1], [0, 0, 1, 1], [], []>} : vector<64x64xf32>, vector<64x8xf32>, vector<64x8xf32> -> vector<64x8xf32>
    %c0_141 = arith.constant 0 : index
    %c24_142 = arith.constant 24 : index
    %287 = vector.load %arg20[%c0_141, %c24_142] : memref<64x32xf32, #tpu.memory_space<vmem>>, vector<64x8xf32>
    tpu.vector_store %arg20[%c0_141, %c24_142], %286 {strides = array<i32>} : memref<64x32xf32, #tpu.memory_space<vmem>>, vector<64x8xf32>,
    %c0_143 = arith.constant 0 : index
    %c0_144 = arith.constant 0 : index
    %288 = vector.load %arg20[%c0_143, %c0_144] : memref<64x32xf32, #tpu.memory_space<vmem>>, vector<64x32xf32>
    %289 = arith.truncf %288 : vector<64x32xf32> to vector<64x32xbf16>
    %c1_145 = arith.constant 1 : index
    %c0_146 = arith.constant 0 : index
    %c0_147 = arith.constant 0 : index
    %290 = vector.load %arg9[%c1_145, %c0_146, %c0_147] : memref<2x32x32xbf16, #tpu.memory_space<vmem>>, vector<1x32x32xbf16>
    %291 = vector.shape_cast %290 : vector<1x32x32xbf16> to vector<32x32xbf16>
    %cst_148 = arith.constant dense<0.000000e+00> : vector<64x32xf32>
    %292 = tpu.matmul %289, %291, %cst_148 {dimension_numbers = #tpu.dot_dimension_numbers<[1], [0], [0], [1], [0, 0, 1, 1], [], []>} : vector<64x32xbf16>, vector<32x32xbf16>, vector<64x32xf32> -> vector<64x32xf32>
    %c1_149 = arith.constant 1 : index
    %c0_150 = arith.constant 0 : index
    %c0_151 = arith.constant 0 : index
    %293 = vector.load %arg10[%c1_149, %c0_150, %c0_151] : memref<2x1x32xf32, #tpu.memory_space<vmem>>, vector<1x1x32xf32>
    %294 = vector.shape_cast %293 : vector<1x1x32xf32> to vector<1x32xf32>
    %295 = vector.broadcast %294 : vector<1x32xf32> to vector<64x32xf32>
    %296 = arith.addf %292, %295 : vector<64x32xf32>
    %297 = arith.addf %185, %296 : vector<64x32xf32>
    %cst_152 = arith.constant dense<0.000000e+00> : vector<64xf32>
    %298 = vector.multi_reduction <add>, %297, %cst_152 [1] : vector<64x32xf32> to vector<64xf32>
    %299 = vector.shape_cast %298 : vector<64xf32> to vector<64x1xf32>
    %cst_153 = arith.constant 3.200000e+01 : f32
    %300 = vector.broadcast %cst_153 : f32 to vector<64x1xf32>
    %301 = arith.divf %299, %300 : vector<64x1xf32>
    %302 = vector.broadcast %301 : vector<64x1xf32> to vector<64x32xf32>
    %303 = arith.subf %297, %302 : vector<64x32xf32>
    %304 = arith.mulf %303, %303 : vector<64x32xf32>
    %cst_154 = arith.constant dense<0.000000e+00> : vector<64xf32>
    %305 = vector.multi_reduction <add>, %304, %cst_154 [1] : vector<64x32xf32> to vector<64xf32>
    %306 = vector.shape_cast %305 : vector<64xf32> to vector<64x1xf32>
    %cst_155 = arith.constant 3.200000e+01 : f32
    %307 = vector.broadcast %cst_155 : f32 to vector<64x1xf32>
    %308 = arith.divf %306, %307 : vector<64x1xf32>
    %309 = vector.broadcast %301 : vector<64x1xf32> to vector<64x32xf32>
    %310 = arith.subf %297, %309 : vector<64x32xf32>
    %cst_156 = arith.constant 9.99999974E-6 : f32
    %311 = vector.broadcast %cst_156 : f32 to vector<64x1xf32>
    %312 = arith.addf %308, %311 : vector<64x1xf32>
    %313 = math.rsqrt %312 : vector<64x1xf32>
    %314 = vector.broadcast %313 : vector<64x1xf32> to vector<64x32xf32>
    %315 = arith.mulf %310, %314 : vector<64x32xf32>
    %c1_157 = arith.constant 1 : index
    %c0_158 = arith.constant 0 : index
    %c0_159 = arith.constant 0 : index
    %316 = vector.load %arg15[%c1_157, %c0_158, %c0_159] : memref<2x1x32xf32, #tpu.memory_space<vmem>>, vector<1x1x32xf32>
    %317 = vector.shape_cast %316 : vector<1x1x32xf32> to vector<1x32xf32>
    %318 = vector.broadcast %317 : vector<1x32xf32> to vector<64x32xf32>
    %319 = arith.mulf %315, %318 : vector<64x32xf32>
    %c1_160 = arith.constant 1 : index
    %c0_161 = arith.constant 0 : index
    %c0_162 = arith.constant 0 : index
    %320 = vector.load %arg16[%c1_160, %c0_161, %c0_162] : memref<2x1x32xf32, #tpu.memory_space<vmem>>, vector<1x1x32xf32>
    %321 = vector.shape_cast %320 : vector<1x1x32xf32> to vector<1x32xf32>
    %322 = vector.broadcast %321 : vector<1x32xf32> to vector<64x32xf32>
    %323 = arith.addf %319, %322 : vector<64x32xf32>
    %324 = arith.truncf %323 : vector<64x32xf32> to vector<64x32xbf16>
    %c1_163 = arith.constant 1 : index
    %c0_164 = arith.constant 0 : index
    %c0_165 = arith.constant 0 : index
    %325 = vector.load %arg11[%c1_163, %c0_164, %c0_165] : memref<2x32x64xbf16, #tpu.memory_space<vmem>>, vector<1x32x64xbf16>
    %326 = vector.shape_cast %325 : vector<1x32x64xbf16> to vector<32x64xbf16>
    %cst_166 = arith.constant dense<0.000000e+00> : vector<64x64xf32>
    %327 = tpu.matmul %324, %326, %cst_166 {dimension_numbers = #tpu.dot_dimension_numbers<[1], [0], [0], [1], [0, 0, 1, 1], [], []>} : vector<64x32xbf16>, vector<32x64xbf16>, vector<64x64xf32> -> vector<64x64xf32>
    %c1_167 = arith.constant 1 : index
    %c0_168 = arith.constant 0 : index
    %c0_169 = arith.constant 0 : index
    %328 = vector.load %arg12[%c1_167, %c0_168, %c0_169] : memref<2x1x64xf32, #tpu.memory_space<vmem>>, vector<1x1x64xf32>
    %329 = vector.shape_cast %328 : vector<1x1x64xf32> to vector<1x64xf32>
    %330 = vector.broadcast %329 : vector<1x64xf32> to vector<64x64xf32>
    %331 = arith.addf %327, %330 : vector<64x64xf32>
    %cst_170 = arith.constant 0.000000e+00 : f32
    %332 = vector.broadcast %cst_170 : f32 to vector<64x64xf32>
    %333 = arith.maximumf %331, %332 : vector<64x64xf32>
    %334 = arith.truncf %333 : vector<64x64xf32> to vector<64x64xbf16>
    %c1_171 = arith.constant 1 : index
    %c0_172 = arith.constant 0 : index
    %c0_173 = arith.constant 0 : index
    %335 = vector.load %arg13[%c1_171, %c0_172, %c0_173] : memref<2x64x32xbf16, #tpu.memory_space<vmem>>, vector<1x64x32xbf16>
    %336 = vector.shape_cast %335 : vector<1x64x32xbf16> to vector<64x32xbf16>
    %cst_174 = arith.constant dense<0.000000e+00> : vector<64x32xf32>
    %337 = tpu.matmul %334, %336, %cst_174 {dimension_numbers = #tpu.dot_dimension_numbers<[1], [0], [0], [1], [0, 0, 1, 1], [], []>} : vector<64x64xbf16>, vector<64x32xbf16>, vector<64x32xf32> -> vector<64x32xf32>
    %c1_175 = arith.constant 1 : index
    %c0_176 = arith.constant 0 : index
    %c0_177 = arith.constant 0 : index
    %338 = vector.load %arg14[%c1_175, %c0_176, %c0_177] : memref<2x1x32xf32, #tpu.memory_space<vmem>>, vector<1x1x32xf32>
    %339 = vector.shape_cast %338 : vector<1x1x32xf32> to vector<1x32xf32>
    %340 = vector.broadcast %339 : vector<1x32xf32> to vector<64x32xf32>
    %341 = arith.addf %337, %340 : vector<64x32xf32>
    %342 = arith.addf %323, %341 : vector<64x32xf32>
    %cst_178 = arith.constant dense<0.000000e+00> : vector<64xf32>
    %343 = vector.multi_reduction <add>, %342, %cst_178 [1] : vector<64x32xf32> to vector<64xf32>
    %344 = vector.shape_cast %343 : vector<64xf32> to vector<64x1xf32>
    %cst_179 = arith.constant 3.200000e+01 : f32
    %345 = vector.broadcast %cst_179 : f32 to vector<64x1xf32>
    %346 = arith.divf %344, %345 : vector<64x1xf32>
    %347 = vector.broadcast %346 : vector<64x1xf32> to vector<64x32xf32>
    %348 = arith.subf %342, %347 : vector<64x32xf32>
    %349 = arith.mulf %348, %348 : vector<64x32xf32>
    %cst_180 = arith.constant dense<0.000000e+00> : vector<64xf32>
    %350 = vector.multi_reduction <add>, %349, %cst_180 [1] : vector<64x32xf32> to vector<64xf32>
    %351 = vector.shape_cast %350 : vector<64xf32> to vector<64x1xf32>
    %cst_181 = arith.constant 3.200000e+01 : f32
    %352 = vector.broadcast %cst_181 : f32 to vector<64x1xf32>
    %353 = arith.divf %351, %352 : vector<64x1xf32>
    %354 = vector.broadcast %346 : vector<64x1xf32> to vector<64x32xf32>
    %355 = arith.subf %342, %354 : vector<64x32xf32>
    %cst_182 = arith.constant 9.99999974E-6 : f32
    %356 = vector.broadcast %cst_182 : f32 to vector<64x1xf32>
    %357 = arith.addf %353, %356 : vector<64x1xf32>
    %358 = math.rsqrt %357 : vector<64x1xf32>
    %359 = vector.broadcast %358 : vector<64x1xf32> to vector<64x32xf32>
    %360 = arith.mulf %355, %359 : vector<64x32xf32>
    %c1_183 = arith.constant 1 : index
    %c0_184 = arith.constant 0 : index
    %c0_185 = arith.constant 0 : index
    %361 = vector.load %arg17[%c1_183, %c0_184, %c0_185] : memref<2x1x32xf32, #tpu.memory_space<vmem>>, vector<1x1x32xf32>
    %362 = vector.shape_cast %361 : vector<1x1x32xf32> to vector<1x32xf32>
    %363 = vector.broadcast %362 : vector<1x32xf32> to vector<64x32xf32>
    %364 = arith.mulf %360, %363 : vector<64x32xf32>
    %c1_186 = arith.constant 1 : index
    %c0_187 = arith.constant 0 : index
    %c0_188 = arith.constant 0 : index
    %365 = vector.load %arg18[%c1_186, %c0_187, %c0_188] : memref<2x1x32xf32, #tpu.memory_space<vmem>>, vector<1x1x32xf32>
    %366 = vector.shape_cast %365 : vector<1x1x32xf32> to vector<1x32xf32>
    %367 = vector.broadcast %366 : vector<1x32xf32> to vector<64x32xf32>
    %368 = arith.addf %364, %367 : vector<64x32xf32>
    %c0_189 = arith.constant 0 : index
    %c0_190 = arith.constant 0 : index
    %369 = vector.load %arg19[%c0_189, %c0_190] : memref<64x32xf32, #tpu.memory_space<vmem>>, vector<64x32xf32>
    tpu.vector_store %arg19[%c0_189, %c0_190], %368 {strides = array<i32>} : memref<64x32xf32, #tpu.memory_space<vmem>>, vector<64x32xf32>,
    return
  }
  func.func @transform_0(%arg0: i32) -> (i32, i32) {
    %c0_i32 = arith.constant 0 : i32
    %c0_i32_0 = arith.constant 0 : i32
    return %arg0, %c0_i32 : i32, i32
  }
  func.func @transform_1(%arg0: i32) -> (i32, i32, i32) {
    %c0_i32 = arith.constant 0 : i32
    %c0_i32_0 = arith.constant 0 : i32
    %c0_i32_1 = arith.constant 0 : i32
    return %arg0, %c0_i32, %c0_i32_0 : i32, i32, i32
  }
  func.func @transform_2(%arg0: i32) -> (i32, i32, i32) {
    %c0_i32 = arith.constant 0 : i32
    %c0_i32_0 = arith.constant 0 : i32
    %c0_i32_1 = arith.constant 0 : i32
    %c0_i32_2 = arith.constant 0 : i32
    return %c0_i32, %c0_i32_0, %c0_i32_1 : i32, i32, i32
  }
  func.func @transform_3(%arg0: i32) -> (i32, i32, i32) {
    %c0_i32 = arith.constant 0 : i32
    %c0_i32_0 = arith.constant 0 : i32
    %c0_i32_1 = arith.constant 0 : i32
    %c0_i32_2 = arith.constant 0 : i32
    return %c0_i32, %c0_i32_0, %c0_i32_1 : i32, i32, i32
  }
  func.func @transform_4(%arg0: i32) -> (i32, i32, i32) {
    %c0_i32 = arith.constant 0 : i32
    %c0_i32_0 = arith.constant 0 : i32
    %c0_i32_1 = arith.constant 0 : i32
    %c0_i32_2 = arith.constant 0 : i32
    return %c0_i32, %c0_i32_0, %c0_i32_1 : i32, i32, i32
  }
  func.func @transform_5(%arg0: i32) -> (i32, i32, i32) {
    %c0_i32 = arith.constant 0 : i32
    %c0_i32_0 = arith.constant 0 : i32
    %c0_i32_1 = arith.constant 0 : i32
    %c0_i32_2 = arith.constant 0 : i32
    return %c0_i32, %c0_i32_0, %c0_i32_1 : i32, i32, i32
  }
  func.func @transform_6(%arg0: i32) -> (i32, i32, i32) {
    %c0_i32 = arith.constant 0 : i32
    %c0_i32_0 = arith.constant 0 : i32
    %c0_i32_1 = arith.constant 0 : i32
    %c0_i32_2 = arith.constant 0 : i32
    return %c0_i32, %c0_i32_0, %c0_i32_1 : i32, i32, i32
  }
  func.func @transform_7(%arg0: i32) -> (i32, i32, i32) {
    %c0_i32 = arith.constant 0 : i32
    %c0_i32_0 = arith.constant 0 : i32
    %c0_i32_1 = arith.constant 0 : i32
    %c0_i32_2 = arith.constant 0 : i32
    return %c0_i32, %c0_i32_0, %c0_i32_1 : i32, i32, i32
  }
  func.func @transform_8(%arg0: i32) -> (i32, i32, i32) {
    %c0_i32 = arith.constant 0 : i32
    %c0_i32_0 = arith.constant 0 : i32
    %c0_i32_1 = arith.constant 0 : i32
    %c0_i32_2 = arith.constant 0 : i32
    return %c0_i32, %c0_i32_0, %c0_i32_1 : i32, i32, i32
  }
  func.func @transform_9(%arg0: i32) -> (i32, i32, i32) {
    %c0_i32 = arith.constant 0 : i32
    %c0_i32_0 = arith.constant 0 : i32
    %c0_i32_1 = arith.constant 0 : i32
    %c0_i32_2 = arith.constant 0 : i32
    return %c0_i32, %c0_i32_0, %c0_i32_1 : i32, i32, i32
  }
  func.func @transform_10(%arg0: i32) -> (i32, i32, i32) {
    %c0_i32 = arith.constant 0 : i32
    %c0_i32_0 = arith.constant 0 : i32
    %c0_i32_1 = arith.constant 0 : i32
    %c0_i32_2 = arith.constant 0 : i32
    return %c0_i32, %c0_i32_0, %c0_i32_1 : i32, i32, i32
  }
  func.func @transform_11(%arg0: i32) -> (i32, i32, i32) {
    %c0_i32 = arith.constant 0 : i32
    %c0_i32_0 = arith.constant 0 : i32
    %c0_i32_1 = arith.constant 0 : i32
    %c0_i32_2 = arith.constant 0 : i32
    return %c0_i32, %c0_i32_0, %c0_i32_1 : i32, i32, i32
  }
  func.func @transform_12(%arg0: i32) -> (i32, i32, i32) {
    %c0_i32 = arith.constant 0 : i32
    %c0_i32_0 = arith.constant 0 : i32
    %c0_i32_1 = arith.constant 0 : i32
    %c0_i32_2 = arith.constant 0 : i32
    return %c0_i32, %c0_i32_0, %c0_i32_1 : i32, i32, i32
  }
  func.func @transform_13(%arg0: i32) -> (i32, i32, i32) {
    %c0_i32 = arith.constant 0 : i32
    %c0_i32_0 = arith.constant 0 : i32
    %c0_i32_1 = arith.constant 0 : i32
    %c0_i32_2 = arith.constant 0 : i32
    return %c0_i32, %c0_i32_0, %c0_i32_1 : i32, i32, i32
  }
  func.func @transform_14(%arg0: i32) -> (i32, i32, i32) {
    %c0_i32 = arith.constant 0 : i32
    %c0_i32_0 = arith.constant 0 : i32
    %c0_i32_1 = arith.constant 0 : i32
    %c0_i32_2 = arith.constant 0 : i32
    return %c0_i32, %c0_i32_0, %c0_i32_1 : i32, i32, i32
  }
  func.func @transform_15(%arg0: i32) -> (i32, i32, i32) {
    %c0_i32 = arith.constant 0 : i32
    %c0_i32_0 = arith.constant 0 : i32
    %c0_i32_1 = arith.constant 0 : i32
    %c0_i32_2 = arith.constant 0 : i32
    return %c0_i32, %c0_i32_0, %c0_i32_1 : i32, i32, i32
  }
  func.func @transform_16(%arg0: i32) -> (i32, i32, i32) {
    %c0_i32 = arith.constant 0 : i32
    %c0_i32_0 = arith.constant 0 : i32
    %c0_i32_1 = arith.constant 0 : i32
    %c0_i32_2 = arith.constant 0 : i32
    return %c0_i32, %c0_i32_0, %c0_i32_1 : i32, i32, i32
  }
  func.func @transform_17(%arg0: i32) -> (i32, i32, i32) {
    %c0_i32 = arith.constant 0 : i32
    %c0_i32_0 = arith.constant 0 : i32
    %c0_i32_1 = arith.constant 0 : i32
    %c0_i32_2 = arith.constant 0 : i32
    return %c0_i32, %c0_i32_0, %c0_i32_1 : i32, i32, i32
  }
  func.func @transform_18(%arg0: i32) -> (i32, i32) {
    %c0_i32 = arith.constant 0 : i32
    %c0_i32_0 = arith.constant 0 : i32
    return %arg0, %c0_i32 : i32, i32
  }
}

</mosaic_0001>

<llo_original>
// kernel: tpu_custom_call.1
$region0: #{tpu_custom_call.1}
  #allocation0 [shape = 'u32[]', space=smem, size = 0x4, offset = 0x4, fixed_abs, tag = 'smem constant byte address 0x4 - core index']
  #allocation1 [shape = 'u32[144,128]{1,0:T(1,128)}', space=vmem, size = 0x12000, scoped, tag = 'internal scratch']
  #allocation2 [shape = 'f32[64,32]{1,0:T(8,128)}', space=vmem, size = 0x8000, scoped, tag = 'scratch operand']
  %s0 = inlined_call_operand.vmem [shape: f32[128,32], index: 0, kind: input, shape index: {}]
  %s1 = inlined_call_operand.vmem [shape: f32[2,64,64], index: 1, kind: input, shape index: {}]
  %s2 = inlined_call_operand.vmem [shape: bf16[2,32,32], index: 2, kind: input, shape index: {}]
  %s3 = inlined_call_operand.vmem [shape: f32[2,1,32], index: 3, kind: input, shape index: {}]
  %s4 = inlined_call_operand.vmem [shape: bf16[2,32,32], index: 4, kind: input, shape index: {}]
  %s5 = inlined_call_operand.vmem [shape: f32[2,1,32], index: 5, kind: input, shape index: {}]
  %s6 = inlined_call_operand.vmem [shape: bf16[2,32,32], index: 6, kind: input, shape index: {}]
  %s7 = inlined_call_operand.vmem [shape: f32[2,1,32], index: 7, kind: input, shape index: {}]
  %s8 = inlined_call_operand.vmem [shape: bf16[2,32,32], index: 8, kind: input, shape index: {}]
  %s9 = inlined_call_operand.vmem [shape: f32[2,1,32], index: 9, kind: input, shape index: {}]
  %s10 = inlined_call_operand.hbm [shape: bf16[2,32,64], index: 10, kind: input, shape index: {}]
  %s11 = inlined_call_operand.vmem [shape: f32[2,1,64], index: 11, kind: input, shape index: {}]
  %s12 = inlined_call_operand.vmem [shape: bf16[2,64,32], index: 12, kind: input, shape index: {}]
  %s13 = inlined_call_operand.vmem [shape: f32[2,1,32], index: 13, kind: input, shape index: {}]
  %s14 = inlined_call_operand.vmem [shape: f32[2,1,32], index: 14, kind: input, shape index: {}]
  %s15 = inlined_call_operand.vmem [shape: f32[2,1,32], index: 15, kind: input, shape index: {}]
  %s16 = inlined_call_operand.vmem [shape: f32[2,1,32], index: 16, kind: input, shape index: {}]
  %s17 = inlined_call_operand.vmem [shape: f32[2,1,32], index: 17, kind: input, shape index: {}]
  %s18 = inlined_call_operand.vmem [shape: f32[128,32], index: 18, kind: output, shape index: {}]
  %s19 = sld [smem:[#allocation0]]
  $region109: #{tpu_custom_call.1} parent=0
    _
  %s21 = ssub.s32 1, %s19
  %s22 = scalar_select 0, %s21, %s19
  $region1: #{tpu_custom_call.1} parent=0
    #allocation3 [shape = 'u8[16384]{0}', space=vmem, size = 0x4000, scoped, tag = 'input window, operand 10, single buffered']
    #allocation4 [shape = 's32[2]{0}', space=sflag, size = 0x8, scoped, tag = 'scoped memory for tpu_custom_call.1']
    %23 = vsyncpa [#allocation4], 0
    loop: start=0, step=1, limit=4
    $region2: #{tpu_custom_call.1} parent=1 // loop_pre_header
      _
    $region3: #{tpu_custom_call.1} parent=1 // loop_header
      %s25 = sphi 0, %s29
      %p26 = scmp.ge.s32.totalorder %s25, 4
      %s35 = sphi 0, %s37
      %s38 = sphi 0, %s35
      %s39 = sphi 0, %s38
      %s55 = sphi 0, %s39
      %s61 = sphi 0, %s63
      %s64 = sphi 0, %s61
      %s65 = sphi 0, %s64
      %s81 = sphi 0, %s65
      %s85 = sphi 0, %s85
      %s87 = sphi 0, %s85
      %s88 = sphi 0, %s87
      %s102 = sphi 0, %s88
      %s106 = sphi 0, %s106
      %s108 = sphi 0, %s106
      %s109 = sphi 0, %s108
      %s123 = sphi 0, %s109
      %s127 = sphi 0, %s127
      %s129 = sphi 0, %s127
      %s130 = sphi 0, %s129
      %s144 = sphi 0, %s130
      %s148 = sphi 0, %s148
      %s150 = sphi 0, %s148
      %s151 = sphi 0, %s150
      %s165 = sphi 0, %s151
      %s169 = sphi 0, %s169
      %s171 = sphi 0, %s169
      %s172 = sphi 0, %s171
      %s186 = sphi 0, %s172
      %s190 = sphi 0, %s190
      %s192 = sphi 0, %s190
      %s193 = sphi 0, %s192
      %s207 = sphi 0, %s193
      %s211 = sphi 0, %s211
      %s213 = sphi 0, %s211
      %s214 = sphi 0, %s213
      %s228 = sphi 0, %s214
      %s232 = sphi 0, %s232
      %s234 = sphi 0, %s232
      %s235 = sphi 0, %s234
      %s249 = sphi 0, %s235
      %s253 = sphi 0, %s253
      %s255 = sphi 0, %s253
      %s256 = sphi 0, %s255
      %s270 = sphi 0, %s256
      %s274 = sphi 0, %s274
      %s276 = sphi 0, %s274
      %s277 = sphi 0, %s276
      %s291 = sphi 0, %s277
      %s295 = sphi 0, %s295
      %s297 = sphi 0, %s295
      %s298 = sphi 0, %s297
      %s312 = sphi 0, %s298
      %s316 = sphi 0, %s316
      %s318 = sphi 0, %s316
      %s319 = sphi 0, %s318
      %s333 = sphi 0, %s319
      %s337 = sphi 0, %s337
      %s339 = sphi 0, %s337
      %s340 = sphi 0, %s339
      %s354 = sphi 0, %s340
      %s358 = sphi 0, %s358
      %s360 = sphi 0, %s358
      %s361 = sphi 0, %s360
      %s375 = sphi 0, %s361
      %s379 = sphi 0, %s379
      %s381 = sphi 0, %s379
      %s382 = sphi 0, %s381
      %s396 = sphi 0, %s382
      %s400 = sphi 0, %s400
      %s402 = sphi 0, %s400
      %s403 = sphi 0, %s402
      %s417 = sphi 0, %s403
      %s423 = sphi 0, %s425
      %s426 = sphi 0, %s423
      %s427 = sphi 0, %s426
      %s443 = sphi 0, %s427
    $region4: #{tpu_custom_call.1} parent=1 // loop_header_branch
      %28 = sbr.rel (%p26) target = $region8
    $region5: #{tpu_custom_call.1} parent=1 // loop_body
      %s30 = ssub.s32 %s25, 1
      %s31 = ssub.s32 %s25, 2
      %s32 = sadd.s32 %s25, 1
      %s33 = ssub.s32 %s25, %s32
      %p34 = scmp.eq.s32.totalorder %s33, 0
      %s36 = sadd.s32 %s35, 1
      %s37 = scalar_select %p34, %s35, %s36
      %p40 = pneg %p34
      %p41 = scmp.eq.s32.totalorder %s25, 1
      %p42 = por %p40, %p41
      %p43 = scmp.ne.s32.totalorder %s35, %s38
      %p44 = scmp.eq.s32.totalorder %s25, 0
      %p45 = por %p43, %p44
      %p46 = scmp.ne.s32.totalorder %s35, %s38
      %p47 = scmp.eq.s32.totalorder %s30, 1
      %p48 = por %p46, %p47
      %p49 = scmp.ne.s32.totalorder %s38, %s39
      %p50 = scmp.eq.s32.totalorder %s30, 0
      %p51 = por %p49, %p50
      %p52 = scmp.ne.s32.totalorder %s38, %s39
      %p53 = scmp.eq.s32.totalorder %s31, 1
      %p54 = por %p52, %p53
      %p56 = scmp.ne.s32.totalorder %s39, %s55
      %p57 = scmp.eq.s32.totalorder %s31, 0
      %p58 = por %p56, %p57
      %s59 = ssub.s32 %s25, %s32
      %p60 = scmp.eq.s32.totalorder %s59, 0
      %s62 = sadd.s32 %s61, 1
      %s63 = scalar_select %p60, %s61, %s62
      %p66 = pneg %p60
      %p67 = scmp.eq.s32.totalorder %s25, 1
      %p68 = por %p66, %p67
      %p69 = scmp.ne.s32.totalorder %s61, %s64
      %p70 = scmp.eq.s32.totalorder %s25, 0
      %p71 = por %p69, %p70
      %p72 = scmp.ne.s32.totalorder %s61, %s64
      %p73 = scmp.eq.s32.totalorder %s30, 1
      %p74 = por %p72, %p73
      %p75 = scmp.ne.s32.totalorder %s64, %s65
      %p76 = scmp.eq.s32.totalorder %s30, 0
      %p77 = por %p75, %p76
      %p78 = scmp.ne.s32.totalorder %s64, %s65
      %p79 = scmp.eq.s32.totalorder %s31, 1
      %p80 = por %p78, %p79
      %p82 = scmp.ne.s32.totalorder %s65, %s81
      %p83 = scmp.eq.s32.totalorder %s31, 0
      %p84 = por %p82, %p83
      %s86 = sadd.s32 %s85, 1
      %p89 = scmp.eq.s32.totalorder %s25, 1
      %p90 = scmp.ne.s32.totalorder %s85, %s87
      %p91 = scmp.eq.s32.totalorder %s25, 0
      %p92 = por %p90, %p91
      %p93 = scmp.ne.s32.totalorder %s85, %s87
      %p94 = scmp.eq.s32.totalorder %s30, 1
      %p95 = por %p93, %p94
      %p96 = scmp.ne.s32.totalorder %s87, %s88
      %p97 = scmp.eq.s32.totalorder %s30, 0
      %p98 = por %p96, %p97
      %p99 = scmp.ne.s32.totalorder %s87, %s88
      %p100 = scmp.eq.s32.totalorder %s31, 1
      %p101 = por %p99, %p100
      %p103 = scmp.ne.s32.totalorder %s88, %s102
      %p104 = scmp.eq.s32.totalorder %s31, 0
      %p105 = por %p103, %p104
      %s107 = sadd.s32 %s106, 1
      %p110 = scmp.eq.s32.totalorder %s25, 1
      %p111 = scmp.ne.s32.totalorder %s106, %s108
      %p112 = scmp.eq.s32.totalorder %s25, 0
      %p113 = por %p111, %p112
      %p114 = scmp.ne.s32.totalorder %s106, %s108
      %p115 = scmp.eq.s32.totalorder %s30, 1
      %p116 = por %p114, %p115
      %p117 = scmp.ne.s32.totalorder %s108, %s109
      %p118 = scmp.eq.s32.totalorder %s30, 0
      %p119 = por %p117, %p118
      %p120 = scmp.ne.s32.totalorder %s108, %s109
      %p121 = scmp.eq.s32.totalorder %s31, 1
      %p122 = por %p120, %p121
      %p124 = scmp.ne.s32.totalorder %s109, %s123
      %p125 = scmp.eq.s32.totalorder %s31, 0
      %p126 = por %p124, %p125
      %s128 = sadd.s32 %s127, 1
      %p131 = scmp.eq.s32.totalorder %s25, 1
      %p132 = scmp.ne.s32.totalorder %s127, %s129
      %p133 = scmp.eq.s32.totalorder %s25, 0
      %p134 = por %p132, %p133
      %p135 = scmp.ne.s32.totalorder %s127, %s129
      %p136 = scmp.eq.s32.totalorder %s30, 1
      %p137 = por %p135, %p136
      %p138 = scmp.ne.s32.totalorder %s129, %s130
      %p139 = scmp.eq.s32.totalorder %s30, 0
      %p140 = por %p138, %p139
      %p141 = scmp.ne.s32.totalorder %s129, %s130
      %p142 = scmp.eq.s32.totalorder %s31, 1
      %p143 = por %p141, %p142
      %p145 = scmp.ne.s32.totalorder %s130, %s144
      %p146 = scmp.eq.s32.totalorder %s31, 0
      %p147 = por %p145, %p146
      %s149 = sadd.s32 %s148, 1
      %p152 = scmp.eq.s32.totalorder %s25, 1
      %p153 = scmp.ne.s32.totalorder %s148, %s150
      %p154 = scmp.eq.s32.totalorder %s25, 0
      %p155 = por %p153, %p154
      %p156 = scmp.ne.s32.totalorder %s148, %s150
      %p157 = scmp.eq.s32.totalorder %s30, 1
      %p158 = por %p156, %p157
      %p159 = scmp.ne.s32.totalorder %s150, %s151
      %p160 = scmp.eq.s32.totalorder %s30, 0
      %p161 = por %p159, %p160
      %p162 = scmp.ne.s32.totalorder %s150, %s151
      %p163 = scmp.eq.s32.totalorder %s31, 1
      %p164 = por %p162, %p163
      %p166 = scmp.ne.s32.totalorder %s151, %s165
      %p167 = scmp.eq.s32.totalorder %s31, 0
      %p168 = por %p166, %p167
      %s170 = sadd.s32 %s169, 1
      %p173 = scmp.eq.s32.totalorder %s25, 1
      %p174 = scmp.ne.s32.totalorder %s169, %s171
      %p175 = scmp.eq.s32.totalorder %s25, 0
      %p176 = por %p174, %p175
      %p177 = scmp.ne.s32.totalorder %s169, %s171
      %p178 = scmp.eq.s32.totalorder %s30, 1
      %p179 = por %p177, %p178
      %p180 = scmp.ne.s32.totalorder %s171, %s172
      %p181 = scmp.eq.s32.totalorder %s30, 0
      %p182 = por %p180, %p181
      %p183 = scmp.ne.s32.totalorder %s171, %s172
      %p184 = scmp.eq.s32.totalorder %s31, 1
      %p185 = por %p183, %p184
      %p187 = scmp.ne.s32.totalorder %s172, %s186
      %p188 = scmp.eq.s32.totalorder %s31, 0
      %p189 = por %p187, %p188
      %s191 = sadd.s32 %s190, 1
      %p194 = scmp.eq.s32.totalorder %s25, 1
      %p195 = scmp.ne.s32.totalorder %s190, %s192
      %p196 = scmp.eq.s32.totalorder %s25, 0
      %p197 = por %p195, %p196
      %p198 = scmp.ne.s32.totalorder %s190, %s192
      %p199 = scmp.eq.s32.totalorder %s30, 1
      %p200 = por %p198, %p199
      %p201 = scmp.ne.s32.totalorder %s192, %s193
      %p202 = scmp.eq.s32.totalorder %s30, 0
      %p203 = por %p201, %p202
      %p204 = scmp.ne.s32.totalorder %s192, %s193
      %p205 = scmp.eq.s32.totalorder %s31, 1
      %p206 = por %p204, %p205
      %p208 = scmp.ne.s32.totalorder %s193, %s207
      %p209 = scmp.eq.s32.totalorder %s31, 0
      %p210 = por %p208, %p209
      %s212 = sadd.s32 %s211, 1
      %p215 = scmp.eq.s32.totalorder %s25, 1
      %p216 = scmp.ne.s32.totalorder %s211, %s213
      %p217 = scmp.eq.s32.totalorder %s25, 0
      %p218 = por %p216, %p217
      %p219 = scmp.ne.s32.totalorder %s211, %s213
      %p220 = scmp.eq.s32.totalorder %s30, 1
      %p221 = por %p219, %p220
      %p222 = scmp.ne.s32.totalorder %s213, %s214
      %p223 = scmp.eq.s32.totalorder %s30, 0
      %p224 = por %p222, %p223
      %p225 = scmp.ne.s32.totalorder %s213, %s214
      %p226 = scmp.eq.s32.totalorder %s31, 1
      %p227 = por %p225, %p226
      %p229 = scmp.ne.s32.totalorder %s214, %s228
      %p230 = scmp.eq.s32.totalorder %s31, 0
      %p231 = por %p229, %p230
      %s233 = sadd.s32 %s232, 1
      %p236 = scmp.eq.s32.totalorder %s25, 1
      %p237 = scmp.ne.s32.totalorder %s232, %s234
      %p238 = scmp.eq.s32.totalorder %s25, 0
      %p239 = por %p237, %p238
      %p240 = scmp.ne.s32.totalorder %s232, %s234
      %p241 = scmp.eq.s32.totalorder %s30, 1
      %p242 = por %p240, %p241
      %p243 = scmp.ne.s32.totalorder %s234, %s235
      %p244 = scmp.eq.s32.totalorder %s30, 0
      %p245 = por %p243, %p244
      %p246 = scmp.ne.s32.totalorder %s234, %s235
      %p247 = scmp.eq.s32.totalorder %s31, 1
      %p248 = por %p246, %p247
      %p250 = scmp.ne.s32.totalorder %s235, %s249
      %p251 = scmp.eq.s32.totalorder %s31, 0
      %p252 = por %p250, %p251
      %s254 = sadd.s32 %s253, 1
      %p257 = scmp.eq.s32.totalorder %s25, 1
      %p258 = scmp.ne.s32.totalorder %s253, %s255
      %p259 = scmp.eq.s32.totalorder %s25, 0
      %p260 = por %p258, %p259
      %p261 = scmp.ne.s32.totalorder %s253, %s255
      %p262 = scmp.eq.s32.totalorder %s30, 1
      %p263 = por %p261, %p262
      %p264 = scmp.ne.s32.totalorder %s255, %s256
      %p265 = scmp.eq.s32.totalorder %s30, 0
      %p266 = por %p264, %p265
      %p267 = scmp.ne.s32.totalorder %s255, %s256
      %p268 = scmp.eq.s32.totalorder %s31, 1
      %p269 = por %p267, %p268
      %p271 = scmp.ne.s32.totalorder %s256, %s270
      %p272 = scmp.eq.s32.totalorder %s31, 0
      %p273 = por %p271, %p272
      %s275 = sadd.s32 %s274, 1
      %p278 = scmp.eq.s32.totalorder %s25, 1
      %p279 = scmp.ne.s32.totalorder %s274, %s276
      %p280 = scmp.eq.s32.totalorder %s25, 0
      %p281 = por %p279, %p280
      %p282 = scmp.ne.s32.totalorder %s274, %s276
      %p283 = scmp.eq.s32.totalorder %s30, 1
      %p284 = por %p282, %p283
      %p285 = scmp.ne.s32.totalorder %s276, %s277
      %p286 = scmp.eq.s32.totalorder %s30, 0
      %p287 = por %p285, %p286
      %p288 = scmp.ne.s32.totalorder %s276, %s277
      %p289 = scmp.eq.s32.totalorder %s31, 1
      %p290 = por %p288, %p289
      %p292 = scmp.ne.s32.totalorder %s277, %s291
      %p293 = scmp.eq.s32.totalorder %s31, 0
      %p294 = por %p292, %p293
      %s296 = sadd.s32 %s295, 1
      %p299 = scmp.eq.s32.totalorder %s25, 1
      %p300 = scmp.ne.s32.totalorder %s295, %s297
      %p301 = scmp.eq.s32.totalorder %s25, 0
      %p302 = por %p300, %p301
      %p303 = scmp.ne.s32.totalorder %s295, %s297
      %p304 = scmp.eq.s32.totalorder %s30, 1
      %p305 = por %p303, %p304
      %p306 = scmp.ne.s32.totalorder %s297, %s298
      %p307 = scmp.eq.s32.totalorder %s30, 0
      %p308 = por %p306, %p307
      %p309 = scmp.ne.s32.totalorder %s297, %s298
      %p310 = scmp.eq.s32.totalorder %s31, 1
      %p311 = por %p309, %p310
      %p313 = scmp.ne.s32.totalorder %s298, %s312
      %p314 = scmp.eq.s32.totalorder %s31, 0
      %p315 = por %p313, %p314
      %s317 = sadd.s32 %s316, 1
      %p320 = scmp.eq.s32.totalorder %s25, 1
      %p321 = scmp.ne.s32.totalorder %s316, %s318
      %p322 = scmp.eq.s32.totalorder %s25, 0
      %p323 = por %p321, %p322
      %p324 = scmp.ne.s32.totalorder %s316, %s318
      %p325 = scmp.eq.s32.totalorder %s30, 1
      %p326 = por %p324, %p325
      %p327 = scmp.ne.s32.totalorder %s318, %s319
      %p328 = scmp.eq.s32.totalorder %s30, 0
      %p329 = por %p327, %p328
      %p330 = scmp.ne.s32.totalorder %s318, %s319
      %p331 = scmp.eq.s32.totalorder %s31, 1
      %p332 = por %p330, %p331
      %p334 = scmp.ne.s32.totalorder %s319, %s333
      %p335 = scmp.eq.s32.totalorder %s31, 0
      %p336 = por %p334, %p335
      %s338 = sadd.s32 %s337, 1
      %p341 = scmp.eq.s32.totalorder %s25, 1
      %p342 = scmp.ne.s32.totalorder %s337, %s339
      %p343 = scmp.eq.s32.totalorder %s25, 0
      %p344 = por %p342, %p343
      %p345 = scmp.ne.s32.totalorder %s337, %s339
      %p346 = scmp.eq.s32.totalorder %s30, 1
      %p347 = por %p345, %p346
      %p348 = scmp.ne.s32.totalorder %s339, %s340
      %p349 = scmp.eq.s32.totalorder %s30, 0
      %p350 = por %p348, %p349
      %p351 = scmp.ne.s32.totalorder %s339, %s340
      %p352 = scmp.eq.s32.totalorder %s31, 1
      %p353 = por %p351, %p352
      %p355 = scmp.ne.s32.totalorder %s340, %s354
      %p356 = scmp.eq.s32.totalorder %s31, 0
      %p357 = por %p355, %p356
      %s359 = sadd.s32 %s358, 1
      %p362 = scmp.eq.s32.totalorder %s25, 1
      %p363 = scmp.ne.s32.totalorder %s358, %s360
      %p364 = scmp.eq.s32.totalorder %s25, 0
      %p365 = por %p363, %p364
      %p366 = scmp.ne.s32.totalorder %s358, %s360
      %p367 = scmp.eq.s32.totalorder %s30, 1
      %p368 = por %p366, %p367
      %p369 = scmp.ne.s32.totalorder %s360, %s361
      %p370 = scmp.eq.s32.totalorder %s30, 0
      %p371 = por %p369, %p370
      %p372 = scmp.ne.s32.totalorder %s360, %s361
      %p373 = scmp.eq.s32.totalorder %s31, 1
      %p374 = por %p372, %p373
      %p376 = scmp.ne.s32.totalorder %s361, %s375
      %p377 = scmp.eq.s32.totalorder %s31, 0
      %p378 = por %p376, %p377
      %s380 = sadd.s32 %s379, 1
      %p383 = scmp.eq.s32.totalorder %s25, 1
      %p384 = scmp.ne.s32.totalorder %s379, %s381
      %p385 = scmp.eq.s32.totalorder %s25, 0
      %p386 = por %p384, %p385
      %p387 = scmp.ne.s32.totalorder %s379, %s381
      %p388 = scmp.eq.s32.totalorder %s30, 1
      %p389 = por %p387, %p388
      %p390 = scmp.ne.s32.totalorder %s381, %s382
      %p391 = scmp.eq.s32.totalorder %s30, 0
      %p392 = por %p390, %p391
      %p393 = scmp.ne.s32.totalorder %s381, %s382
      %p394 = scmp.eq.s32.totalorder %s31, 1
      %p395 = por %p393, %p394
      %p397 = scmp.ne.s32.totalorder %s382, %s396
      %p398 = scmp.eq.s32.totalorder %s31, 0
      %p399 = por %p397, %p398
      %s401 = sadd.s32 %s400, 1
      %p404 = scmp.eq.s32.totalorder %s25, 1
      %p405 = scmp.ne.s32.totalorder %s400, %s402
      %p406 = scmp.eq.s32.totalorder %s25, 0
      %p407 = por %p405, %p406
      %p408 = scmp.ne.s32.totalorder %s400, %s402
      %p409 = scmp.eq.s32.totalorder %s30, 1
      %p410 = por %p408, %p409
      %p411 = scmp.ne.s32.totalorder %s402, %s403
      %p412 = scmp.eq.s32.totalorder %s30, 0
      %p413 = por %p411, %p412
      %p414 = scmp.ne.s32.totalorder %s402, %s403
      %p415 = scmp.eq.s32.totalorder %s31, 1
      %p416 = por %p414, %p415
      %p418 = scmp.ne.s32.totalorder %s403, %s417
      %p419 = scmp.eq.s32.totalorder %s31, 0
      %p420 = por %p418, %p419
      %s421 = ssub.s32 %s25, %s32
      %p422 = scmp.eq.s32.totalorder %s421, 0
      %s424 = sadd.s32 %s423, 1
      %s425 = scalar_select %p422, %s423, %s424
      %p428 = pneg %p422
      %p429 = scmp.eq.s32.totalorder %s25, 1
      %p430 = por %p428, %p429
      %p431 = scmp.ne.s32.totalorder %s423, %s426
      %p432 = scmp.eq.s32.totalorder %s25, 0
      %p433 = por %p431, %p432
      %p434 = scmp.ne.s32.totalorder %s423, %s426
      %p435 = scmp.eq.s32.totalorder %s30, 1
      %p436 = por %p434, %p435
      %p437 = scmp.ne.s32.totalorder %s426, %s427
      %p438 = scmp.eq.s32.totalorder %s30, 0
      %p439 = por %p437, %p438
      %p440 = scmp.ne.s32.totalorder %s426, %s427
      %p441 = scmp.eq.s32.totalorder %s31, 1
      %p442 = por %p440, %p441
      %p444 = scmp.ne.s32.totalorder %s427, %s443
      %p445 = scmp.eq.s32.totalorder %s31, 0
      %p446 = por %p444, %p445
      %p447 = scmp.le.s32.totalorder 1, %s25
      %p448 = scmp.lt.s32.totalorder %s25, 3
      %p449 = pnand %p447, %p448
      %p450 = pneg %p449
      // Predicated region
      $region9: #{tpu_custom_call.1} parent=5 // pred_check
        _
      $region10: #{tpu_custom_call.1} parent=5 // pred_check_branch
        %452 = sbr.rel (%p449) target = $region12
      $region11: #{tpu_custom_call.1} parent=5 // pred_region
        %s453 = ssub.s32 %s25, 1
        // Predicated region
        $region13: #{tpu_custom_call.1} parent=11 // pred_check
          %p454 = pneg %p98
        $region14: #{tpu_custom_call.1} parent=11 // pred_check_branch
          %456 = sbr.rel (%p454) target = $region16
        $region15: #{tpu_custom_call.1} parent=11 // pred_region
          _
        $region16: #{tpu_custom_call.1} parent=11 // pred_fallthru
          _
        // Predicated region
        $region17: #{tpu_custom_call.1} parent=11 // pred_check
          %p457 = pneg %p119
        $region18: #{tpu_custom_call.1} parent=11 // pred_check_branch
          %459 = sbr.rel (%p457) target = $region20
        $region19: #{tpu_custom_call.1} parent=11 // pred_region
          _
        $region20: #{tpu_custom_call.1} parent=11 // pred_fallthru
          _
        // Predicated region
        $region21: #{tpu_custom_call.1} parent=11 // pred_check
          %p460 = pneg %p140
        $region22: #{tpu_custom_call.1} parent=11 // pred_check_branch
          %462 = sbr.rel (%p460) target = $region24
        $region23: #{tpu_custom_call.1} parent=11 // pred_region
          _
        $region24: #{tpu_custom_call.1} parent=11 // pred_fallthru
          _
        // Predicated region
        $region25: #{tpu_custom_call.1} parent=11 // pred_check
          %p463 = pneg %p161
        $region26: #{tpu_custom_call.1} parent=11 // pred_check_branch
          %465 = sbr.rel (%p463) target = $region28
        $region27: #{tpu_custom_call.1} parent=11 // pred_region
          _
        $region28: #{tpu_custom_call.1} parent=11 // pred_fallthru
          _
        // Predicated region
        $region29: #{tpu_custom_call.1} parent=11 // pred_check
          %p466 = pneg %p182
        $region30: #{tpu_custom_call.1} parent=11 // pred_check_branch
          %468 = sbr.rel (%p466) target = $region32
        $region31: #{tpu_custom_call.1} parent=11 // pred_region
          _
        $region32: #{tpu_custom_call.1} parent=11 // pred_fallthru
          _
        // Predicated region
        $region33: #{tpu_custom_call.1} parent=11 // pred_check
          %p469 = pneg %p203
        $region34: #{tpu_custom_call.1} parent=11 // pred_check_branch
          %471 = sbr.rel (%p469) target = $region36
        $region35: #{tpu_custom_call.1} parent=11 // pred_region
          _
        $region36: #{tpu_custom_call.1} parent=11 // pred_fallthru
          _
        // Predicated region
        $region37: #{tpu_custom_call.1} parent=11 // pred_check
          %p472 = pneg %p224
        $region38: #{tpu_custom_call.1} parent=11 // pred_check_branch
          %474 = sbr.rel (%p472) target = $region40
        $region39: #{tpu_custom_call.1} parent=11 // pred_region
          _
        $region40: #{tpu_custom_call.1} parent=11 // pred_fallthru
          _
        // Predicated region
        $region41: #{tpu_custom_call.1} parent=11 // pred_check
          %p475 = pneg %p245
        $region42: #{tpu_custom_call.1} parent=11 // pred_check_branch
          %477 = sbr.rel (%p475) target = $region44
        $region43: #{tpu_custom_call.1} parent=11 // pred_region
          _
        $region44: #{tpu_custom_call.1} parent=11 // pred_fallthru
          _
        // Predicated region
        $region45: #{tpu_custom_call.1} parent=11 // pred_check
          %p478 = pneg %p266
        $region46: #{tpu_custom_call.1} parent=11 // pred_check_branch
          %480 = sbr.rel (%p478) target = $region48
        $region47: #{tpu_custom_call.1} parent=11 // pred_region
          %s482 = ssub.s32 512, 512
          %483 = vsyncadd [#allocation4], %s482
          %s484 = sshll.u32 [#allocation3], 4
          %s485 = int_to_ptr.vmem [resolvable:$true] %s484
          %490 = dma.hbm_to_vmem [thread:$0]  %s10, 512, %s485, [#allocation4], 64, 64, 4
        $region48: #{tpu_custom_call.1} parent=11 // pred_fallthru
          _
        // Predicated region
        $region49: #{tpu_custom_call.1} parent=11 // pred_check
          %p491 = pneg %p287
        $region50: #{tpu_custom_call.1} parent=11 // pred_check_branch
          %493 = sbr.rel (%p491) target = $region52
        $region51: #{tpu_custom_call.1} parent=11 // pred_region
          _
        $region52: #{tpu_custom_call.1} parent=11 // pred_fallthru
          _
        // Predicated region
        $region53: #{tpu_custom_call.1} parent=11 // pred_check
          %p494 = pneg %p308
        $region54: #{tpu_custom_call.1} parent=11 // pred_check_branch
          %496 = sbr.rel (%p494) target = $region56
        $region55: #{tpu_custom_call.1} parent=11 // pred_region
          _
        $region56: #{tpu_custom_call.1} parent=11 // pred_fallthru
          _
        // Predicated region
        $region57: #{tpu_custom_call.1} parent=11 // pred_check
          %p497 = pneg %p329
        $region58: #{tpu_custom_call.1} parent=11 // pred_check_branch
          %499 = sbr.rel (%p497) target = $region60
        $region59: #{tpu_custom_call.1} parent=11 // pred_region
          _
        $region60: #{tpu_custom_call.1} parent=11 // pred_fallthru
          _
        // Predicated region
        $region61: #{tpu_custom_call.1} parent=11 // pred_check
          %p500 = pneg %p350
        $region62: #{tpu_custom_call.1} parent=11 // pred_check_branch
          %502 = sbr.rel (%p500) target = $region64
        $region63: #{tpu_custom_call.1} parent=11 // pred_region
          _
        $region64: #{tpu_custom_call.1} parent=11 // pred_fallthru
          _
        // Predicated region
        $region65: #{tpu_custom_call.1} parent=11 // pred_check
          %p503 = pneg %p371
        $region66: #{tpu_custom_call.1} parent=11 // pred_check_branch
          %505 = sbr.rel (%p503) target = $region68
        $region67: #{tpu_custom_call.1} parent=11 // pred_region
          _
        $region68: #{tpu_custom_call.1} parent=11 // pred_fallthru
          _
        // Predicated region
        $region69: #{tpu_custom_call.1} parent=11 // pred_check
          %p506 = pneg %p392
        $region70: #{tpu_custom_call.1} parent=11 // pred_check_branch
          %508 = sbr.rel (%p506) target = $region72
        $region71: #{tpu_custom_call.1} parent=11 // pred_region
          _
        $region72: #{tpu_custom_call.1} parent=11 // pred_fallthru
          _
        // Predicated region
        $region73: #{tpu_custom_call.1} parent=11 // pred_check
          %p509 = pneg %p413
        $region74: #{tpu_custom_call.1} parent=11 // pred_check_branch
          %511 = sbr.rel (%p509) target = $region76
        $region75: #{tpu_custom_call.1} parent=11 // pred_region
          _
        $region76: #{tpu_custom_call.1} parent=11 // pred_fallthru
          _
      $region12: #{tpu_custom_call.1} parent=5 // pred_fallthru
        _
      %p512 = scmp.lt.s32.totalorder %s25, 2
      // Predicated region
      $region77: #{tpu_custom_call.1} parent=5 // pred_check
        %p513 = pneg %p512
      $region78: #{tpu_custom_call.1} parent=5 // pred_check_branch
        %515 = sbr.rel (%p513) target = $region80
      $region79: #{tpu_custom_call.1} parent=5 // pred_region
        // Predicated region
        $region81: #{tpu_custom_call.1} parent=79 // pred_check
          %p516 = pneg %p45
        $region82: #{tpu_custom_call.1} parent=79 // pred_check_branch
          %518 = sbr.rel (%p516) target = $region84
        $region83: #{tpu_custom_call.1} parent=79 // pred_region
          %s519 = smul.u32 8, %s25
          %p520 = scmp.lt.s32.totalorder %s519, 15
          %s521 = scalar_select %p520, %s519, 15
          %s522 = smul.addr %s521, 8
          %s523 = scalar_lea.vmem %s0, %s522
          %s524 = smul.u32 8, %s25
        $region84: #{tpu_custom_call.1} parent=79 // pred_fallthru
          _
        // Predicated region
        $region85: #{tpu_custom_call.1} parent=79 // pred_check
          %p525 = pneg %p71
        $region86: #{tpu_custom_call.1} parent=79 // pred_check_branch
          %527 = sbr.rel (%p525) target = $region88
        $region87: #{tpu_custom_call.1} parent=79 // pred_region
          %p528 = scmp.lt.s32.totalorder %s25, 1
          %s529 = scalar_select %p528, %s25, 1
          %s530 = smul.addr %s529, 8
          %s531 = smul.addr %s530, 8
          %s532 = scalar_lea.vmem %s1, %s531
        $region88: #{tpu_custom_call.1} parent=79 // pred_fallthru
          _
      $region80: #{tpu_custom_call.1} parent=5 // pred_fallthru
        _
      %p533 = scmp.le.s32.totalorder 1, %s25
      %p534 = scmp.lt.s32.totalorder %s25, 3
      %p535 = pnand %p533, %p534
      %p536 = pneg %p535
      // Predicated region
      $region89: #{tpu_custom_call.1} parent=5 // pred_check
        _
      $region90: #{tpu_custom_call.1} parent=5 // pred_check_branch
        %538 = sbr.rel (%p535) target = $region92
      $region91: #{tpu_custom_call.1} parent=5 // pred_region
        %s539 = ssub.s32 %s25, 1
        // Predicated region
        $region93: #{tpu_custom_call.1} parent=91 // pred_check
          %p540 = pneg %p266
        $region94: #{tpu_custom_call.1} parent=91 // pred_check_branch
          %542 = sbr.rel (%p540) target = $region96
        $region95: #{tpu_custom_call.1} parent=91 // pred_region
          %543 = dma.done [#allocation4], 512
        $region96: #{tpu_custom_call.1} parent=91 // pred_fallthru
          _
        %s544 = smul.u32 8, %s30
        %p545 = scmp.lt.s32.totalorder %s544, 15
        %s546 = scalar_select %p545, %s544, 15
        %s547 = smul.addr %s546, 8
        %s548 = scalar_lea.vmem %s0, %s547
        %p549 = pneg %p51
        %p550 = pneg %p48
        %p551 = scmp.lt.s32.totalorder %s30, 1
        %s552 = scalar_select %p551, %s30, 1
        %s553 = smul.addr %s552, 8
        %s554 = smul.addr %s553, 8
        %s555 = scalar_lea.vmem %s1, %s554
        %p556 = pneg %p77
        %p557 = pneg %p74
        %p558 = pneg %p98
        %p559 = pneg %p95
        %p560 = pneg %p119
        %p561 = pneg %p116
        %p562 = pneg %p140
        %p563 = pneg %p137
        %p564 = pneg %p161
        %p565 = pneg %p158
        %p566 = pneg %p182
        %p567 = pneg %p179
        %p568 = pneg %p203
        %p569 = pneg %p200
        %p570 = pneg %p224
        %p571 = pneg %p221
        %p572 = pneg %p245
        %p573 = pneg %p242
        %p574 = pneg %p266
        %p575 = pneg %p263
        %p576 = pneg %p287
        %p577 = pneg %p284
        %p578 = pneg %p308
        %p579 = pneg %p305
        %p580 = pneg %p329
        %p581 = pneg %p326
        %p582 = pneg %p350
        %p583 = pneg %p347
        %p584 = pneg %p371
        %p585 = pneg %p368
        %p586 = pneg %p392
        %p587 = pneg %p389
        %p588 = pneg %p413
        %p589 = pneg %p410
        %p590 = pneg %p439
        %p591 = pneg %p436
        %s592 = smul.u32 8, %s30
        %p593 = scmp.lt.s32.totalorder %s592, 15
        %s594 = scalar_select %p593, %s592, 15
        %s595 = smul.addr %s594, 8
        %s596 = scalar_lea.vmem %s18, %s595
        %s597 = smul.u32 8, %s30
        %p598 = scmp.lt.s32.totalorder %s597, 15
        %s599 = scalar_select %p598, %s597, 15
        %s600 = smul.addr %s599, 8
        %s601 = scalar_lea.vmem %s0, %s600
        %s602 = smul.u32 8, %s30
        %p603 = scmp.lt.s32.totalorder %s30, 1
        %s604 = scalar_select %p603, %s30, 1
        %s605 = smul.addr %s604, 8
        %s606 = smul.addr %s605, 8
        %s607 = scalar_lea.vmem %s1, %s606
        %s608 = smul.u32 8, %s30
        %p609 = scmp.lt.s32.totalorder %s608, 15
        %s610 = scalar_select %p609, %s608, 15
        %s611 = smul.addr %s610, 8
        %s612 = scalar_lea.vmem %s18, %s611
        %s613 = smul.u32 8, %s30
        %v615 = vld [vmem:[%s601] sm:$0xff]
        %v616 = vld [vmem:[%s601 + $0x8] sm:$0xff]
        %v617 = vld [vmem:[%s601 + $0x10] sm:$0xff]
        %v618 = vld [vmem:[%s601 + $0x18] sm:$0xff]
        %v619 = vld [vmem:[%s601 + $0x20] sm:$0xff]
        %v620 = vld [vmem:[%s601 + $0x28] sm:$0xff]
        %v621 = vld [vmem:[%s601 + $0x30] sm:$0xff]
        %v622 = vld [vmem:[%s601 + $0x38] sm:$0xff]
        %v623 = vld [vmem:[%s607] sm:$0xff]
        %v624 = vld [vmem:[%s607 + $0x8] sm:$0xff]
        %v625 = vld [vmem:[%s607 + $0x10] sm:$0xff]
        %v626 = vld [vmem:[%s607 + $0x18] sm:$0xff]
        %v627 = vld [vmem:[%s607 + $0x20] sm:$0xff]
        %v628 = vld [vmem:[%s607 + $0x28] sm:$0xff]
        %v629 = vld [vmem:[%s607 + $0x30] sm:$0xff]
        %v630 = vld [vmem:[%s607 + $0x38] sm:$0xff]
        %v631 = vpack.c.bf16 %v616, %v615
        %v632 = vpack.c.bf16 %v618, %v617
        %v633 = vpack.c.bf16 %v620, %v619
        %v634 = vpack.c.bf16 %v622, %v621
        %v635 = vld [vmem:[%s2] sm:$0xf]
        %v636 = vld [vmem:[%s2 + $0x4] sm:$0xf]
        %v637 = vld [vmem:[%s2 + $0x8] sm:$0xf]
        %v638 = vld [vmem:[%s2 + $0xc] sm:$0xf]
        %v639 = vld [vmem:[%s3] sm:$0x1]
        %v641 = vlaneseq
        %v642 = vshrl.u32 %v641, 7
        %v643 = vsub.s32 0, %v642
        %v644 = vrot.slane %v639, %v643
        %v650 = vunpack.c.l.b16 %v635
        %v651 = vunpack.c.l.b16 %v636
        %v652 = vunpack.c.l.b16 %v637
        %v653 = vunpack.c.l.b16 %v638
        %v654 = vpack.c.b16 %v651, %v650
        %v655 = vpack.c.b16 %v653, %v652
        %vm658 = vcmask 261120
        %v660 = vsel %vm658, %v631, 0
        %v663 = vsel %vm658, %v632, 0
        %v666 = vsel %vm658, %v633, 0
        %v669 = vsel %vm658, %v634, 0
        %671 = vmatprep.subr.bf16.mxu0 0
        %672 = vmatpush1.bf16.msra.mxu0 %v654
        %673 = vmatprep.subr.bf16.mxu0 0
        %674 = vmatpush1.bf16.msra.mxu0 %v655
        %675 = vmatprep.subr.bf16.mxu0 0
        %676 = vmatpush1.bf16.msra.mxu0 0
        %677 = vmatprep.subr.bf16.mxu0 0
        %678 = vmatpush1.bf16.msra.mxu0 0
        %679 = vmatprep.subr.bf16.mxu0 0
        %680 = vmatpush1.bf16.msra.mxu0 0
        %681 = vmatprep.subr.bf16.mxu0 0
        %682 = vmatpush1.bf16.msra.mxu0 0
        %683 = vmatprep.subr.bf16.mxu0 0
        %684 = vmatpush1.bf16.msra.mxu0 0
        %685 = vmatprep.subr.bf16.mxu0 0
        %686 = vmatpush1.bf16.msra.mxu0 0
        %687 = vmatprep.subr.bf16.mxu0 0
        %688 = vmatpush1.bf16.msra.mxu0 0
        %689 = vmatprep.subr.bf16.mxu0 0
        %690 = vmatpush1.bf16.msra.mxu0 0
        %691 = vmatprep.subr.bf16.mxu0 0
        %692 = vmatpush1.bf16.msra.mxu0 0
        %693 = vmatprep.subr.bf16.mxu0 0
        %694 = vmatpush1.bf16.msra.mxu0 0
        %695 = vmatprep.subr.bf16.mxu0 0
        %696 = vmatpush1.bf16.msra.mxu0 0
        %697 = vmatprep.subr.bf16.mxu0 0
        %698 = vmatpush1.bf16.msra.mxu0 0
        %699 = vmatprep.subr.bf16.mxu0 0
        %700 = vmatpush1.bf16.msra.mxu0 0
        %701 = vmatprep.subr.bf16.mxu0 0
        %702 = vmatpush1.bf16.msra.mxu0 0
        %703 = vmatprep.mubr.bf16.mxu0 0
        %704 = vmatmul.mubr.bf16.gmra.mrb[0].mxu0 %v660
        %v705 = vpop.f32.mrb[0].mxu0
        %v706 = vadd.f32 %v644, %v705
        %v707 = vpop.f32.mrb[0].mxu0
        %v708 = vpop.f32.mrb[0].mxu0
        %v709 = vadd.f32 %v644, %v708
        %v710 = vpop.f32.mrb[0].mxu0
        %711 = vmatprep.mubr.bf16.mxu0 0
        %712 = vmatmul.mubr.bf16.gmra.mrb[0].mxu0 %v663
        %v713 = vpop.f32.mrb[0].mxu0
        %v714 = vadd.f32 %v644, %v713
        %v715 = vpop.f32.mrb[0].mxu0
        %v716 = vpop.f32.mrb[0].mxu0
        %v717 = vadd.f32 %v644, %v716
        %v718 = vpop.f32.mrb[0].mxu0
        %719 = vmatprep.mubr.bf16.mxu0 0
        %720 = vmatmul.mubr.bf16.gmra.mrb[0].mxu0 %v666
        %v721 = vpop.f32.mrb[0].mxu0
        %v722 = vadd.f32 %v644, %v721
        %v723 = vpop.f32.mrb[0].mxu0
        %v724 = vpop.f32.mrb[0].mxu0
        %v725 = vadd.f32 %v644, %v724
        %v726 = vpop.f32.mrb[0].mxu0
        %727 = vmatprep.mubr.bf16.mxu0 0
        %728 = vmatmul.mubr.bf16.gmra.mrb[0].mxu0 %v669
        %v729 = vpop.f32.mrb[0].mxu0
        %v730 = vadd.f32 %v644, %v729
        %v731 = vpop.f32.mrb[0].mxu0
        %v732 = vpop.f32.mrb[0].mxu0
        %v733 = vadd.f32 %v644, %v732
        %v734 = vpop.f32.mrb[0].mxu0
        %735 = vdwg.mxu0
        %v736 = vld [vmem:[%s4] sm:$0xf]
        %v737 = vld [vmem:[%s4 + $0x4] sm:$0xf]
        %v738 = vld [vmem:[%s4 + $0x8] sm:$0xf]
        %v739 = vld [vmem:[%s4 + $0xc] sm:$0xf]
        %v740 = vld [vmem:[%s5] sm:$0x1]
        %v742 = vlaneseq
        %v743 = vshrl.u32 %v742, 7
        %v744 = vsub.s32 0, %v743
        %v745 = vrot.slane %v740, %v744
        %v751 = vunpack.c.l.b16 %v736
        %v752 = vunpack.c.l.b16 %v737
        %v753 = vunpack.c.l.b16 %v738
        %v754 = vunpack.c.l.b16 %v739
        %v755 = vpack.c.b16 %v752, %v751
        %v756 = vpack.c.b16 %v754, %v753
        %759 = vmatprep.subr.bf16.mxu0 0
        %760 = vmatpush1.bf16.msra.mxu0 %v755
        %761 = vmatprep.subr.bf16.mxu0 0
        %762 = vmatpush1.bf16.msra.mxu0 %v756
        %763 = vmatprep.subr.bf16.mxu0 0
        %764 = vmatpush1.bf16.msra.mxu0 0
        %765 = vmatprep.subr.bf16.mxu0 0
        %766 = vmatpush1.bf16.msra.mxu0 0
        %767 = vmatprep.subr.bf16.mxu0 0
        %768 = vmatpush1.bf16.msra.mxu0 0
        %769 = vmatprep.subr.bf16.mxu0 0
        %770 = vmatpush1.bf16.msra.mxu0 0
        %771 = vmatprep.subr.bf16.mxu0 0
        %772 = vmatpush1.bf16.msra.mxu0 0
        %773 = vmatprep.subr.bf16.mxu0 0
        %774 = vmatpush1.bf16.msra.mxu0 0
        %775 = vmatprep.subr.bf16.mxu0 0
        %776 = vmatpush1.bf16.msra.mxu0 0
        %777 = vmatprep.subr.bf16.mxu0 0
        %778 = vmatpush1.bf16.msra.mxu0 0
        %779 = vmatprep.subr.bf16.mxu0 0
        %780 = vmatpush1.bf16.msra.mxu0 0
        %781 = vmatprep.subr.bf16.mxu0 0
        %782 = vmatpush1.bf16.msra.mxu0 0
        %783 = vmatprep.subr.bf16.mxu0 0
        %784 = vmatpush1.bf16.msra.mxu0 0
        %785 = vmatprep.subr.bf16.mxu0 0
        %786 = vmatpush1.bf16.msra.mxu0 0
        %787 = vmatprep.subr.bf16.mxu0 0
        %788 = vmatpush1.bf16.msra.mxu0 0
        %789 = vmatprep.subr.bf16.mxu0 0
        %790 = vmatpush1.bf16.msra.mxu0 0
        %791 = vmatprep.mubr.bf16.mxu0 0
        %792 = vmatmul.mubr.bf16.gmra.mrb[0].mxu0 %v660
        %v793 = vpop.f32.mrb[0].mxu0
        %v794 = vadd.f32 %v745, %v793
        %v795 = vpop.f32.mrb[0].mxu0
        %v796 = vpop.f32.mrb[0].mxu0
        %v797 = vadd.f32 %v745, %v796
        %v798 = vpop.f32.mrb[0].mxu0
        %799 = vmatprep.mubr.bf16.mxu0 0
        %800 = vmatmul.mubr.bf16.gmra.mrb[0].mxu0 %v663
        %v801 = vpop.f32.mrb[0].mxu0
        %v802 = vadd.f32 %v745, %v801
        %v803 = vpop.f32.mrb[0].mxu0
        %v804 = vpop.f32.mrb[0].mxu0
        %v805 = vadd.f32 %v745, %v804
        %v806 = vpop.f32.mrb[0].mxu0
        %807 = vmatprep.mubr.bf16.mxu0 0
        %808 = vmatmul.mubr.bf16.gmra.mrb[0].mxu0 %v666
        %v809 = vpop.f32.mrb[0].mxu0
        %v810 = vadd.f32 %v745, %v809
        %v811 = vpop.f32.mrb[0].mxu0
        %v812 = vpop.f32.mrb[0].mxu0
        %v813 = vadd.f32 %v745, %v812
        %v814 = vpop.f32.mrb[0].mxu0
        %815 = vmatprep.mubr.bf16.mxu0 0
        %816 = vmatmul.mubr.bf16.gmra.mrb[0].mxu0 %v669
        %v817 = vpop.f32.mrb[0].mxu0
        %v818 = vadd.f32 %v745, %v817
        %v819 = vpop.f32.mrb[0].mxu0
        %v820 = vpop.f32.mrb[0].mxu0
        %v821 = vadd.f32 %v745, %v820
        %v822 = vpop.f32.mrb[0].mxu0
        %823 = vdwg.mxu0
        %v824 = vld [vmem:[%s6] sm:$0xf]
        %v825 = vld [vmem:[%s6 + $0x4] sm:$0xf]
        %v826 = vld [vmem:[%s6 + $0x8] sm:$0xf]
        %v827 = vld [vmem:[%s6 + $0xc] sm:$0xf]
        %v828 = vld [vmem:[%s7] sm:$0x1]
        %v830 = vlaneseq
        %v831 = vshrl.u32 %v830, 7
        %v832 = vsub.s32 0, %v831
        %v833 = vrot.slane %v828, %v832
        %v839 = vunpack.c.l.b16 %v824
        %v840 = vunpack.c.l.b16 %v825
        %v841 = vunpack.c.l.b16 %v826
        %v842 = vunpack.c.l.b16 %v827
        %v843 = vpack.c.b16 %v840, %v839
        %v844 = vpack.c.b16 %v842, %v841
        %847 = vmatprep.subr.bf16.mxu0 0
        %848 = vmatpush1.bf16.msra.mxu0 %v843
        %849 = vmatprep.subr.bf16.mxu0 0
        %850 = vmatpush1.bf16.msra.mxu0 %v844
        %851 = vmatprep.subr.bf16.mxu0 0
        %852 = vmatpush1.bf16.msra.mxu0 0
        %853 = vmatprep.subr.bf16.mxu0 0
        %854 = vmatpush1.bf16.msra.mxu0 0
        %855 = vmatprep.subr.bf16.mxu0 0
        %856 = vmatpush1.bf16.msra.mxu0 0
        %857 = vmatprep.subr.bf16.mxu0 0
        %858 = vmatpush1.bf16.msra.mxu0 0
        %859 = vmatprep.subr.bf16.mxu0 0
        %860 = vmatpush1.bf16.msra.mxu0 0
        %861 = vmatprep.subr.bf16.mxu0 0
        %862 = vmatpush1.bf16.msra.mxu0 0
        %863 = vmatprep.subr.bf16.mxu0 0
        %864 = vmatpush1.bf16.msra.mxu0 0
        %865 = vmatprep.subr.bf16.mxu0 0
        %866 = vmatpush1.bf16.msra.mxu0 0
        %867 = vmatprep.subr.bf16.mxu0 0
        %868 = vmatpush1.bf16.msra.mxu0 0
        %869 = vmatprep.subr.bf16.mxu0 0
        %870 = vmatpush1.bf16.msra.mxu0 0
        %871 = vmatprep.subr.bf16.mxu0 0
        %872 = vmatpush1.bf16.msra.mxu0 0
        %873 = vmatprep.subr.bf16.mxu0 0
        %874 = vmatpush1.bf16.msra.mxu0 0
        %875 = vmatprep.subr.bf16.mxu0 0
        %876 = vmatpush1.bf16.msra.mxu0 0
        %877 = vmatprep.subr.bf16.mxu0 0
        %878 = vmatpush1.bf16.msra.mxu0 0
        %879 = vmatprep.mubr.bf16.mxu0 0
        %880 = vmatmul.mubr.bf16.gmra.mrb[0].mxu0 %v660
        %v881 = vpop.f32.mrb[0].mxu0
        %v882 = vadd.f32 %v833, %v881
        %v883 = vpop.f32.mrb[0].mxu0
        %v884 = vpop.f32.mrb[0].mxu0
        %v885 = vadd.f32 %v833, %v884
        %v886 = vpop.f32.mrb[0].mxu0
        %887 = vmatprep.mubr.bf16.mxu0 0
        %888 = vmatmul.mubr.bf16.gmra.mrb[0].mxu0 %v663
        %v889 = vpop.f32.mrb[0].mxu0
        %v890 = vadd.f32 %v833, %v889
        %v891 = vpop.f32.mrb[0].mxu0
        %v892 = vpop.f32.mrb[0].mxu0
        %v893 = vadd.f32 %v833, %v892
        %v894 = vpop.f32.mrb[0].mxu0
        %895 = vmatprep.mubr.bf16.mxu0 0
        %896 = vmatmul.mubr.bf16.gmra.mrb[0].mxu0 %v666
        %v897 = vpop.f32.mrb[0].mxu0
        %v898 = vadd.f32 %v833, %v897
        %v899 = vpop.f32.mrb[0].mxu0
        %v900 = vpop.f32.mrb[0].mxu0
        %v901 = vadd.f32 %v833, %v900
        %v902 = vpop.f32.mrb[0].mxu0
        %903 = vmatprep.mubr.bf16.mxu0 0
        %904 = vmatmul.mubr.bf16.gmra.mrb[0].mxu0 %v669
        %v905 = vpop.f32.mrb[0].mxu0
        %v906 = vadd.f32 %v833, %v905
        %v907 = vpop.f32.mrb[0].mxu0
        %v908 = vpop.f32.mrb[0].mxu0
        %v909 = vadd.f32 %v833, %v908
        %v910 = vpop.f32.mrb[0].mxu0
        %911 = vdwg.mxu0
        %vm912 = vcmask 64512
        %v914 = vsel %vm912, %v706, 0
        %v917 = vsel %vm912, %v709, 0
        %v920 = vsel %vm912, %v714, 0
        %v923 = vsel %vm912, %v717, 0
        %v926 = vsel %vm912, %v722, 0
        %v929 = vsel %vm912, %v725, 0
        %v932 = vsel %vm912, %v730, 0
        %v935 = vsel %vm912, %v733, 0
        %v938 = vsel %vm912, %v794, 0
        %v941 = vsel %vm912, %v797, 0
        %v944 = vsel %vm912, %v802, 0
        %v947 = vsel %vm912, %v805, 0
        %v950 = vsel %vm912, %v810, 0
        %v953 = vsel %vm912, %v813, 0
        %v956 = vsel %vm912, %v818, 0
        %v959 = vsel %vm912, %v821, 0
        %961 = vmatprep.subr.mxu0 0.0
        %962 = vmatpush1.xpose.msra.mxu0 %v938
        %963 = vmatprep.subr.mxu0 0.0
        %964 = vmatpush1.xpose.msra.mxu0 %v941
        %965 = vmatprep.subr.mxu0 0.0
        %966 = vmatpush1.xpose.msra.mxu0 %v944
        %967 = vmatprep.subr.mxu0 0.0
        %968 = vmatpush1.xpose.msra.mxu0 %v947
        %969 = vmatprep.subr.mxu0 0.0
        %970 = vmatpush1.xpose.msra.mxu0 %v950
        %971 = vmatprep.subr.mxu0 0.0
        %972 = vmatpush1.xpose.msra.mxu0 %v953
        %973 = vmatprep.subr.mxu0 0.0
        %974 = vmatpush1.xpose.msra.mxu0 %v956
        %975 = vmatprep.subr.mxu0 0.0
        %976 = vmatpush1.xpose.msra.mxu0 %v959
        %977 = vmatprep.subr.mxu0 0.0
        %978 = vmatpush1.xpose.msra.mxu0 0.0
        %979 = vmatprep.subr.mxu0 0.0
        %980 = vmatpush1.xpose.msra.mxu0 0.0
        %981 = vmatprep.subr.mxu0 0.0
        %982 = vmatpush1.xpose.msra.mxu0 0.0
        %983 = vmatprep.subr.mxu0 0.0
        %984 = vmatpush1.xpose.msra.mxu0 0.0
        %985 = vmatprep.subr.mxu0 0.0
        %986 = vmatpush1.xpose.msra.mxu0 0.0
        %987 = vmatprep.subr.mxu0 0.0
        %988 = vmatpush1.xpose.msra.mxu0 0.0
        %989 = vmatprep.subr.mxu0 0.0
        %990 = vmatpush1.xpose.msra.mxu0 0.0
        %991 = vmatprep.subr.mxu0 0.0
        %992 = vmatpush1.xpose.msra.mxu0 0.0
        %993 = vmatprep.subr.mxu0 0.0
        %994 = vmatpush1.xpose.msra.mxu0 0.0
        %995 = vmatprep.subr.mxu0 0.0
        %996 = vmatpush1.xpose.msra.mxu0 0.0
        %997 = vmatprep.subr.mxu0 0.0
        %998 = vmatpush1.xpose.msra.mxu0 0.0
        %999 = vmatprep.subr.mxu0 0.0
        %1000 = vmatpush1.xpose.msra.mxu0 0.0
        %1001 = vmatprep.subr.mxu0 0.0
        %1002 = vmatpush1.xpose.msra.mxu0 0.0
        %1003 = vmatprep.subr.mxu0 0.0
        %1004 = vmatpush1.xpose.msra.mxu0 0.0
        %1005 = vmatprep.subr.mxu0 0.0
        %1006 = vmatpush1.xpose.msra.mxu0 0.0
        %1007 = vmatprep.subr.mxu0 0.0
        %1008 = vmatpush1.xpose.msra.mxu0 0.0
        %1009 = vmatprep.subr.mxu0 0.0
        %1010 = vmatpush1.xpose.msra.mxu0 0.0
        %1011 = vmatprep.subr.mxu0 0.0
        %1012 = vmatpush1.xpose.msra.mxu0 0.0
        %1013 = vmatprep.subr.mxu0 0.0
        %1014 = vmatpush1.xpose.msra.mxu0 0.0
        %1015 = vmatprep.subr.mxu0 0.0
        %1016 = vmatpush1.xpose.msra.mxu0 0.0
        %1017 = vmatprep.subr.mxu0 0.0
        %1018 = vmatpush1.xpose.msra.mxu0 0.0
        %1019 = vmatprep.subr.mxu0 0.0
        %1020 = vmatpush1.xpose.msra.mxu0 0.0
        %1021 = vmatprep.subr.mxu0 0.0
        %1022 = vmatpush1.xpose.msra.mxu0 0.0
        %1023 = vmatprep.subr.mxu0 0.0
        %1024 = vmatpush1.xpose.msra.mxu0 0.0
        %1025 = vmatprep.mubr.f32.mxu0 0.0
        %1026 = vmatmul.mubr.f32.gmra.mrb[0].mxu0 %v914
        %v1027 = vpop.f32.mrb[0].mxu0
        %v1028 = vadd.f32 0.0, %v1027
        %v1029 = vpop.f32.mrb[0].mxu0
        %1030 = vmatprep.mubr.f32.mxu0 0.0
        %1031 = vmatmul.mubr.f32.gmra.mrb[0].mxu0 %v917
        %v1032 = vpop.f32.mrb[0].mxu0
        %v1033 = vadd.f32 0.0, %v1032
        %v1034 = vpop.f32.mrb[0].mxu0
        %1035 = vmatprep.mubr.f32.mxu0 0.0
        %1036 = vmatmul.mubr.f32.gmra.mrb[0].mxu0 %v920
        %v1037 = vpop.f32.mrb[0].mxu0
        %v1038 = vadd.f32 0.0, %v1037
        %v1039 = vpop.f32.mrb[0].mxu0
        %1040 = vmatprep.mubr.f32.mxu0 0.0
        %1041 = vmatmul.mubr.f32.gmra.mrb[0].mxu0 %v923
        %v1042 = vpop.f32.mrb[0].mxu0
        %v1043 = vadd.f32 0.0, %v1042
        %v1044 = vpop.f32.mrb[0].mxu0
        %1045 = vmatprep.mubr.f32.mxu0 0.0
        %1046 = vmatmul.mubr.f32.gmra.mrb[0].mxu0 %v926
        %v1047 = vpop.f32.mrb[0].mxu0
        %v1048 = vadd.f32 0.0, %v1047
        %v1049 = vpop.f32.mrb[0].mxu0
        %1050 = vmatprep.mubr.f32.mxu0 0.0
        %1051 = vmatmul.mubr.f32.gmra.mrb[0].mxu0 %v929
        %v1052 = vpop.f32.mrb[0].mxu0
        %v1053 = vadd.f32 0.0, %v1052
        %v1054 = vpop.f32.mrb[0].mxu0
        %1055 = vmatprep.mubr.f32.mxu0 0.0
        %1056 = vmatmul.mubr.f32.gmra.mrb[0].mxu0 %v932
        %v1057 = vpop.f32.mrb[0].mxu0
        %v1058 = vadd.f32 0.0, %v1057
        %v1059 = vpop.f32.mrb[0].mxu0
        %1060 = vmatprep.mubr.f32.mxu0 0.0
        %1061 = vmatmul.mubr.f32.gmra.mrb[0].mxu0 %v935
        %v1062 = vpop.f32.mrb[0].mxu0
        %v1063 = vadd.f32 0.0, %v1062
        %v1064 = vpop.f32.mrb[0].mxu0
        %1065 = vdwg.mxu0
        %v1066 = vmul.f32 %v1028, 0.35355338
        %v1067 = vmul.f32 %v1033, 0.35355338
        %v1068 = vmul.f32 %v1038, 0.35355338
        %v1069 = vmul.f32 %v1043, 0.35355338
        %v1070 = vmul.f32 %v1048, 0.35355338
        %v1071 = vmul.f32 %v1053, 0.35355338
        %v1072 = vmul.f32 %v1058, 0.35355338
        %v1073 = vmul.f32 %v1063, 0.35355338
        %v1074 = vadd.f32 %v1066, %v623
        %v1075 = vadd.f32 %v1067, %v624
        %v1076 = vadd.f32 %v1068, %v625
        %v1077 = vadd.f32 %v1069, %v626
        %v1078 = vadd.f32 %v1070, %v627
        %v1079 = vadd.f32 %v1071, %v628
        %v1080 = vadd.f32 %v1072, %v629
        %v1081 = vadd.f32 %v1073, %v630
        %vm1082 = vcmask 523264
        %v1083 = vsel %vm1082, %v1074, -inf
        %1084 = vmax.xlane.f32.xlu0 %v1083
        %v1085 = vpop.xlane.xlu0 %1084
        %v1086 = vsel %vm1082, %v1075, -inf
        %1087 = vmax.xlane.f32.xlu0 %v1086
        %v1088 = vpop.xlane.xlu0 %1087
        %v1089 = vsel %vm1082, %v1076, -inf
        %1090 = vmax.xlane.f32.xlu0 %v1089
        %v1091 = vpop.xlane.xlu0 %1090
        %v1092 = vsel %vm1082, %v1077, -inf
        %1093 = vmax.xlane.f32.xlu0 %v1092
        %v1094 = vpop.xlane.xlu0 %1093
        %v1095 = vsel %vm1082, %v1078, -inf
        %1096 = vmax.xlane.f32.xlu0 %v1095
        %v1097 = vpop.xlane.xlu0 %1096
        %v1098 = vsel %vm1082, %v1079, -inf
        %1099 = vmax.xlane.f32.xlu0 %v1098
        %v1100 = vpop.xlane.xlu0 %1099
        %v1101 = vsel %vm1082, %v1080, -inf
        %1102 = vmax.xlane.f32.xlu0 %v1101
        %v1103 = vpop.xlane.xlu0 %1102
        %v1104 = vsel %vm1082, %v1081, -inf
        %1105 = vmax.xlane.f32.xlu0 %v1104
        %v1106 = vpop.xlane.xlu0 %1105
        %v1107 = vsub.f32 %v1074, %v1085
        %v1108 = vsub.f32 %v1075, %v1088
        %v1109 = vsub.f32 %v1076, %v1091
        %v1110 = vsub.f32 %v1077, %v1094
        %v1111 = vsub.f32 %v1078, %v1097
        %v1112 = vsub.f32 %v1079, %v1100
        %v1113 = vsub.f32 %v1080, %v1103
        %v1114 = vsub.f32 %v1081, %v1106
        %v1115 = vmul.f32 %v1107, 1.442695
        %v1116 = vpow.pop %v1115
        %v1117 = vmul.f32 %v1108, 1.442695
        %v1118 = vpow.pop %v1117
        %v1119 = vmul.f32 %v1109, 1.442695
        %v1120 = vpow.pop %v1119
        %v1121 = vmul.f32 %v1110, 1.442695
        %v1122 = vpow.pop %v1121
        %v1123 = vmul.f32 %v1111, 1.442695
        %v1124 = vpow.pop %v1123
        %v1125 = vmul.f32 %v1112, 1.442695
        %v1126 = vpow.pop %v1125
        %v1127 = vmul.f32 %v1113, 1.442695
        %v1128 = vpow.pop %v1127
        %v1129 = vmul.f32 %v1114, 1.442695
        %v1130 = vpow.pop %v1129
        %v1131 = vsel %vm1082, %v1116, 0.0
        %1132 = vadd.xlane.f32.xlu0 %v1131
        %v1133 = vpop.xlane.xlu0 %1132
        %v1134 = vsel %vm1082, %v1118, 0.0
        %1135 = vadd.xlane.f32.xlu0 %v1134
        %v1136 = vpop.xlane.xlu0 %1135
        %v1137 = vsel %vm1082, %v1120, 0.0
        %1138 = vadd.xlane.f32.xlu0 %v1137
        %v1139 = vpop.xlane.xlu0 %1138
        %v1140 = vsel %vm1082, %v1122, 0.0
        %1141 = vadd.xlane.f32.xlu0 %v1140
        %v1142 = vpop.xlane.xlu0 %1141
        %v1143 = vsel %vm1082, %v1124, 0.0
        %1144 = vadd.xlane.f32.xlu0 %v1143
        %v1145 = vpop.xlane.xlu0 %1144
        %v1146 = vsel %vm1082, %v1126, 0.0
        %1147 = vadd.xlane.f32.xlu0 %v1146
        %v1148 = vpop.xlane.xlu0 %1147
        %v1149 = vsel %vm1082, %v1128, 0.0
        %1150 = vadd.xlane.f32.xlu0 %v1149
        %v1151 = vpop.xlane.xlu0 %1150
        %v1152 = vsel %vm1082, %v1130, 0.0
        %1153 = vadd.xlane.f32.xlu0 %v1152
        %v1154 = vpop.xlane.xlu0 %1153
        %v1155 = vrcp.pop %v1133
        %v1156 = vrcp.pop %v1136
        %v1157 = vrcp.pop %v1139
        %v1158 = vrcp.pop %v1142
        %v1159 = vrcp.pop %v1145
        %v1160 = vrcp.pop %v1148
        %v1161 = vrcp.pop %v1151
        %v1162 = vrcp.pop %v1154
        %v1163 = vmul.f32 %v1116, %v1155
        %v1164 = vmul.f32 %v1118, %v1156
        %v1165 = vmul.f32 %v1120, %v1157
        %v1166 = vmul.f32 %v1122, %v1158
        %v1167 = vmul.f32 %v1124, %v1159
        %v1168 = vmul.f32 %v1126, %v1160
        %v1169 = vmul.f32 %v1128, %v1161
        %v1170 = vmul.f32 %v1130, %v1162
        %v1172 = vsel %vm1082, %v1163, 0
        %v1175 = vsel %vm1082, %v1164, 0
        %v1178 = vsel %vm1082, %v1165, 0
        %v1181 = vsel %vm1082, %v1166, 0
        %v1184 = vsel %vm1082, %v1167, 0
        %v1187 = vsel %vm1082, %v1168, 0
        %v1190 = vsel %vm1082, %v1169, 0
        %v1193 = vsel %vm1082, %v1170, 0
        %1195 = vmatprep.subr.mxu0 0.0
        %1196 = vmatpush1.msra.mxu0 %v882
        %1197 = vmatprep.subr.mxu0 0.0
        %1198 = vmatpush1.msra.mxu0 %v885
        %1199 = vmatprep.subr.mxu0 0.0
        %1200 = vmatpush1.msra.mxu0 %v890
        %1201 = vmatprep.subr.mxu0 0.0
        %1202 = vmatpush1.msra.mxu0 %v893
        %1203 = vmatprep.subr.mxu0 0.0
        %1204 = vmatpush1.msra.mxu0 %v898
        %1205 = vmatprep.subr.mxu0 0.0
        %1206 = vmatpush1.msra.mxu0 %v901
        %1207 = vmatprep.subr.mxu0 0.0
        %1208 = vmatpush1.msra.mxu0 %v906
        %1209 = vmatprep.subr.mxu0 0.0
        %1210 = vmatpush1.msra.mxu0 %v909
        %1211 = vmatprep.subr.mxu0 0.0
        %1212 = vmatpush1.msra.mxu0 0.0
        %1213 = vmatprep.subr.mxu0 0.0
        %1214 = vmatpush1.msra.mxu0 0.0
        %1215 = vmatprep.subr.mxu0 0.0
        %1216 = vmatpush1.msra.mxu0 0.0
        %1217 = vmatprep.subr.mxu0 0.0
        %1218 = vmatpush1.msra.mxu0 0.0
        %1219 = vmatprep.subr.mxu0 0.0
        %1220 = vmatpush1.msra.mxu0 0.0
        %1221 = vmatprep.subr.mxu0 0.0
        %1222 = vmatpush1.msra.mxu0 0.0
        %1223 = vmatprep.subr.mxu0 0.0
        %1224 = vmatpush1.msra.mxu0 0.0
        %1225 = vmatprep.subr.mxu0 0.0
        %1226 = vmatpush1.msra.mxu0 0.0
        %1227 = vmatprep.subr.mxu0 0.0
        %1228 = vmatpush1.msra.mxu0 0.0
        %1229 = vmatprep.subr.mxu0 0.0
        %1230 = vmatpush1.msra.mxu0 0.0
        %1231 = vmatprep.subr.mxu0 0.0
        %1232 = vmatpush1.msra.mxu0 0.0
        %1233 = vmatprep.subr.mxu0 0.0
        %1234 = vmatpush1.msra.mxu0 0.0
        %1235 = vmatprep.subr.mxu0 0.0
        %1236 = vmatpush1.msra.mxu0 0.0
        %1237 = vmatprep.subr.mxu0 0.0
        %1238 = vmatpush1.msra.mxu0 0.0
        %1239 = vmatprep.subr.mxu0 0.0
        %1240 = vmatpush1.msra.mxu0 0.0
        %1241 = vmatprep.subr.mxu0 0.0
        %1242 = vmatpush1.msra.mxu0 0.0
        %1243 = vmatprep.subr.mxu0 0.0
        %1244 = vmatpush1.msra.mxu0 0.0
        %1245 = vmatprep.subr.mxu0 0.0
        %1246 = vmatpush1.msra.mxu0 0.0
        %1247 = vmatprep.subr.mxu0 0.0
        %1248 = vmatpush1.msra.mxu0 0.0
        %1249 = vmatprep.subr.mxu0 0.0
        %1250 = vmatpush1.msra.mxu0 0.0
        %1251 = vmatprep.subr.mxu0 0.0
        %1252 = vmatpush1.msra.mxu0 0.0
        %1253 = vmatprep.subr.mxu0 0.0
        %1254 = vmatpush1.msra.mxu0 0.0
        %1255 = vmatprep.subr.mxu0 0.0
        %1256 = vmatpush1.msra.mxu0 0.0
        %1257 = vmatprep.subr.mxu0 0.0
        %1258 = vmatpush1.msra.mxu0 0.0
        %1259 = vmatprep.mubr.f32.mxu0 0.0
        %1260 = vmatmul.mubr.f32.gmra.mrb[0].mxu0 %v1172
        %v1261 = vpop.f32.mrb[0].mxu0
        %v1262 = vadd.f32 0.0, %v1261
        %v1263 = vpop.f32.mrb[0].mxu0
        %1264 = vmatprep.mubr.f32.mxu0 0.0
        %1265 = vmatmul.mubr.f32.gmra.mrb[0].mxu0 %v1175
        %v1266 = vpop.f32.mrb[0].mxu0
        %v1267 = vadd.f32 0.0, %v1266
        %v1268 = vpop.f32.mrb[0].mxu0
        %1269 = vmatprep.mubr.f32.mxu0 0.0
        %1270 = vmatmul.mubr.f32.gmra.mrb[0].mxu0 %v1178
        %v1271 = vpop.f32.mrb[0].mxu0
        %v1272 = vadd.f32 0.0, %v1271
        %v1273 = vpop.f32.mrb[0].mxu0
        %1274 = vmatprep.mubr.f32.mxu0 0.0
        %1275 = vmatmul.mubr.f32.gmra.mrb[0].mxu0 %v1181
        %v1276 = vpop.f32.mrb[0].mxu0
        %v1277 = vadd.f32 0.0, %v1276
        %v1278 = vpop.f32.mrb[0].mxu0
        %1279 = vmatprep.mubr.f32.mxu0 0.0
        %1280 = vmatmul.mubr.f32.gmra.mrb[0].mxu0 %v1184
        %v1281 = vpop.f32.mrb[0].mxu0
        %v1282 = vadd.f32 0.0, %v1281
        %v1283 = vpop.f32.mrb[0].mxu0
        %1284 = vmatprep.mubr.f32.mxu0 0.0
        %1285 = vmatmul.mubr.f32.gmra.mrb[0].mxu0 %v1187
        %v1286 = vpop.f32.mrb[0].mxu0
        %v1287 = vadd.f32 0.0, %v1286
        %v1288 = vpop.f32.mrb[0].mxu0
        %1289 = vmatprep.mubr.f32.mxu0 0.0
        %1290 = vmatmul.mubr.f32.gmra.mrb[0].mxu0 %v1190
        %v1291 = vpop.f32.mrb[0].mxu0
        %v1292 = vadd.f32 0.0, %v1291
        %v1293 = vpop.f32.mrb[0].mxu0
        %1294 = vmatprep.mubr.f32.mxu0 0.0
        %1295 = vmatmul.mubr.f32.gmra.mrb[0].mxu0 %v1193
        %v1296 = vpop.f32.mrb[0].mxu0
        %v1297 = vadd.f32 0.0, %v1296
        %v1298 = vpop.f32.mrb[0].mxu0
        %1299 = vdwg.mxu0
        %1300 = vst.msk [vmem:[#allocation2] sm:$0xff] %vm912, %v1262
        %1301 = vst.msk [vmem:[#allocation2 + $0x8] sm:$0xff] %vm912, %v1267
        %1302 = vst.msk [vmem:[#allocation2 + $0x10] sm:$0xff] %vm912, %v1272
        %1303 = vst.msk [vmem:[#allocation2 + $0x18] sm:$0xff] %vm912, %v1277
        %1304 = vst.msk [vmem:[#allocation2 + $0x20] sm:$0xff] %vm912, %v1282
        %1305 = vst.msk [vmem:[#allocation2 + $0x28] sm:$0xff] %vm912, %v1287
        %1306 = vst.msk [vmem:[#allocation2 + $0x30] sm:$0xff] %vm912, %v1292
        %1307 = vst.msk [vmem:[#allocation2 + $0x38] sm:$0xff] %vm912, %v1297
        %1308 = vrot.lane.b32.xlu0 %v706, 120
        %v1309 = vpop.permute.xlu0 %1308
        %1310 = vrot.lane.b32.xlu0 %v709, 120
        %v1311 = vpop.permute.xlu0 %1310
        %1312 = vrot.lane.b32.xlu0 %v714, 120
        %v1313 = vpop.permute.xlu0 %1312
        %1314 = vrot.lane.b32.xlu0 %v717, 120
        %v1315 = vpop.permute.xlu0 %1314
        %1316 = vrot.lane.b32.xlu0 %v722, 120
        %v1317 = vpop.permute.xlu0 %1316
        %1318 = vrot.lane.b32.xlu0 %v725, 120
        %v1319 = vpop.permute.xlu0 %1318
        %1320 = vrot.lane.b32.xlu0 %v730, 120
        %v1321 = vpop.permute.xlu0 %1320
        %1322 = vrot.lane.b32.xlu0 %v733, 120
        %v1323 = vpop.permute.xlu0 %1322
        %1324 = vrot.lane.b32.xlu0 %v794, 120
        %v1325 = vpop.permute.xlu0 %1324
        %1326 = vrot.lane.b32.xlu0 %v797, 120
        %v1327 = vpop.permute.xlu0 %1326
        %1328 = vrot.lane.b32.xlu0 %v802, 120
        %v1329 = vpop.permute.xlu0 %1328
        %1330 = vrot.lane.b32.xlu0 %v805, 120
        %v1331 = vpop.permute.xlu0 %1330
        %1332 = vrot.lane.b32.xlu0 %v810, 120
        %v1333 = vpop.permute.xlu0 %1332
        %1334 = vrot.lane.b32.xlu0 %v813, 120
        %v1335 = vpop.permute.xlu0 %1334
        %1336 = vrot.lane.b32.xlu0 %v818, 120
        %v1337 = vpop.permute.xlu0 %1336
        %1338 = vrot.lane.b32.xlu0 %v821, 120
        %v1339 = vpop.permute.xlu0 %1338
        %v1340 = vsel %vm912, %v1309, 0
        %v1342 = vsel %vm912, %v1311, 0
        %v1344 = vsel %vm912, %v1313, 0
        %v1346 = vsel %vm912, %v1315, 0
        %v1348 = vsel %vm912, %v1317, 0
        %v1350 = vsel %vm912, %v1319, 0
        %v1352 = vsel %vm912, %v1321, 0
        %v1354 = vsel %vm912, %v1323, 0
        %v1356 = vsel %vm912, %v1325, 0
        %v1358 = vsel %vm912, %v1327, 0
        %v1360 = vsel %vm912, %v1329, 0
        %v1362 = vsel %vm912, %v1331, 0
        %v1364 = vsel %vm912, %v1333, 0
        %v1366 = vsel %vm912, %v1335, 0
        %v1368 = vsel %vm912, %v1337, 0
        %v1370 = vsel %vm912, %v1339, 0
        %1372 = vmatprep.subr.mxu0 0.0
        %1373 = vmatpush1.xpose.msra.mxu0 %v1356
        %1374 = vmatprep.subr.mxu0 0.0
        %1375 = vmatpush1.xpose.msra.mxu0 %v1358
        %1376 = vmatprep.subr.mxu0 0.0
        %1377 = vmatpush1.xpose.msra.mxu0 %v1360
        %1378 = vmatprep.subr.mxu0 0.0
        %1379 = vmatpush1.xpose.msra.mxu0 %v1362
        %1380 = vmatprep.subr.mxu0 0.0
        %1381 = vmatpush1.xpose.msra.mxu0 %v1364
        %1382 = vmatprep.subr.mxu0 0.0
        %1383 = vmatpush1.xpose.msra.mxu0 %v1366
        %1384 = vmatprep.subr.mxu0 0.0
        %1385 = vmatpush1.xpose.msra.mxu0 %v1368
        %1386 = vmatprep.subr.mxu0 0.0
        %1387 = vmatpush1.xpose.msra.mxu0 %v1370
        %1388 = vmatprep.subr.mxu0 0.0
        %1389 = vmatpush1.xpose.msra.mxu0 0.0
        %1390 = vmatprep.subr.mxu0 0.0
        %1391 = vmatpush1.xpose.msra.mxu0 0.0
        %1392 = vmatprep.subr.mxu0 0.0
        %1393 = vmatpush1.xpose.msra.mxu0 0.0
        %1394 = vmatprep.subr.mxu0 0.0
        %1395 = vmatpush1.xpose.msra.mxu0 0.0
        %1396 = vmatprep.subr.mxu0 0.0
        %1397 = vmatpush1.xpose.msra.mxu0 0.0
        %1398 = vmatprep.subr.mxu0 0.0
        %1399 = vmatpush1.xpose.msra.mxu0 0.0
        %1400 = vmatprep.subr.mxu0 0.0
        %1401 = vmatpush1.xpose.msra.mxu0 0.0
        %1402 = vmatprep.subr.mxu0 0.0
        %1403 = vmatpush1.xpose.msra.mxu0 0.0
        %1404 = vmatprep.subr.mxu0 0.0
        %1405 = vmatpush1.xpose.msra.mxu0 0.0
        %1406 = vmatprep.subr.mxu0 0.0
        %1407 = vmatpush1.xpose.msra.mxu0 0.0
        %1408 = vmatprep.subr.mxu0 0.0
        %1409 = vmatpush1.xpose.msra.mxu0 0.0
        %1410 = vmatprep.subr.mxu0 0.0
        %1411 = vmatpush1.xpose.msra.mxu0 0.0
        %1412 = vmatprep.subr.mxu0 0.0
        %1413 = vmatpush1.xpose.msra.mxu0 0.0
        %1414 = vmatprep.subr.mxu0 0.0
        %1415 = vmatpush1.xpose.msra.mxu0 0.0
        %1416 = vmatprep.subr.mxu0 0.0
        %1417 = vmatpush1.xpose.msra.mxu0 0.0
        %1418 = vmatprep.subr.mxu0 0.0
        %1419 = vmatpush1.xpose.msra.mxu0 0.0
        %1420 = vmatprep.subr.mxu0 0.0
        %1421 = vmatpush1.xpose.msra.mxu0 0.0
        %1422 = vmatprep.subr.mxu0 0.0
        %1423 = vmatpush1.xpose.msra.mxu0 0.0
        %1424 = vmatprep.subr.mxu0 0.0
        %1425 = vmatpush1.xpose.msra.mxu0 0.0
        %1426 = vmatprep.subr.mxu0 0.0
        %1427 = vmatpush1.xpose.msra.mxu0 0.0
        %1428 = vmatprep.subr.mxu0 0.0
        %1429 = vmatpush1.xpose.msra.mxu0 0.0
        %1430 = vmatprep.subr.mxu0 0.0
        %1431 = vmatpush1.xpose.msra.mxu0 0.0
        %1432 = vmatprep.subr.mxu0 0.0
        %1433 = vmatpush1.xpose.msra.mxu0 0.0
        %1434 = vmatprep.subr.mxu0 0.0
        %1435 = vmatpush1.xpose.msra.mxu0 0.0
        %1436 = vmatprep.mubr.f32.mxu0 0.0
        %1437 = vmatmul.mubr.f32.gmra.mrb[0].mxu0 %v1340
        %v1438 = vpop.f32.mrb[0].mxu0
        %v1439 = vadd.f32 0.0, %v1438
        %v1440 = vpop.f32.mrb[0].mxu0
        %1441 = vmatprep.mubr.f32.mxu0 0.0
        %1442 = vmatmul.mubr.f32.gmra.mrb[0].mxu0 %v1342
        %v1443 = vpop.f32.mrb[0].mxu0
        %v1444 = vadd.f32 0.0, %v1443
        %v1445 = vpop.f32.mrb[0].mxu0
        %1446 = vmatprep.mubr.f32.mxu0 0.0
        %1447 = vmatmul.mubr.f32.gmra.mrb[0].mxu0 %v1344
        %v1448 = vpop.f32.mrb[0].mxu0
        %v1449 = vadd.f32 0.0, %v1448
        %v1450 = vpop.f32.mrb[0].mxu0
        %1451 = vmatprep.mubr.f32.mxu0 0.0
        %1452 = vmatmul.mubr.f32.gmra.mrb[0].mxu0 %v1346
        %v1453 = vpop.f32.mrb[0].mxu0
        %v1454 = vadd.f32 0.0, %v1453
        %v1455 = vpop.f32.mrb[0].mxu0
        %1456 = vmatprep.mubr.f32.mxu0 0.0
        %1457 = vmatmul.mubr.f32.gmra.mrb[0].mxu0 %v1348
        %v1458 = vpop.f32.mrb[0].mxu0
        %v1459 = vadd.f32 0.0, %v1458
        %v1460 = vpop.f32.mrb[0].mxu0
        %1461 = vmatprep.mubr.f32.mxu0 0.0
        %1462 = vmatmul.mubr.f32.gmra.mrb[0].mxu0 %v1350
        %v1463 = vpop.f32.mrb[0].mxu0
        %v1464 = vadd.f32 0.0, %v1463
        %v1465 = vpop.f32.mrb[0].mxu0
        %1466 = vmatprep.mubr.f32.mxu0 0.0
        %1467 = vmatmul.mubr.f32.gmra.mrb[0].mxu0 %v1352
        %v1468 = vpop.f32.mrb[0].mxu0
        %v1469 = vadd.f32 0.0, %v1468
        %v1470 = vpop.f32.mrb[0].mxu0
        %1471 = vmatprep.mubr.f32.mxu0 0.0
        %1472 = vmatmul.mubr.f32.gmra.mrb[0].mxu0 %v1354
        %v1473 = vpop.f32.mrb[0].mxu0
        %v1474 = vadd.f32 0.0, %v1473
        %v1475 = vpop.f32.mrb[0].mxu0
        %1476 = vdwg.mxu0
        %v1477 = vmul.f32 %v1439, 0.35355338
        %v1478 = vmul.f32 %v1444, 0.35355338
        %v1479 = vmul.f32 %v1449, 0.35355338
        %v1480 = vmul.f32 %v1454, 0.35355338
        %v1481 = vmul.f32 %v1459, 0.35355338
        %v1482 = vmul.f32 %v1464, 0.35355338
        %v1483 = vmul.f32 %v1469, 0.35355338
        %v1484 = vmul.f32 %v1474, 0.35355338
        %v1485 = vadd.f32 %v1477, %v623
        %v1486 = vadd.f32 %v1478, %v624
        %v1487 = vadd.f32 %v1479, %v625
        %v1488 = vadd.f32 %v1480, %v626
        %v1489 = vadd.f32 %v1481, %v627
        %v1490 = vadd.f32 %v1482, %v628
        %v1491 = vadd.f32 %v1483, %v629
        %v1492 = vadd.f32 %v1484, %v630
        %v1493 = vsel %vm1082, %v1485, -inf
        %1494 = vmax.xlane.f32.xlu0 %v1493
        %v1495 = vpop.xlane.xlu0 %1494
        %v1496 = vsel %vm1082, %v1486, -inf
        %1497 = vmax.xlane.f32.xlu0 %v1496
        %v1498 = vpop.xlane.xlu0 %1497
        %v1499 = vsel %vm1082, %v1487, -inf
        %1500 = vmax.xlane.f32.xlu0 %v1499
        %v1501 = vpop.xlane.xlu0 %1500
        %v1502 = vsel %vm1082, %v1488, -inf
        %1503 = vmax.xlane.f32.xlu0 %v1502
        %v1504 = vpop.xlane.xlu0 %1503
        %v1505 = vsel %vm1082, %v1489, -inf
        %1506 = vmax.xlane.f32.xlu0 %v1505
        %v1507 = vpop.xlane.xlu0 %1506
        %v1508 = vsel %vm1082, %v1490, -inf
        %1509 = vmax.xlane.f32.xlu0 %v1508
        %v1510 = vpop.xlane.xlu0 %1509
        %v1511 = vsel %vm1082, %v1491, -inf
        %1512 = vmax.xlane.f32.xlu0 %v1511
        %v1513 = vpop.xlane.xlu0 %1512
        %v1514 = vsel %vm1082, %v1492, -inf
        %1515 = vmax.xlane.f32.xlu0 %v1514
        %v1516 = vpop.xlane.xlu0 %1515
        %v1517 = vsub.f32 %v1485, %v1495
        %v1518 = vsub.f32 %v1486, %v1498
        %v1519 = vsub.f32 %v1487, %v1501
        %v1520 = vsub.f32 %v1488, %v1504
        %v1521 = vsub.f32 %v1489, %v1507
        %v1522 = vsub.f32 %v1490, %v1510
        %v1523 = vsub.f32 %v1491, %v1513
        %v1524 = vsub.f32 %v1492, %v1516
        %v1525 = vmul.f32 %v1517, 1.442695
        %v1526 = vpow.pop %v1525
        %v1527 = vmul.f32 %v1518, 1.442695
        %v1528 = vpow.pop %v1527
        %v1529 = vmul.f32 %v1519, 1.442695
        %v1530 = vpow.pop %v1529
        %v1531 = vmul.f32 %v1520, 1.442695
        %v1532 = vpow.pop %v1531
        %v1533 = vmul.f32 %v1521, 1.442695
        %v1534 = vpow.pop %v1533
        %v1535 = vmul.f32 %v1522, 1.442695
        %v1536 = vpow.pop %v1535
        %v1537 = vmul.f32 %v1523, 1.442695
        %v1538 = vpow.pop %v1537
        %v1539 = vmul.f32 %v1524, 1.442695
        %v1540 = vpow.pop %v1539
        %v1541 = vsel %vm1082, %v1526, 0.0
        %1542 = vadd.xlane.f32.xlu0 %v1541
        %v1543 = vpop.xlane.xlu0 %1542
        %v1544 = vsel %vm1082, %v1528, 0.0
        %1545 = vadd.xlane.f32.xlu0 %v1544
        %v1546 = vpop.xlane.xlu0 %1545
        %v1547 = vsel %vm1082, %v1530, 0.0
        %1548 = vadd.xlane.f32.xlu0 %v1547
        %v1549 = vpop.xlane.xlu0 %1548
        %v1550 = vsel %vm1082, %v1532, 0.0
        %1551 = vadd.xlane.f32.xlu0 %v1550
        %v1552 = vpop.xlane.xlu0 %1551
        %v1553 = vsel %vm1082, %v1534, 0.0
        %1554 = vadd.xlane.f32.xlu0 %v1553
        %v1555 = vpop.xlane.xlu0 %1554
        %v1556 = vsel %vm1082, %v1536, 0.0
        %1557 = vadd.xlane.f32.xlu0 %v1556
        %v1558 = vpop.xlane.xlu0 %1557
        %v1559 = vsel %vm1082, %v1538, 0.0
        %1560 = vadd.xlane.f32.xlu0 %v1559
        %v1561 = vpop.xlane.xlu0 %1560
        %v1562 = vsel %vm1082, %v1540, 0.0
        %1563 = vadd.xlane.f32.xlu0 %v1562
        %v1564 = vpop.xlane.xlu0 %1563
        %v1565 = vrcp.pop %v1543
        %v1566 = vrcp.pop %v1546
        %v1567 = vrcp.pop %v1549
        %v1568 = vrcp.pop %v1552
        %v1569 = vrcp.pop %v1555
        %v1570 = vrcp.pop %v1558
        %v1571 = vrcp.pop %v1561
        %v1572 = vrcp.pop %v1564
        %v1573 = vmul.f32 %v1526, %v1565
        %v1574 = vmul.f32 %v1528, %v1566
        %v1575 = vmul.f32 %v1530, %v1567
        %v1576 = vmul.f32 %v1532, %v1568
        %v1577 = vmul.f32 %v1534, %v1569
        %v1578 = vmul.f32 %v1536, %v1570
        %v1579 = vmul.f32 %v1538, %v1571
        %v1580 = vmul.f32 %v1540, %v1572
        %1589 = vrot.lane.b32.xlu0 %v882, 120
        %v1590 = vpop.permute.xlu0 %1589
        %1591 = vrot.lane.b32.xlu0 %v885, 120
        %v1592 = vpop.permute.xlu0 %1591
        %1593 = vrot.lane.b32.xlu0 %v890, 120
        %v1594 = vpop.permute.xlu0 %1593
        %1595 = vrot.lane.b32.xlu0 %v893, 120
        %v1596 = vpop.permute.xlu0 %1595
        %1597 = vrot.lane.b32.xlu0 %v898, 120
        %v1598 = vpop.permute.xlu0 %1597
        %1599 = vrot.lane.b32.xlu0 %v901, 120
        %v1600 = vpop.permute.xlu0 %1599
        %1601 = vrot.lane.b32.xlu0 %v906, 120
        %v1602 = vpop.permute.xlu0 %1601
        %1603 = vrot.lane.b32.xlu0 %v909, 120
        %v1604 = vpop.permute.xlu0 %1603
        %v1614 = vsel %vm1082, %v1573, 0
        %v1617 = vsel %vm1082, %v1574, 0
        %v1620 = vsel %vm1082, %v1575, 0
        %v1623 = vsel %vm1082, %v1576, 0
        %v1626 = vsel %vm1082, %v1577, 0
        %v1629 = vsel %vm1082, %v1578, 0
        %v1632 = vsel %vm1082, %v1579, 0
        %v1635 = vsel %vm1082, %v1580, 0
        %1637 = vmatprep.subr.mxu0 0.0
        %1638 = vmatpush1.msra.mxu0 %v1590
        %1639 = vmatprep.subr.mxu0 0.0
        %1640 = vmatpush1.msra.mxu0 %v1592
        %1641 = vmatprep.subr.mxu0 0.0
        %1642 = vmatpush1.msra.mxu0 %v1594
        %1643 = vmatprep.subr.mxu0 0.0
        %1644 = vmatpush1.msra.mxu0 %v1596
        %1645 = vmatprep.subr.mxu0 0.0
        %1646 = vmatpush1.msra.mxu0 %v1598
        %1647 = vmatprep.subr.mxu0 0.0
        %1648 = vmatpush1.msra.mxu0 %v1600
        %1649 = vmatprep.subr.mxu0 0.0
        %1650 = vmatpush1.msra.mxu0 %v1602
        %1651 = vmatprep.subr.mxu0 0.0
        %1652 = vmatpush1.msra.mxu0 %v1604
        %1653 = vmatprep.subr.mxu0 0.0
        %1654 = vmatpush1.msra.mxu0 0.0
        %1655 = vmatprep.subr.mxu0 0.0
        %1656 = vmatpush1.msra.mxu0 0.0
        %1657 = vmatprep.subr.mxu0 0.0
        %1658 = vmatpush1.msra.mxu0 0.0
        %1659 = vmatprep.subr.mxu0 0.0
        %1660 = vmatpush1.msra.mxu0 0.0
        %1661 = vmatprep.subr.mxu0 0.0
        %1662 = vmatpush1.msra.mxu0 0.0
        %1663 = vmatprep.subr.mxu0 0.0
        %1664 = vmatpush1.msra.mxu0 0.0
        %1665 = vmatprep.subr.mxu0 0.0
        %1666 = vmatpush1.msra.mxu0 0.0
        %1667 = vmatprep.subr.mxu0 0.0
        %1668 = vmatpush1.msra.mxu0 0.0
        %1669 = vmatprep.subr.mxu0 0.0
        %1670 = vmatpush1.msra.mxu0 0.0
        %1671 = vmatprep.subr.mxu0 0.0
        %1672 = vmatpush1.msra.mxu0 0.0
        %1673 = vmatprep.subr.mxu0 0.0
        %1674 = vmatpush1.msra.mxu0 0.0
        %1675 = vmatprep.subr.mxu0 0.0
        %1676 = vmatpush1.msra.mxu0 0.0
        %1677 = vmatprep.subr.mxu0 0.0
        %1678 = vmatpush1.msra.mxu0 0.0
        %1679 = vmatprep.subr.mxu0 0.0
        %1680 = vmatpush1.msra.mxu0 0.0
        %1681 = vmatprep.subr.mxu0 0.0
        %1682 = vmatpush1.msra.mxu0 0.0
        %1683 = vmatprep.subr.mxu0 0.0
        %1684 = vmatpush1.msra.mxu0 0.0
        %1685 = vmatprep.subr.mxu0 0.0
        %1686 = vmatpush1.msra.mxu0 0.0
        %1687 = vmatprep.subr.mxu0 0.0
        %1688 = vmatpush1.msra.mxu0 0.0
        %1689 = vmatprep.subr.mxu0 0.0
        %1690 = vmatpush1.msra.mxu0 0.0
        %1691 = vmatprep.subr.mxu0 0.0
        %1692 = vmatpush1.msra.mxu0 0.0
        %1693 = vmatprep.subr.mxu0 0.0
        %1694 = vmatpush1.msra.mxu0 0.0
        %1695 = vmatprep.subr.mxu0 0.0
        %1696 = vmatpush1.msra.mxu0 0.0
        %1697 = vmatprep.subr.mxu0 0.0
        %1698 = vmatpush1.msra.mxu0 0.0
        %1699 = vmatprep.subr.mxu0 0.0
        %1700 = vmatpush1.msra.mxu0 0.0
        %1701 = vmatprep.mubr.f32.mxu0 0.0
        %1702 = vmatmul.mubr.f32.gmra.mrb[0].mxu0 %v1614
        %v1703 = vpop.f32.mrb[0].mxu0
        %v1704 = vadd.f32 0.0, %v1703
        %v1705 = vpop.f32.mrb[0].mxu0
        %1706 = vmatprep.mubr.f32.mxu0 0.0
        %1707 = vmatmul.mubr.f32.gmra.mrb[0].mxu0 %v1617
        %v1708 = vpop.f32.mrb[0].mxu0
        %v1709 = vadd.f32 0.0, %v1708
        %v1710 = vpop.f32.mrb[0].mxu0
        %1711 = vmatprep.mubr.f32.mxu0 0.0
        %1712 = vmatmul.mubr.f32.gmra.mrb[0].mxu0 %v1620
        %v1713 = vpop.f32.mrb[0].mxu0
        %v1714 = vadd.f32 0.0, %v1713
        %v1715 = vpop.f32.mrb[0].mxu0
        %1716 = vmatprep.mubr.f32.mxu0 0.0
        %1717 = vmatmul.mubr.f32.gmra.mrb[0].mxu0 %v1623
        %v1718 = vpop.f32.mrb[0].mxu0
        %v1719 = vadd.f32 0.0, %v1718
        %v1720 = vpop.f32.mrb[0].mxu0
        %1721 = vmatprep.mubr.f32.mxu0 0.0
        %1722 = vmatmul.mubr.f32.gmra.mrb[0].mxu0 %v1626
        %v1723 = vpop.f32.mrb[0].mxu0
        %v1724 = vadd.f32 0.0, %v1723
        %v1725 = vpop.f32.mrb[0].mxu0
        %1726 = vmatprep.mubr.f32.mxu0 0.0
        %1727 = vmatmul.mubr.f32.gmra.mrb[0].mxu0 %v1629
        %v1728 = vpop.f32.mrb[0].mxu0
        %v1729 = vadd.f32 0.0, %v1728
        %v1730 = vpop.f32.mrb[0].mxu0
        %1731 = vmatprep.mubr.f32.mxu0 0.0
        %1732 = vmatmul.mubr.f32.gmra.mrb[0].mxu0 %v1632
        %v1733 = vpop.f32.mrb[0].mxu0
        %v1734 = vadd.f32 0.0, %v1733
        %v1735 = vpop.f32.mrb[0].mxu0
        %1736 = vmatprep.mubr.f32.mxu0 0.0
        %1737 = vmatmul.mubr.f32.gmra.mrb[0].mxu0 %v1635
        %v1738 = vpop.f32.mrb[0].mxu0
        %v1739 = vadd.f32 0.0, %v1738
        %v1740 = vpop.f32.mrb[0].mxu0
        %1741 = vdwg.mxu0
        %1750 = vrot.lane.b32.xlu0 %v1704, 8
        %v1751 = vpop.permute.xlu0 %1750
        %1752 = vrot.lane.b32.xlu0 %v1709, 8
        %v1753 = vpop.permute.xlu0 %1752
        %1754 = vrot.lane.b32.xlu0 %v1714, 8
        %v1755 = vpop.permute.xlu0 %1754
        %1756 = vrot.lane.b32.xlu0 %v1719, 8
        %v1757 = vpop.permute.xlu0 %1756
        %1758 = vrot.lane.b32.xlu0 %v1724, 8
        %v1759 = vpop.permute.xlu0 %1758
        %1760 = vrot.lane.b32.xlu0 %v1729, 8
        %v1761 = vpop.permute.xlu0 %1760
        %1762 = vrot.lane.b32.xlu0 %v1734, 8
        %v1763 = vpop.permute.xlu0 %1762
        %1764 = vrot.lane.b32.xlu0 %v1739, 8
        %v1765 = vpop.permute.xlu0 %1764
        %vm1774 = vcmask 130112
        %1775 = vst.msk [vmem:[#allocation2] sm:$0xff] %vm1774, %v1751
        %1776 = vst.msk [vmem:[#allocation2 + $0x8] sm:$0xff] %vm1774, %v1753
        %1777 = vst.msk [vmem:[#allocation2 + $0x10] sm:$0xff] %vm1774, %v1755
        %1778 = vst.msk [vmem:[#allocation2 + $0x18] sm:$0xff] %vm1774, %v1757
        %1779 = vst.msk [vmem:[#allocation2 + $0x20] sm:$0xff] %vm1774, %v1759
        %1780 = vst.msk [vmem:[#allocation2 + $0x28] sm:$0xff] %vm1774, %v1761
        %1781 = vst.msk [vmem:[#allocation2 + $0x30] sm:$0xff] %vm1774, %v1763
        %1782 = vst.msk [vmem:[#allocation2 + $0x38] sm:$0xff] %vm1774, %v1765
        %1783 = vrot.lane.b32.xlu0 %v706, 112
        %v1784 = vpop.permute.xlu0 %1783
        %1785 = vrot.lane.b32.xlu0 %v709, 112
        %v1786 = vpop.permute.xlu0 %1785
        %1787 = vrot.lane.b32.xlu0 %v714, 112
        %v1788 = vpop.permute.xlu0 %1787
        %1789 = vrot.lane.b32.xlu0 %v717, 112
        %v1790 = vpop.permute.xlu0 %1789
        %1791 = vrot.lane.b32.xlu0 %v722, 112
        %v1792 = vpop.permute.xlu0 %1791
        %1793 = vrot.lane.b32.xlu0 %v725, 112
        %v1794 = vpop.permute.xlu0 %1793
        %1795 = vrot.lane.b32.xlu0 %v730, 112
        %v1796 = vpop.permute.xlu0 %1795
        %1797 = vrot.lane.b32.xlu0 %v733, 112
        %v1798 = vpop.permute.xlu0 %1797
        %1799 = vrot.lane.b32.xlu0 %v794, 112
        %v1800 = vpop.permute.xlu0 %1799
        %1801 = vrot.lane.b32.xlu0 %v797, 112
        %v1802 = vpop.permute.xlu0 %1801
        %1803 = vrot.lane.b32.xlu0 %v802, 112
        %v1804 = vpop.permute.xlu0 %1803
        %1805 = vrot.lane.b32.xlu0 %v805, 112
        %v1806 = vpop.permute.xlu0 %1805
        %1807 = vrot.lane.b32.xlu0 %v810, 112
        %v1808 = vpop.permute.xlu0 %1807
        %1809 = vrot.lane.b32.xlu0 %v813, 112
        %v1810 = vpop.permute.xlu0 %1809
        %1811 = vrot.lane.b32.xlu0 %v818, 112
        %v1812 = vpop.permute.xlu0 %1811
        %1813 = vrot.lane.b32.xlu0 %v821, 112
        %v1814 = vpop.permute.xlu0 %1813
        %v1815 = vsel %vm912, %v1784, 0
        %v1817 = vsel %vm912, %v1786, 0
        %v1819 = vsel %vm912, %v1788, 0
        %v1821 = vsel %vm912, %v1790, 0
        %v1823 = vsel %vm912, %v1792, 0
        %v1825 = vsel %vm912, %v1794, 0
        %v1827 = vsel %vm912, %v1796, 0
        %v1829 = vsel %vm912, %v1798, 0
        %v1831 = vsel %vm912, %v1800, 0
        %v1833 = vsel %vm912, %v1802, 0
        %v1835 = vsel %vm912, %v1804, 0
        %v1837 = vsel %vm912, %v1806, 0
        %v1839 = vsel %vm912, %v1808, 0
        %v1841 = vsel %vm912, %v1810, 0
        %v1843 = vsel %vm912, %v1812, 0
        %v1845 = vsel %vm912, %v1814, 0
        %1847 = vmatprep.subr.mxu0 0.0
        %1848 = vmatpush1.xpose.msra.mxu0 %v1831
        %1849 = vmatprep.subr.mxu0 0.0
        %1850 = vmatpush1.xpose.msra.mxu0 %v1833
        %1851 = vmatprep.subr.mxu0 0.0
        %1852 = vmatpush1.xpose.msra.mxu0 %v1835
        %1853 = vmatprep.subr.mxu0 0.0
        %1854 = vmatpush1.xpose.msra.mxu0 %v1837
        %1855 = vmatprep.subr.mxu0 0.0
        %1856 = vmatpush1.xpose.msra.mxu0 %v1839
        %1857 = vmatprep.subr.mxu0 0.0
        %1858 = vmatpush1.xpose.msra.mxu0 %v1841
        %1859 = vmatprep.subr.mxu0 0.0
        %1860 = vmatpush1.xpose.msra.mxu0 %v1843
        %1861 = vmatprep.subr.mxu0 0.0
        %1862 = vmatpush1.xpose.msra.mxu0 %v1845
        %1863 = vmatprep.subr.mxu0 0.0
        %1864 = vmatpush1.xpose.msra.mxu0 0.0
        %1865 = vmatprep.subr.mxu0 0.0
        %1866 = vmatpush1.xpose.msra.mxu0 0.0
        %1867 = vmatprep.subr.mxu0 0.0
        %1868 = vmatpush1.xpose.msra.mxu0 0.0
        %1869 = vmatprep.subr.mxu0 0.0
        %1870 = vmatpush1.xpose.msra.mxu0 0.0
        %1871 = vmatprep.subr.mxu0 0.0
        %1872 = vmatpush1.xpose.msra.mxu0 0.0
        %1873 = vmatprep.subr.mxu0 0.0
        %1874 = vmatpush1.xpose.msra.mxu0 0.0
        %1875 = vmatprep.subr.mxu0 0.0
        %1876 = vmatpush1.xpose.msra.mxu0 0.0
        %1877 = vmatprep.subr.mxu0 0.0
        %1878 = vmatpush1.xpose.msra.mxu0 0.0
        %1879 = vmatprep.subr.mxu0 0.0
        %1880 = vmatpush1.xpose.msra.mxu0 0.0
        %1881 = vmatprep.subr.mxu0 0.0
        %1882 = vmatpush1.xpose.msra.mxu0 0.0
        %1883 = vmatprep.subr.mxu0 0.0
        %1884 = vmatpush1.xpose.msra.mxu0 0.0
        %1885 = vmatprep.subr.mxu0 0.0
        %1886 = vmatpush1.xpose.msra.mxu0 0.0
        %1887 = vmatprep.subr.mxu0 0.0
        %1888 = vmatpush1.xpose.msra.mxu0 0.0
        %1889 = vmatprep.subr.mxu0 0.0
        %1890 = vmatpush1.xpose.msra.mxu0 0.0
        %1891 = vmatprep.subr.mxu0 0.0
        %1892 = vmatpush1.xpose.msra.mxu0 0.0
        %1893 = vmatprep.subr.mxu0 0.0
        %1894 = vmatpush1.xpose.msra.mxu0 0.0
        %1895 = vmatprep.subr.mxu0 0.0
        %1896 = vmatpush1.xpose.msra.mxu0 0.0
        %1897 = vmatprep.subr.mxu0 0.0
        %1898 = vmatpush1.xpose.msra.mxu0 0.0
        %1899 = vmatprep.subr.mxu0 0.0
        %1900 = vmatpush1.xpose.msra.mxu0 0.0
        %1901 = vmatprep.subr.mxu0 0.0
        %1902 = vmatpush1.xpose.msra.mxu0 0.0
        %1903 = vmatprep.subr.mxu0 0.0
        %1904 = vmatpush1.xpose.msra.mxu0 0.0
        %1905 = vmatprep.subr.mxu0 0.0
        %1906 = vmatpush1.xpose.msra.mxu0 0.0
        %1907 = vmatprep.subr.mxu0 0.0
        %1908 = vmatpush1.xpose.msra.mxu0 0.0
        %1909 = vmatprep.subr.mxu0 0.0
        %1910 = vmatpush1.xpose.msra.mxu0 0.0
        %1911 = vmatprep.mubr.f32.mxu0 0.0
        %1912 = vmatmul.mubr.f32.gmra.mrb[0].mxu0 %v1815
        %v1913 = vpop.f32.mrb[0].mxu0
        %v1914 = vadd.f32 0.0, %v1913
        %v1915 = vpop.f32.mrb[0].mxu0
        %1916 = vmatprep.mubr.f32.mxu0 0.0
        %1917 = vmatmul.mubr.f32.gmra.mrb[0].mxu0 %v1817
        %v1918 = vpop.f32.mrb[0].mxu0
        %v1919 = vadd.f32 0.0, %v1918
        %v1920 = vpop.f32.mrb[0].mxu0
        %1921 = vmatprep.mubr.f32.mxu0 0.0
        %1922 = vmatmul.mubr.f32.gmra.mrb[0].mxu0 %v1819
        %v1923 = vpop.f32.mrb[0].mxu0
        %v1924 = vadd.f32 0.0, %v1923
        %v1925 = vpop.f32.mrb[0].mxu0
        %1926 = vmatprep.mubr.f32.mxu0 0.0
        %1927 = vmatmul.mubr.f32.gmra.mrb[0].mxu0 %v1821
        %v1928 = vpop.f32.mrb[0].mxu0
        %v1929 = vadd.f32 0.0, %v1928
        %v1930 = vpop.f32.mrb[0].mxu0
        %1931 = vmatprep.mubr.f32.mxu0 0.0
        %1932 = vmatmul.mubr.f32.gmra.mrb[0].mxu0 %v1823
        %v1933 = vpop.f32.mrb[0].mxu0
        %v1934 = vadd.f32 0.0, %v1933
        %v1935 = vpop.f32.mrb[0].mxu0
        %1936 = vmatprep.mubr.f32.mxu0 0.0
        %1937 = vmatmul.mubr.f32.gmra.mrb[0].mxu0 %v1825
        %v1938 = vpop.f32.mrb[0].mxu0
        %v1939 = vadd.f32 0.0, %v1938
        %v1940 = vpop.f32.mrb[0].mxu0
        %1941 = vmatprep.mubr.f32.mxu0 0.0
        %1942 = vmatmul.mubr.f32.gmra.mrb[0].mxu0 %v1827
        %v1943 = vpop.f32.mrb[0].mxu0
        %v1944 = vadd.f32 0.0, %v1943
        %v1945 = vpop.f32.mrb[0].mxu0
        %1946 = vmatprep.mubr.f32.mxu0 0.0
        %1947 = vmatmul.mubr.f32.gmra.mrb[0].mxu0 %v1829
        %v1948 = vpop.f32.mrb[0].mxu0
        %v1949 = vadd.f32 0.0, %v1948
        %v1950 = vpop.f32.mrb[0].mxu0
        %1951 = vdwg.mxu0
        %v1952 = vmul.f32 %v1914, 0.35355338
        %v1953 = vmul.f32 %v1919, 0.35355338
        %v1954 = vmul.f32 %v1924, 0.35355338
        %v1955 = vmul.f32 %v1929, 0.35355338
        %v1956 = vmul.f32 %v1934, 0.35355338
        %v1957 = vmul.f32 %v1939, 0.35355338
        %v1958 = vmul.f32 %v1944, 0.35355338
        %v1959 = vmul.f32 %v1949, 0.35355338
        %v1960 = vadd.f32 %v1952, %v623
        %v1961 = vadd.f32 %v1953, %v624
        %v1962 = vadd.f32 %v1954, %v625
        %v1963 = vadd.f32 %v1955, %v626
        %v1964 = vadd.f32 %v1956, %v627
        %v1965 = vadd.f32 %v1957, %v628
        %v1966 = vadd.f32 %v1958, %v629
        %v1967 = vadd.f32 %v1959, %v630
        %v1968 = vsel %vm1082, %v1960, -inf
        %1969 = vmax.xlane.f32.xlu0 %v1968
        %v1970 = vpop.xlane.xlu0 %1969
        %v1971 = vsel %vm1082, %v1961, -inf
        %1972 = vmax.xlane.f32.xlu0 %v1971
        %v1973 = vpop.xlane.xlu0 %1972
        %v1974 = vsel %vm1082, %v1962, -inf
        %1975 = vmax.xlane.f32.xlu0 %v1974
        %v1976 = vpop.xlane.xlu0 %1975
        %v1977 = vsel %vm1082, %v1963, -inf
        %1978 = vmax.xlane.f32.xlu0 %v1977
        %v1979 = vpop.xlane.xlu0 %1978
        %v1980 = vsel %vm1082, %v1964, -inf
        %1981 = vmax.xlane.f32.xlu0 %v1980
        %v1982 = vpop.xlane.xlu0 %1981
        %v1983 = vsel %vm1082, %v1965, -inf
        %1984 = vmax.xlane.f32.xlu0 %v1983
        %v1985 = vpop.xlane.xlu0 %1984
        %v1986 = vsel %vm1082, %v1966, -inf
        %1987 = vmax.xlane.f32.xlu0 %v1986
        %v1988 = vpop.xlane.xlu0 %1987
        %v1989 = vsel %vm1082, %v1967, -inf
        %1990 = vmax.xlane.f32.xlu0 %v1989
        %v1991 = vpop.xlane.xlu0 %1990
        %v1992 = vsub.f32 %v1960, %v1970
        %v1993 = vsub.f32 %v1961, %v1973
        %v1994 = vsub.f32 %v1962, %v1976
        %v1995 = vsub.f32 %v1963, %v1979
        %v1996 = vsub.f32 %v1964, %v1982
        %v1997 = vsub.f32 %v1965, %v1985
        %v1998 = vsub.f32 %v1966, %v1988
        %v1999 = vsub.f32 %v1967, %v1991
        %v2000 = vmul.f32 %v1992, 1.442695
        %v2001 = vpow.pop %v2000
        %v2002 = vmul.f32 %v1993, 1.442695
        %v2003 = vpow.pop %v2002
        %v2004 = vmul.f32 %v1994, 1.442695
        %v2005 = vpow.pop %v2004
        %v2006 = vmul.f32 %v1995, 1.442695
        %v2007 = vpow.pop %v2006
        %v2008 = vmul.f32 %v1996, 1.442695
        %v2009 = vpow.pop %v2008
        %v2010 = vmul.f32 %v1997, 1.442695
        %v2011 = vpow.pop %v2010
        %v2012 = vmul.f32 %v1998, 1.442695
        %v2013 = vpow.pop %v2012
        %v2014 = vmul.f32 %v1999, 1.442695
        %v2015 = vpow.pop %v2014
        %v2016 = vsel %vm1082, %v2001, 0.0
        %2017 = vadd.xlane.f32.xlu0 %v2016
        %v2018 = vpop.xlane.xlu0 %2017
        %v2019 = vsel %vm1082, %v2003, 0.0
        %2020 = vadd.xlane.f32.xlu0 %v2019
        %v2021 = vpop.xlane.xlu0 %2020
        %v2022 = vsel %vm1082, %v2005, 0.0
        %2023 = vadd.xlane.f32.xlu0 %v2022
        %v2024 = vpop.xlane.xlu0 %2023
        %v2025 = vsel %vm1082, %v2007, 0.0
        %2026 = vadd.xlane.f32.xlu0 %v2025
        %v2027 = vpop.xlane.xlu0 %2026
        %v2028 = vsel %vm1082, %v2009, 0.0
        %2029 = vadd.xlane.f32.xlu0 %v2028
        %v2030 = vpop.xlane.xlu0 %2029
        %v2031 = vsel %vm1082, %v2011, 0.0
        %2032 = vadd.xlane.f32.xlu0 %v2031
        %v2033 = vpop.xlane.xlu0 %2032
        %v2034 = vsel %vm1082, %v2013, 0.0
        %2035 = vadd.xlane.f32.xlu0 %v2034
        %v2036 = vpop.xlane.xlu0 %2035
        %v2037 = vsel %vm1082, %v2015, 0.0
        %2038 = vadd.xlane.f32.xlu0 %v2037
        %v2039 = vpop.xlane.xlu0 %2038
        %v2040 = vrcp.pop %v2018
        %v2041 = vrcp.pop %v2021
        %v2042 = vrcp.pop %v2024
        %v2043 = vrcp.pop %v2027
        %v2044 = vrcp.pop %v2030
        %v2045 = vrcp.pop %v2033
        %v2046 = vrcp.pop %v2036
        %v2047 = vrcp.pop %v2039
        %v2048 = vmul.f32 %v2001, %v2040
        %v2049 = vmul.f32 %v2003, %v2041
        %v2050 = vmul.f32 %v2005, %v2042
        %v2051 = vmul.f32 %v2007, %v2043
        %v2052 = vmul.f32 %v2009, %v2044
        %v2053 = vmul.f32 %v2011, %v2045
        %v2054 = vmul.f32 %v2013, %v2046
        %v2055 = vmul.f32 %v2015, %v2047
        %2056 = vrot.lane.b32.xlu0 %v882, 112
        %v2057 = vpop.permute.xlu0 %2056
        %2058 = vrot.lane.b32.xlu0 %v885, 112
        %v2059 = vpop.permute.xlu0 %2058
        %2060 = vrot.lane.b32.xlu0 %v890, 112
        %v2061 = vpop.permute.xlu0 %2060
        %2062 = vrot.lane.b32.xlu0 %v893, 112
        %v2063 = vpop.permute.xlu0 %2062
        %2064 = vrot.lane.b32.xlu0 %v898, 112
        %v2065 = vpop.permute.xlu0 %2064
        %2066 = vrot.lane.b32.xlu0 %v901, 112
        %v2067 = vpop.permute.xlu0 %2066
        %2068 = vrot.lane.b32.xlu0 %v906, 112
        %v2069 = vpop.permute.xlu0 %2068
        %2070 = vrot.lane.b32.xlu0 %v909, 112
        %v2071 = vpop.permute.xlu0 %2070
        %v2081 = vsel %vm1082, %v2048, 0
        %v2084 = vsel %vm1082, %v2049, 0
        %v2087 = vsel %vm1082, %v2050, 0
        %v2090 = vsel %vm1082, %v2051, 0
        %v2093 = vsel %vm1082, %v2052, 0
        %v2096 = vsel %vm1082, %v2053, 0
        %v2099 = vsel %vm1082, %v2054, 0
        %v2102 = vsel %vm1082, %v2055, 0
        %2104 = vmatprep.subr.mxu0 0.0
        %2105 = vmatpush1.msra.mxu0 %v2057
        %2106 = vmatprep.subr.mxu0 0.0
        %2107 = vmatpush1.msra.mxu0 %v2059
        %2108 = vmatprep.subr.mxu0 0.0
        %2109 = vmatpush1.msra.mxu0 %v2061
        %2110 = vmatprep.subr.mxu0 0.0
        %2111 = vmatpush1.msra.mxu0 %v2063
        %2112 = vmatprep.subr.mxu0 0.0
        %2113 = vmatpush1.msra.mxu0 %v2065
        %2114 = vmatprep.subr.mxu0 0.0
        %2115 = vmatpush1.msra.mxu0 %v2067
        %2116 = vmatprep.subr.mxu0 0.0
        %2117 = vmatpush1.msra.mxu0 %v2069
        %2118 = vmatprep.subr.mxu0 0.0
        %2119 = vmatpush1.msra.mxu0 %v2071
        %2120 = vmatprep.subr.mxu0 0.0
        %2121 = vmatpush1.msra.mxu0 0.0
        %2122 = vmatprep.subr.mxu0 0.0
        %2123 = vmatpush1.msra.mxu0 0.0
        %2124 = vmatprep.subr.mxu0 0.0
        %2125 = vmatpush1.msra.mxu0 0.0
        %2126 = vmatprep.subr.mxu0 0.0
        %2127 = vmatpush1.msra.mxu0 0.0
        %2128 = vmatprep.subr.mxu0 0.0
        %2129 = vmatpush1.msra.mxu0 0.0
        %2130 = vmatprep.subr.mxu0 0.0
        %2131 = vmatpush1.msra.mxu0 0.0
        %2132 = vmatprep.subr.mxu0 0.0
        %2133 = vmatpush1.msra.mxu0 0.0
        %2134 = vmatprep.subr.mxu0 0.0
        %2135 = vmatpush1.msra.mxu0 0.0
        %2136 = vmatprep.subr.mxu0 0.0
        %2137 = vmatpush1.msra.mxu0 0.0
        %2138 = vmatprep.subr.mxu0 0.0
        %2139 = vmatpush1.msra.mxu0 0.0
        %2140 = vmatprep.subr.mxu0 0.0
        %2141 = vmatpush1.msra.mxu0 0.0
        %2142 = vmatprep.subr.mxu0 0.0
        %2143 = vmatpush1.msra.mxu0 0.0
        %2144 = vmatprep.subr.mxu0 0.0
        %2145 = vmatpush1.msra.mxu0 0.0
        %2146 = vmatprep.subr.mxu0 0.0
        %2147 = vmatpush1.msra.mxu0 0.0
        %2148 = vmatprep.subr.mxu0 0.0
        %2149 = vmatpush1.msra.mxu0 0.0
        %2150 = vmatprep.subr.mxu0 0.0
        %2151 = vmatpush1.msra.mxu0 0.0
        %2152 = vmatprep.subr.mxu0 0.0
        %2153 = vmatpush1.msra.mxu0 0.0
        %2154 = vmatprep.subr.mxu0 0.0
        %2155 = vmatpush1.msra.mxu0 0.0
        %2156 = vmatprep.subr.mxu0 0.0
        %2157 = vmatpush1.msra.mxu0 0.0
        %2158 = vmatprep.subr.mxu0 0.0
        %2159 = vmatpush1.msra.mxu0 0.0
        %2160 = vmatprep.subr.mxu0 0.0
        %2161 = vmatpush1.msra.mxu0 0.0
        %2162 = vmatprep.subr.mxu0 0.0
        %2163 = vmatpush1.msra.mxu0 0.0
        %2164 = vmatprep.subr.mxu0 0.0
        %2165 = vmatpush1.msra.mxu0 0.0
        %2166 = vmatprep.subr.mxu0 0.0
        %2167 = vmatpush1.msra.mxu0 0.0
        %2168 = vmatprep.mubr.f32.mxu0 0.0
        %2169 = vmatmul.mubr.f32.gmra.mrb[0].mxu0 %v2081
        %v2170 = vpop.f32.mrb[0].mxu0
        %v2171 = vadd.f32 0.0, %v2170
        %v2172 = vpop.f32.mrb[0].mxu0
        %2173 = vmatprep.mubr.f32.mxu0 0.0
        %2174 = vmatmul.mubr.f32.gmra.mrb[0].mxu0 %v2084
        %v2175 = vpop.f32.mrb[0].mxu0
        %v2176 = vadd.f32 0.0, %v2175
        %v2177 = vpop.f32.mrb[0].mxu0
        %2178 = vmatprep.mubr.f32.mxu0 0.0
        %2179 = vmatmul.mubr.f32.gmra.mrb[0].mxu0 %v2087
        %v2180 = vpop.f32.mrb[0].mxu0
        %v2181 = vadd.f32 0.0, %v2180
        %v2182 = vpop.f32.mrb[0].mxu0
        %2183 = vmatprep.mubr.f32.mxu0 0.0
        %2184 = vmatmul.mubr.f32.gmra.mrb[0].mxu0 %v2090
        %v2185 = vpop.f32.mrb[0].mxu0
        %v2186 = vadd.f32 0.0, %v2185
        %v2187 = vpop.f32.mrb[0].mxu0
        %2188 = vmatprep.mubr.f32.mxu0 0.0
        %2189 = vmatmul.mubr.f32.gmra.mrb[0].mxu0 %v2093
        %v2190 = vpop.f32.mrb[0].mxu0
        %v2191 = vadd.f32 0.0, %v2190
        %v2192 = vpop.f32.mrb[0].mxu0
        %2193 = vmatprep.mubr.f32.mxu0 0.0
        %2194 = vmatmul.mubr.f32.gmra.mrb[0].mxu0 %v2096
        %v2195 = vpop.f32.mrb[0].mxu0
        %v2196 = vadd.f32 0.0, %v2195
        %v2197 = vpop.f32.mrb[0].mxu0
        %2198 = vmatprep.mubr.f32.mxu0 0.0
        %2199 = vmatmul.mubr.f32.gmra.mrb[0].mxu0 %v2099
        %v2200 = vpop.f32.mrb[0].mxu0
        %v2201 = vadd.f32 0.0, %v2200
        %v2202 = vpop.f32.mrb[0].mxu0
        %2203 = vmatprep.mubr.f32.mxu0 0.0
        %2204 = vmatmul.mubr.f32.gmra.mrb[0].mxu0 %v2102
        %v2205 = vpop.f32.mrb[0].mxu0
        %v2206 = vadd.f32 0.0, %v2205
        %v2207 = vpop.f32.mrb[0].mxu0
        %2208 = vdwg.mxu0
        %2217 = vrot.lane.b32.xlu0 %v2171, 16
        %v2218 = vpop.permute.xlu0 %2217
        %2219 = vrot.lane.b32.xlu0 %v2176, 16
        %v2220 = vpop.permute.xlu0 %2219
        %2221 = vrot.lane.b32.xlu0 %v2181, 16
        %v2222 = vpop.permute.xlu0 %2221
        %2223 = vrot.lane.b32.xlu0 %v2186, 16
        %v2224 = vpop.permute.xlu0 %2223
        %2225 = vrot.lane.b32.xlu0 %v2191, 16
        %v2226 = vpop.permute.xlu0 %2225
        %2227 = vrot.lane.b32.xlu0 %v2196, 16
        %v2228 = vpop.permute.xlu0 %2227
        %2229 = vrot.lane.b32.xlu0 %v2201, 16
        %v2230 = vpop.permute.xlu0 %2229
        %2231 = vrot.lane.b32.xlu0 %v2206, 16
        %v2232 = vpop.permute.xlu0 %2231
        %vm2241 = vcmask 195712
        %2242 = vst.msk [vmem:[#allocation2] sm:$0xff] %vm2241, %v2218
        %2243 = vst.msk [vmem:[#allocation2 + $0x8] sm:$0xff] %vm2241, %v2220
        %2244 = vst.msk [vmem:[#allocation2 + $0x10] sm:$0xff] %vm2241, %v2222
        %2245 = vst.msk [vmem:[#allocation2 + $0x18] sm:$0xff] %vm2241, %v2224
        %2246 = vst.msk [vmem:[#allocation2 + $0x20] sm:$0xff] %vm2241, %v2226
        %2247 = vst.msk [vmem:[#allocation2 + $0x28] sm:$0xff] %vm2241, %v2228
        %2248 = vst.msk [vmem:[#allocation2 + $0x30] sm:$0xff] %vm2241, %v2230
        %2249 = vst.msk [vmem:[#allocation2 + $0x38] sm:$0xff] %vm2241, %v2232
        %2250 = vrot.lane.b32.xlu0 %v706, 104
        %v2251 = vpop.permute.xlu0 %2250
        %2252 = vrot.lane.b32.xlu0 %v709, 104
        %v2253 = vpop.permute.xlu0 %2252
        %2254 = vrot.lane.b32.xlu0 %v714, 104
        %v2255 = vpop.permute.xlu0 %2254
        %2256 = vrot.lane.b32.xlu0 %v717, 104
        %v2257 = vpop.permute.xlu0 %2256
        %2258 = vrot.lane.b32.xlu0 %v722, 104
        %v2259 = vpop.permute.xlu0 %2258
        %2260 = vrot.lane.b32.xlu0 %v725, 104
        %v2261 = vpop.permute.xlu0 %2260
        %2262 = vrot.lane.b32.xlu0 %v730, 104
        %v2263 = vpop.permute.xlu0 %2262
        %2264 = vrot.lane.b32.xlu0 %v733, 104
        %v2265 = vpop.permute.xlu0 %2264
        %2266 = vrot.lane.b32.xlu0 %v794, 104
        %v2267 = vpop.permute.xlu0 %2266
        %2268 = vrot.lane.b32.xlu0 %v797, 104
        %v2269 = vpop.permute.xlu0 %2268
        %2270 = vrot.lane.b32.xlu0 %v802, 104
        %v2271 = vpop.permute.xlu0 %2270
        %2272 = vrot.lane.b32.xlu0 %v805, 104
        %v2273 = vpop.permute.xlu0 %2272
        %2274 = vrot.lane.b32.xlu0 %v810, 104
        %v2275 = vpop.permute.xlu0 %2274
        %2276 = vrot.lane.b32.xlu0 %v813, 104
        %v2277 = vpop.permute.xlu0 %2276
        %2278 = vrot.lane.b32.xlu0 %v818, 104
        %v2279 = vpop.permute.xlu0 %2278
        %2280 = vrot.lane.b32.xlu0 %v821, 104
        %v2281 = vpop.permute.xlu0 %2280
        %v2282 = vsel %vm912, %v2251, 0
        %v2284 = vsel %vm912, %v2253, 0
        %v2286 = vsel %vm912, %v2255, 0
        %v2288 = vsel %vm912, %v2257, 0
        %v2290 = vsel %vm912, %v2259, 0
        %v2292 = vsel %vm912, %v2261, 0
        %v2294 = vsel %vm912, %v2263, 0
        %v2296 = vsel %vm912, %v2265, 0
        %v2298 = vsel %vm912, %v2267, 0
        %v2300 = vsel %vm912, %v2269, 0
        %v2302 = vsel %vm912, %v2271, 0
        %v2304 = vsel %vm912, %v2273, 0
        %v2306 = vsel %vm912, %v2275, 0
        %v2308 = vsel %vm912, %v2277, 0
        %v2310 = vsel %vm912, %v2279, 0
        %v2312 = vsel %vm912, %v2281, 0
        %2314 = vmatprep.subr.mxu0 0.0
        %2315 = vmatpush1.xpose.msra.mxu0 %v2298
        %2316 = vmatprep.subr.mxu0 0.0
        %2317 = vmatpush1.xpose.msra.mxu0 %v2300
        %2318 = vmatprep.subr.mxu0 0.0
        %2319 = vmatpush1.xpose.msra.mxu0 %v2302
        %2320 = vmatprep.subr.mxu0 0.0
        %2321 = vmatpush1.xpose.msra.mxu0 %v2304
        %2322 = vmatprep.subr.mxu0 0.0
        %2323 = vmatpush1.xpose.msra.mxu0 %v2306
        %2324 = vmatprep.subr.mxu0 0.0
        %2325 = vmatpush1.xpose.msra.mxu0 %v2308
        %2326 = vmatprep.subr.mxu0 0.0
        %2327 = vmatpush1.xpose.msra.mxu0 %v2310
        %2328 = vmatprep.subr.mxu0 0.0
        %2329 = vmatpush1.xpose.msra.mxu0 %v2312
        %2330 = vmatprep.subr.mxu0 0.0
        %2331 = vmatpush1.xpose.msra.mxu0 0.0
        %2332 = vmatprep.subr.mxu0 0.0
        %2333 = vmatpush1.xpose.msra.mxu0 0.0
        %2334 = vmatprep.subr.mxu0 0.0
        %2335 = vmatpush1.xpose.msra.mxu0 0.0
        %2336 = vmatprep.subr.mxu0 0.0
        %2337 = vmatpush1.xpose.msra.mxu0 0.0
        %2338 = vmatprep.subr.mxu0 0.0
        %2339 = vmatpush1.xpose.msra.mxu0 0.0
        %2340 = vmatprep.subr.mxu0 0.0
        %2341 = vmatpush1.xpose.msra.mxu0 0.0
        %2342 = vmatprep.subr.mxu0 0.0
        %2343 = vmatpush1.xpose.msra.mxu0 0.0
        %2344 = vmatprep.subr.mxu0 0.0
        %2345 = vmatpush1.xpose.msra.mxu0 0.0
        %2346 = vmatprep.subr.mxu0 0.0
        %2347 = vmatpush1.xpose.msra.mxu0 0.0
        %2348 = vmatprep.subr.mxu0 0.0
        %2349 = vmatpush1.xpose.msra.mxu0 0.0
        %2350 = vmatprep.subr.mxu0 0.0
        %2351 = vmatpush1.xpose.msra.mxu0 0.0
        %2352 = vmatprep.subr.mxu0 0.0
        %2353 = vmatpush1.xpose.msra.mxu0 0.0
        %2354 = vmatprep.subr.mxu0 0.0
        %2355 = vmatpush1.xpose.msra.mxu0 0.0
        %2356 = vmatprep.subr.mxu0 0.0
        %2357 = vmatpush1.xpose.msra.mxu0 0.0
        %2358 = vmatprep.subr.mxu0 0.0
        %2359 = vmatpush1.xpose.msra.mxu0 0.0
        %2360 = vmatprep.subr.mxu0 0.0
        %2361 = vmatpush1.xpose.msra.mxu0 0.0
        %2362 = vmatprep.subr.mxu0 0.0
        %2363 = vmatpush1.xpose.msra.mxu0 0.0
        %2364 = vmatprep.subr.mxu0 0.0
        %2365 = vmatpush1.xpose.msra.mxu0 0.0
        %2366 = vmatprep.subr.mxu0 0.0
        %2367 = vmatpush1.xpose.msra.mxu0 0.0
        %2368 = vmatprep.subr.mxu0 0.0
        %2369 = vmatpush1.xpose.msra.mxu0 0.0
        %2370 = vmatprep.subr.mxu0 0.0
        %2371 = vmatpush1.xpose.msra.mxu0 0.0
        %2372 = vmatprep.subr.mxu0 0.0
        %2373 = vmatpush1.xpose.msra.mxu0 0.0
        %2374 = vmatprep.subr.mxu0 0.0
        %2375 = vmatpush1.xpose.msra.mxu0 0.0
        %2376 = vmatprep.subr.mxu0 0.0
        %2377 = vmatpush1.xpose.msra.mxu0 0.0
        %2378 = vmatprep.mubr.f32.mxu0 0.0
        %2379 = vmatmul.mubr.f32.gmra.mrb[0].mxu0 %v2282
        %v2380 = vpop.f32.mrb[0].mxu0
        %v2381 = vadd.f32 0.0, %v2380
        %v2382 = vpop.f32.mrb[0].mxu0
        %2383 = vmatprep.mubr.f32.mxu0 0.0
        %2384 = vmatmul.mubr.f32.gmra.mrb[0].mxu0 %v2284
        %v2385 = vpop.f32.mrb[0].mxu0
        %v2386 = vadd.f32 0.0, %v2385
        %v2387 = vpop.f32.mrb[0].mxu0
        %2388 = vmatprep.mubr.f32.mxu0 0.0
        %2389 = vmatmul.mubr.f32.gmra.mrb[0].mxu0 %v2286
        %v2390 = vpop.f32.mrb[0].mxu0
        %v2391 = vadd.f32 0.0, %v2390
        %v2392 = vpop.f32.mrb[0].mxu0
        %2393 = vmatprep.mubr.f32.mxu0 0.0
        %2394 = vmatmul.mubr.f32.gmra.mrb[0].mxu0 %v2288
        %v2395 = vpop.f32.mrb[0].mxu0
        %v2396 = vadd.f32 0.0, %v2395
        %v2397 = vpop.f32.mrb[0].mxu0
        %2398 = vmatprep.mubr.f32.mxu0 0.0
        %2399 = vmatmul.mubr.f32.gmra.mrb[0].mxu0 %v2290
        %v2400 = vpop.f32.mrb[0].mxu0
        %v2401 = vadd.f32 0.0, %v2400
        %v2402 = vpop.f32.mrb[0].mxu0
        %2403 = vmatprep.mubr.f32.mxu0 0.0
        %2404 = vmatmul.mubr.f32.gmra.mrb[0].mxu0 %v2292
        %v2405 = vpop.f32.mrb[0].mxu0
        %v2406 = vadd.f32 0.0, %v2405
        %v2407 = vpop.f32.mrb[0].mxu0
        %2408 = vmatprep.mubr.f32.mxu0 0.0
        %2409 = vmatmul.mubr.f32.gmra.mrb[0].mxu0 %v2294
        %v2410 = vpop.f32.mrb[0].mxu0
        %v2411 = vadd.f32 0.0, %v2410
        %v2412 = vpop.f32.mrb[0].mxu0
        %2413 = vmatprep.mubr.f32.mxu0 0.0
        %2414 = vmatmul.mubr.f32.gmra.mrb[0].mxu0 %v2296
        %v2415 = vpop.f32.mrb[0].mxu0
        %v2416 = vadd.f32 0.0, %v2415
        %v2417 = vpop.f32.mrb[0].mxu0
        %2418 = vdwg.mxu0
        %v2419 = vmul.f32 %v2381, 0.35355338
        %v2420 = vmul.f32 %v2386, 0.35355338
        %v2421 = vmul.f32 %v2391, 0.35355338
        %v2422 = vmul.f32 %v2396, 0.35355338
        %v2423 = vmul.f32 %v2401, 0.35355338
        %v2424 = vmul.f32 %v2406, 0.35355338
        %v2425 = vmul.f32 %v2411, 0.35355338
        %v2426 = vmul.f32 %v2416, 0.35355338
        %v2427 = vadd.f32 %v2419, %v623
        %v2428 = vadd.f32 %v2420, %v624
        %v2429 = vadd.f32 %v2421, %v625
        %v2430 = vadd.f32 %v2422, %v626
        %v2431 = vadd.f32 %v2423, %v627
        %v2432 = vadd.f32 %v2424, %v628
        %v2433 = vadd.f32 %v2425, %v629
        %v2434 = vadd.f32 %v2426, %v630
        %v2435 = vsel %vm1082, %v2427, -inf
        %2436 = vmax.xlane.f32.xlu0 %v2435
        %v2437 = vpop.xlane.xlu0 %2436
        %v2438 = vsel %vm1082, %v2428, -inf
        %2439 = vmax.xlane.f32.xlu0 %v2438
        %v2440 = vpop.xlane.xlu0 %2439
        %v2441 = vsel %vm1082, %v2429, -inf
        %2442 = vmax.xlane.f32.xlu0 %v2441
        %v2443 = vpop.xlane.xlu0 %2442
        %v2444 = vsel %vm1082, %v2430, -inf
        %2445 = vmax.xlane.f32.xlu0 %v2444
        %v2446 = vpop.xlane.xlu0 %2445
        %v2447 = vsel %vm1082, %v2431, -inf
        %2448 = vmax.xlane.f32.xlu0 %v2447
        %v2449 = vpop.xlane.xlu0 %2448
        %v2450 = vsel %vm1082, %v2432, -inf
        %2451 = vmax.xlane.f32.xlu0 %v2450
        %v2452 = vpop.xlane.xlu0 %2451
        %v2453 = vsel %vm1082, %v2433, -inf
        %2454 = vmax.xlane.f32.xlu0 %v2453
        %v2455 = vpop.xlane.xlu0 %2454
        %v2456 = vsel %vm1082, %v2434, -inf
        %2457 = vmax.xlane.f32.xlu0 %v2456
        %v2458 = vpop.xlane.xlu0 %2457
        %v2459 = vsub.f32 %v2427, %v2437
        %v2460 = vsub.f32 %v2428, %v2440
        %v2461 = vsub.f32 %v2429, %v2443
        %v2462 = vsub.f32 %v2430, %v2446
        %v2463 = vsub.f32 %v2431, %v2449
        %v2464 = vsub.f32 %v2432, %v2452
        %v2465 = vsub.f32 %v2433, %v2455
        %v2466 = vsub.f32 %v2434, %v2458
        %v2467 = vmul.f32 %v2459, 1.442695
        %v2468 = vpow.pop %v2467
        %v2469 = vmul.f32 %v2460, 1.442695
        %v2470 = vpow.pop %v2469
        %v2471 = vmul.f32 %v2461, 1.442695
        %v2472 = vpow.pop %v2471
        %v2473 = vmul.f32 %v2462, 1.442695
        %v2474 = vpow.pop %v2473
        %v2475 = vmul.f32 %v2463, 1.442695
        %v2476 = vpow.pop %v2475
        %v2477 = vmul.f32 %v2464, 1.442695
        %v2478 = vpow.pop %v2477
        %v2479 = vmul.f32 %v2465, 1.442695
        %v2480 = vpow.pop %v2479
        %v2481 = vmul.f32 %v2466, 1.442695
        %v2482 = vpow.pop %v2481
        %v2483 = vsel %vm1082, %v2468, 0.0
        %2484 = vadd.xlane.f32.xlu0 %v2483
        %v2485 = vpop.xlane.xlu0 %2484
        %v2486 = vsel %vm1082, %v2470, 0.0
        %2487 = vadd.xlane.f32.xlu0 %v2486
        %v2488 = vpop.xlane.xlu0 %2487
        %v2489 = vsel %vm1082, %v2472, 0.0
        %2490 = vadd.xlane.f32.xlu0 %v2489
        %v2491 = vpop.xlane.xlu0 %2490
        %v2492 = vsel %vm1082, %v2474, 0.0
        %2493 = vadd.xlane.f32.xlu0 %v2492
        %v2494 = vpop.xlane.xlu0 %2493
        %v2495 = vsel %vm1082, %v2476, 0.0
        %2496 = vadd.xlane.f32.xlu0 %v2495
        %v2497 = vpop.xlane.xlu0 %2496
        %v2498 = vsel %vm1082, %v2478, 0.0
        %2499 = vadd.xlane.f32.xlu0 %v2498
        %v2500 = vpop.xlane.xlu0 %2499
        %v2501 = vsel %vm1082, %v2480, 0.0
        %2502 = vadd.xlane.f32.xlu0 %v2501
        %v2503 = vpop.xlane.xlu0 %2502
        %v2504 = vsel %vm1082, %v2482, 0.0
        %2505 = vadd.xlane.f32.xlu0 %v2504
        %v2506 = vpop.xlane.xlu0 %2505
        %v2507 = vrcp.pop %v2485
        %v2508 = vrcp.pop %v2488
        %v2509 = vrcp.pop %v2491
        %v2510 = vrcp.pop %v2494
        %v2511 = vrcp.pop %v2497
        %v2512 = vrcp.pop %v2500
        %v2513 = vrcp.pop %v2503
        %v2514 = vrcp.pop %v2506
        %v2515 = vmul.f32 %v2468, %v2507
        %v2516 = vmul.f32 %v2470, %v2508
        %v2517 = vmul.f32 %v2472, %v2509
        %v2518 = vmul.f32 %v2474, %v2510
        %v2519 = vmul.f32 %v2476, %v2511
        %v2520 = vmul.f32 %v2478, %v2512
        %v2521 = vmul.f32 %v2480, %v2513
        %v2522 = vmul.f32 %v2482, %v2514
        %2523 = vrot.lane.b32.xlu0 %v882, 104
        %v2524 = vpop.permute.xlu0 %2523
        %2525 = vrot.lane.b32.xlu0 %v885, 104
        %v2526 = vpop.permute.xlu0 %2525
        %2527 = vrot.lane.b32.xlu0 %v890, 104
        %v2528 = vpop.permute.xlu0 %2527
        %2529 = vrot.lane.b32.xlu0 %v893, 104
        %v2530 = vpop.permute.xlu0 %2529
        %2531 = vrot.lane.b32.xlu0 %v898, 104
        %v2532 = vpop.permute.xlu0 %2531
        %2533 = vrot.lane.b32.xlu0 %v901, 104
        %v2534 = vpop.permute.xlu0 %2533
        %2535 = vrot.lane.b32.xlu0 %v906, 104
        %v2536 = vpop.permute.xlu0 %2535
        %2537 = vrot.lane.b32.xlu0 %v909, 104
        %v2538 = vpop.permute.xlu0 %2537
        %v2548 = vsel %vm1082, %v2515, 0
        %v2551 = vsel %vm1082, %v2516, 0
        %v2554 = vsel %vm1082, %v2517, 0
        %v2557 = vsel %vm1082, %v2518, 0
        %v2560 = vsel %vm1082, %v2519, 0
        %v2563 = vsel %vm1082, %v2520, 0
        %v2566 = vsel %vm1082, %v2521, 0
        %v2569 = vsel %vm1082, %v2522, 0
        %2571 = vmatprep.subr.mxu0 0.0
        %2572 = vmatpush1.msra.mxu0 %v2524
        %2573 = vmatprep.subr.mxu0 0.0
        %2574 = vmatpush1.msra.mxu0 %v2526
        %2575 = vmatprep.subr.mxu0 0.0
        %2576 = vmatpush1.msra.mxu0 %v2528
        %2577 = vmatprep.subr.mxu0 0.0
        %2578 = vmatpush1.msra.mxu0 %v2530
        %2579 = vmatprep.subr.mxu0 0.0
        %2580 = vmatpush1.msra.mxu0 %v2532
        %2581 = vmatprep.subr.mxu0 0.0
        %2582 = vmatpush1.msra.mxu0 %v2534
        %2583 = vmatprep.subr.mxu0 0.0
        %2584 = vmatpush1.msra.mxu0 %v2536
        %2585 = vmatprep.subr.mxu0 0.0
        %2586 = vmatpush1.msra.mxu0 %v2538
        %2587 = vmatprep.subr.mxu0 0.0
        %2588 = vmatpush1.msra.mxu0 0.0
        %2589 = vmatprep.subr.mxu0 0.0
        %2590 = vmatpush1.msra.mxu0 0.0
        %2591 = vmatprep.subr.mxu0 0.0
        %2592 = vmatpush1.msra.mxu0 0.0
        %2593 = vmatprep.subr.mxu0 0.0
        %2594 = vmatpush1.msra.mxu0 0.0
        %2595 = vmatprep.subr.mxu0 0.0
        %2596 = vmatpush1.msra.mxu0 0.0
        %2597 = vmatprep.subr.mxu0 0.0
        %2598 = vmatpush1.msra.mxu0 0.0
        %2599 = vmatprep.subr.mxu0 0.0
        %2600 = vmatpush1.msra.mxu0 0.0
        %2601 = vmatprep.subr.mxu0 0.0
        %2602 = vmatpush1.msra.mxu0 0.0
        %2603 = vmatprep.subr.mxu0 0.0
        %2604 = vmatpush1.msra.mxu0 0.0
        %2605 = vmatprep.subr.mxu0 0.0
        %2606 = vmatpush1.msra.mxu0 0.0
        %2607 = vmatprep.subr.mxu0 0.0
        %2608 = vmatpush1.msra.mxu0 0.0
        %2609 = vmatprep.subr.mxu0 0.0
        %2610 = vmatpush1.msra.mxu0 0.0
        %2611 = vmatprep.subr.mxu0 0.0
        %2612 = vmatpush1.msra.mxu0 0.0
        %2613 = vmatprep.subr.mxu0 0.0
        %2614 = vmatpush1.msra.mxu0 0.0
        %2615 = vmatprep.subr.mxu0 0.0
        %2616 = vmatpush1.msra.mxu0 0.0
        %2617 = vmatprep.subr.mxu0 0.0
        %2618 = vmatpush1.msra.mxu0 0.0
        %2619 = vmatprep.subr.mxu0 0.0
        %2620 = vmatpush1.msra.mxu0 0.0
        %2621 = vmatprep.subr.mxu0 0.0
        %2622 = vmatpush1.msra.mxu0 0.0
        %2623 = vmatprep.subr.mxu0 0.0
        %2624 = vmatpush1.msra.mxu0 0.0
        %2625 = vmatprep.subr.mxu0 0.0
        %2626 = vmatpush1.msra.mxu0 0.0
        %2627 = vmatprep.subr.mxu0 0.0
        %2628 = vmatpush1.msra.mxu0 0.0
        %2629 = vmatprep.subr.mxu0 0.0
        %2630 = vmatpush1.msra.mxu0 0.0
        %2631 = vmatprep.subr.mxu0 0.0
        %2632 = vmatpush1.msra.mxu0 0.0
        %2633 = vmatprep.subr.mxu0 0.0
        %2634 = vmatpush1.msra.mxu0 0.0
        %2635 = vmatprep.mubr.f32.mxu0 0.0
        %2636 = vmatmul.mubr.f32.gmra.mrb[0].mxu0 %v2548
        %v2637 = vpop.f32.mrb[0].mxu0
        %v2638 = vadd.f32 0.0, %v2637
        %v2639 = vpop.f32.mrb[0].mxu0
        %2640 = vmatprep.mubr.f32.mxu0 0.0
        %2641 = vmatmul.mubr.f32.gmra.mrb[0].mxu0 %v2551
        %v2642 = vpop.f32.mrb[0].mxu0
        %v2643 = vadd.f32 0.0, %v2642
        %v2644 = vpop.f32.mrb[0].mxu0
        %2645 = vmatprep.mubr.f32.mxu0 0.0
        %2646 = vmatmul.mubr.f32.gmra.mrb[0].mxu0 %v2554
        %v2647 = vpop.f32.mrb[0].mxu0
        %v2648 = vadd.f32 0.0, %v2647
        %v2649 = vpop.f32.mrb[0].mxu0
        %2650 = vmatprep.mubr.f32.mxu0 0.0
        %2651 = vmatmul.mubr.f32.gmra.mrb[0].mxu0 %v2557
        %v2652 = vpop.f32.mrb[0].mxu0
        %v2653 = vadd.f32 0.0, %v2652
        %v2654 = vpop.f32.mrb[0].mxu0
        %2655 = vmatprep.mubr.f32.mxu0 0.0
        %2656 = vmatmul.mubr.f32.gmra.mrb[0].mxu0 %v2560
        %v2657 = vpop.f32.mrb[0].mxu0
        %v2658 = vadd.f32 0.0, %v2657
        %v2659 = vpop.f32.mrb[0].mxu0
        %2660 = vmatprep.mubr.f32.mxu0 0.0
        %2661 = vmatmul.mubr.f32.gmra.mrb[0].mxu0 %v2563
        %v2662 = vpop.f32.mrb[0].mxu0
        %v2663 = vadd.f32 0.0, %v2662
        %v2664 = vpop.f32.mrb[0].mxu0
        %2665 = vmatprep.mubr.f32.mxu0 0.0
        %2666 = vmatmul.mubr.f32.gmra.mrb[0].mxu0 %v2566
        %v2667 = vpop.f32.mrb[0].mxu0
        %v2668 = vadd.f32 0.0, %v2667
        %v2669 = vpop.f32.mrb[0].mxu0
        %2670 = vmatprep.mubr.f32.mxu0 0.0
        %2671 = vmatmul.mubr.f32.gmra.mrb[0].mxu0 %v2569
        %v2672 = vpop.f32.mrb[0].mxu0
        %v2673 = vadd.f32 0.0, %v2672
        %v2674 = vpop.f32.mrb[0].mxu0
        %2675 = vdwg.mxu0
        %2684 = vrot.lane.b32.xlu0 %v2638, 24
        %v2685 = vpop.permute.xlu0 %2684
        %2686 = vrot.lane.b32.xlu0 %v2643, 24
        %v2687 = vpop.permute.xlu0 %2686
        %2688 = vrot.lane.b32.xlu0 %v2648, 24
        %v2689 = vpop.permute.xlu0 %2688
        %2690 = vrot.lane.b32.xlu0 %v2653, 24
        %v2691 = vpop.permute.xlu0 %2690
        %2692 = vrot.lane.b32.xlu0 %v2658, 24
        %v2693 = vpop.permute.xlu0 %2692
        %2694 = vrot.lane.b32.xlu0 %v2663, 24
        %v2695 = vpop.permute.xlu0 %2694
        %2696 = vrot.lane.b32.xlu0 %v2668, 24
        %v2697 = vpop.permute.xlu0 %2696
        %2698 = vrot.lane.b32.xlu0 %v2673, 24
        %v2699 = vpop.permute.xlu0 %2698
        %vm2708 = vcmask 261312
        %2709 = vst.msk [vmem:[#allocation2] sm:$0xff] %vm2708, %v2685
        %2710 = vst.msk [vmem:[#allocation2 + $0x8] sm:$0xff] %vm2708, %v2687
        %2711 = vst.msk [vmem:[#allocation2 + $0x10] sm:$0xff] %vm2708, %v2689
        %2712 = vst.msk [vmem:[#allocation2 + $0x18] sm:$0xff] %vm2708, %v2691
        %2713 = vst.msk [vmem:[#allocation2 + $0x20] sm:$0xff] %vm2708, %v2693
        %2714 = vst.msk [vmem:[#allocation2 + $0x28] sm:$0xff] %vm2708, %v2695
        %2715 = vst.msk [vmem:[#allocation2 + $0x30] sm:$0xff] %vm2708, %v2697
        %2716 = vst.msk [vmem:[#allocation2 + $0x38] sm:$0xff] %vm2708, %v2699
        %v2717 = vld [vmem:[#allocation2] sm:$0xff]
        %v2718 = vld [vmem:[#allocation2 + $0x8] sm:$0xff]
        %v2719 = vld [vmem:[#allocation2 + $0x10] sm:$0xff]
        %v2720 = vld [vmem:[#allocation2 + $0x18] sm:$0xff]
        %v2721 = vld [vmem:[#allocation2 + $0x20] sm:$0xff]
        %v2722 = vld [vmem:[#allocation2 + $0x28] sm:$0xff]
        %v2723 = vld [vmem:[#allocation2 + $0x30] sm:$0xff]
        %v2724 = vld [vmem:[#allocation2 + $0x38] sm:$0xff]
        %v2725 = vpack.c.bf16 %v2718, %v2717
        %v2726 = vpack.c.bf16 %v2720, %v2719
        %v2727 = vpack.c.bf16 %v2722, %v2721
        %v2728 = vpack.c.bf16 %v2724, %v2723
        %v2729 = vld [vmem:[%s8] sm:$0xf]
        %v2730 = vld [vmem:[%s8 + $0x4] sm:$0xf]
        %v2731 = vld [vmem:[%s8 + $0x8] sm:$0xf]
        %v2732 = vld [vmem:[%s8 + $0xc] sm:$0xf]
        %v2733 = vld [vmem:[%s9] sm:$0x1]
        %v2735 = vlaneseq
        %v2736 = vshrl.u32 %v2735, 7
        %v2737 = vsub.s32 0, %v2736
        %v2738 = vrot.slane %v2733, %v2737
        %v2744 = vunpack.c.l.b16 %v2729
        %v2745 = vunpack.c.l.b16 %v2730
        %v2746 = vunpack.c.l.b16 %v2731
        %v2747 = vunpack.c.l.b16 %v2732
        %v2748 = vpack.c.b16 %v2745, %v2744
        %v2749 = vpack.c.b16 %v2747, %v2746
        %v2753 = vsel %vm658, %v2725, 0
        %v2756 = vsel %vm658, %v2726, 0
        %v2759 = vsel %vm658, %v2727, 0
        %v2762 = vsel %vm658, %v2728, 0
        %2764 = vmatprep.subr.bf16.mxu0 0
        %2765 = vmatpush1.bf16.msra.mxu0 %v2748
        %2766 = vmatprep.subr.bf16.mxu0 0
        %2767 = vmatpush1.bf16.msra.mxu0 %v2749
        %2768 = vmatprep.subr.bf16.mxu0 0
        %2769 = vmatpush1.bf16.msra.mxu0 0
        %2770 = vmatprep.subr.bf16.mxu0 0
        %2771 = vmatpush1.bf16.msra.mxu0 0
        %2772 = vmatprep.subr.bf16.mxu0 0
        %2773 = vmatpush1.bf16.msra.mxu0 0
        %2774 = vmatprep.subr.bf16.mxu0 0
        %2775 = vmatpush1.bf16.msra.mxu0 0
        %2776 = vmatprep.subr.bf16.mxu0 0
        %2777 = vmatpush1.bf16.msra.mxu0 0
        %2778 = vmatprep.subr.bf16.mxu0 0
        %2779 = vmatpush1.bf16.msra.mxu0 0
        %2780 = vmatprep.subr.bf16.mxu0 0
        %2781 = vmatpush1.bf16.msra.mxu0 0
        %2782 = vmatprep.subr.bf16.mxu0 0
        %2783 = vmatpush1.bf16.msra.mxu0 0
        %2784 = vmatprep.subr.bf16.mxu0 0
        %2785 = vmatpush1.bf16.msra.mxu0 0
        %2786 = vmatprep.subr.bf16.mxu0 0
        %2787 = vmatpush1.bf16.msra.mxu0 0
        %2788 = vmatprep.subr.bf16.mxu0 0
        %2789 = vmatpush1.bf16.msra.mxu0 0
        %2790 = vmatprep.subr.bf16.mxu0 0
        %2791 = vmatpush1.bf16.msra.mxu0 0
        %2792 = vmatprep.subr.bf16.mxu0 0
        %2793 = vmatpush1.bf16.msra.mxu0 0
        %2794 = vmatprep.subr.bf16.mxu0 0
        %2795 = vmatpush1.bf16.msra.mxu0 0
        %2796 = vmatprep.mubr.bf16.mxu0 0
        %2797 = vmatmul.mubr.bf16.gmra.mrb[0].mxu0 %v2753
        %v2798 = vpop.f32.mrb[0].mxu0
        %v2799 = vadd.f32 %v2738, %v2798
        %v2800 = vpop.f32.mrb[0].mxu0
        %v2801 = vpop.f32.mrb[0].mxu0
        %v2802 = vadd.f32 %v2738, %v2801
        %v2803 = vpop.f32.mrb[0].mxu0
        %2804 = vmatprep.mubr.bf16.mxu0 0
        %2805 = vmatmul.mubr.bf16.gmra.mrb[0].mxu0 %v2756
        %v2806 = vpop.f32.mrb[0].mxu0
        %v2807 = vadd.f32 %v2738, %v2806
        %v2808 = vpop.f32.mrb[0].mxu0
        %v2809 = vpop.f32.mrb[0].mxu0
        %v2810 = vadd.f32 %v2738, %v2809
        %v2811 = vpop.f32.mrb[0].mxu0
        %2812 = vmatprep.mubr.bf16.mxu0 0
        %2813 = vmatmul.mubr.bf16.gmra.mrb[0].mxu0 %v2759
        %v2814 = vpop.f32.mrb[0].mxu0
        %v2815 = vadd.f32 %v2738, %v2814
        %v2816 = vpop.f32.mrb[0].mxu0
        %v2817 = vpop.f32.mrb[0].mxu0
        %v2818 = vadd.f32 %v2738, %v2817
        %v2819 = vpop.f32.mrb[0].mxu0
        %2820 = vmatprep.mubr.bf16.mxu0 0
        %2821 = vmatmul.mubr.bf16.gmra.mrb[0].mxu0 %v2762
        %v2822 = vpop.f32.mrb[0].mxu0
        %v2823 = vadd.f32 %v2738, %v2822
        %v2824 = vpop.f32.mrb[0].mxu0
        %v2825 = vpop.f32.mrb[0].mxu0
        %v2826 = vadd.f32 %v2738, %v2825
        %v2827 = vpop.f32.mrb[0].mxu0
        %2828 = vdwg.mxu0
        %v2829 = vadd.f32 %v615, %v2799
        %v2830 = vadd.f32 %v616, %v2802
        %v2831 = vadd.f32 %v617, %v2807
        %v2832 = vadd.f32 %v618, %v2810
        %v2833 = vadd.f32 %v619, %v2815
        %v2834 = vadd.f32 %v620, %v2818
        %v2835 = vadd.f32 %v621, %v2823
        %v2836 = vadd.f32 %v622, %v2826
        %v2837 = vsel %vm658, %v2829, 0.0
        %2838 = vadd.xlane.f32.xlu0 %v2837
        %v2839 = vpop.xlane.xlu0 %2838
        %v2840 = vsel %vm658, %v2830, 0.0
        %2841 = vadd.xlane.f32.xlu0 %v2840
        %v2842 = vpop.xlane.xlu0 %2841
        %v2843 = vsel %vm658, %v2831, 0.0
        %2844 = vadd.xlane.f32.xlu0 %v2843
        %v2845 = vpop.xlane.xlu0 %2844
        %v2846 = vsel %vm658, %v2832, 0.0
        %2847 = vadd.xlane.f32.xlu0 %v2846
        %v2848 = vpop.xlane.xlu0 %2847
        %v2849 = vsel %vm658, %v2833, 0.0
        %2850 = vadd.xlane.f32.xlu0 %v2849
        %v2851 = vpop.xlane.xlu0 %2850
        %v2852 = vsel %vm658, %v2834, 0.0
        %2853 = vadd.xlane.f32.xlu0 %v2852
        %v2854 = vpop.xlane.xlu0 %2853
        %v2855 = vsel %vm658, %v2835, 0.0
        %2856 = vadd.xlane.f32.xlu0 %v2855
        %v2857 = vpop.xlane.xlu0 %2856
        %v2858 = vsel %vm658, %v2836, 0.0
        %2859 = vadd.xlane.f32.xlu0 %v2858
        %v2860 = vpop.xlane.xlu0 %2859
        %v2861 = vrcp.pop 32.0
        %v2862 = vmul.f32 %v2839, %v2861
        %v2863 = vmul.f32 %v2842, %v2861
        %v2864 = vmul.f32 %v2845, %v2861
        %v2865 = vmul.f32 %v2848, %v2861
        %v2866 = vmul.f32 %v2851, %v2861
        %v2867 = vmul.f32 %v2854, %v2861
        %v2868 = vmul.f32 %v2857, %v2861
        %v2869 = vmul.f32 %v2860, %v2861
        %v2870 = vsub.f32 %v2829, %v2862
        %v2871 = vsub.f32 %v2830, %v2863
        %v2872 = vsub.f32 %v2831, %v2864
        %v2873 = vsub.f32 %v2832, %v2865
        %v2874 = vsub.f32 %v2833, %v2866
        %v2875 = vsub.f32 %v2834, %v2867
        %v2876 = vsub.f32 %v2835, %v2868
        %v2877 = vsub.f32 %v2836, %v2869
        %v2878 = vmul.f32 %v2870, %v2870
        %v2879 = vmul.f32 %v2871, %v2871
        %v2880 = vmul.f32 %v2872, %v2872
        %v2881 = vmul.f32 %v2873, %v2873
        %v2882 = vmul.f32 %v2874, %v2874
        %v2883 = vmul.f32 %v2875, %v2875
        %v2884 = vmul.f32 %v2876, %v2876
        %v2885 = vmul.f32 %v2877, %v2877
        %v2886 = vsel %vm658, %v2878, 0.0
        %2887 = vadd.xlane.f32.xlu0 %v2886
        %v2888 = vpop.xlane.xlu0 %2887
        %v2889 = vsel %vm658, %v2879, 0.0
        %2890 = vadd.xlane.f32.xlu0 %v2889
        %v2891 = vpop.xlane.xlu0 %2890
        %v2892 = vsel %vm658, %v2880, 0.0
        %2893 = vadd.xlane.f32.xlu0 %v2892
        %v2894 = vpop.xlane.xlu0 %2893
        %v2895 = vsel %vm658, %v2881, 0.0
        %2896 = vadd.xlane.f32.xlu0 %v2895
        %v2897 = vpop.xlane.xlu0 %2896
        %v2898 = vsel %vm658, %v2882, 0.0
        %2899 = vadd.xlane.f32.xlu0 %v2898
        %v2900 = vpop.xlane.xlu0 %2899
        %v2901 = vsel %vm658, %v2883, 0.0
        %2902 = vadd.xlane.f32.xlu0 %v2901
        %v2903 = vpop.xlane.xlu0 %2902
        %v2904 = vsel %vm658, %v2884, 0.0
        %2905 = vadd.xlane.f32.xlu0 %v2904
        %v2906 = vpop.xlane.xlu0 %2905
        %v2907 = vsel %vm658, %v2885, 0.0
        %2908 = vadd.xlane.f32.xlu0 %v2907
        %v2909 = vpop.xlane.xlu0 %2908
        %v2910 = vmul.f32 %v2888, %v2861
        %v2911 = vmul.f32 %v2891, %v2861
        %v2912 = vmul.f32 %v2894, %v2861
        %v2913 = vmul.f32 %v2897, %v2861
        %v2914 = vmul.f32 %v2900, %v2861
        %v2915 = vmul.f32 %v2903, %v2861
        %v2916 = vmul.f32 %v2906, %v2861
        %v2917 = vmul.f32 %v2909, %v2861
        %v2918 = vadd.f32 %v2910, 1e-05
        %v2919 = vadd.f32 %v2911, 1e-05
        %v2920 = vadd.f32 %v2912, 1e-05
        %v2921 = vadd.f32 %v2913, 1e-05
        %v2922 = vadd.f32 %v2914, 1e-05
        %v2923 = vadd.f32 %v2915, 1e-05
        %v2924 = vadd.f32 %v2916, 1e-05
        %v2925 = vadd.f32 %v2917, 1e-05
        %v2926 = vrsqrt.pop %v2918
        %v2927 = vrsqrt.pop %v2919
        %v2928 = vrsqrt.pop %v2920
        %v2929 = vrsqrt.pop %v2921
        %v2930 = vrsqrt.pop %v2922
        %v2931 = vrsqrt.pop %v2923
        %v2932 = vrsqrt.pop %v2924
        %v2933 = vrsqrt.pop %v2925
        %v2934 = vmul.f32 %v2870, %v2926
        %v2935 = vmul.f32 %v2871, %v2927
        %v2936 = vmul.f32 %v2872, %v2928
        %v2937 = vmul.f32 %v2873, %v2929
        %v2938 = vmul.f32 %v2874, %v2930
        %v2939 = vmul.f32 %v2875, %v2931
        %v2940 = vmul.f32 %v2876, %v2932
        %v2941 = vmul.f32 %v2877, %v2933
        %v2942 = vld [vmem:[%s14] sm:$0x1]
        %v2944 = vlaneseq
        %v2945 = vshrl.u32 %v2944, 7
        %v2946 = vsub.s32 0, %v2945
        %v2947 = vrot.slane %v2942, %v2946
        %v2949 = vmul.f32 %v2934, %v2947
        %v2950 = vmul.f32 %v2935, %v2947
        %v2951 = vmul.f32 %v2936, %v2947
        %v2952 = vmul.f32 %v2937, %v2947
        %v2953 = vmul.f32 %v2938, %v2947
        %v2954 = vmul.f32 %v2939, %v2947
        %v2955 = vmul.f32 %v2940, %v2947
        %v2956 = vmul.f32 %v2941, %v2947
        %v2957 = vld [vmem:[%s15] sm:$0x1]
        %v2959 = vlaneseq
        %v2960 = vshrl.u32 %v2959, 7
        %v2961 = vsub.s32 0, %v2960
        %v2962 = vrot.slane %v2957, %v2961
        %v2964 = vadd.f32 %v2949, %v2962
        %v2965 = vadd.f32 %v2950, %v2962
        %v2966 = vadd.f32 %v2951, %v2962
        %v2967 = vadd.f32 %v2952, %v2962
        %v2968 = vadd.f32 %v2953, %v2962
        %v2969 = vadd.f32 %v2954, %v2962
        %v2970 = vadd.f32 %v2955, %v2962
        %v2971 = vadd.f32 %v2956, %v2962
        %v2972 = vpack.c.bf16 %v2965, %v2964
        %v2973 = vpack.c.bf16 %v2967, %v2966
        %v2974 = vpack.c.bf16 %v2969, %v2968
        %v2975 = vpack.c.bf16 %v2971, %v2970
        %v2976 = vld [vmem:[#allocation3] sm:$0xf]
        %v2977 = vld [vmem:[#allocation3 + $0x4] sm:$0xf]
        %v2978 = vld [vmem:[#allocation3 + $0x8] sm:$0xf]
        %v2979 = vld [vmem:[#allocation3 + $0xc] sm:$0xf]
        %v2980 = vld [vmem:[%s11] sm:$0x1]
        %v2982 = vlaneseq
        %v2983 = vshrl.u32 %v2982, 7
        %v2984 = vsub.s32 0, %v2983
        %v2985 = vrot.slane %v2980, %v2984
        %v2991 = vunpack.c.l.b16 %v2976
        %v2992 = vunpack.c.l.b16 %v2977
        %v2993 = vunpack.c.l.b16 %v2978
        %v2994 = vunpack.c.l.b16 %v2979
        %v2995 = vpack.c.b16 %v2992, %v2991
        %v2996 = vpack.c.b16 %v2994, %v2993
        %v3000 = vsel %vm658, %v2972, 0
        %v3003 = vsel %vm658, %v2973, 0
        %v3006 = vsel %vm658, %v2974, 0
        %v3009 = vsel %vm658, %v2975, 0
        %3011 = vmatprep.subr.bf16.mxu0 0
        %3012 = vmatpush1.bf16.msra.mxu0 %v2995
        %3013 = vmatprep.subr.bf16.mxu0 0
        %3014 = vmatpush1.bf16.msra.mxu0 %v2996
        %3015 = vmatprep.subr.bf16.mxu0 0
        %3016 = vmatpush1.bf16.msra.mxu0 0
        %3017 = vmatprep.subr.bf16.mxu0 0
        %3018 = vmatpush1.bf16.msra.mxu0 0
        %3019 = vmatprep.subr.bf16.mxu0 0
        %3020 = vmatpush1.bf16.msra.mxu0 0
        %3021 = vmatprep.subr.bf16.mxu0 0
        %3022 = vmatpush1.bf16.msra.mxu0 0
        %3023 = vmatprep.subr.bf16.mxu0 0
        %3024 = vmatpush1.bf16.msra.mxu0 0
        %3025 = vmatprep.subr.bf16.mxu0 0
        %3026 = vmatpush1.bf16.msra.mxu0 0
        %3027 = vmatprep.subr.bf16.mxu0 0
        %3028 = vmatpush1.bf16.msra.mxu0 0
        %3029 = vmatprep.subr.bf16.mxu0 0
        %3030 = vmatpush1.bf16.msra.mxu0 0
        %3031 = vmatprep.subr.bf16.mxu0 0
        %3032 = vmatpush1.bf16.msra.mxu0 0
        %3033 = vmatprep.subr.bf16.mxu0 0
        %3034 = vmatpush1.bf16.msra.mxu0 0
        %3035 = vmatprep.subr.bf16.mxu0 0
        %3036 = vmatpush1.bf16.msra.mxu0 0
        %3037 = vmatprep.subr.bf16.mxu0 0
        %3038 = vmatpush1.bf16.msra.mxu0 0
        %3039 = vmatprep.subr.bf16.mxu0 0
        %3040 = vmatpush1.bf16.msra.mxu0 0
        %3041 = vmatprep.subr.bf16.mxu0 0
        %3042 = vmatpush1.bf16.msra.mxu0 0
        %3043 = vmatprep.mubr.bf16.mxu0 0
        %3044 = vmatmul.mubr.bf16.gmra.mrb[0].mxu0 %v3000
        %v3045 = vpop.f32.mrb[0].mxu0
        %v3046 = vadd.f32 %v2985, %v3045
        %v3047 = vpop.f32.mrb[0].mxu0
        %v3048 = vpop.f32.mrb[0].mxu0
        %v3049 = vadd.f32 %v2985, %v3048
        %v3050 = vpop.f32.mrb[0].mxu0
        %3051 = vmatprep.mubr.bf16.mxu0 0
        %3052 = vmatmul.mubr.bf16.gmra.mrb[0].mxu0 %v3003
        %v3053 = vpop.f32.mrb[0].mxu0
        %v3054 = vadd.f32 %v2985, %v3053
        %v3055 = vpop.f32.mrb[0].mxu0
        %v3056 = vpop.f32.mrb[0].mxu0
        %v3057 = vadd.f32 %v2985, %v3056
        %v3058 = vpop.f32.mrb[0].mxu0
        %3059 = vmatprep.mubr.bf16.mxu0 0
        %3060 = vmatmul.mubr.bf16.gmra.mrb[0].mxu0 %v3006
        %v3061 = vpop.f32.mrb[0].mxu0
        %v3062 = vadd.f32 %v2985, %v3061
        %v3063 = vpop.f32.mrb[0].mxu0
        %v3064 = vpop.f32.mrb[0].mxu0
        %v3065 = vadd.f32 %v2985, %v3064
        %v3066 = vpop.f32.mrb[0].mxu0
        %3067 = vmatprep.mubr.bf16.mxu0 0
        %3068 = vmatmul.mubr.bf16.gmra.mrb[0].mxu0 %v3009
        %v3069 = vpop.f32.mrb[0].mxu0
        %v3070 = vadd.f32 %v2985, %v3069
        %v3071 = vpop.f32.mrb[0].mxu0
        %v3072 = vpop.f32.mrb[0].mxu0
        %v3073 = vadd.f32 %v2985, %v3072
        %v3074 = vpop.f32.mrb[0].mxu0
        %3075 = vdwg.mxu0
        %v3076 = vmax.f32 %v3046, 0.0
        %v3077 = vmax.f32 %v3049, 0.0
        %v3078 = vmax.f32 %v3054, 0.0
        %v3079 = vmax.f32 %v3057, 0.0
        %v3080 = vmax.f32 %v3062, 0.0
        %v3081 = vmax.f32 %v3065, 0.0
        %v3082 = vmax.f32 %v3070, 0.0
        %v3083 = vmax.f32 %v3073, 0.0
        %v3084 = vpack.c.bf16 %v3077, %v3076
        %v3085 = vpack.c.bf16 %v3079, %v3078
        %v3086 = vpack.c.bf16 %v3081, %v3080
        %v3087 = vpack.c.bf16 %v3083, %v3082
        %v3088 = vld [vmem:[%s12] sm:$0xf]
        %v3089 = vld [vmem:[%s12 + $0x4] sm:$0xf]
        %v3090 = vld [vmem:[%s12 + $0x8] sm:$0xf]
        %v3091 = vld [vmem:[%s12 + $0xc] sm:$0xf]
        %v3092 = vld [vmem:[%s12 + $0x10] sm:$0xf]
        %v3093 = vld [vmem:[%s12 + $0x14] sm:$0xf]
        %v3094 = vld [vmem:[%s12 + $0x18] sm:$0xf]
        %v3095 = vld [vmem:[%s12 + $0x1c] sm:$0xf]
        %v3096 = vld [vmem:[%s13] sm:$0x1]
        %v3098 = vlaneseq
        %v3099 = vshrl.u32 %v3098, 7
        %v3100 = vsub.s32 0, %v3099
        %v3101 = vrot.slane %v3096, %v3100
        %v3111 = vunpack.c.l.b16 %v3088
        %v3112 = vunpack.c.l.b16 %v3089
        %v3113 = vunpack.c.l.b16 %v3090
        %v3114 = vunpack.c.l.b16 %v3091
        %v3115 = vunpack.c.l.b16 %v3092
        %v3116 = vunpack.c.l.b16 %v3093
        %v3117 = vunpack.c.l.b16 %v3094
        %v3118 = vunpack.c.l.b16 %v3095
        %v3119 = vpack.c.b16 %v3112, %v3111
        %v3120 = vpack.c.b16 %v3114, %v3113
        %v3121 = vpack.c.b16 %v3116, %v3115
        %v3122 = vpack.c.b16 %v3118, %v3117
        %v3128 = vsel %vm1082, %v3084, 0
        %v3131 = vsel %vm1082, %v3085, 0
        %v3134 = vsel %vm1082, %v3086, 0
        %v3137 = vsel %vm1082, %v3087, 0
        %3139 = vmatprep.subr.bf16.mxu0 0
        %3140 = vmatpush1.bf16.msra.mxu0 %v3119
        %3141 = vmatprep.subr.bf16.mxu0 0
        %3142 = vmatpush1.bf16.msra.mxu0 %v3120
        %3143 = vmatprep.subr.bf16.mxu0 0
        %3144 = vmatpush1.bf16.msra.mxu0 %v3121
        %3145 = vmatprep.subr.bf16.mxu0 0
        %3146 = vmatpush1.bf16.msra.mxu0 %v3122
        %3147 = vmatprep.subr.bf16.mxu0 0
        %3148 = vmatpush1.bf16.msra.mxu0 0
        %3149 = vmatprep.subr.bf16.mxu0 0
        %3150 = vmatpush1.bf16.msra.mxu0 0
        %3151 = vmatprep.subr.bf16.mxu0 0
        %3152 = vmatpush1.bf16.msra.mxu0 0
        %3153 = vmatprep.subr.bf16.mxu0 0
        %3154 = vmatpush1.bf16.msra.mxu0 0
        %3155 = vmatprep.subr.bf16.mxu0 0
        %3156 = vmatpush1.bf16.msra.mxu0 0
        %3157 = vmatprep.subr.bf16.mxu0 0
        %3158 = vmatpush1.bf16.msra.mxu0 0
        %3159 = vmatprep.subr.bf16.mxu0 0
        %3160 = vmatpush1.bf16.msra.mxu0 0
        %3161 = vmatprep.subr.bf16.mxu0 0
        %3162 = vmatpush1.bf16.msra.mxu0 0
        %3163 = vmatprep.subr.bf16.mxu0 0
        %3164 = vmatpush1.bf16.msra.mxu0 0
        %3165 = vmatprep.subr.bf16.mxu0 0
        %3166 = vmatpush1.bf16.msra.mxu0 0
        %3167 = vmatprep.subr.bf16.mxu0 0
        %3168 = vmatpush1.bf16.msra.mxu0 0
        %3169 = vmatprep.subr.bf16.mxu0 0
        %3170 = vmatpush1.bf16.msra.mxu0 0
        %3171 = vmatprep.mubr.bf16.mxu0 0
        %3172 = vmatmul.mubr.bf16.gmra.mrb[0].mxu0 %v3128
        %v3173 = vpop.f32.mrb[0].mxu0
        %v3174 = vadd.f32 %v3101, %v3173
        %v3175 = vpop.f32.mrb[0].mxu0
        %v3176 = vpop.f32.mrb[0].mxu0
        %v3177 = vadd.f32 %v3101, %v3176
        %v3178 = vpop.f32.mrb[0].mxu0
        %3179 = vmatprep.mubr.bf16.mxu0 0
        %3180 = vmatmul.mubr.bf16.gmra.mrb[0].mxu0 %v3131
        %v3181 = vpop.f32.mrb[0].mxu0
        %v3182 = vadd.f32 %v3101, %v3181
        %v3183 = vpop.f32.mrb[0].mxu0
        %v3184 = vpop.f32.mrb[0].mxu0
        %v3185 = vadd.f32 %v3101, %v3184
        %v3186 = vpop.f32.mrb[0].mxu0
        %3187 = vmatprep.mubr.bf16.mxu0 0
        %3188 = vmatmul.mubr.bf16.gmra.mrb[0].mxu0 %v3134
        %v3189 = vpop.f32.mrb[0].mxu0
        %v3190 = vadd.f32 %v3101, %v3189
        %v3191 = vpop.f32.mrb[0].mxu0
        %v3192 = vpop.f32.mrb[0].mxu0
        %v3193 = vadd.f32 %v3101, %v3192
        %v3194 = vpop.f32.mrb[0].mxu0
        %3195 = vmatprep.mubr.bf16.mxu0 0
        %3196 = vmatmul.mubr.bf16.gmra.mrb[0].mxu0 %v3137
        %v3197 = vpop.f32.mrb[0].mxu0
        %v3198 = vadd.f32 %v3101, %v3197
        %v3199 = vpop.f32.mrb[0].mxu0
        %v3200 = vpop.f32.mrb[0].mxu0
        %v3201 = vadd.f32 %v3101, %v3200
        %v3202 = vpop.f32.mrb[0].mxu0
        %3203 = vdwg.mxu0
        %v3204 = vadd.f32 %v2964, %v3174
        %v3205 = vadd.f32 %v2965, %v3177
        %v3206 = vadd.f32 %v2966, %v3182
        %v3207 = vadd.f32 %v2967, %v3185
        %v3208 = vadd.f32 %v2968, %v3190
        %v3209 = vadd.f32 %v2969, %v3193
        %v3210 = vadd.f32 %v2970, %v3198
        %v3211 = vadd.f32 %v2971, %v3201
        %v3212 = vsel %vm658, %v3204, 0.0
        %3213 = vadd.xlane.f32.xlu0 %v3212
        %v3214 = vpop.xlane.xlu0 %3213
        %v3215 = vsel %vm658, %v3205, 0.0
        %3216 = vadd.xlane.f32.xlu0 %v3215
        %v3217 = vpop.xlane.xlu0 %3216
        %v3218 = vsel %vm658, %v3206, 0.0
        %3219 = vadd.xlane.f32.xlu0 %v3218
        %v3220 = vpop.xlane.xlu0 %3219
        %v3221 = vsel %vm658, %v3207, 0.0
        %3222 = vadd.xlane.f32.xlu0 %v3221
        %v3223 = vpop.xlane.xlu0 %3222
        %v3224 = vsel %vm658, %v3208, 0.0
        %3225 = vadd.xlane.f32.xlu0 %v3224
        %v3226 = vpop.xlane.xlu0 %3225
        %v3227 = vsel %vm658, %v3209, 0.0
        %3228 = vadd.xlane.f32.xlu0 %v3227
        %v3229 = vpop.xlane.xlu0 %3228
        %v3230 = vsel %vm658, %v3210, 0.0
        %3231 = vadd.xlane.f32.xlu0 %v3230
        %v3232 = vpop.xlane.xlu0 %3231
        %v3233 = vsel %vm658, %v3211, 0.0
        %3234 = vadd.xlane.f32.xlu0 %v3233
        %v3235 = vpop.xlane.xlu0 %3234
        %v3236 = vmul.f32 %v3214, %v2861
        %v3237 = vmul.f32 %v3217, %v2861
        %v3238 = vmul.f32 %v3220, %v2861
        %v3239 = vmul.f32 %v3223, %v2861
        %v3240 = vmul.f32 %v3226, %v2861
        %v3241 = vmul.f32 %v3229, %v2861
        %v3242 = vmul.f32 %v3232, %v2861
        %v3243 = vmul.f32 %v3235, %v2861
        %v3244 = vsub.f32 %v3204, %v3236
        %v3245 = vsub.f32 %v3205, %v3237
        %v3246 = vsub.f32 %v3206, %v3238
        %v3247 = vsub.f32 %v3207, %v3239
        %v3248 = vsub.f32 %v3208, %v3240
        %v3249 = vsub.f32 %v3209, %v3241
        %v3250 = vsub.f32 %v3210, %v3242
        %v3251 = vsub.f32 %v3211, %v3243
        %v3252 = vmul.f32 %v3244, %v3244
        %v3253 = vmul.f32 %v3245, %v3245
        %v3254 = vmul.f32 %v3246, %v3246
        %v3255 = vmul.f32 %v3247, %v3247
        %v3256 = vmul.f32 %v3248, %v3248
        %v3257 = vmul.f32 %v3249, %v3249
        %v3258 = vmul.f32 %v3250, %v3250
        %v3259 = vmul.f32 %v3251, %v3251
        %v3260 = vsel %vm658, %v3252, 0.0
        %3261 = vadd.xlane.f32.xlu0 %v3260
        %v3262 = vpop.xlane.xlu0 %3261
        %v3263 = vsel %vm658, %v3253, 0.0
        %3264 = vadd.xlane.f32.xlu0 %v3263
        %v3265 = vpop.xlane.xlu0 %3264
        %v3266 = vsel %vm658, %v3254, 0.0
        %3267 = vadd.xlane.f32.xlu0 %v3266
        %v3268 = vpop.xlane.xlu0 %3267
        %v3269 = vsel %vm658, %v3255, 0.0
        %3270 = vadd.xlane.f32.xlu0 %v3269
        %v3271 = vpop.xlane.xlu0 %3270
        %v3272 = vsel %vm658, %v3256, 0.0
        %3273 = vadd.xlane.f32.xlu0 %v3272
        %v3274 = vpop.xlane.xlu0 %3273
        %v3275 = vsel %vm658, %v3257, 0.0
        %3276 = vadd.xlane.f32.xlu0 %v3275
        %v3277 = vpop.xlane.xlu0 %3276
        %v3278 = vsel %vm658, %v3258, 0.0
        %3279 = vadd.xlane.f32.xlu0 %v3278
        %v3280 = vpop.xlane.xlu0 %3279
        %v3281 = vsel %vm658, %v3259, 0.0
        %3282 = vadd.xlane.f32.xlu0 %v3281
        %v3283 = vpop.xlane.xlu0 %3282
        %v3284 = vmul.f32 %v3262, %v2861
        %v3285 = vmul.f32 %v3265, %v2861
        %v3286 = vmul.f32 %v3268, %v2861
        %v3287 = vmul.f32 %v3271, %v2861
        %v3288 = vmul.f32 %v3274, %v2861
        %v3289 = vmul.f32 %v3277, %v2861
        %v3290 = vmul.f32 %v3280, %v2861
        %v3291 = vmul.f32 %v3283, %v2861
        %v3292 = vadd.f32 %v3284, 1e-05
        %v3293 = vadd.f32 %v3285, 1e-05
        %v3294 = vadd.f32 %v3286, 1e-05
        %v3295 = vadd.f32 %v3287, 1e-05
        %v3296 = vadd.f32 %v3288, 1e-05
        %v3297 = vadd.f32 %v3289, 1e-05
        %v3298 = vadd.f32 %v3290, 1e-05
        %v3299 = vadd.f32 %v3291, 1e-05
        %v3300 = vrsqrt.pop %v3292
        %v3301 = vrsqrt.pop %v3293
        %v3302 = vrsqrt.pop %v3294
        %v3303 = vrsqrt.pop %v3295
        %v3304 = vrsqrt.pop %v3296
        %v3305 = vrsqrt.pop %v3297
        %v3306 = vrsqrt.pop %v3298
        %v3307 = vrsqrt.pop %v3299
        %v3308 = vmul.f32 %v3244, %v3300
        %v3309 = vmul.f32 %v3245, %v3301
        %v3310 = vmul.f32 %v3246, %v3302
        %v3311 = vmul.f32 %v3247, %v3303
        %v3312 = vmul.f32 %v3248, %v3304
        %v3313 = vmul.f32 %v3249, %v3305
        %v3314 = vmul.f32 %v3250, %v3306
        %v3315 = vmul.f32 %v3251, %v3307
        %v3316 = vld [vmem:[%s16] sm:$0x1]
        %v3318 = vlaneseq
        %v3319 = vshrl.u32 %v3318, 7
        %v3320 = vsub.s32 0, %v3319
        %v3321 = vrot.slane %v3316, %v3320
        %v3323 = vmul.f32 %v3308, %v3321
        %v3324 = vmul.f32 %v3309, %v3321
        %v3325 = vmul.f32 %v3310, %v3321
        %v3326 = vmul.f32 %v3311, %v3321
        %v3327 = vmul.f32 %v3312, %v3321
        %v3328 = vmul.f32 %v3313, %v3321
        %v3329 = vmul.f32 %v3314, %v3321
        %v3330 = vmul.f32 %v3315, %v3321
        %v3331 = vld [vmem:[%s17] sm:$0x1]
        %v3333 = vlaneseq
        %v3334 = vshrl.u32 %v3333, 7
        %v3335 = vsub.s32 0, %v3334
        %v3336 = vrot.slane %v3331, %v3335
        %v3338 = vadd.f32 %v3323, %v3336
        %v3339 = vadd.f32 %v3324, %v3336
        %v3340 = vadd.f32 %v3325, %v3336
        %v3341 = vadd.f32 %v3326, %v3336
        %v3342 = vadd.f32 %v3327, %v3336
        %v3343 = vadd.f32 %v3328, %v3336
        %v3344 = vadd.f32 %v3329, %v3336
        %v3345 = vadd.f32 %v3330, %v3336
        %v3346 = vpack.c.bf16 %v3339, %v3338
        %v3347 = vpack.c.bf16 %v3341, %v3340
        %v3348 = vpack.c.bf16 %v3343, %v3342
        %v3349 = vpack.c.bf16 %v3345, %v3344
        %s3350 = scalar_lea.vmem %s2, 16
        %v3351 = vld [vmem:[%s3350] sm:$0xf]
        %v3352 = vld [vmem:[%s3350 + $0x4] sm:$0xf]
        %v3353 = vld [vmem:[%s3350 + $0x8] sm:$0xf]
        %v3354 = vld [vmem:[%s3350 + $0xc] sm:$0xf]
        %s3355 = scalar_lea.vmem %s3, 1
        %v3356 = vld [vmem:[%s3355] sm:$0x1]
        %v3358 = vlaneseq
        %v3359 = vshrl.u32 %v3358, 7
        %v3360 = vsub.s32 0, %v3359
        %v3361 = vrot.slane %v3356, %v3360
        %v3367 = vunpack.c.l.b16 %v3351
        %v3368 = vunpack.c.l.b16 %v3352
        %v3369 = vunpack.c.l.b16 %v3353
        %v3370 = vunpack.c.l.b16 %v3354
        %v3371 = vpack.c.b16 %v3368, %v3367
        %v3372 = vpack.c.b16 %v3370, %v3369
        %v3376 = vsel %vm658, %v3346, 0
        %v3379 = vsel %vm658, %v3347, 0
        %v3382 = vsel %vm658, %v3348, 0
        %v3385 = vsel %vm658, %v3349, 0
        %3387 = vmatprep.subr.bf16.mxu0 0
        %3388 = vmatpush1.bf16.msra.mxu0 %v3371
        %3389 = vmatprep.subr.bf16.mxu0 0
        %3390 = vmatpush1.bf16.msra.mxu0 %v3372
        %3391 = vmatprep.subr.bf16.mxu0 0
        %3392 = vmatpush1.bf16.msra.mxu0 0
        %3393 = vmatprep.subr.bf16.mxu0 0
        %3394 = vmatpush1.bf16.msra.mxu0 0
        %3395 = vmatprep.subr.bf16.mxu0 0
        %3396 = vmatpush1.bf16.msra.mxu0 0
        %3397 = vmatprep.subr.bf16.mxu0 0
        %3398 = vmatpush1.bf16.msra.mxu0 0
        %3399 = vmatprep.subr.bf16.mxu0 0
        %3400 = vmatpush1.bf16.msra.mxu0 0
        %3401 = vmatprep.subr.bf16.mxu0 0
        %3402 = vmatpush1.bf16.msra.mxu0 0
        %3403 = vmatprep.subr.bf16.mxu0 0
        %3404 = vmatpush1.bf16.msra.mxu0 0
        %3405 = vmatprep.subr.bf16.mxu0 0
        %3406 = vmatpush1.bf16.msra.mxu0 0
        %3407 = vmatprep.subr.bf16.mxu0 0
        %3408 = vmatpush1.bf16.msra.mxu0 0
        %3409 = vmatprep.subr.bf16.mxu0 0
        %3410 = vmatpush1.bf16.msra.mxu0 0
        %3411 = vmatprep.subr.bf16.mxu0 0
        %3412 = vmatpush1.bf16.msra.mxu0 0
        %3413 = vmatprep.subr.bf16.mxu0 0
        %3414 = vmatpush1.bf16.msra.mxu0 0
        %3415 = vmatprep.subr.bf16.mxu0 0
        %3416 = vmatpush1.bf16.msra.mxu0 0
        %3417 = vmatprep.subr.bf16.mxu0 0
        %3418 = vmatpush1.bf16.msra.mxu0 0
        %3419 = vmatprep.mubr.bf16.mxu0 0
        %3420 = vmatmul.mubr.bf16.gmra.mrb[0].mxu0 %v3376
        %v3421 = vpop.f32.mrb[0].mxu0
        %v3422 = vadd.f32 %v3361, %v3421
        %v3423 = vpop.f32.mrb[0].mxu0
        %v3424 = vpop.f32.mrb[0].mxu0
        %v3425 = vadd.f32 %v3361, %v3424
        %v3426 = vpop.f32.mrb[0].mxu0
        %3427 = vmatprep.mubr.bf16.mxu0 0
        %3428 = vmatmul.mubr.bf16.gmra.mrb[0].mxu0 %v3379
        %v3429 = vpop.f32.mrb[0].mxu0
        %v3430 = vadd.f32 %v3361, %v3429
        %v3431 = vpop.f32.mrb[0].mxu0
        %v3432 = vpop.f32.mrb[0].mxu0
        %v3433 = vadd.f32 %v3361, %v3432
        %v3434 = vpop.f32.mrb[0].mxu0
        %3435 = vmatprep.mubr.bf16.mxu0 0
        %3436 = vmatmul.mubr.bf16.gmra.mrb[0].mxu0 %v3382
        %v3437 = vpop.f32.mrb[0].mxu0
        %v3438 = vadd.f32 %v3361, %v3437
        %v3439 = vpop.f32.mrb[0].mxu0
        %v3440 = vpop.f32.mrb[0].mxu0
        %v3441 = vadd.f32 %v3361, %v3440
        %v3442 = vpop.f32.mrb[0].mxu0
        %3443 = vmatprep.mubr.bf16.mxu0 0
        %3444 = vmatmul.mubr.bf16.gmra.mrb[0].mxu0 %v3385
        %v3445 = vpop.f32.mrb[0].mxu0
        %v3446 = vadd.f32 %v3361, %v3445
        %v3447 = vpop.f32.mrb[0].mxu0
        %v3448 = vpop.f32.mrb[0].mxu0
        %v3449 = vadd.f32 %v3361, %v3448
        %v3450 = vpop.f32.mrb[0].mxu0
        %3451 = vdwg.mxu0
        %s3452 = scalar_lea.vmem %s4, 16
        %v3453 = vld [vmem:[%s3452] sm:$0xf]
        %v3454 = vld [vmem:[%s3452 + $0x4] sm:$0xf]
        %v3455 = vld [vmem:[%s3452 + $0x8] sm:$0xf]
        %v3456 = vld [vmem:[%s3452 + $0xc] sm:$0xf]
        %s3457 = scalar_lea.vmem %s5, 1
        %v3458 = vld [vmem:[%s3457] sm:$0x1]
        %v3460 = vlaneseq
        %v3461 = vshrl.u32 %v3460, 7
        %v3462 = vsub.s32 0, %v3461
        %v3463 = vrot.slane %v3458, %v3462
        %v3469 = vunpack.c.l.b16 %v3453
        %v3470 = vunpack.c.l.b16 %v3454
        %v3471 = vunpack.c.l.b16 %v3455
        %v3472 = vunpack.c.l.b16 %v3456
        %v3473 = vpack.c.b16 %v3470, %v3469
        %v3474 = vpack.c.b16 %v3472, %v3471
        %3477 = vmatprep.subr.bf16.mxu0 0
        %3478 = vmatpush1.bf16.msra.mxu0 %v3473
        %3479 = vmatprep.subr.bf16.mxu0 0
        %3480 = vmatpush1.bf16.msra.mxu0 %v3474
        %3481 = vmatprep.subr.bf16.mxu0 0
        %3482 = vmatpush1.bf16.msra.mxu0 0
        %3483 = vmatprep.subr.bf16.mxu0 0
        %3484 = vmatpush1.bf16.msra.mxu0 0
        %3485 = vmatprep.subr.bf16.mxu0 0
        %3486 = vmatpush1.bf16.msra.mxu0 0
        %3487 = vmatprep.subr.bf16.mxu0 0
        %3488 = vmatpush1.bf16.msra.mxu0 0
        %3489 = vmatprep.subr.bf16.mxu0 0
        %3490 = vmatpush1.bf16.msra.mxu0 0
        %3491 = vmatprep.subr.bf16.mxu0 0
        %3492 = vmatpush1.bf16.msra.mxu0 0
        %3493 = vmatprep.subr.bf16.mxu0 0
        %3494 = vmatpush1.bf16.msra.mxu0 0
        %3495 = vmatprep.subr.bf16.mxu0 0
        %3496 = vmatpush1.bf16.msra.mxu0 0
        %3497 = vmatprep.subr.bf16.mxu0 0
        %3498 = vmatpush1.bf16.msra.mxu0 0
        %3499 = vmatprep.subr.bf16.mxu0 0
        %3500 = vmatpush1.bf16.msra.mxu0 0
        %3501 = vmatprep.subr.bf16.mxu0 0
        %3502 = vmatpush1.bf16.msra.mxu0 0
        %3503 = vmatprep.subr.bf16.mxu0 0
        %3504 = vmatpush1.bf16.msra.mxu0 0
        %3505 = vmatprep.subr.bf16.mxu0 0
        %3506 = vmatpush1.bf16.msra.mxu0 0
        %3507 = vmatprep.subr.bf16.mxu0 0
        %3508 = vmatpush1.bf16.msra.mxu0 0
        %3509 = vmatprep.mubr.bf16.mxu0 0
        %3510 = vmatmul.mubr.bf16.gmra.mrb[0].mxu0 %v3376
        %v3511 = vpop.f32.mrb[0].mxu0
        %v3512 = vadd.f32 %v3463, %v3511
        %v3513 = vpop.f32.mrb[0].mxu0
        %v3514 = vpop.f32.mrb[0].mxu0
        %v3515 = vadd.f32 %v3463, %v3514
        %v3516 = vpop.f32.mrb[0].mxu0
        %3517 = vmatprep.mubr.bf16.mxu0 0
        %3518 = vmatmul.mubr.bf16.gmra.mrb[0].mxu0 %v3379
        %v3519 = vpop.f32.mrb[0].mxu0
        %v3520 = vadd.f32 %v3463, %v3519
        %v3521 = vpop.f32.mrb[0].mxu0
        %v3522 = vpop.f32.mrb[0].mxu0
        %v3523 = vadd.f32 %v3463, %v3522
        %v3524 = vpop.f32.mrb[0].mxu0
        %3525 = vmatprep.mubr.bf16.mxu0 0
        %3526 = vmatmul.mubr.bf16.gmra.mrb[0].mxu0 %v3382
        %v3527 = vpop.f32.mrb[0].mxu0
        %v3528 = vadd.f32 %v3463, %v3527
        %v3529 = vpop.f32.mrb[0].mxu0
        %v3530 = vpop.f32.mrb[0].mxu0
        %v3531 = vadd.f32 %v3463, %v3530
        %v3532 = vpop.f32.mrb[0].mxu0
        %3533 = vmatprep.mubr.bf16.mxu0 0
        %3534 = vmatmul.mubr.bf16.gmra.mrb[0].mxu0 %v3385
        %v3535 = vpop.f32.mrb[0].mxu0
        %v3536 = vadd.f32 %v3463, %v3535
        %v3537 = vpop.f32.mrb[0].mxu0
        %v3538 = vpop.f32.mrb[0].mxu0
        %v3539 = vadd.f32 %v3463, %v3538
        %v3540 = vpop.f32.mrb[0].mxu0
        %3541 = vdwg.mxu0
        %s3542 = scalar_lea.vmem %s6, 16
        %v3543 = vld [vmem:[%s3542] sm:$0xf]
        %v3544 = vld [vmem:[%s3542 + $0x4] sm:$0xf]
        %v3545 = vld [vmem:[%s3542 + $0x8] sm:$0xf]
        %v3546 = vld [vmem:[%s3542 + $0xc] sm:$0xf]
        %s3547 = scalar_lea.vmem %s7, 1
        %v3548 = vld [vmem:[%s3547] sm:$0x1]
        %v3550 = vlaneseq
        %v3551 = vshrl.u32 %v3550, 7
        %v3552 = vsub.s32 0, %v3551
        %v3553 = vrot.slane %v3548, %v3552
        %v3559 = vunpack.c.l.b16 %v3543
        %v3560 = vunpack.c.l.b16 %v3544
        %v3561 = vunpack.c.l.b16 %v3545
        %v3562 = vunpack.c.l.b16 %v3546
        %v3563 = vpack.c.b16 %v3560, %v3559
        %v3564 = vpack.c.b16 %v3562, %v3561
        %3567 = vmatprep.subr.bf16.mxu0 0
        %3568 = vmatpush1.bf16.msra.mxu0 %v3563
        %3569 = vmatprep.subr.bf16.mxu0 0
        %3570 = vmatpush1.bf16.msra.mxu0 %v3564
        %3571 = vmatprep.subr.bf16.mxu0 0
        %3572 = vmatpush1.bf16.msra.mxu0 0
        %3573 = vmatprep.subr.bf16.mxu0 0
        %3574 = vmatpush1.bf16.msra.mxu0 0
        %3575 = vmatprep.subr.bf16.mxu0 0
        %3576 = vmatpush1.bf16.msra.mxu0 0
        %3577 = vmatprep.subr.bf16.mxu0 0
        %3578 = vmatpush1.bf16.msra.mxu0 0
        %3579 = vmatprep.subr.bf16.mxu0 0
        %3580 = vmatpush1.bf16.msra.mxu0 0
        %3581 = vmatprep.subr.bf16.mxu0 0
        %3582 = vmatpush1.bf16.msra.mxu0 0
        %3583 = vmatprep.subr.bf16.mxu0 0
        %3584 = vmatpush1.bf16.msra.mxu0 0
        %3585 = vmatprep.subr.bf16.mxu0 0
        %3586 = vmatpush1.bf16.msra.mxu0 0
        %3587 = vmatprep.subr.bf16.mxu0 0
        %3588 = vmatpush1.bf16.msra.mxu0 0
        %3589 = vmatprep.subr.bf16.mxu0 0
        %3590 = vmatpush1.bf16.msra.mxu0 0
        %3591 = vmatprep.subr.bf16.mxu0 0
        %3592 = vmatpush1.bf16.msra.mxu0 0
        %3593 = vmatprep.subr.bf16.mxu0 0
        %3594 = vmatpush1.bf16.msra.mxu0 0
        %3595 = vmatprep.subr.bf16.mxu0 0
        %3596 = vmatpush1.bf16.msra.mxu0 0
        %3597 = vmatprep.subr.bf16.mxu0 0
        %3598 = vmatpush1.bf16.msra.mxu0 0
        %3599 = vmatprep.mubr.bf16.mxu0 0
        %3600 = vmatmul.mubr.bf16.gmra.mrb[0].mxu0 %v3376
        %v3601 = vpop.f32.mrb[0].mxu0
        %v3602 = vadd.f32 %v3553, %v3601
        %v3603 = vpop.f32.mrb[0].mxu0
        %v3604 = vpop.f32.mrb[0].mxu0
        %v3605 = vadd.f32 %v3553, %v3604
        %v3606 = vpop.f32.mrb[0].mxu0
        %3607 = vmatprep.mubr.bf16.mxu0 0
        %3608 = vmatmul.mubr.bf16.gmra.mrb[0].mxu0 %v3379
        %v3609 = vpop.f32.mrb[0].mxu0
        %v3610 = vadd.f32 %v3553, %v3609
        %v3611 = vpop.f32.mrb[0].mxu0
        %v3612 = vpop.f32.mrb[0].mxu0
        %v3613 = vadd.f32 %v3553, %v3612
        %v3614 = vpop.f32.mrb[0].mxu0
        %3615 = vmatprep.mubr.bf16.mxu0 0
        %3616 = vmatmul.mubr.bf16.gmra.mrb[0].mxu0 %v3382
        %v3617 = vpop.f32.mrb[0].mxu0
        %v3618 = vadd.f32 %v3553, %v3617
        %v3619 = vpop.f32.mrb[0].mxu0
        %v3620 = vpop.f32.mrb[0].mxu0
        %v3621 = vadd.f32 %v3553, %v3620
        %v3622 = vpop.f32.mrb[0].mxu0
        %3623 = vmatprep.mubr.bf16.mxu0 0
        %3624 = vmatmul.mubr.bf16.gmra.mrb[0].mxu0 %v3385
        %v3625 = vpop.f32.mrb[0].mxu0
        %v3626 = vadd.f32 %v3553, %v3625
        %v3627 = vpop.f32.mrb[0].mxu0
        %v3628 = vpop.f32.mrb[0].mxu0
        %v3629 = vadd.f32 %v3553, %v3628
        %v3630 = vpop.f32.mrb[0].mxu0
        %3631 = vdwg.mxu0
        %v3633 = vsel %vm912, %v3422, 0
        %v3636 = vsel %vm912, %v3425, 0
        %v3639 = vsel %vm912, %v3430, 0
        %v3642 = vsel %vm912, %v3433, 0
        %v3645 = vsel %vm912, %v3438, 0
        %v3648 = vsel %vm912, %v3441, 0
        %v3651 = vsel %vm912, %v3446, 0
        %v3654 = vsel %vm912, %v3449, 0
        %v3657 = vsel %vm912, %v3512, 0
        %v3660 = vsel %vm912, %v3515, 0
        %v3663 = vsel %vm912, %v3520, 0
        %v3666 = vsel %vm912, %v3523, 0
        %v3669 = vsel %vm912, %v3528, 0
        %v3672 = vsel %vm912, %v3531, 0
        %v3675 = vsel %vm912, %v3536, 0
        %v3678 = vsel %vm912, %v3539, 0
        %3680 = vmatprep.subr.mxu0 0.0
        %3681 = vmatpush1.xpose.msra.mxu0 %v3657
        %3682 = vmatprep.subr.mxu0 0.0
        %3683 = vmatpush1.xpose.msra.mxu0 %v3660
        %3684 = vmatprep.subr.mxu0 0.0
        %3685 = vmatpush1.xpose.msra.mxu0 %v3663
        %3686 = vmatprep.subr.mxu0 0.0
        %3687 = vmatpush1.xpose.msra.mxu0 %v3666
        %3688 = vmatprep.subr.mxu0 0.0
        %3689 = vmatpush1.xpose.msra.mxu0 %v3669
        %3690 = vmatprep.subr.mxu0 0.0
        %3691 = vmatpush1.xpose.msra.mxu0 %v3672
        %3692 = vmatprep.subr.mxu0 0.0
        %3693 = vmatpush1.xpose.msra.mxu0 %v3675
        %3694 = vmatprep.subr.mxu0 0.0
        %3695 = vmatpush1.xpose.msra.mxu0 %v3678
        %3696 = vmatprep.subr.mxu0 0.0
        %3697 = vmatpush1.xpose.msra.mxu0 0.0
        %3698 = vmatprep.subr.mxu0 0.0
        %3699 = vmatpush1.xpose.msra.mxu0 0.0
        %3700 = vmatprep.subr.mxu0 0.0
        %3701 = vmatpush1.xpose.msra.mxu0 0.0
        %3702 = vmatprep.subr.mxu0 0.0
        %3703 = vmatpush1.xpose.msra.mxu0 0.0
        %3704 = vmatprep.subr.mxu0 0.0
        %3705 = vmatpush1.xpose.msra.mxu0 0.0
        %3706 = vmatprep.subr.mxu0 0.0
        %3707 = vmatpush1.xpose.msra.mxu0 0.0
        %3708 = vmatprep.subr.mxu0 0.0
        %3709 = vmatpush1.xpose.msra.mxu0 0.0
        %3710 = vmatprep.subr.mxu0 0.0
        %3711 = vmatpush1.xpose.msra.mxu0 0.0
        %3712 = vmatprep.subr.mxu0 0.0
        %3713 = vmatpush1.xpose.msra.mxu0 0.0
        %3714 = vmatprep.subr.mxu0 0.0
        %3715 = vmatpush1.xpose.msra.mxu0 0.0
        %3716 = vmatprep.subr.mxu0 0.0
        %3717 = vmatpush1.xpose.msra.mxu0 0.0
        %3718 = vmatprep.subr.mxu0 0.0
        %3719 = vmatpush1.xpose.msra.mxu0 0.0
        %3720 = vmatprep.subr.mxu0 0.0
        %3721 = vmatpush1.xpose.msra.mxu0 0.0
        %3722 = vmatprep.subr.mxu0 0.0
        %3723 = vmatpush1.xpose.msra.mxu0 0.0
        %3724 = vmatprep.subr.mxu0 0.0
        %3725 = vmatpush1.xpose.msra.mxu0 0.0
        %3726 = vmatprep.subr.mxu0 0.0
        %3727 = vmatpush1.xpose.msra.mxu0 0.0
        %3728 = vmatprep.subr.mxu0 0.0
        %3729 = vmatpush1.xpose.msra.mxu0 0.0
        %3730 = vmatprep.subr.mxu0 0.0
        %3731 = vmatpush1.xpose.msra.mxu0 0.0
        %3732 = vmatprep.subr.mxu0 0.0
        %3733 = vmatpush1.xpose.msra.mxu0 0.0
        %3734 = vmatprep.subr.mxu0 0.0
        %3735 = vmatpush1.xpose.msra.mxu0 0.0
        %3736 = vmatprep.subr.mxu0 0.0
        %3737 = vmatpush1.xpose.msra.mxu0 0.0
        %3738 = vmatprep.subr.mxu0 0.0
        %3739 = vmatpush1.xpose.msra.mxu0 0.0
        %3740 = vmatprep.subr.mxu0 0.0
        %3741 = vmatpush1.xpose.msra.mxu0 0.0
        %3742 = vmatprep.subr.mxu0 0.0
        %3743 = vmatpush1.xpose.msra.mxu0 0.0
        %3744 = vmatprep.mubr.f32.mxu0 0.0
        %3745 = vmatmul.mubr.f32.gmra.mrb[0].mxu0 %v3633
        %v3746 = vpop.f32.mrb[0].mxu0
        %v3747 = vadd.f32 0.0, %v3746
        %v3748 = vpop.f32.mrb[0].mxu0
        %3749 = vmatprep.mubr.f32.mxu0 0.0
        %3750 = vmatmul.mubr.f32.gmra.mrb[0].mxu0 %v3636
        %v3751 = vpop.f32.mrb[0].mxu0
        %v3752 = vadd.f32 0.0, %v3751
        %v3753 = vpop.f32.mrb[0].mxu0
        %3754 = vmatprep.mubr.f32.mxu0 0.0
        %3755 = vmatmul.mubr.f32.gmra.mrb[0].mxu0 %v3639
        %v3756 = vpop.f32.mrb[0].mxu0
        %v3757 = vadd.f32 0.0, %v3756
        %v3758 = vpop.f32.mrb[0].mxu0
        %3759 = vmatprep.mubr.f32.mxu0 0.0
        %3760 = vmatmul.mubr.f32.gmra.mrb[0].mxu0 %v3642
        %v3761 = vpop.f32.mrb[0].mxu0
        %v3762 = vadd.f32 0.0, %v3761
        %v3763 = vpop.f32.mrb[0].mxu0
        %3764 = vmatprep.mubr.f32.mxu0 0.0
        %3765 = vmatmul.mubr.f32.gmra.mrb[0].mxu0 %v3645
        %v3766 = vpop.f32.mrb[0].mxu0
        %v3767 = vadd.f32 0.0, %v3766
        %v3768 = vpop.f32.mrb[0].mxu0
        %3769 = vmatprep.mubr.f32.mxu0 0.0
        %3770 = vmatmul.mubr.f32.gmra.mrb[0].mxu0 %v3648
        %v3771 = vpop.f32.mrb[0].mxu0
        %v3772 = vadd.f32 0.0, %v3771
        %v3773 = vpop.f32.mrb[0].mxu0
        %3774 = vmatprep.mubr.f32.mxu0 0.0
        %3775 = vmatmul.mubr.f32.gmra.mrb[0].mxu0 %v3651
        %v3776 = vpop.f32.mrb[0].mxu0
        %v3777 = vadd.f32 0.0, %v3776
        %v3778 = vpop.f32.mrb[0].mxu0
        %3779 = vmatprep.mubr.f32.mxu0 0.0
        %3780 = vmatmul.mubr.f32.gmra.mrb[0].mxu0 %v3654
        %v3781 = vpop.f32.mrb[0].mxu0
        %v3782 = vadd.f32 0.0, %v3781
        %v3783 = vpop.f32.mrb[0].mxu0
        %3784 = vdwg.mxu0
        %v3785 = vmul.f32 %v3747, 0.35355338
        %v3786 = vmul.f32 %v3752, 0.35355338
        %v3787 = vmul.f32 %v3757, 0.35355338
        %v3788 = vmul.f32 %v3762, 0.35355338
        %v3789 = vmul.f32 %v3767, 0.35355338
        %v3790 = vmul.f32 %v3772, 0.35355338
        %v3791 = vmul.f32 %v3777, 0.35355338
        %v3792 = vmul.f32 %v3782, 0.35355338
        %v3793 = vadd.f32 %v3785, %v623
        %v3794 = vadd.f32 %v3786, %v624
        %v3795 = vadd.f32 %v3787, %v625
        %v3796 = vadd.f32 %v3788, %v626
        %v3797 = vadd.f32 %v3789, %v627
        %v3798 = vadd.f32 %v3790, %v628
        %v3799 = vadd.f32 %v3791, %v629
        %v3800 = vadd.f32 %v3792, %v630
        %v3801 = vsel %vm1082, %v3793, -inf
        %3802 = vmax.xlane.f32.xlu0 %v3801
        %v3803 = vpop.xlane.xlu0 %3802
        %v3804 = vsel %vm1082, %v3794, -inf
        %3805 = vmax.xlane.f32.xlu0 %v3804
        %v3806 = vpop.xlane.xlu0 %3805
        %v3807 = vsel %vm1082, %v3795, -inf
        %3808 = vmax.xlane.f32.xlu0 %v3807
        %v3809 = vpop.xlane.xlu0 %3808
        %v3810 = vsel %vm1082, %v3796, -inf
        %3811 = vmax.xlane.f32.xlu0 %v3810
        %v3812 = vpop.xlane.xlu0 %3811
        %v3813 = vsel %vm1082, %v3797, -inf
        %3814 = vmax.xlane.f32.xlu0 %v3813
        %v3815 = vpop.xlane.xlu0 %3814
        %v3816 = vsel %vm1082, %v3798, -inf
        %3817 = vmax.xlane.f32.xlu0 %v3816
        %v3818 = vpop.xlane.xlu0 %3817
        %v3819 = vsel %vm1082, %v3799, -inf
        %3820 = vmax.xlane.f32.xlu0 %v3819
        %v3821 = vpop.xlane.xlu0 %3820
        %v3822 = vsel %vm1082, %v3800, -inf
        %3823 = vmax.xlane.f32.xlu0 %v3822
        %v3824 = vpop.xlane.xlu0 %3823
        %v3825 = vsub.f32 %v3793, %v3803
        %v3826 = vsub.f32 %v3794, %v3806
        %v3827 = vsub.f32 %v3795, %v3809
        %v3828 = vsub.f32 %v3796, %v3812
        %v3829 = vsub.f32 %v3797, %v3815
        %v3830 = vsub.f32 %v3798, %v3818
        %v3831 = vsub.f32 %v3799, %v3821
        %v3832 = vsub.f32 %v3800, %v3824
        %v3833 = vmul.f32 %v3825, 1.442695
        %v3834 = vpow.pop %v3833
        %v3835 = vmul.f32 %v3826, 1.442695
        %v3836 = vpow.pop %v3835
        %v3837 = vmul.f32 %v3827, 1.442695
        %v3838 = vpow.pop %v3837
        %v3839 = vmul.f32 %v3828, 1.442695
        %v3840 = vpow.pop %v3839
        %v3841 = vmul.f32 %v3829, 1.442695
        %v3842 = vpow.pop %v3841
        %v3843 = vmul.f32 %v3830, 1.442695
        %v3844 = vpow.pop %v3843
        %v3845 = vmul.f32 %v3831, 1.442695
        %v3846 = vpow.pop %v3845
        %v3847 = vmul.f32 %v3832, 1.442695
        %v3848 = vpow.pop %v3847
        %v3849 = vsel %vm1082, %v3834, 0.0
        %3850 = vadd.xlane.f32.xlu0 %v3849
        %v3851 = vpop.xlane.xlu0 %3850
        %v3852 = vsel %vm1082, %v3836, 0.0
        %3853 = vadd.xlane.f32.xlu0 %v3852
        %v3854 = vpop.xlane.xlu0 %3853
        %v3855 = vsel %vm1082, %v3838, 0.0
        %3856 = vadd.xlane.f32.xlu0 %v3855
        %v3857 = vpop.xlane.xlu0 %3856
        %v3858 = vsel %vm1082, %v3840, 0.0
        %3859 = vadd.xlane.f32.xlu0 %v3858
        %v3860 = vpop.xlane.xlu0 %3859
        %v3861 = vsel %vm1082, %v3842, 0.0
        %3862 = vadd.xlane.f32.xlu0 %v3861
        %v3863 = vpop.xlane.xlu0 %3862
        %v3864 = vsel %vm1082, %v3844, 0.0
        %3865 = vadd.xlane.f32.xlu0 %v3864
        %v3866 = vpop.xlane.xlu0 %3865
        %v3867 = vsel %vm1082, %v3846, 0.0
        %3868 = vadd.xlane.f32.xlu0 %v3867
        %v3869 = vpop.xlane.xlu0 %3868
        %v3870 = vsel %vm1082, %v3848, 0.0
        %3871 = vadd.xlane.f32.xlu0 %v3870
        %v3872 = vpop.xlane.xlu0 %3871
        %v3873 = vrcp.pop %v3851
        %v3874 = vrcp.pop %v3854
        %v3875 = vrcp.pop %v3857
        %v3876 = vrcp.pop %v3860
        %v3877 = vrcp.pop %v3863
        %v3878 = vrcp.pop %v3866
        %v3879 = vrcp.pop %v3869
        %v3880 = vrcp.pop %v3872
        %v3881 = vmul.f32 %v3834, %v3873
        %v3882 = vmul.f32 %v3836, %v3874
        %v3883 = vmul.f32 %v3838, %v3875
        %v3884 = vmul.f32 %v3840, %v3876
        %v3885 = vmul.f32 %v3842, %v3877
        %v3886 = vmul.f32 %v3844, %v3878
        %v3887 = vmul.f32 %v3846, %v3879
        %v3888 = vmul.f32 %v3848, %v3880
        %v3890 = vsel %vm1082, %v3881, 0
        %v3893 = vsel %vm1082, %v3882, 0
        %v3896 = vsel %vm1082, %v3883, 0
        %v3899 = vsel %vm1082, %v3884, 0
        %v3902 = vsel %vm1082, %v3885, 0
        %v3905 = vsel %vm1082, %v3886, 0
        %v3908 = vsel %vm1082, %v3887, 0
        %v3911 = vsel %vm1082, %v3888, 0
        %3913 = vmatprep.subr.mxu0 0.0
        %3914 = vmatpush1.msra.mxu0 %v3602
        %3915 = vmatprep.subr.mxu0 0.0
        %3916 = vmatpush1.msra.mxu0 %v3605
        %3917 = vmatprep.subr.mxu0 0.0
        %3918 = vmatpush1.msra.mxu0 %v3610
        %3919 = vmatprep.subr.mxu0 0.0
        %3920 = vmatpush1.msra.mxu0 %v3613
        %3921 = vmatprep.subr.mxu0 0.0
        %3922 = vmatpush1.msra.mxu0 %v3618
        %3923 = vmatprep.subr.mxu0 0.0
        %3924 = vmatpush1.msra.mxu0 %v3621
        %3925 = vmatprep.subr.mxu0 0.0
        %3926 = vmatpush1.msra.mxu0 %v3626
        %3927 = vmatprep.subr.mxu0 0.0
        %3928 = vmatpush1.msra.mxu0 %v3629
        %3929 = vmatprep.subr.mxu0 0.0
        %3930 = vmatpush1.msra.mxu0 0.0
        %3931 = vmatprep.subr.mxu0 0.0
        %3932 = vmatpush1.msra.mxu0 0.0
        %3933 = vmatprep.subr.mxu0 0.0
        %3934 = vmatpush1.msra.mxu0 0.0
        %3935 = vmatprep.subr.mxu0 0.0
        %3936 = vmatpush1.msra.mxu0 0.0
        %3937 = vmatprep.subr.mxu0 0.0
        %3938 = vmatpush1.msra.mxu0 0.0
        %3939 = vmatprep.subr.mxu0 0.0
        %3940 = vmatpush1.msra.mxu0 0.0
        %3941 = vmatprep.subr.mxu0 0.0
        %3942 = vmatpush1.msra.mxu0 0.0
        %3943 = vmatprep.subr.mxu0 0.0
        %3944 = vmatpush1.msra.mxu0 0.0
        %3945 = vmatprep.subr.mxu0 0.0
        %3946 = vmatpush1.msra.mxu0 0.0
        %3947 = vmatprep.subr.mxu0 0.0
        %3948 = vmatpush1.msra.mxu0 0.0
        %3949 = vmatprep.subr.mxu0 0.0
        %3950 = vmatpush1.msra.mxu0 0.0
        %3951 = vmatprep.subr.mxu0 0.0
        %3952 = vmatpush1.msra.mxu0 0.0
        %3953 = vmatprep.subr.mxu0 0.0
        %3954 = vmatpush1.msra.mxu0 0.0
        %3955 = vmatprep.subr.mxu0 0.0
        %3956 = vmatpush1.msra.mxu0 0.0
        %3957 = vmatprep.subr.mxu0 0.0
        %3958 = vmatpush1.msra.mxu0 0.0
        %3959 = vmatprep.subr.mxu0 0.0
        %3960 = vmatpush1.msra.mxu0 0.0
        %3961 = vmatprep.subr.mxu0 0.0
        %3962 = vmatpush1.msra.mxu0 0.0
        %3963 = vmatprep.subr.mxu0 0.0
        %3964 = vmatpush1.msra.mxu0 0.0
        %3965 = vmatprep.subr.mxu0 0.0
        %3966 = vmatpush1.msra.mxu0 0.0
        %3967 = vmatprep.subr.mxu0 0.0
        %3968 = vmatpush1.msra.mxu0 0.0
        %3969 = vmatprep.subr.mxu0 0.0
        %3970 = vmatpush1.msra.mxu0 0.0
        %3971 = vmatprep.subr.mxu0 0.0
        %3972 = vmatpush1.msra.mxu0 0.0
        %3973 = vmatprep.subr.mxu0 0.0
        %3974 = vmatpush1.msra.mxu0 0.0
        %3975 = vmatprep.subr.mxu0 0.0
        %3976 = vmatpush1.msra.mxu0 0.0
        %3977 = vmatprep.mubr.f32.mxu0 0.0
        %3978 = vmatmul.mubr.f32.gmra.mrb[0].mxu0 %v3890
        %v3979 = vpop.f32.mrb[0].mxu0
        %v3980 = vadd.f32 0.0, %v3979
        %v3981 = vpop.f32.mrb[0].mxu0
        %3982 = vmatprep.mubr.f32.mxu0 0.0
        %3983 = vmatmul.mubr.f32.gmra.mrb[0].mxu0 %v3893
        %v3984 = vpop.f32.mrb[0].mxu0
        %v3985 = vadd.f32 0.0, %v3984
        %v3986 = vpop.f32.mrb[0].mxu0
        %3987 = vmatprep.mubr.f32.mxu0 0.0
        %3988 = vmatmul.mubr.f32.gmra.mrb[0].mxu0 %v3896
        %v3989 = vpop.f32.mrb[0].mxu0
        %v3990 = vadd.f32 0.0, %v3989
        %v3991 = vpop.f32.mrb[0].mxu0
        %3992 = vmatprep.mubr.f32.mxu0 0.0
        %3993 = vmatmul.mubr.f32.gmra.mrb[0].mxu0 %v3899
        %v3994 = vpop.f32.mrb[0].mxu0
        %v3995 = vadd.f32 0.0, %v3994
        %v3996 = vpop.f32.mrb[0].mxu0
        %3997 = vmatprep.mubr.f32.mxu0 0.0
        %3998 = vmatmul.mubr.f32.gmra.mrb[0].mxu0 %v3902
        %v3999 = vpop.f32.mrb[0].mxu0
        %v4000 = vadd.f32 0.0, %v3999
        %v4001 = vpop.f32.mrb[0].mxu0
        %4002 = vmatprep.mubr.f32.mxu0 0.0
        %4003 = vmatmul.mubr.f32.gmra.mrb[0].mxu0 %v3905
        %v4004 = vpop.f32.mrb[0].mxu0
        %v4005 = vadd.f32 0.0, %v4004
        %v4006 = vpop.f32.mrb[0].mxu0
        %4007 = vmatprep.mubr.f32.mxu0 0.0
        %4008 = vmatmul.mubr.f32.gmra.mrb[0].mxu0 %v3908
        %v4009 = vpop.f32.mrb[0].mxu0
        %v4010 = vadd.f32 0.0, %v4009
        %v4011 = vpop.f32.mrb[0].mxu0
        %4012 = vmatprep.mubr.f32.mxu0 0.0
        %4013 = vmatmul.mubr.f32.gmra.mrb[0].mxu0 %v3911
        %v4014 = vpop.f32.mrb[0].mxu0
        %v4015 = vadd.f32 0.0, %v4014
        %v4016 = vpop.f32.mrb[0].mxu0
        %4017 = vdwg.mxu0
        %4018 = vst.msk [vmem:[#allocation2] sm:$0xff] %vm912, %v3980
        %4019 = vst.msk [vmem:[#allocation2 + $0x8] sm:$0xff] %vm912, %v3985
        %4020 = vst.msk [vmem:[#allocation2 + $0x10] sm:$0xff] %vm912, %v3990
        %4021 = vst.msk [vmem:[#allocation2 + $0x18] sm:$0xff] %vm912, %v3995
        %4022 = vst.msk [vmem:[#allocation2 + $0x20] sm:$0xff] %vm912, %v4000
        %4023 = vst.msk [vmem:[#allocation2 + $0x28] sm:$0xff] %vm912, %v4005
        %4024 = vst.msk [vmem:[#allocation2 + $0x30] sm:$0xff] %vm912, %v4010
        %4025 = vst.msk [vmem:[#allocation2 + $0x38] sm:$0xff] %vm912, %v4015
        %4026 = vrot.lane.b32.xlu0 %v3422, 120
        %v4027 = vpop.permute.xlu0 %4026
        %4028 = vrot.lane.b32.xlu0 %v3425, 120
        %v4029 = vpop.permute.xlu0 %4028
        %4030 = vrot.lane.b32.xlu0 %v3430, 120
        %v4031 = vpop.permute.xlu0 %4030
        %4032 = vrot.lane.b32.xlu0 %v3433, 120
        %v4033 = vpop.permute.xlu0 %4032
        %4034 = vrot.lane.b32.xlu0 %v3438, 120
        %v4035 = vpop.permute.xlu0 %4034
        %4036 = vrot.lane.b32.xlu0 %v3441, 120
        %v4037 = vpop.permute.xlu0 %4036
        %4038 = vrot.lane.b32.xlu0 %v3446, 120
        %v4039 = vpop.permute.xlu0 %4038
        %4040 = vrot.lane.b32.xlu0 %v3449, 120
        %v4041 = vpop.permute.xlu0 %4040
        %4042 = vrot.lane.b32.xlu0 %v3512, 120
        %v4043 = vpop.permute.xlu0 %4042
        %4044 = vrot.lane.b32.xlu0 %v3515, 120
        %v4045 = vpop.permute.xlu0 %4044
        %4046 = vrot.lane.b32.xlu0 %v3520, 120
        %v4047 = vpop.permute.xlu0 %4046
        %4048 = vrot.lane.b32.xlu0 %v3523, 120
        %v4049 = vpop.permute.xlu0 %4048
        %4050 = vrot.lane.b32.xlu0 %v3528, 120
        %v4051 = vpop.permute.xlu0 %4050
        %4052 = vrot.lane.b32.xlu0 %v3531, 120
        %v4053 = vpop.permute.xlu0 %4052
        %4054 = vrot.lane.b32.xlu0 %v3536, 120
        %v4055 = vpop.permute.xlu0 %4054
        %4056 = vrot.lane.b32.xlu0 %v3539, 120
        %v4057 = vpop.permute.xlu0 %4056
        %v4058 = vsel %vm912, %v4027, 0
        %v4060 = vsel %vm912, %v4029, 0
        %v4062 = vsel %vm912, %v4031, 0
        %v4064 = vsel %vm912, %v4033, 0
        %v4066 = vsel %vm912, %v4035, 0
        %v4068 = vsel %vm912, %v4037, 0
        %v4070 = vsel %vm912, %v4039, 0
        %v4072 = vsel %vm912, %v4041, 0
        %v4074 = vsel %vm912, %v4043, 0
        %v4076 = vsel %vm912, %v4045, 0
        %v4078 = vsel %vm912, %v4047, 0
        %v4080 = vsel %vm912, %v4049, 0
        %v4082 = vsel %vm912, %v4051, 0
        %v4084 = vsel %vm912, %v4053, 0
        %v4086 = vsel %vm912, %v4055, 0
        %v4088 = vsel %vm912, %v4057, 0
        %4090 = vmatprep.subr.mxu0 0.0
        %4091 = vmatpush1.xpose.msra.mxu0 %v4074
        %4092 = vmatprep.subr.mxu0 0.0
        %4093 = vmatpush1.xpose.msra.mxu0 %v4076
        %4094 = vmatprep.subr.mxu0 0.0
        %4095 = vmatpush1.xpose.msra.mxu0 %v4078
        %4096 = vmatprep.subr.mxu0 0.0
        %4097 = vmatpush1.xpose.msra.mxu0 %v4080
        %4098 = vmatprep.subr.mxu0 0.0
        %4099 = vmatpush1.xpose.msra.mxu0 %v4082
        %4100 = vmatprep.subr.mxu0 0.0
        %4101 = vmatpush1.xpose.msra.mxu0 %v4084
        %4102 = vmatprep.subr.mxu0 0.0
        %4103 = vmatpush1.xpose.msra.mxu0 %v4086
        %4104 = vmatprep.subr.mxu0 0.0
        %4105 = vmatpush1.xpose.msra.mxu0 %v4088
        %4106 = vmatprep.subr.mxu0 0.0
        %4107 = vmatpush1.xpose.msra.mxu0 0.0
        %4108 = vmatprep.subr.mxu0 0.0
        %4109 = vmatpush1.xpose.msra.mxu0 0.0
        %4110 = vmatprep.subr.mxu0 0.0
        %4111 = vmatpush1.xpose.msra.mxu0 0.0
        %4112 = vmatprep.subr.mxu0 0.0
        %4113 = vmatpush1.xpose.msra.mxu0 0.0
        %4114 = vmatprep.subr.mxu0 0.0
        %4115 = vmatpush1.xpose.msra.mxu0 0.0
        %4116 = vmatprep.subr.mxu0 0.0
        %4117 = vmatpush1.xpose.msra.mxu0 0.0
        %4118 = vmatprep.subr.mxu0 0.0
        %4119 = vmatpush1.xpose.msra.mxu0 0.0
        %4120 = vmatprep.subr.mxu0 0.0
        %4121 = vmatpush1.xpose.msra.mxu0 0.0
        %4122 = vmatprep.subr.mxu0 0.0
        %4123 = vmatpush1.xpose.msra.mxu0 0.0
        %4124 = vmatprep.subr.mxu0 0.0
        %4125 = vmatpush1.xpose.msra.mxu0 0.0
        %4126 = vmatprep.subr.mxu0 0.0
        %4127 = vmatpush1.xpose.msra.mxu0 0.0
        %4128 = vmatprep.subr.mxu0 0.0
        %4129 = vmatpush1.xpose.msra.mxu0 0.0
        %4130 = vmatprep.subr.mxu0 0.0
        %4131 = vmatpush1.xpose.msra.mxu0 0.0
        %4132 = vmatprep.subr.mxu0 0.0
        %4133 = vmatpush1.xpose.msra.mxu0 0.0
        %4134 = vmatprep.subr.mxu0 0.0
        %4135 = vmatpush1.xpose.msra.mxu0 0.0
        %4136 = vmatprep.subr.mxu0 0.0
        %4137 = vmatpush1.xpose.msra.mxu0 0.0
        %4138 = vmatprep.subr.mxu0 0.0
        %4139 = vmatpush1.xpose.msra.mxu0 0.0
        %4140 = vmatprep.subr.mxu0 0.0
        %4141 = vmatpush1.xpose.msra.mxu0 0.0
        %4142 = vmatprep.subr.mxu0 0.0
        %4143 = vmatpush1.xpose.msra.mxu0 0.0
        %4144 = vmatprep.subr.mxu0 0.0
        %4145 = vmatpush1.xpose.msra.mxu0 0.0
        %4146 = vmatprep.subr.mxu0 0.0
        %4147 = vmatpush1.xpose.msra.mxu0 0.0
        %4148 = vmatprep.subr.mxu0 0.0
        %4149 = vmatpush1.xpose.msra.mxu0 0.0
        %4150 = vmatprep.subr.mxu0 0.0
        %4151 = vmatpush1.xpose.msra.mxu0 0.0
        %4152 = vmatprep.subr.mxu0 0.0
        %4153 = vmatpush1.xpose.msra.mxu0 0.0
        %4154 = vmatprep.mubr.f32.mxu0 0.0
        %4155 = vmatmul.mubr.f32.gmra.mrb[0].mxu0 %v4058
        %v4156 = vpop.f32.mrb[0].mxu0
        %v4157 = vadd.f32 0.0, %v4156
        %v4158 = vpop.f32.mrb[0].mxu0
        %4159 = vmatprep.mubr.f32.mxu0 0.0
        %4160 = vmatmul.mubr.f32.gmra.mrb[0].mxu0 %v4060
        %v4161 = vpop.f32.mrb[0].mxu0
        %v4162 = vadd.f32 0.0, %v4161
        %v4163 = vpop.f32.mrb[0].mxu0
        %4164 = vmatprep.mubr.f32.mxu0 0.0
        %4165 = vmatmul.mubr.f32.gmra.mrb[0].mxu0 %v4062
        %v4166 = vpop.f32.mrb[0].mxu0
        %v4167 = vadd.f32 0.0, %v4166
        %v4168 = vpop.f32.mrb[0].mxu0
        %4169 = vmatprep.mubr.f32.mxu0 0.0
        %4170 = vmatmul.mubr.f32.gmra.mrb[0].mxu0 %v4064
        %v4171 = vpop.f32.mrb[0].mxu0
        %v4172 = vadd.f32 0.0, %v4171
        %v4173 = vpop.f32.mrb[0].mxu0
        %4174 = vmatprep.mubr.f32.mxu0 0.0
        %4175 = vmatmul.mubr.f32.gmra.mrb[0].mxu0 %v4066
        %v4176 = vpop.f32.mrb[0].mxu0
        %v4177 = vadd.f32 0.0, %v4176
        %v4178 = vpop.f32.mrb[0].mxu0
        %4179 = vmatprep.mubr.f32.mxu0 0.0
        %4180 = vmatmul.mubr.f32.gmra.mrb[0].mxu0 %v4068
        %v4181 = vpop.f32.mrb[0].mxu0
        %v4182 = vadd.f32 0.0, %v4181
        %v4183 = vpop.f32.mrb[0].mxu0
        %4184 = vmatprep.mubr.f32.mxu0 0.0
        %4185 = vmatmul.mubr.f32.gmra.mrb[0].mxu0 %v4070
        %v4186 = vpop.f32.mrb[0].mxu0
        %v4187 = vadd.f32 0.0, %v4186
        %v4188 = vpop.f32.mrb[0].mxu0
        %4189 = vmatprep.mubr.f32.mxu0 0.0
        %4190 = vmatmul.mubr.f32.gmra.mrb[0].mxu0 %v4072
        %v4191 = vpop.f32.mrb[0].mxu0
        %v4192 = vadd.f32 0.0, %v4191
        %v4193 = vpop.f32.mrb[0].mxu0
        %4194 = vdwg.mxu0
        %v4195 = vmul.f32 %v4157, 0.35355338
        %v4196 = vmul.f32 %v4162, 0.35355338
        %v4197 = vmul.f32 %v4167, 0.35355338
        %v4198 = vmul.f32 %v4172, 0.35355338
        %v4199 = vmul.f32 %v4177, 0.35355338
        %v4200 = vmul.f32 %v4182, 0.35355338
        %v4201 = vmul.f32 %v4187, 0.35355338
        %v4202 = vmul.f32 %v4192, 0.35355338
        %v4203 = vadd.f32 %v4195, %v623
        %v4204 = vadd.f32 %v4196, %v624
        %v4205 = vadd.f32 %v4197, %v625
        %v4206 = vadd.f32 %v4198, %v626
        %v4207 = vadd.f32 %v4199, %v627
        %v4208 = vadd.f32 %v4200, %v628
        %v4209 = vadd.f32 %v4201, %v629
        %v4210 = vadd.f32 %v4202, %v630
        %v4211 = vsel %vm1082, %v4203, -inf
        %4212 = vmax.xlane.f32.xlu0 %v4211
        %v4213 = vpop.xlane.xlu0 %4212
        %v4214 = vsel %vm1082, %v4204, -inf
        %4215 = vmax.xlane.f32.xlu0 %v4214
        %v4216 = vpop.xlane.xlu0 %4215
        %v4217 = vsel %vm1082, %v4205, -inf
        %4218 = vmax.xlane.f32.xlu0 %v4217
        %v4219 = vpop.xlane.xlu0 %4218
        %v4220 = vsel %vm1082, %v4206, -inf
        %4221 = vmax.xlane.f32.xlu0 %v4220
        %v4222 = vpop.xlane.xlu0 %4221
        %v4223 = vsel %vm1082, %v4207, -inf
        %4224 = vmax.xlane.f32.xlu0 %v4223
        %v4225 = vpop.xlane.xlu0 %4224
        %v4226 = vsel %vm1082, %v4208, -inf
        %4227 = vmax.xlane.f32.xlu0 %v4226
        %v4228 = vpop.xlane.xlu0 %4227
        %v4229 = vsel %vm1082, %v4209, -inf
        %4230 = vmax.xlane.f32.xlu0 %v4229
        %v4231 = vpop.xlane.xlu0 %4230
        %v4232 = vsel %vm1082, %v4210, -inf
        %4233 = vmax.xlane.f32.xlu0 %v4232
        %v4234 = vpop.xlane.xlu0 %4233
        %v4235 = vsub.f32 %v4203, %v4213
        %v4236 = vsub.f32 %v4204, %v4216
        %v4237 = vsub.f32 %v4205, %v4219
        %v4238 = vsub.f32 %v4206, %v4222
        %v4239 = vsub.f32 %v4207, %v4225
        %v4240 = vsub.f32 %v4208, %v4228
        %v4241 = vsub.f32 %v4209, %v4231
        %v4242 = vsub.f32 %v4210, %v4234
        %v4243 = vmul.f32 %v4235, 1.442695
        %v4244 = vpow.pop %v4243
        %v4245 = vmul.f32 %v4236, 1.442695
        %v4246 = vpow.pop %v4245
        %v4247 = vmul.f32 %v4237, 1.442695
        %v4248 = vpow.pop %v4247
        %v4249 = vmul.f32 %v4238, 1.442695
        %v4250 = vpow.pop %v4249
        %v4251 = vmul.f32 %v4239, 1.442695
        %v4252 = vpow.pop %v4251
        %v4253 = vmul.f32 %v4240, 1.442695
        %v4254 = vpow.pop %v4253
        %v4255 = vmul.f32 %v4241, 1.442695
        %v4256 = vpow.pop %v4255
        %v4257 = vmul.f32 %v4242, 1.442695
        %v4258 = vpow.pop %v4257
        %v4259 = vsel %vm1082, %v4244, 0.0
        %4260 = vadd.xlane.f32.xlu0 %v4259
        %v4261 = vpop.xlane.xlu0 %4260
        %v4262 = vsel %vm1082, %v4246, 0.0
        %4263 = vadd.xlane.f32.xlu0 %v4262
        %v4264 = vpop.xlane.xlu0 %4263
        %v4265 = vsel %vm1082, %v4248, 0.0
        %4266 = vadd.xlane.f32.xlu0 %v4265
        %v4267 = vpop.xlane.xlu0 %4266
        %v4268 = vsel %vm1082, %v4250, 0.0
        %4269 = vadd.xlane.f32.xlu0 %v4268
        %v4270 = vpop.xlane.xlu0 %4269
        %v4271 = vsel %vm1082, %v4252, 0.0
        %4272 = vadd.xlane.f32.xlu0 %v4271
        %v4273 = vpop.xlane.xlu0 %4272
        %v4274 = vsel %vm1082, %v4254, 0.0
        %4275 = vadd.xlane.f32.xlu0 %v4274
        %v4276 = vpop.xlane.xlu0 %4275
        %v4277 = vsel %vm1082, %v4256, 0.0
        %4278 = vadd.xlane.f32.xlu0 %v4277
        %v4279 = vpop.xlane.xlu0 %4278
        %v4280 = vsel %vm1082, %v4258, 0.0
        %4281 = vadd.xlane.f32.xlu0 %v4280
        %v4282 = vpop.xlane.xlu0 %4281
        %v4283 = vrcp.pop %v4261
        %v4284 = vrcp.pop %v4264
        %v4285 = vrcp.pop %v4267
        %v4286 = vrcp.pop %v4270
        %v4287 = vrcp.pop %v4273
        %v4288 = vrcp.pop %v4276
        %v4289 = vrcp.pop %v4279
        %v4290 = vrcp.pop %v4282
        %v4291 = vmul.f32 %v4244, %v4283
        %v4292 = vmul.f32 %v4246, %v4284
        %v4293 = vmul.f32 %v4248, %v4285
        %v4294 = vmul.f32 %v4250, %v4286
        %v4295 = vmul.f32 %v4252, %v4287
        %v4296 = vmul.f32 %v4254, %v4288
        %v4297 = vmul.f32 %v4256, %v4289
        %v4298 = vmul.f32 %v4258, %v4290
        %4307 = vrot.lane.b32.xlu0 %v3602, 120
        %v4308 = vpop.permute.xlu0 %4307
        %4309 = vrot.lane.b32.xlu0 %v3605, 120
        %v4310 = vpop.permute.xlu0 %4309
        %4311 = vrot.lane.b32.xlu0 %v3610, 120
        %v4312 = vpop.permute.xlu0 %4311
        %4313 = vrot.lane.b32.xlu0 %v3613, 120
        %v4314 = vpop.permute.xlu0 %4313
        %4315 = vrot.lane.b32.xlu0 %v3618, 120
        %v4316 = vpop.permute.xlu0 %4315
        %4317 = vrot.lane.b32.xlu0 %v3621, 120
        %v4318 = vpop.permute.xlu0 %4317
        %4319 = vrot.lane.b32.xlu0 %v3626, 120
        %v4320 = vpop.permute.xlu0 %4319
        %4321 = vrot.lane.b32.xlu0 %v3629, 120
        %v4322 = vpop.permute.xlu0 %4321
        %v4332 = vsel %vm1082, %v4291, 0
        %v4335 = vsel %vm1082, %v4292, 0
        %v4338 = vsel %vm1082, %v4293, 0
        %v4341 = vsel %vm1082, %v4294, 0
        %v4344 = vsel %vm1082, %v4295, 0
        %v4347 = vsel %vm1082, %v4296, 0
        %v4350 = vsel %vm1082, %v4297, 0
        %v4353 = vsel %vm1082, %v4298, 0
        %4355 = vmatprep.subr.mxu0 0.0
        %4356 = vmatpush1.msra.mxu0 %v4308
        %4357 = vmatprep.subr.mxu0 0.0
        %4358 = vmatpush1.msra.mxu0 %v4310
        %4359 = vmatprep.subr.mxu0 0.0
        %4360 = vmatpush1.msra.mxu0 %v4312
        %4361 = vmatprep.subr.mxu0 0.0
        %4362 = vmatpush1.msra.mxu0 %v4314
        %4363 = vmatprep.subr.mxu0 0.0
        %4364 = vmatpush1.msra.mxu0 %v4316
        %4365 = vmatprep.subr.mxu0 0.0
        %4366 = vmatpush1.msra.mxu0 %v4318
        %4367 = vmatprep.subr.mxu0 0.0
        %4368 = vmatpush1.msra.mxu0 %v4320
        %4369 = vmatprep.subr.mxu0 0.0
        %4370 = vmatpush1.msra.mxu0 %v4322
        %4371 = vmatprep.subr.mxu0 0.0
        %4372 = vmatpush1.msra.mxu0 0.0
        %4373 = vmatprep.subr.mxu0 0.0
        %4374 = vmatpush1.msra.mxu0 0.0
        %4375 = vmatprep.subr.mxu0 0.0
        %4376 = vmatpush1.msra.mxu0 0.0
        %4377 = vmatprep.subr.mxu0 0.0
        %4378 = vmatpush1.msra.mxu0 0.0
        %4379 = vmatprep.subr.mxu0 0.0
        %4380 = vmatpush1.msra.mxu0 0.0
        %4381 = vmatprep.subr.mxu0 0.0
        %4382 = vmatpush1.msra.mxu0 0.0
        %4383 = vmatprep.subr.mxu0 0.0
        %4384 = vmatpush1.msra.mxu0 0.0
        %4385 = vmatprep.subr.mxu0 0.0
        %4386 = vmatpush1.msra.mxu0 0.0
        %4387 = vmatprep.subr.mxu0 0.0
        %4388 = vmatpush1.msra.mxu0 0.0
        %4389 = vmatprep.subr.mxu0 0.0
        %4390 = vmatpush1.msra.mxu0 0.0
        %4391 = vmatprep.subr.mxu0 0.0
        %4392 = vmatpush1.msra.mxu0 0.0
        %4393 = vmatprep.subr.mxu0 0.0
        %4394 = vmatpush1.msra.mxu0 0.0
        %4395 = vmatprep.subr.mxu0 0.0
        %4396 = vmatpush1.msra.mxu0 0.0
        %4397 = vmatprep.subr.mxu0 0.0
        %4398 = vmatpush1.msra.mxu0 0.0
        %4399 = vmatprep.subr.mxu0 0.0
        %4400 = vmatpush1.msra.mxu0 0.0
        %4401 = vmatprep.subr.mxu0 0.0
        %4402 = vmatpush1.msra.mxu0 0.0
        %4403 = vmatprep.subr.mxu0 0.0
        %4404 = vmatpush1.msra.mxu0 0.0
        %4405 = vmatprep.subr.mxu0 0.0
        %4406 = vmatpush1.msra.mxu0 0.0
        %4407 = vmatprep.subr.mxu0 0.0
        %4408 = vmatpush1.msra.mxu0 0.0
        %4409 = vmatprep.subr.mxu0 0.0
        %4410 = vmatpush1.msra.mxu0 0.0
        %4411 = vmatprep.subr.mxu0 0.0
        %4412 = vmatpush1.msra.mxu0 0.0
        %4413 = vmatprep.subr.mxu0 0.0
        %4414 = vmatpush1.msra.mxu0 0.0
        %4415 = vmatprep.subr.mxu0 0.0
        %4416 = vmatpush1.msra.mxu0 0.0
        %4417 = vmatprep.subr.mxu0 0.0
        %4418 = vmatpush1.msra.mxu0 0.0
        %4419 = vmatprep.mubr.f32.mxu0 0.0
        %4420 = vmatmul.mubr.f32.gmra.mrb[0].mxu0 %v4332
        %v4421 = vpop.f32.mrb[0].mxu0
        %v4422 = vadd.f32 0.0, %v4421
        %v4423 = vpop.f32.mrb[0].mxu0
        %4424 = vmatprep.mubr.f32.mxu0 0.0
        %4425 = vmatmul.mubr.f32.gmra.mrb[0].mxu0 %v4335
        %v4426 = vpop.f32.mrb[0].mxu0
        %v4427 = vadd.f32 0.0, %v4426
        %v4428 = vpop.f32.mrb[0].mxu0
        %4429 = vmatprep.mubr.f32.mxu0 0.0
        %4430 = vmatmul.mubr.f32.gmra.mrb[0].mxu0 %v4338
        %v4431 = vpop.f32.mrb[0].mxu0
        %v4432 = vadd.f32 0.0, %v4431
        %v4433 = vpop.f32.mrb[0].mxu0
        %4434 = vmatprep.mubr.f32.mxu0 0.0
        %4435 = vmatmul.mubr.f32.gmra.mrb[0].mxu0 %v4341
        %v4436 = vpop.f32.mrb[0].mxu0
        %v4437 = vadd.f32 0.0, %v4436
        %v4438 = vpop.f32.mrb[0].mxu0
        %4439 = vmatprep.mubr.f32.mxu0 0.0
        %4440 = vmatmul.mubr.f32.gmra.mrb[0].mxu0 %v4344
        %v4441 = vpop.f32.mrb[0].mxu0
        %v4442 = vadd.f32 0.0, %v4441
        %v4443 = vpop.f32.mrb[0].mxu0
        %4444 = vmatprep.mubr.f32.mxu0 0.0
        %4445 = vmatmul.mubr.f32.gmra.mrb[0].mxu0 %v4347
        %v4446 = vpop.f32.mrb[0].mxu0
        %v4447 = vadd.f32 0.0, %v4446
        %v4448 = vpop.f32.mrb[0].mxu0
        %4449 = vmatprep.mubr.f32.mxu0 0.0
        %4450 = vmatmul.mubr.f32.gmra.mrb[0].mxu0 %v4350
        %v4451 = vpop.f32.mrb[0].mxu0
        %v4452 = vadd.f32 0.0, %v4451
        %v4453 = vpop.f32.mrb[0].mxu0
        %4454 = vmatprep.mubr.f32.mxu0 0.0
        %4455 = vmatmul.mubr.f32.gmra.mrb[0].mxu0 %v4353
        %v4456 = vpop.f32.mrb[0].mxu0
        %v4457 = vadd.f32 0.0, %v4456
        %v4458 = vpop.f32.mrb[0].mxu0
        %4459 = vdwg.mxu0
        %4468 = vrot.lane.b32.xlu0 %v4422, 8
        %v4469 = vpop.permute.xlu0 %4468
        %4470 = vrot.lane.b32.xlu0 %v4427, 8
        %v4471 = vpop.permute.xlu0 %4470
        %4472 = vrot.lane.b32.xlu0 %v4432, 8
        %v4473 = vpop.permute.xlu0 %4472
        %4474 = vrot.lane.b32.xlu0 %v4437, 8
        %v4475 = vpop.permute.xlu0 %4474
        %4476 = vrot.lane.b32.xlu0 %v4442, 8
        %v4477 = vpop.permute.xlu0 %4476
        %4478 = vrot.lane.b32.xlu0 %v4447, 8
        %v4479 = vpop.permute.xlu0 %4478
        %4480 = vrot.lane.b32.xlu0 %v4452, 8
        %v4481 = vpop.permute.xlu0 %4480
        %4482 = vrot.lane.b32.xlu0 %v4457, 8
        %v4483 = vpop.permute.xlu0 %4482
        %4492 = vst.msk [vmem:[#allocation2] sm:$0xff] %vm1774, %v4469
        %4493 = vst.msk [vmem:[#allocation2 + $0x8] sm:$0xff] %vm1774, %v4471
        %4494 = vst.msk [vmem:[#allocation2 + $0x10] sm:$0xff] %vm1774, %v4473
        %4495 = vst.msk [vmem:[#allocation2 + $0x18] sm:$0xff] %vm1774, %v4475
        %4496 = vst.msk [vmem:[#allocation2 + $0x20] sm:$0xff] %vm1774, %v4477
        %4497 = vst.msk [vmem:[#allocation2 + $0x28] sm:$0xff] %vm1774, %v4479
        %4498 = vst.msk [vmem:[#allocation2 + $0x30] sm:$0xff] %vm1774, %v4481
        %4499 = vst.msk [vmem:[#allocation2 + $0x38] sm:$0xff] %vm1774, %v4483
        %4500 = vrot.lane.b32.xlu0 %v3422, 112
        %v4501 = vpop.permute.xlu0 %4500
        %4502 = vrot.lane.b32.xlu0 %v3425, 112
        %v4503 = vpop.permute.xlu0 %4502
        %4504 = vrot.lane.b32.xlu0 %v3430, 112
        %v4505 = vpop.permute.xlu0 %4504
        %4506 = vrot.lane.b32.xlu0 %v3433, 112
        %v4507 = vpop.permute.xlu0 %4506
        %4508 = vrot.lane.b32.xlu0 %v3438, 112
        %v4509 = vpop.permute.xlu0 %4508
        %4510 = vrot.lane.b32.xlu0 %v3441, 112
        %v4511 = vpop.permute.xlu0 %4510
        %4512 = vrot.lane.b32.xlu0 %v3446, 112
        %v4513 = vpop.permute.xlu0 %4512
        %4514 = vrot.lane.b32.xlu0 %v3449, 112
        %v4515 = vpop.permute.xlu0 %4514
        %4516 = vrot.lane.b32.xlu0 %v3512, 112
        %v4517 = vpop.permute.xlu0 %4516
        %4518 = vrot.lane.b32.xlu0 %v3515, 112
        %v4519 = vpop.permute.xlu0 %4518
        %4520 = vrot.lane.b32.xlu0 %v3520, 112
        %v4521 = vpop.permute.xlu0 %4520
        %4522 = vrot.lane.b32.xlu0 %v3523, 112
        %v4523 = vpop.permute.xlu0 %4522
        %4524 = vrot.lane.b32.xlu0 %v3528, 112
        %v4525 = vpop.permute.xlu0 %4524
        %4526 = vrot.lane.b32.xlu0 %v3531, 112
        %v4527 = vpop.permute.xlu0 %4526
        %4528 = vrot.lane.b32.xlu0 %v3536, 112
        %v4529 = vpop.permute.xlu0 %4528
        %4530 = vrot.lane.b32.xlu0 %v3539, 112
        %v4531 = vpop.permute.xlu0 %4530
        %v4532 = vsel %vm912, %v4501, 0
        %v4534 = vsel %vm912, %v4503, 0
        %v4536 = vsel %vm912, %v4505, 0
        %v4538 = vsel %vm912, %v4507, 0
        %v4540 = vsel %vm912, %v4509, 0
        %v4542 = vsel %vm912, %v4511, 0
        %v4544 = vsel %vm912, %v4513, 0
        %v4546 = vsel %vm912, %v4515, 0
        %v4548 = vsel %vm912, %v4517, 0
        %v4550 = vsel %vm912, %v4519, 0
        %v4552 = vsel %vm912, %v4521, 0
        %v4554 = vsel %vm912, %v4523, 0
        %v4556 = vsel %vm912, %v4525, 0
        %v4558 = vsel %vm912, %v4527, 0
        %v4560 = vsel %vm912, %v4529, 0
        %v4562 = vsel %vm912, %v4531, 0
        %4564 = vmatprep.subr.mxu0 0.0
        %4565 = vmatpush1.xpose.msra.mxu0 %v4548
        %4566 = vmatprep.subr.mxu0 0.0
        %4567 = vmatpush1.xpose.msra.mxu0 %v4550
        %4568 = vmatprep.subr.mxu0 0.0
        %4569 = vmatpush1.xpose.msra.mxu0 %v4552
        %4570 = vmatprep.subr.mxu0 0.0
        %4571 = vmatpush1.xpose.msra.mxu0 %v4554
        %4572 = vmatprep.subr.mxu0 0.0
        %4573 = vmatpush1.xpose.msra.mxu0 %v4556
        %4574 = vmatprep.subr.mxu0 0.0
        %4575 = vmatpush1.xpose.msra.mxu0 %v4558
        %4576 = vmatprep.subr.mxu0 0.0
        %4577 = vmatpush1.xpose.msra.mxu0 %v4560
        %4578 = vmatprep.subr.mxu0 0.0
        %4579 = vmatpush1.xpose.msra.mxu0 %v4562
        %4580 = vmatprep.subr.mxu0 0.0
        %4581 = vmatpush1.xpose.msra.mxu0 0.0
        %4582 = vmatprep.subr.mxu0 0.0
        %4583 = vmatpush1.xpose.msra.mxu0 0.0
        %4584 = vmatprep.subr.mxu0 0.0
        %4585 = vmatpush1.xpose.msra.mxu0 0.0
        %4586 = vmatprep.subr.mxu0 0.0
        %4587 = vmatpush1.xpose.msra.mxu0 0.0
        %4588 = vmatprep.subr.mxu0 0.0
        %4589 = vmatpush1.xpose.msra.mxu0 0.0
        %4590 = vmatprep.subr.mxu0 0.0
        %4591 = vmatpush1.xpose.msra.mxu0 0.0
        %4592 = vmatprep.subr.mxu0 0.0
        %4593 = vmatpush1.xpose.msra.mxu0 0.0
        %4594 = vmatprep.subr.mxu0 0.0
        %4595 = vmatpush1.xpose.msra.mxu0 0.0
        %4596 = vmatprep.subr.mxu0 0.0
        %4597 = vmatpush1.xpose.msra.mxu0 0.0
        %4598 = vmatprep.subr.mxu0 0.0
        %4599 = vmatpush1.xpose.msra.mxu0 0.0
        %4600 = vmatprep.subr.mxu0 0.0
        %4601 = vmatpush1.xpose.msra.mxu0 0.0
        %4602 = vmatprep.subr.mxu0 0.0
        %4603 = vmatpush1.xpose.msra.mxu0 0.0
        %4604 = vmatprep.subr.mxu0 0.0
        %4605 = vmatpush1.xpose.msra.mxu0 0.0
        %4606 = vmatprep.subr.mxu0 0.0
        %4607 = vmatpush1.xpose.msra.mxu0 0.0
        %4608 = vmatprep.subr.mxu0 0.0
        %4609 = vmatpush1.xpose.msra.mxu0 0.0
        %4610 = vmatprep.subr.mxu0 0.0
        %4611 = vmatpush1.xpose.msra.mxu0 0.0
        %4612 = vmatprep.subr.mxu0 0.0
        %4613 = vmatpush1.xpose.msra.mxu0 0.0
        %4614 = vmatprep.subr.mxu0 0.0
        %4615 = vmatpush1.xpose.msra.mxu0 0.0
        %4616 = vmatprep.subr.mxu0 0.0
        %4617 = vmatpush1.xpose.msra.mxu0 0.0
        %4618 = vmatprep.subr.mxu0 0.0
        %4619 = vmatpush1.xpose.msra.mxu0 0.0
        %4620 = vmatprep.subr.mxu0 0.0
        %4621 = vmatpush1.xpose.msra.mxu0 0.0
        %4622 = vmatprep.subr.mxu0 0.0
        %4623 = vmatpush1.xpose.msra.mxu0 0.0
        %4624 = vmatprep.subr.mxu0 0.0
        %4625 = vmatpush1.xpose.msra.mxu0 0.0
        %4626 = vmatprep.subr.mxu0 0.0
        %4627 = vmatpush1.xpose.msra.mxu0 0.0
        %4628 = vmatprep.mubr.f32.mxu0 0.0
        %4629 = vmatmul.mubr.f32.gmra.mrb[0].mxu0 %v4532
        %v4630 = vpop.f32.mrb[0].mxu0
        %v4631 = vadd.f32 0.0, %v4630
        %v4632 = vpop.f32.mrb[0].mxu0
        %4633 = vmatprep.mubr.f32.mxu0 0.0
        %4634 = vmatmul.mubr.f32.gmra.mrb[0].mxu0 %v4534
        %v4635 = vpop.f32.mrb[0].mxu0
        %v4636 = vadd.f32 0.0, %v4635
        %v4637 = vpop.f32.mrb[0].mxu0
        %4638 = vmatprep.mubr.f32.mxu0 0.0
        %4639 = vmatmul.mubr.f32.gmra.mrb[0].mxu0 %v4536
        %v4640 = vpop.f32.mrb[0].mxu0
        %v4641 = vadd.f32 0.0, %v4640
        %v4642 = vpop.f32.mrb[0].mxu0
        %4643 = vmatprep.mubr.f32.mxu0 0.0
        %4644 = vmatmul.mubr.f32.gmra.mrb[0].mxu0 %v4538
        %v4645 = vpop.f32.mrb[0].mxu0
        %v4646 = vadd.f32 0.0, %v4645
        %v4647 = vpop.f32.mrb[0].mxu0
        %4648 = vmatprep.mubr.f32.mxu0 0.0
        %4649 = vmatmul.mubr.f32.gmra.mrb[0].mxu0 %v4540
        %v4650 = vpop.f32.mrb[0].mxu0
        %v4651 = vadd.f32 0.0, %v4650
        %v4652 = vpop.f32.mrb[0].mxu0
        %4653 = vmatprep.mubr.f32.mxu0 0.0
        %4654 = vmatmul.mubr.f32.gmra.mrb[0].mxu0 %v4542
        %v4655 = vpop.f32.mrb[0].mxu0
        %v4656 = vadd.f32 0.0, %v4655
        %v4657 = vpop.f32.mrb[0].mxu0
        %4658 = vmatprep.mubr.f32.mxu0 0.0
        %4659 = vmatmul.mubr.f32.gmra.mrb[0].mxu0 %v4544
        %v4660 = vpop.f32.mrb[0].mxu0
        %v4661 = vadd.f32 0.0, %v4660
        %v4662 = vpop.f32.mrb[0].mxu0
        %4663 = vmatprep.mubr.f32.mxu0 0.0
        %4664 = vmatmul.mubr.f32.gmra.mrb[0].mxu0 %v4546
        %v4665 = vpop.f32.mrb[0].mxu0
        %v4666 = vadd.f32 0.0, %v4665
        %v4667 = vpop.f32.mrb[0].mxu0
        %4668 = vdwg.mxu0
        %v4669 = vmul.f32 %v4631, 0.35355338
        %v4670 = vmul.f32 %v4636, 0.35355338
        %v4671 = vmul.f32 %v4641, 0.35355338
        %v4672 = vmul.f32 %v4646, 0.35355338
        %v4673 = vmul.f32 %v4651, 0.35355338
        %v4674 = vmul.f32 %v4656, 0.35355338
        %v4675 = vmul.f32 %v4661, 0.35355338
        %v4676 = vmul.f32 %v4666, 0.35355338
        %v4677 = vadd.f32 %v4669, %v623
        %v4678 = vadd.f32 %v4670, %v624
        %v4679 = vadd.f32 %v4671, %v625
        %v4680 = vadd.f32 %v4672, %v626
        %v4681 = vadd.f32 %v4673, %v627
        %v4682 = vadd.f32 %v4674, %v628
        %v4683 = vadd.f32 %v4675, %v629
        %v4684 = vadd.f32 %v4676, %v630
        %v4685 = vsel %vm1082, %v4677, -inf
        %4686 = vmax.xlane.f32.xlu0 %v4685
        %v4687 = vpop.xlane.xlu0 %4686
        %v4688 = vsel %vm1082, %v4678, -inf
        %4689 = vmax.xlane.f32.xlu0 %v4688
        %v4690 = vpop.xlane.xlu0 %4689
        %v4691 = vsel %vm1082, %v4679, -inf
        %4692 = vmax.xlane.f32.xlu0 %v4691
        %v4693 = vpop.xlane.xlu0 %4692
        %v4694 = vsel %vm1082, %v4680, -inf
        %4695 = vmax.xlane.f32.xlu0 %v4694
        %v4696 = vpop.xlane.xlu0 %4695
        %v4697 = vsel %vm1082, %v4681, -inf
        %4698 = vmax.xlane.f32.xlu0 %v4697
        %v4699 = vpop.xlane.xlu0 %4698
        %v4700 = vsel %vm1082, %v4682, -inf
        %4701 = vmax.xlane.f32.xlu0 %v4700
        %v4702 = vpop.xlane.xlu0 %4701
        %v4703 = vsel %vm1082, %v4683, -inf
        %4704 = vmax.xlane.f32.xlu0 %v4703
        %v4705 = vpop.xlane.xlu0 %4704
        %v4706 = vsel %vm1082, %v4684, -inf
        %4707 = vmax.xlane.f32.xlu0 %v4706
        %v4708 = vpop.xlane.xlu0 %4707
        %v4709 = vsub.f32 %v4677, %v4687
        %v4710 = vsub.f32 %v4678, %v4690
        %v4711 = vsub.f32 %v4679, %v4693
        %v4712 = vsub.f32 %v4680, %v4696
        %v4713 = vsub.f32 %v4681, %v4699
        %v4714 = vsub.f32 %v4682, %v4702
        %v4715 = vsub.f32 %v4683, %v4705
        %v4716 = vsub.f32 %v4684, %v4708
        %v4717 = vmul.f32 %v4709, 1.442695
        %v4718 = vpow.pop %v4717
        %v4719 = vmul.f32 %v4710, 1.442695
        %v4720 = vpow.pop %v4719
        %v4721 = vmul.f32 %v4711, 1.442695
        %v4722 = vpow.pop %v4721
        %v4723 = vmul.f32 %v4712, 1.442695
        %v4724 = vpow.pop %v4723
        %v4725 = vmul.f32 %v4713, 1.442695
        %v4726 = vpow.pop %v4725
        %v4727 = vmul.f32 %v4714, 1.442695
        %v4728 = vpow.pop %v4727
        %v4729 = vmul.f32 %v4715, 1.442695
        %v4730 = vpow.pop %v4729
        %v4731 = vmul.f32 %v4716, 1.442695
        %v4732 = vpow.pop %v4731
        %v4733 = vsel %vm1082, %v4718, 0.0
        %4734 = vadd.xlane.f32.xlu0 %v4733
        %v4735 = vpop.xlane.xlu0 %4734
        %v4736 = vsel %vm1082, %v4720, 0.0
        %4737 = vadd.xlane.f32.xlu0 %v4736
        %v4738 = vpop.xlane.xlu0 %4737
        %v4739 = vsel %vm1082, %v4722, 0.0
        %4740 = vadd.xlane.f32.xlu0 %v4739
        %v4741 = vpop.xlane.xlu0 %4740
        %v4742 = vsel %vm1082, %v4724, 0.0
        %4743 = vadd.xlane.f32.xlu0 %v4742
        %v4744 = vpop.xlane.xlu0 %4743
        %v4745 = vsel %vm1082, %v4726, 0.0
        %4746 = vadd.xlane.f32.xlu0 %v4745
        %v4747 = vpop.xlane.xlu0 %4746
        %v4748 = vsel %vm1082, %v4728, 0.0
        %4749 = vadd.xlane.f32.xlu0 %v4748
        %v4750 = vpop.xlane.xlu0 %4749
        %v4751 = vsel %vm1082, %v4730, 0.0
        %4752 = vadd.xlane.f32.xlu0 %v4751
        %v4753 = vpop.xlane.xlu0 %4752
        %v4754 = vsel %vm1082, %v4732, 0.0
        %4755 = vadd.xlane.f32.xlu0 %v4754
        %v4756 = vpop.xlane.xlu0 %4755
        %v4757 = vrcp.pop %v4735
        %v4758 = vrcp.pop %v4738
        %v4759 = vrcp.pop %v4741
        %v4760 = vrcp.pop %v4744
        %v4761 = vrcp.pop %v4747
        %v4762 = vrcp.pop %v4750
        %v4763 = vrcp.pop %v4753
        %v4764 = vrcp.pop %v4756
        %v4765 = vmul.f32 %v4718, %v4757
        %v4766 = vmul.f32 %v4720, %v4758
        %v4767 = vmul.f32 %v4722, %v4759
        %v4768 = vmul.f32 %v4724, %v4760
        %v4769 = vmul.f32 %v4726, %v4761
        %v4770 = vmul.f32 %v4728, %v4762
        %v4771 = vmul.f32 %v4730, %v4763
        %v4772 = vmul.f32 %v4732, %v4764
        %4773 = vrot.lane.b32.xlu0 %v3602, 112
        %v4774 = vpop.permute.xlu0 %4773
        %4775 = vrot.lane.b32.xlu0 %v3605, 112
        %v4776 = vpop.permute.xlu0 %4775
        %4777 = vrot.lane.b32.xlu0 %v3610, 112
        %v4778 = vpop.permute.xlu0 %4777
        %4779 = vrot.lane.b32.xlu0 %v3613, 112
        %v4780 = vpop.permute.xlu0 %4779
        %4781 = vrot.lane.b32.xlu0 %v3618, 112
        %v4782 = vpop.permute.xlu0 %4781
        %4783 = vrot.lane.b32.xlu0 %v3621, 112
        %v4784 = vpop.permute.xlu0 %4783
        %4785 = vrot.lane.b32.xlu0 %v3626, 112
        %v4786 = vpop.permute.xlu0 %4785
        %4787 = vrot.lane.b32.xlu0 %v3629, 112
        %v4788 = vpop.permute.xlu0 %4787
        %v4798 = vsel %vm1082, %v4765, 0
        %v4801 = vsel %vm1082, %v4766, 0
        %v4804 = vsel %vm1082, %v4767, 0
        %v4807 = vsel %vm1082, %v4768, 0
        %v4810 = vsel %vm1082, %v4769, 0
        %v4813 = vsel %vm1082, %v4770, 0
        %v4816 = vsel %vm1082, %v4771, 0
        %v4819 = vsel %vm1082, %v4772, 0
        %4821 = vmatprep.subr.mxu0 0.0
        %4822 = vmatpush1.msra.mxu0 %v4774
        %4823 = vmatprep.subr.mxu0 0.0
        %4824 = vmatpush1.msra.mxu0 %v4776
        %4825 = vmatprep.subr.mxu0 0.0
        %4826 = vmatpush1.msra.mxu0 %v4778
        %4827 = vmatprep.subr.mxu0 0.0
        %4828 = vmatpush1.msra.mxu0 %v4780
        %4829 = vmatprep.subr.mxu0 0.0
        %4830 = vmatpush1.msra.mxu0 %v4782
        %4831 = vmatprep.subr.mxu0 0.0
        %4832 = vmatpush1.msra.mxu0 %v4784
        %4833 = vmatprep.subr.mxu0 0.0
        %4834 = vmatpush1.msra.mxu0 %v4786
        %4835 = vmatprep.subr.mxu0 0.0
        %4836 = vmatpush1.msra.mxu0 %v4788
        %4837 = vmatprep.subr.mxu0 0.0
        %4838 = vmatpush1.msra.mxu0 0.0
        %4839 = vmatprep.subr.mxu0 0.0
        %4840 = vmatpush1.msra.mxu0 0.0
        %4841 = vmatprep.subr.mxu0 0.0
        %4842 = vmatpush1.msra.mxu0 0.0
        %4843 = vmatprep.subr.mxu0 0.0
        %4844 = vmatpush1.msra.mxu0 0.0
        %4845 = vmatprep.subr.mxu0 0.0
        %4846 = vmatpush1.msra.mxu0 0.0
        %4847 = vmatprep.subr.mxu0 0.0
        %4848 = vmatpush1.msra.mxu0 0.0
        %4849 = vmatprep.subr.mxu0 0.0
        %4850 = vmatpush1.msra.mxu0 0.0
        %4851 = vmatprep.subr.mxu0 0.0
        %4852 = vmatpush1.msra.mxu0 0.0
        %4853 = vmatprep.subr.mxu0 0.0
        %4854 = vmatpush1.msra.mxu0 0.0
        %4855 = vmatprep.subr.mxu0 0.0
        %4856 = vmatpush1.msra.mxu0 0.0
        %4857 = vmatprep.subr.mxu0 0.0
        %4858 = vmatpush1.msra.mxu0 0.0
        %4859 = vmatprep.subr.mxu0 0.0
        %4860 = vmatpush1.msra.mxu0 0.0
        %4861 = vmatprep.subr.mxu0 0.0
        %4862 = vmatpush1.msra.mxu0 0.0
        %4863 = vmatprep.subr.mxu0 0.0
        %4864 = vmatpush1.msra.mxu0 0.0
        %4865 = vmatprep.subr.mxu0 0.0
        %4866 = vmatpush1.msra.mxu0 0.0
        %4867 = vmatprep.subr.mxu0 0.0
        %4868 = vmatpush1.msra.mxu0 0.0
        %4869 = vmatprep.subr.mxu0 0.0
        %4870 = vmatpush1.msra.mxu0 0.0
        %4871 = vmatprep.subr.mxu0 0.0
        %4872 = vmatpush1.msra.mxu0 0.0
        %4873 = vmatprep.subr.mxu0 0.0
        %4874 = vmatpush1.msra.mxu0 0.0
        %4875 = vmatprep.subr.mxu0 0.0
        %4876 = vmatpush1.msra.mxu0 0.0
        %4877 = vmatprep.subr.mxu0 0.0
        %4878 = vmatpush1.msra.mxu0 0.0
        %4879 = vmatprep.subr.mxu0 0.0
        %4880 = vmatpush1.msra.mxu0 0.0
        %4881 = vmatprep.subr.mxu0 0.0
        %4882 = vmatpush1.msra.mxu0 0.0
        %4883 = vmatprep.subr.mxu0 0.0
        %4884 = vmatpush1.msra.mxu0 0.0
        %4885 = vmatprep.mubr.f32.mxu0 0.0
        %4886 = vmatmul.mubr.f32.gmra.mrb[0].mxu0 %v4798
        %v4887 = vpop.f32.mrb[0].mxu0
        %v4888 = vadd.f32 0.0, %v4887
        %v4889 = vpop.f32.mrb[0].mxu0
        %4890 = vmatprep.mubr.f32.mxu0 0.0
        %4891 = vmatmul.mubr.f32.gmra.mrb[0].mxu0 %v4801
        %v4892 = vpop.f32.mrb[0].mxu0
        %v4893 = vadd.f32 0.0, %v4892
        %v4894 = vpop.f32.mrb[0].mxu0
        %4895 = vmatprep.mubr.f32.mxu0 0.0
        %4896 = vmatmul.mubr.f32.gmra.mrb[0].mxu0 %v4804
        %v4897 = vpop.f32.mrb[0].mxu0
        %v4898 = vadd.f32 0.0, %v4897
        %v4899 = vpop.f32.mrb[0].mxu0
        %4900 = vmatprep.mubr.f32.mxu0 0.0
        %4901 = vmatmul.mubr.f32.gmra.mrb[0].mxu0 %v4807
        %v4902 = vpop.f32.mrb[0].mxu0
        %v4903 = vadd.f32 0.0, %v4902
        %v4904 = vpop.f32.mrb[0].mxu0
        %4905 = vmatprep.mubr.f32.mxu0 0.0
        %4906 = vmatmul.mubr.f32.gmra.mrb[0].mxu0 %v4810
        %v4907 = vpop.f32.mrb[0].mxu0
        %v4908 = vadd.f32 0.0, %v4907
        %v4909 = vpop.f32.mrb[0].mxu0
        %4910 = vmatprep.mubr.f32.mxu0 0.0
        %4911 = vmatmul.mubr.f32.gmra.mrb[0].mxu0 %v4813
        %v4912 = vpop.f32.mrb[0].mxu0
        %v4913 = vadd.f32 0.0, %v4912
        %v4914 = vpop.f32.mrb[0].mxu0
        %4915 = vmatprep.mubr.f32.mxu0 0.0
        %4916 = vmatmul.mubr.f32.gmra.mrb[0].mxu0 %v4816
        %v4917 = vpop.f32.mrb[0].mxu0
        %v4918 = vadd.f32 0.0, %v4917
        %v4919 = vpop.f32.mrb[0].mxu0
        %4920 = vmatprep.mubr.f32.mxu0 0.0
        %4921 = vmatmul.mubr.f32.gmra.mrb[0].mxu0 %v4819
        %v4922 = vpop.f32.mrb[0].mxu0
        %v4923 = vadd.f32 0.0, %v4922
        %v4924 = vpop.f32.mrb[0].mxu0
        %4925 = vdwg.mxu0
        %4934 = vrot.lane.b32.xlu0 %v4888, 16
        %v4935 = vpop.permute.xlu0 %4934
        %4936 = vrot.lane.b32.xlu0 %v4893, 16
        %v4937 = vpop.permute.xlu0 %4936
        %4938 = vrot.lane.b32.xlu0 %v4898, 16
        %v4939 = vpop.permute.xlu0 %4938
        %4940 = vrot.lane.b32.xlu0 %v4903, 16
        %v4941 = vpop.permute.xlu0 %4940
        %4942 = vrot.lane.b32.xlu0 %v4908, 16
        %v4943 = vpop.permute.xlu0 %4942
        %4944 = vrot.lane.b32.xlu0 %v4913, 16
        %v4945 = vpop.permute.xlu0 %4944
        %4946 = vrot.lane.b32.xlu0 %v4918, 16
        %v4947 = vpop.permute.xlu0 %4946
        %4948 = vrot.lane.b32.xlu0 %v4923, 16
        %v4949 = vpop.permute.xlu0 %4948
        %4958 = vst.msk [vmem:[#allocation2] sm:$0xff] %vm2241, %v4935
        %4959 = vst.msk [vmem:[#allocation2 + $0x8] sm:$0xff] %vm2241, %v4937
        %4960 = vst.msk [vmem:[#allocation2 + $0x10] sm:$0xff] %vm2241, %v4939
        %4961 = vst.msk [vmem:[#allocation2 + $0x18] sm:$0xff] %vm2241, %v4941
        %4962 = vst.msk [vmem:[#allocation2 + $0x20] sm:$0xff] %vm2241, %v4943
        %4963 = vst.msk [vmem:[#allocation2 + $0x28] sm:$0xff] %vm2241, %v4945
        %4964 = vst.msk [vmem:[#allocation2 + $0x30] sm:$0xff] %vm2241, %v4947
        %4965 = vst.msk [vmem:[#allocation2 + $0x38] sm:$0xff] %vm2241, %v4949
        %4966 = vrot.lane.b32.xlu0 %v3422, 104
        %v4967 = vpop.permute.xlu0 %4966
        %4968 = vrot.lane.b32.xlu0 %v3425, 104
        %v4969 = vpop.permute.xlu0 %4968
        %4970 = vrot.lane.b32.xlu0 %v3430, 104
        %v4971 = vpop.permute.xlu0 %4970
        %4972 = vrot.lane.b32.xlu0 %v3433, 104
        %v4973 = vpop.permute.xlu0 %4972
        %4974 = vrot.lane.b32.xlu0 %v3438, 104
        %v4975 = vpop.permute.xlu0 %4974
        %4976 = vrot.lane.b32.xlu0 %v3441, 104
        %v4977 = vpop.permute.xlu0 %4976
        %4978 = vrot.lane.b32.xlu0 %v3446, 104
        %v4979 = vpop.permute.xlu0 %4978
        %4980 = vrot.lane.b32.xlu0 %v3449, 104
        %v4981 = vpop.permute.xlu0 %4980
        %4982 = vrot.lane.b32.xlu0 %v3512, 104
        %v4983 = vpop.permute.xlu0 %4982
        %4984 = vrot.lane.b32.xlu0 %v3515, 104
        %v4985 = vpop.permute.xlu0 %4984
        %4986 = vrot.lane.b32.xlu0 %v3520, 104
        %v4987 = vpop.permute.xlu0 %4986
        %4988 = vrot.lane.b32.xlu0 %v3523, 104
        %v4989 = vpop.permute.xlu0 %4988
        %4990 = vrot.lane.b32.xlu0 %v3528, 104
        %v4991 = vpop.permute.xlu0 %4990
        %4992 = vrot.lane.b32.xlu0 %v3531, 104
        %v4993 = vpop.permute.xlu0 %4992
        %4994 = vrot.lane.b32.xlu0 %v3536, 104
        %v4995 = vpop.permute.xlu0 %4994
        %4996 = vrot.lane.b32.xlu0 %v3539, 104
        %v4997 = vpop.permute.xlu0 %4996
        %v4998 = vsel %vm912, %v4967, 0
        %v5000 = vsel %vm912, %v4969, 0
        %v5002 = vsel %vm912, %v4971, 0
        %v5004 = vsel %vm912, %v4973, 0
        %v5006 = vsel %vm912, %v4975, 0
        %v5008 = vsel %vm912, %v4977, 0
        %v5010 = vsel %vm912, %v4979, 0
        %v5012 = vsel %vm912, %v4981, 0
        %v5014 = vsel %vm912, %v4983, 0
        %v5016 = vsel %vm912, %v4985, 0
        %v5018 = vsel %vm912, %v4987, 0
        %v5020 = vsel %vm912, %v4989, 0
        %v5022 = vsel %vm912, %v4991, 0
        %v5024 = vsel %vm912, %v4993, 0
        %v5026 = vsel %vm912, %v4995, 0
        %v5028 = vsel %vm912, %v4997, 0
        %5030 = vmatprep.subr.mxu0 0.0
        %5031 = vmatpush1.xpose.msra.mxu0 %v5014
        %5032 = vmatprep.subr.mxu0 0.0
        %5033 = vmatpush1.xpose.msra.mxu0 %v5016
        %5034 = vmatprep.subr.mxu0 0.0
        %5035 = vmatpush1.xpose.msra.mxu0 %v5018
        %5036 = vmatprep.subr.mxu0 0.0
        %5037 = vmatpush1.xpose.msra.mxu0 %v5020
        %5038 = vmatprep.subr.mxu0 0.0
        %5039 = vmatpush1.xpose.msra.mxu0 %v5022
        %5040 = vmatprep.subr.mxu0 0.0
        %5041 = vmatpush1.xpose.msra.mxu0 %v5024
        %5042 = vmatprep.subr.mxu0 0.0
        %5043 = vmatpush1.xpose.msra.mxu0 %v5026
        %5044 = vmatprep.subr.mxu0 0.0
        %5045 = vmatpush1.xpose.msra.mxu0 %v5028
        %5046 = vmatprep.subr.mxu0 0.0
        %5047 = vmatpush1.xpose.msra.mxu0 0.0
        %5048 = vmatprep.subr.mxu0 0.0
        %5049 = vmatpush1.xpose.msra.mxu0 0.0
        %5050 = vmatprep.subr.mxu0 0.0
        %5051 = vmatpush1.xpose.msra.mxu0 0.0
        %5052 = vmatprep.subr.mxu0 0.0
        %5053 = vmatpush1.xpose.msra.mxu0 0.0
        %5054 = vmatprep.subr.mxu0 0.0
        %5055 = vmatpush1.xpose.msra.mxu0 0.0
        %5056 = vmatprep.subr.mxu0 0.0
        %5057 = vmatpush1.xpose.msra.mxu0 0.0
        %5058 = vmatprep.subr.mxu0 0.0
        %5059 = vmatpush1.xpose.msra.mxu0 0.0
        %5060 = vmatprep.subr.mxu0 0.0
        %5061 = vmatpush1.xpose.msra.mxu0 0.0
        %5062 = vmatprep.subr.mxu0 0.0
        %5063 = vmatpush1.xpose.msra.mxu0 0.0
        %5064 = vmatprep.subr.mxu0 0.0
        %5065 = vmatpush1.xpose.msra.mxu0 0.0
        %5066 = vmatprep.subr.mxu0 0.0
        %5067 = vmatpush1.xpose.msra.mxu0 0.0
        %5068 = vmatprep.subr.mxu0 0.0
        %5069 = vmatpush1.xpose.msra.mxu0 0.0
        %5070 = vmatprep.subr.mxu0 0.0
        %5071 = vmatpush1.xpose.msra.mxu0 0.0
        %5072 = vmatprep.subr.mxu0 0.0
        %5073 = vmatpush1.xpose.msra.mxu0 0.0
        %5074 = vmatprep.subr.mxu0 0.0
        %5075 = vmatpush1.xpose.msra.mxu0 0.0
        %5076 = vmatprep.subr.mxu0 0.0
        %5077 = vmatpush1.xpose.msra.mxu0 0.0
        %5078 = vmatprep.subr.mxu0 0.0
        %5079 = vmatpush1.xpose.msra.mxu0 0.0
        %5080 = vmatprep.subr.mxu0 0.0
        %5081 = vmatpush1.xpose.msra.mxu0 0.0
        %5082 = vmatprep.subr.mxu0 0.0
        %5083 = vmatpush1.xpose.msra.mxu0 0.0
        %5084 = vmatprep.subr.mxu0 0.0
        %5085 = vmatpush1.xpose.msra.mxu0 0.0
        %5086 = vmatprep.subr.mxu0 0.0
        %5087 = vmatpush1.xpose.msra.mxu0 0.0
        %5088 = vmatprep.subr.mxu0 0.0
        %5089 = vmatpush1.xpose.msra.mxu0 0.0
        %5090 = vmatprep.subr.mxu0 0.0
        %5091 = vmatpush1.xpose.msra.mxu0 0.0
        %5092 = vmatprep.subr.mxu0 0.0
        %5093 = vmatpush1.xpose.msra.mxu0 0.0
        %5094 = vmatprep.mubr.f32.mxu0 0.0
        %5095 = vmatmul.mubr.f32.gmra.mrb[0].mxu0 %v4998
        %v5096 = vpop.f32.mrb[0].mxu0
        %v5097 = vadd.f32 0.0, %v5096
        %v5098 = vpop.f32.mrb[0].mxu0
        %5099 = vmatprep.mubr.f32.mxu0 0.0
        %5100 = vmatmul.mubr.f32.gmra.mrb[0].mxu0 %v5000
        %v5101 = vpop.f32.mrb[0].mxu0
        %v5102 = vadd.f32 0.0, %v5101
        %v5103 = vpop.f32.mrb[0].mxu0
        %5104 = vmatprep.mubr.f32.mxu0 0.0
        %5105 = vmatmul.mubr.f32.gmra.mrb[0].mxu0 %v5002
        %v5106 = vpop.f32.mrb[0].mxu0
        %v5107 = vadd.f32 0.0, %v5106
        %v5108 = vpop.f32.mrb[0].mxu0
        %5109 = vmatprep.mubr.f32.mxu0 0.0
        %5110 = vmatmul.mubr.f32.gmra.mrb[0].mxu0 %v5004
        %v5111 = vpop.f32.mrb[0].mxu0
        %v5112 = vadd.f32 0.0, %v5111
        %v5113 = vpop.f32.mrb[0].mxu0
        %5114 = vmatprep.mubr.f32.mxu0 0.0
        %5115 = vmatmul.mubr.f32.gmra.mrb[0].mxu0 %v5006
        %v5116 = vpop.f32.mrb[0].mxu0
        %v5117 = vadd.f32 0.0, %v5116
        %v5118 = vpop.f32.mrb[0].mxu0
        %5119 = vmatprep.mubr.f32.mxu0 0.0
        %5120 = vmatmul.mubr.f32.gmra.mrb[0].mxu0 %v5008
        %v5121 = vpop.f32.mrb[0].mxu0
        %v5122 = vadd.f32 0.0, %v5121
        %v5123 = vpop.f32.mrb[0].mxu0
        %5124 = vmatprep.mubr.f32.mxu0 0.0
        %5125 = vmatmul.mubr.f32.gmra.mrb[0].mxu0 %v5010
        %v5126 = vpop.f32.mrb[0].mxu0
        %v5127 = vadd.f32 0.0, %v5126
        %v5128 = vpop.f32.mrb[0].mxu0
        %5129 = vmatprep.mubr.f32.mxu0 0.0
        %5130 = vmatmul.mubr.f32.gmra.mrb[0].mxu0 %v5012
        %v5131 = vpop.f32.mrb[0].mxu0
        %v5132 = vadd.f32 0.0, %v5131
        %v5133 = vpop.f32.mrb[0].mxu0
        %5134 = vdwg.mxu0
        %v5135 = vmul.f32 %v5097, 0.35355338
        %v5136 = vmul.f32 %v5102, 0.35355338
        %v5137 = vmul.f32 %v5107, 0.35355338
        %v5138 = vmul.f32 %v5112, 0.35355338
        %v5139 = vmul.f32 %v5117, 0.35355338
        %v5140 = vmul.f32 %v5122, 0.35355338
        %v5141 = vmul.f32 %v5127, 0.35355338
        %v5142 = vmul.f32 %v5132, 0.35355338
        %v5143 = vadd.f32 %v5135, %v623
        %v5144 = vadd.f32 %v5136, %v624
        %v5145 = vadd.f32 %v5137, %v625
        %v5146 = vadd.f32 %v5138, %v626
        %v5147 = vadd.f32 %v5139, %v627
        %v5148 = vadd.f32 %v5140, %v628
        %v5149 = vadd.f32 %v5141, %v629
        %v5150 = vadd.f32 %v5142, %v630
        %v5151 = vsel %vm1082, %v5143, -inf
        %5152 = vmax.xlane.f32.xlu0 %v5151
        %v5153 = vpop.xlane.xlu0 %5152
        %v5154 = vsel %vm1082, %v5144, -inf
        %5155 = vmax.xlane.f32.xlu0 %v5154
        %v5156 = vpop.xlane.xlu0 %5155
        %v5157 = vsel %vm1082, %v5145, -inf
        %5158 = vmax.xlane.f32.xlu0 %v5157
        %v5159 = vpop.xlane.xlu0 %5158
        %v5160 = vsel %vm1082, %v5146, -inf
        %5161 = vmax.xlane.f32.xlu0 %v5160
        %v5162 = vpop.xlane.xlu0 %5161
        %v5163 = vsel %vm1082, %v5147, -inf
        %5164 = vmax.xlane.f32.xlu0 %v5163
        %v5165 = vpop.xlane.xlu0 %5164
        %v5166 = vsel %vm1082, %v5148, -inf
        %5167 = vmax.xlane.f32.xlu0 %v5166
        %v5168 = vpop.xlane.xlu0 %5167
        %v5169 = vsel %vm1082, %v5149, -inf
        %5170 = vmax.xlane.f32.xlu0 %v5169
        %v5171 = vpop.xlane.xlu0 %5170
        %v5172 = vsel %vm1082, %v5150, -inf
        %5173 = vmax.xlane.f32.xlu0 %v5172
        %v5174 = vpop.xlane.xlu0 %5173
        %v5175 = vsub.f32 %v5143, %v5153
        %v5176 = vsub.f32 %v5144, %v5156
        %v5177 = vsub.f32 %v5145, %v5159
        %v5178 = vsub.f32 %v5146, %v5162
        %v5179 = vsub.f32 %v5147, %v5165
        %v5180 = vsub.f32 %v5148, %v5168
        %v5181 = vsub.f32 %v5149, %v5171
        %v5182 = vsub.f32 %v5150, %v5174
        %v5183 = vmul.f32 %v5175, 1.442695
        %v5184 = vpow.pop %v5183
        %v5185 = vmul.f32 %v5176, 1.442695
        %v5186 = vpow.pop %v5185
        %v5187 = vmul.f32 %v5177, 1.442695
        %v5188 = vpow.pop %v5187
        %v5189 = vmul.f32 %v5178, 1.442695
        %v5190 = vpow.pop %v5189
        %v5191 = vmul.f32 %v5179, 1.442695
        %v5192 = vpow.pop %v5191
        %v5193 = vmul.f32 %v5180, 1.442695
        %v5194 = vpow.pop %v5193
        %v5195 = vmul.f32 %v5181, 1.442695
        %v5196 = vpow.pop %v5195
        %v5197 = vmul.f32 %v5182, 1.442695
        %v5198 = vpow.pop %v5197
        %v5199 = vsel %vm1082, %v5184, 0.0
        %5200 = vadd.xlane.f32.xlu0 %v5199
        %v5201 = vpop.xlane.xlu0 %5200
        %v5202 = vsel %vm1082, %v5186, 0.0
        %5203 = vadd.xlane.f32.xlu0 %v5202
        %v5204 = vpop.xlane.xlu0 %5203
        %v5205 = vsel %vm1082, %v5188, 0.0
        %5206 = vadd.xlane.f32.xlu0 %v5205
        %v5207 = vpop.xlane.xlu0 %5206
        %v5208 = vsel %vm1082, %v5190, 0.0
        %5209 = vadd.xlane.f32.xlu0 %v5208
        %v5210 = vpop.xlane.xlu0 %5209
        %v5211 = vsel %vm1082, %v5192, 0.0
        %5212 = vadd.xlane.f32.xlu0 %v5211
        %v5213 = vpop.xlane.xlu0 %5212
        %v5214 = vsel %vm1082, %v5194, 0.0
        %5215 = vadd.xlane.f32.xlu0 %v5214
        %v5216 = vpop.xlane.xlu0 %5215
        %v5217 = vsel %vm1082, %v5196, 0.0
        %5218 = vadd.xlane.f32.xlu0 %v5217
        %v5219 = vpop.xlane.xlu0 %5218
        %v5220 = vsel %vm1082, %v5198, 0.0
        %5221 = vadd.xlane.f32.xlu0 %v5220
        %v5222 = vpop.xlane.xlu0 %5221
        %v5223 = vrcp.pop %v5201
        %v5224 = vrcp.pop %v5204
        %v5225 = vrcp.pop %v5207
        %v5226 = vrcp.pop %v5210
        %v5227 = vrcp.pop %v5213
        %v5228 = vrcp.pop %v5216
        %v5229 = vrcp.pop %v5219
        %v5230 = vrcp.pop %v5222
        %v5231 = vmul.f32 %v5184, %v5223
        %v5232 = vmul.f32 %v5186, %v5224
        %v5233 = vmul.f32 %v5188, %v5225
        %v5234 = vmul.f32 %v5190, %v5226
        %v5235 = vmul.f32 %v5192, %v5227
        %v5236 = vmul.f32 %v5194, %v5228
        %v5237 = vmul.f32 %v5196, %v5229
        %v5238 = vmul.f32 %v5198, %v5230
        %5239 = vrot.lane.b32.xlu0 %v3602, 104
        %v5240 = vpop.permute.xlu0 %5239
        %5241 = vrot.lane.b32.xlu0 %v3605, 104
        %v5242 = vpop.permute.xlu0 %5241
        %5243 = vrot.lane.b32.xlu0 %v3610, 104
        %v5244 = vpop.permute.xlu0 %5243
        %5245 = vrot.lane.b32.xlu0 %v3613, 104
        %v5246 = vpop.permute.xlu0 %5245
        %5247 = vrot.lane.b32.xlu0 %v3618, 104
        %v5248 = vpop.permute.xlu0 %5247
        %5249 = vrot.lane.b32.xlu0 %v3621, 104
        %v5250 = vpop.permute.xlu0 %5249
        %5251 = vrot.lane.b32.xlu0 %v3626, 104
        %v5252 = vpop.permute.xlu0 %5251
        %5253 = vrot.lane.b32.xlu0 %v3629, 104
        %v5254 = vpop.permute.xlu0 %5253
        %v5264 = vsel %vm1082, %v5231, 0
        %v5267 = vsel %vm1082, %v5232, 0
        %v5270 = vsel %vm1082, %v5233, 0
        %v5273 = vsel %vm1082, %v5234, 0
        %v5276 = vsel %vm1082, %v5235, 0
        %v5279 = vsel %vm1082, %v5236, 0
        %v5282 = vsel %vm1082, %v5237, 0
        %v5285 = vsel %vm1082, %v5238, 0
        %5287 = vmatprep.subr.mxu0 0.0
        %5288 = vmatpush1.msra.mxu0 %v5240
        %5289 = vmatprep.subr.mxu0 0.0
        %5290 = vmatpush1.msra.mxu0 %v5242
        %5291 = vmatprep.subr.mxu0 0.0
        %5292 = vmatpush1.msra.mxu0 %v5244
        %5293 = vmatprep.subr.mxu0 0.0
        %5294 = vmatpush1.msra.mxu0 %v5246
        %5295 = vmatprep.subr.mxu0 0.0
        %5296 = vmatpush1.msra.mxu0 %v5248
        %5297 = vmatprep.subr.mxu0 0.0
        %5298 = vmatpush1.msra.mxu0 %v5250
        %5299 = vmatprep.subr.mxu0 0.0
        %5300 = vmatpush1.msra.mxu0 %v5252
        %5301 = vmatprep.subr.mxu0 0.0
        %5302 = vmatpush1.msra.mxu0 %v5254
        %5303 = vmatprep.subr.mxu0 0.0
        %5304 = vmatpush1.msra.mxu0 0.0
        %5305 = vmatprep.subr.mxu0 0.0
        %5306 = vmatpush1.msra.mxu0 0.0
        %5307 = vmatprep.subr.mxu0 0.0
        %5308 = vmatpush1.msra.mxu0 0.0
        %5309 = vmatprep.subr.mxu0 0.0
        %5310 = vmatpush1.msra.mxu0 0.0
        %5311 = vmatprep.subr.mxu0 0.0
        %5312 = vmatpush1.msra.mxu0 0.0
        %5313 = vmatprep.subr.mxu0 0.0
        %5314 = vmatpush1.msra.mxu0 0.0
        %5315 = vmatprep.subr.mxu0 0.0
        %5316 = vmatpush1.msra.mxu0 0.0
        %5317 = vmatprep.subr.mxu0 0.0
        %5318 = vmatpush1.msra.mxu0 0.0
        %5319 = vmatprep.subr.mxu0 0.0
        %5320 = vmatpush1.msra.mxu0 0.0
        %5321 = vmatprep.subr.mxu0 0.0
        %5322 = vmatpush1.msra.mxu0 0.0
        %5323 = vmatprep.subr.mxu0 0.0
        %5324 = vmatpush1.msra.mxu0 0.0
        %5325 = vmatprep.subr.mxu0 0.0
        %5326 = vmatpush1.msra.mxu0 0.0
        %5327 = vmatprep.subr.mxu0 0.0
        %5328 = vmatpush1.msra.mxu0 0.0
        %5329 = vmatprep.subr.mxu0 0.0
        %5330 = vmatpush1.msra.mxu0 0.0
        %5331 = vmatprep.subr.mxu0 0.0
        %5332 = vmatpush1.msra.mxu0 0.0
        %5333 = vmatprep.subr.mxu0 0.0
        %5334 = vmatpush1.msra.mxu0 0.0
        %5335 = vmatprep.subr.mxu0 0.0
        %5336 = vmatpush1.msra.mxu0 0.0
        %5337 = vmatprep.subr.mxu0 0.0
        %5338 = vmatpush1.msra.mxu0 0.0
        %5339 = vmatprep.subr.mxu0 0.0
        %5340 = vmatpush1.msra.mxu0 0.0
        %5341 = vmatprep.subr.mxu0 0.0
        %5342 = vmatpush1.msra.mxu0 0.0
        %5343 = vmatprep.subr.mxu0 0.0
        %5344 = vmatpush1.msra.mxu0 0.0
        %5345 = vmatprep.subr.mxu0 0.0
        %5346 = vmatpush1.msra.mxu0 0.0
        %5347 = vmatprep.subr.mxu0 0.0
        %5348 = vmatpush1.msra.mxu0 0.0
        %5349 = vmatprep.subr.mxu0 0.0
        %5350 = vmatpush1.msra.mxu0 0.0
        %5351 = vmatprep.mubr.f32.mxu0 0.0
        %5352 = vmatmul.mubr.f32.gmra.mrb[0].mxu0 %v5264
        %v5353 = vpop.f32.mrb[0].mxu0
        %v5354 = vadd.f32 0.0, %v5353
        %v5355 = vpop.f32.mrb[0].mxu0
        %5356 = vmatprep.mubr.f32.mxu0 0.0
        %5357 = vmatmul.mubr.f32.gmra.mrb[0].mxu0 %v5267
        %v5358 = vpop.f32.mrb[0].mxu0
        %v5359 = vadd.f32 0.0, %v5358
        %v5360 = vpop.f32.mrb[0].mxu0
        %5361 = vmatprep.mubr.f32.mxu0 0.0
        %5362 = vmatmul.mubr.f32.gmra.mrb[0].mxu0 %v5270
        %v5363 = vpop.f32.mrb[0].mxu0
        %v5364 = vadd.f32 0.0, %v5363
        %v5365 = vpop.f32.mrb[0].mxu0
        %5366 = vmatprep.mubr.f32.mxu0 0.0
        %5367 = vmatmul.mubr.f32.gmra.mrb[0].mxu0 %v5273
        %v5368 = vpop.f32.mrb[0].mxu0
        %v5369 = vadd.f32 0.0, %v5368
        %v5370 = vpop.f32.mrb[0].mxu0
        %5371 = vmatprep.mubr.f32.mxu0 0.0
        %5372 = vmatmul.mubr.f32.gmra.mrb[0].mxu0 %v5276
        %v5373 = vpop.f32.mrb[0].mxu0
        %v5374 = vadd.f32 0.0, %v5373
        %v5375 = vpop.f32.mrb[0].mxu0
        %5376 = vmatprep.mubr.f32.mxu0 0.0
        %5377 = vmatmul.mubr.f32.gmra.mrb[0].mxu0 %v5279
        %v5378 = vpop.f32.mrb[0].mxu0
        %v5379 = vadd.f32 0.0, %v5378
        %v5380 = vpop.f32.mrb[0].mxu0
        %5381 = vmatprep.mubr.f32.mxu0 0.0
        %5382 = vmatmul.mubr.f32.gmra.mrb[0].mxu0 %v5282
        %v5383 = vpop.f32.mrb[0].mxu0
        %v5384 = vadd.f32 0.0, %v5383
        %v5385 = vpop.f32.mrb[0].mxu0
        %5386 = vmatprep.mubr.f32.mxu0 0.0
        %5387 = vmatmul.mubr.f32.gmra.mrb[0].mxu0 %v5285
        %v5388 = vpop.f32.mrb[0].mxu0
        %v5389 = vadd.f32 0.0, %v5388
        %v5390 = vpop.f32.mrb[0].mxu0
        %5391 = vdwg.mxu0
        %5400 = vrot.lane.b32.xlu0 %v5354, 24
        %v5401 = vpop.permute.xlu0 %5400
        %5402 = vrot.lane.b32.xlu0 %v5359, 24
        %v5403 = vpop.permute.xlu0 %5402
        %5404 = vrot.lane.b32.xlu0 %v5364, 24
        %v5405 = vpop.permute.xlu0 %5404
        %5406 = vrot.lane.b32.xlu0 %v5369, 24
        %v5407 = vpop.permute.xlu0 %5406
        %5408 = vrot.lane.b32.xlu0 %v5374, 24
        %v5409 = vpop.permute.xlu0 %5408
        %5410 = vrot.lane.b32.xlu0 %v5379, 24
        %v5411 = vpop.permute.xlu0 %5410
        %5412 = vrot.lane.b32.xlu0 %v5384, 24
        %v5413 = vpop.permute.xlu0 %5412
        %5414 = vrot.lane.b32.xlu0 %v5389, 24
        %v5415 = vpop.permute.xlu0 %5414
        %5424 = vst.msk [vmem:[#allocation2] sm:$0xff] %vm2708, %v5401
        %5425 = vst.msk [vmem:[#allocation2 + $0x8] sm:$0xff] %vm2708, %v5403
        %5426 = vst.msk [vmem:[#allocation2 + $0x10] sm:$0xff] %vm2708, %v5405
        %5427 = vst.msk [vmem:[#allocation2 + $0x18] sm:$0xff] %vm2708, %v5407
        %5428 = vst.msk [vmem:[#allocation2 + $0x20] sm:$0xff] %vm2708, %v5409
        %5429 = vst.msk [vmem:[#allocation2 + $0x28] sm:$0xff] %vm2708, %v5411
        %5430 = vst.msk [vmem:[#allocation2 + $0x30] sm:$0xff] %vm2708, %v5413
        %5431 = vst.msk [vmem:[#allocation2 + $0x38] sm:$0xff] %vm2708, %v5415
        %v5432 = vld [vmem:[#allocation2] sm:$0xff]
        %v5433 = vld [vmem:[#allocation2 + $0x8] sm:$0xff]
        %v5434 = vld [vmem:[#allocation2 + $0x10] sm:$0xff]
        %v5435 = vld [vmem:[#allocation2 + $0x18] sm:$0xff]
        %v5436 = vld [vmem:[#allocation2 + $0x20] sm:$0xff]
        %v5437 = vld [vmem:[#allocation2 + $0x28] sm:$0xff]
        %v5438 = vld [vmem:[#allocation2 + $0x30] sm:$0xff]
        %v5439 = vld [vmem:[#allocation2 + $0x38] sm:$0xff]
        %v5440 = vpack.c.bf16 %v5433, %v5432
        %v5441 = vpack.c.bf16 %v5435, %v5434
        %v5442 = vpack.c.bf16 %v5437, %v5436
        %v5443 = vpack.c.bf16 %v5439, %v5438
        %s5444 = scalar_lea.vmem %s8, 16
        %v5445 = vld [vmem:[%s5444] sm:$0xf]
        %v5446 = vld [vmem:[%s5444 + $0x4] sm:$0xf]
        %v5447 = vld [vmem:[%s5444 + $0x8] sm:$0xf]
        %v5448 = vld [vmem:[%s5444 + $0xc] sm:$0xf]
        %s5449 = scalar_lea.vmem %s9, 1
        %v5450 = vld [vmem:[%s5449] sm:$0x1]
        %v5452 = vlaneseq
        %v5453 = vshrl.u32 %v5452, 7
        %v5454 = vsub.s32 0, %v5453
        %v5455 = vrot.slane %v5450, %v5454
        %v5461 = vunpack.c.l.b16 %v5445
        %v5462 = vunpack.c.l.b16 %v5446
        %v5463 = vunpack.c.l.b16 %v5447
        %v5464 = vunpack.c.l.b16 %v5448
        %v5465 = vpack.c.b16 %v5462, %v5461
        %v5466 = vpack.c.b16 %v5464, %v5463
        %v5470 = vsel %vm658, %v5440, 0
        %v5473 = vsel %vm658, %v5441, 0
        %v5476 = vsel %vm658, %v5442, 0
        %v5479 = vsel %vm658, %v5443, 0
        %5481 = vmatprep.subr.bf16.mxu0 0
        %5482 = vmatpush1.bf16.msra.mxu0 %v5465
        %5483 = vmatprep.subr.bf16.mxu0 0
        %5484 = vmatpush1.bf16.msra.mxu0 %v5466
        %5485 = vmatprep.subr.bf16.mxu0 0
        %5486 = vmatpush1.bf16.msra.mxu0 0
        %5487 = vmatprep.subr.bf16.mxu0 0
        %5488 = vmatpush1.bf16.msra.mxu0 0
        %5489 = vmatprep.subr.bf16.mxu0 0
        %5490 = vmatpush1.bf16.msra.mxu0 0
        %5491 = vmatprep.subr.bf16.mxu0 0
        %5492 = vmatpush1.bf16.msra.mxu0 0
        %5493 = vmatprep.subr.bf16.mxu0 0
        %5494 = vmatpush1.bf16.msra.mxu0 0
        %5495 = vmatprep.subr.bf16.mxu0 0
        %5496 = vmatpush1.bf16.msra.mxu0 0
        %5497 = vmatprep.subr.bf16.mxu0 0
        %5498 = vmatpush1.bf16.msra.mxu0 0
        %5499 = vmatprep.subr.bf16.mxu0 0
        %5500 = vmatpush1.bf16.msra.mxu0 0
        %5501 = vmatprep.subr.bf16.mxu0 0
        %5502 = vmatpush1.bf16.msra.mxu0 0
        %5503 = vmatprep.subr.bf16.mxu0 0
        %5504 = vmatpush1.bf16.msra.mxu0 0
        %5505 = vmatprep.subr.bf16.mxu0 0
        %5506 = vmatpush1.bf16.msra.mxu0 0
        %5507 = vmatprep.subr.bf16.mxu0 0
        %5508 = vmatpush1.bf16.msra.mxu0 0
        %5509 = vmatprep.subr.bf16.mxu0 0
        %5510 = vmatpush1.bf16.msra.mxu0 0
        %5511 = vmatprep.subr.bf16.mxu0 0
        %5512 = vmatpush1.bf16.msra.mxu0 0
        %5513 = vmatprep.mubr.bf16.mxu0 0
        %5514 = vmatmul.mubr.bf16.gmra.mrb[0].mxu0 %v5470
        %v5515 = vpop.f32.mrb[0].mxu0
        %v5516 = vadd.f32 %v5455, %v5515
        %v5517 = vpop.f32.mrb[0].mxu0
        %v5518 = vpop.f32.mrb[0].mxu0
        %v5519 = vadd.f32 %v5455, %v5518
        %v5520 = vpop.f32.mrb[0].mxu0
        %5521 = vmatprep.mubr.bf16.mxu0 0
        %5522 = vmatmul.mubr.bf16.gmra.mrb[0].mxu0 %v5473
        %v5523 = vpop.f32.mrb[0].mxu0
        %v5524 = vadd.f32 %v5455, %v5523
        %v5525 = vpop.f32.mrb[0].mxu0
        %v5526 = vpop.f32.mrb[0].mxu0
        %v5527 = vadd.f32 %v5455, %v5526
        %v5528 = vpop.f32.mrb[0].mxu0
        %5529 = vmatprep.mubr.bf16.mxu0 0
        %5530 = vmatmul.mubr.bf16.gmra.mrb[0].mxu0 %v5476
        %v5531 = vpop.f32.mrb[0].mxu0
        %v5532 = vadd.f32 %v5455, %v5531
        %v5533 = vpop.f32.mrb[0].mxu0
        %v5534 = vpop.f32.mrb[0].mxu0
        %v5535 = vadd.f32 %v5455, %v5534
        %v5536 = vpop.f32.mrb[0].mxu0
        %5537 = vmatprep.mubr.bf16.mxu0 0
        %5538 = vmatmul.mubr.bf16.gmra.mrb[0].mxu0 %v5479
        %v5539 = vpop.f32.mrb[0].mxu0
        %v5540 = vadd.f32 %v5455, %v5539
        %v5541 = vpop.f32.mrb[0].mxu0
        %v5542 = vpop.f32.mrb[0].mxu0
        %v5543 = vadd.f32 %v5455, %v5542
        %v5544 = vpop.f32.mrb[0].mxu0
        %5545 = vdwg.mxu0
        %v5546 = vadd.f32 %v3338, %v5516
        %v5547 = vadd.f32 %v3339, %v5519
        %v5548 = vadd.f32 %v3340, %v5524
        %v5549 = vadd.f32 %v3341, %v5527
        %v5550 = vadd.f32 %v3342, %v5532
        %v5551 = vadd.f32 %v3343, %v5535
        %v5552 = vadd.f32 %v3344, %v5540
        %v5553 = vadd.f32 %v3345, %v5543
        %v5554 = vsel %vm658, %v5546, 0.0
        %5555 = vadd.xlane.f32.xlu0 %v5554
        %v5556 = vpop.xlane.xlu0 %5555
        %v5557 = vsel %vm658, %v5547, 0.0
        %5558 = vadd.xlane.f32.xlu0 %v5557
        %v5559 = vpop.xlane.xlu0 %5558
        %v5560 = vsel %vm658, %v5548, 0.0
        %5561 = vadd.xlane.f32.xlu0 %v5560
        %v5562 = vpop.xlane.xlu0 %5561
        %v5563 = vsel %vm658, %v5549, 0.0
        %5564 = vadd.xlane.f32.xlu0 %v5563
        %v5565 = vpop.xlane.xlu0 %5564
        %v5566 = vsel %vm658, %v5550, 0.0
        %5567 = vadd.xlane.f32.xlu0 %v5566
        %v5568 = vpop.xlane.xlu0 %5567
        %v5569 = vsel %vm658, %v5551, 0.0
        %5570 = vadd.xlane.f32.xlu0 %v5569
        %v5571 = vpop.xlane.xlu0 %5570
        %v5572 = vsel %vm658, %v5552, 0.0
        %5573 = vadd.xlane.f32.xlu0 %v5572
        %v5574 = vpop.xlane.xlu0 %5573
        %v5575 = vsel %vm658, %v5553, 0.0
        %5576 = vadd.xlane.f32.xlu0 %v5575
        %v5577 = vpop.xlane.xlu0 %5576
        %v5578 = vmul.f32 %v5556, %v2861
        %v5579 = vmul.f32 %v5559, %v2861
        %v5580 = vmul.f32 %v5562, %v2861
        %v5581 = vmul.f32 %v5565, %v2861
        %v5582 = vmul.f32 %v5568, %v2861
        %v5583 = vmul.f32 %v5571, %v2861
        %v5584 = vmul.f32 %v5574, %v2861
        %v5585 = vmul.f32 %v5577, %v2861
        %v5586 = vsub.f32 %v5546, %v5578
        %v5587 = vsub.f32 %v5547, %v5579
        %v5588 = vsub.f32 %v5548, %v5580
        %v5589 = vsub.f32 %v5549, %v5581
        %v5590 = vsub.f32 %v5550, %v5582
        %v5591 = vsub.f32 %v5551, %v5583
        %v5592 = vsub.f32 %v5552, %v5584
        %v5593 = vsub.f32 %v5553, %v5585
        %v5594 = vmul.f32 %v5586, %v5586
        %v5595 = vmul.f32 %v5587, %v5587
        %v5596 = vmul.f32 %v5588, %v5588
        %v5597 = vmul.f32 %v5589, %v5589
        %v5598 = vmul.f32 %v5590, %v5590
        %v5599 = vmul.f32 %v5591, %v5591
        %v5600 = vmul.f32 %v5592, %v5592
        %v5601 = vmul.f32 %v5593, %v5593
        %v5602 = vsel %vm658, %v5594, 0.0
        %5603 = vadd.xlane.f32.xlu0 %v5602
        %v5604 = vpop.xlane.xlu0 %5603
        %v5605 = vsel %vm658, %v5595, 0.0
        %5606 = vadd.xlane.f32.xlu0 %v5605
        %v5607 = vpop.xlane.xlu0 %5606
        %v5608 = vsel %vm658, %v5596, 0.0
        %5609 = vadd.xlane.f32.xlu0 %v5608
        %v5610 = vpop.xlane.xlu0 %5609
        %v5611 = vsel %vm658, %v5597, 0.0
        %5612 = vadd.xlane.f32.xlu0 %v5611
        %v5613 = vpop.xlane.xlu0 %5612
        %v5614 = vsel %vm658, %v5598, 0.0
        %5615 = vadd.xlane.f32.xlu0 %v5614
        %v5616 = vpop.xlane.xlu0 %5615
        %v5617 = vsel %vm658, %v5599, 0.0
        %5618 = vadd.xlane.f32.xlu0 %v5617
        %v5619 = vpop.xlane.xlu0 %5618
        %v5620 = vsel %vm658, %v5600, 0.0
        %5621 = vadd.xlane.f32.xlu0 %v5620
        %v5622 = vpop.xlane.xlu0 %5621
        %v5623 = vsel %vm658, %v5601, 0.0
        %5624 = vadd.xlane.f32.xlu0 %v5623
        %v5625 = vpop.xlane.xlu0 %5624
        %v5626 = vmul.f32 %v5604, %v2861
        %v5627 = vmul.f32 %v5607, %v2861
        %v5628 = vmul.f32 %v5610, %v2861
        %v5629 = vmul.f32 %v5613, %v2861
        %v5630 = vmul.f32 %v5616, %v2861
        %v5631 = vmul.f32 %v5619, %v2861
        %v5632 = vmul.f32 %v5622, %v2861
        %v5633 = vmul.f32 %v5625, %v2861
        %v5634 = vadd.f32 %v5626, 1e-05
        %v5635 = vadd.f32 %v5627, 1e-05
        %v5636 = vadd.f32 %v5628, 1e-05
        %v5637 = vadd.f32 %v5629, 1e-05
        %v5638 = vadd.f32 %v5630, 1e-05
        %v5639 = vadd.f32 %v5631, 1e-05
        %v5640 = vadd.f32 %v5632, 1e-05
        %v5641 = vadd.f32 %v5633, 1e-05
        %v5642 = vrsqrt.pop %v5634
        %v5643 = vrsqrt.pop %v5635
        %v5644 = vrsqrt.pop %v5636
        %v5645 = vrsqrt.pop %v5637
        %v5646 = vrsqrt.pop %v5638
        %v5647 = vrsqrt.pop %v5639
        %v5648 = vrsqrt.pop %v5640
        %v5649 = vrsqrt.pop %v5641
        %v5650 = vmul.f32 %v5586, %v5642
        %v5651 = vmul.f32 %v5587, %v5643
        %v5652 = vmul.f32 %v5588, %v5644
        %v5653 = vmul.f32 %v5589, %v5645
        %v5654 = vmul.f32 %v5590, %v5646
        %v5655 = vmul.f32 %v5591, %v5647
        %v5656 = vmul.f32 %v5592, %v5648
        %v5657 = vmul.f32 %v5593, %v5649
        %s5658 = scalar_lea.vmem %s14, 1
        %v5659 = vld [vmem:[%s5658] sm:$0x1]
        %v5661 = vlaneseq
        %v5662 = vshrl.u32 %v5661, 7
        %v5663 = vsub.s32 0, %v5662
        %v5664 = vrot.slane %v5659, %v5663
        %v5666 = vmul.f32 %v5650, %v5664
        %v5667 = vmul.f32 %v5651, %v5664
        %v5668 = vmul.f32 %v5652, %v5664
        %v5669 = vmul.f32 %v5653, %v5664
        %v5670 = vmul.f32 %v5654, %v5664
        %v5671 = vmul.f32 %v5655, %v5664
        %v5672 = vmul.f32 %v5656, %v5664
        %v5673 = vmul.f32 %v5657, %v5664
        %s5674 = scalar_lea.vmem %s15, 1
        %v5675 = vld [vmem:[%s5674] sm:$0x1]
        %v5677 = vlaneseq
        %v5678 = vshrl.u32 %v5677, 7
        %v5679 = vsub.s32 0, %v5678
        %v5680 = vrot.slane %v5675, %v5679
        %v5682 = vadd.f32 %v5666, %v5680
        %v5683 = vadd.f32 %v5667, %v5680
        %v5684 = vadd.f32 %v5668, %v5680
        %v5685 = vadd.f32 %v5669, %v5680
        %v5686 = vadd.f32 %v5670, %v5680
        %v5687 = vadd.f32 %v5671, %v5680
        %v5688 = vadd.f32 %v5672, %v5680
        %v5689 = vadd.f32 %v5673, %v5680
        %v5690 = vpack.c.bf16 %v5683, %v5682
        %v5691 = vpack.c.bf16 %v5685, %v5684
        %v5692 = vpack.c.bf16 %v5687, %v5686
        %v5693 = vpack.c.bf16 %v5689, %v5688
        %s5694 = scalar_lea.vmem [#allocation3], 16
        %v5695 = vld [vmem:[%s5694] sm:$0xf]
        %v5696 = vld [vmem:[%s5694 + $0x4] sm:$0xf]
        %v5697 = vld [vmem:[%s5694 + $0x8] sm:$0xf]
        %v5698 = vld [vmem:[%s5694 + $0xc] sm:$0xf]
        %s5699 = scalar_lea.vmem %s11, 1
        %v5700 = vld [vmem:[%s5699] sm:$0x1]
        %v5702 = vlaneseq
        %v5703 = vshrl.u32 %v5702, 7
        %v5704 = vsub.s32 0, %v5703
        %v5705 = vrot.slane %v5700, %v5704
        %v5711 = vunpack.c.l.b16 %v5695
        %v5712 = vunpack.c.l.b16 %v5696
        %v5713 = vunpack.c.l.b16 %v5697
        %v5714 = vunpack.c.l.b16 %v5698
        %v5715 = vpack.c.b16 %v5712, %v5711
        %v5716 = vpack.c.b16 %v5714, %v5713
        %v5720 = vsel %vm658, %v5690, 0
        %v5723 = vsel %vm658, %v5691, 0
        %v5726 = vsel %vm658, %v5692, 0
        %v5729 = vsel %vm658, %v5693, 0
        %5731 = vmatprep.subr.bf16.mxu0 0
        %5732 = vmatpush1.bf16.msra.mxu0 %v5715
        %5733 = vmatprep.subr.bf16.mxu0 0
        %5734 = vmatpush1.bf16.msra.mxu0 %v5716
        %5735 = vmatprep.subr.bf16.mxu0 0
        %5736 = vmatpush1.bf16.msra.mxu0 0
        %5737 = vmatprep.subr.bf16.mxu0 0
        %5738 = vmatpush1.bf16.msra.mxu0 0
        %5739 = vmatprep.subr.bf16.mxu0 0
        %5740 = vmatpush1.bf16.msra.mxu0 0
        %5741 = vmatprep.subr.bf16.mxu0 0
        %5742 = vmatpush1.bf16.msra.mxu0 0
        %5743 = vmatprep.subr.bf16.mxu0 0
        %5744 = vmatpush1.bf16.msra.mxu0 0
        %5745 = vmatprep.subr.bf16.mxu0 0
        %5746 = vmatpush1.bf16.msra.mxu0 0
        %5747 = vmatprep.subr.bf16.mxu0 0
        %5748 = vmatpush1.bf16.msra.mxu0 0
        %5749 = vmatprep.subr.bf16.mxu0 0
        %5750 = vmatpush1.bf16.msra.mxu0 0
        %5751 = vmatprep.subr.bf16.mxu0 0
        %5752 = vmatpush1.bf16.msra.mxu0 0
        %5753 = vmatprep.subr.bf16.mxu0 0
        %5754 = vmatpush1.bf16.msra.mxu0 0
        %5755 = vmatprep.subr.bf16.mxu0 0
        %5756 = vmatpush1.bf16.msra.mxu0 0
        %5757 = vmatprep.subr.bf16.mxu0 0
        %5758 = vmatpush1.bf16.msra.mxu0 0
        %5759 = vmatprep.subr.bf16.mxu0 0
        %5760 = vmatpush1.bf16.msra.mxu0 0
        %5761 = vmatprep.subr.bf16.mxu0 0
        %5762 = vmatpush1.bf16.msra.mxu0 0
        %5763 = vmatprep.mubr.bf16.mxu0 0
        %5764 = vmatmul.mubr.bf16.gmra.mrb[0].mxu0 %v5720
        %v5765 = vpop.f32.mrb[0].mxu0
        %v5766 = vadd.f32 %v5705, %v5765
        %v5767 = vpop.f32.mrb[0].mxu0
        %v5768 = vpop.f32.mrb[0].mxu0
        %v5769 = vadd.f32 %v5705, %v5768
        %v5770 = vpop.f32.mrb[0].mxu0
        %5771 = vmatprep.mubr.bf16.mxu0 0
        %5772 = vmatmul.mubr.bf16.gmra.mrb[0].mxu0 %v5723
        %v5773 = vpop.f32.mrb[0].mxu0
        %v5774 = vadd.f32 %v5705, %v5773
        %v5775 = vpop.f32.mrb[0].mxu0
        %v5776 = vpop.f32.mrb[0].mxu0
        %v5777 = vadd.f32 %v5705, %v5776
        %v5778 = vpop.f32.mrb[0].mxu0
        %5779 = vmatprep.mubr.bf16.mxu0 0
        %5780 = vmatmul.mubr.bf16.gmra.mrb[0].mxu0 %v5726
        %v5781 = vpop.f32.mrb[0].mxu0
        %v5782 = vadd.f32 %v5705, %v5781
        %v5783 = vpop.f32.mrb[0].mxu0
        %v5784 = vpop.f32.mrb[0].mxu0
        %v5785 = vadd.f32 %v5705, %v5784
        %v5786 = vpop.f32.mrb[0].mxu0
        %5787 = vmatprep.mubr.bf16.mxu0 0
        %5788 = vmatmul.mubr.bf16.gmra.mrb[0].mxu0 %v5729
        %v5789 = vpop.f32.mrb[0].mxu0
        %v5790 = vadd.f32 %v5705, %v5789
        %v5791 = vpop.f32.mrb[0].mxu0
        %v5792 = vpop.f32.mrb[0].mxu0
        %v5793 = vadd.f32 %v5705, %v5792
        %v5794 = vpop.f32.mrb[0].mxu0
        %5795 = vdwg.mxu0
        %v5796 = vmax.f32 %v5766, 0.0
        %v5797 = vmax.f32 %v5769, 0.0
        %v5798 = vmax.f32 %v5774, 0.0
        %v5799 = vmax.f32 %v5777, 0.0
        %v5800 = vmax.f32 %v5782, 0.0
        %v5801 = vmax.f32 %v5785, 0.0
        %v5802 = vmax.f32 %v5790, 0.0
        %v5803 = vmax.f32 %v5793, 0.0
        %v5804 = vpack.c.bf16 %v5797, %v5796
        %v5805 = vpack.c.bf16 %v5799, %v5798
        %v5806 = vpack.c.bf16 %v5801, %v5800
        %v5807 = vpack.c.bf16 %v5803, %v5802
        %s5808 = scalar_lea.vmem %s12, 32
        %v5809 = vld [vmem:[%s5808] sm:$0xf]
        %v5810 = vld [vmem:[%s5808 + $0x4] sm:$0xf]
        %v5811 = vld [vmem:[%s5808 + $0x8] sm:$0xf]
        %v5812 = vld [vmem:[%s5808 + $0xc] sm:$0xf]
        %v5813 = vld [vmem:[%s5808 + $0x10] sm:$0xf]
        %v5814 = vld [vmem:[%s5808 + $0x14] sm:$0xf]
        %v5815 = vld [vmem:[%s5808 + $0x18] sm:$0xf]
        %v5816 = vld [vmem:[%s5808 + $0x1c] sm:$0xf]
        %s5817 = scalar_lea.vmem %s13, 1
        %v5818 = vld [vmem:[%s5817] sm:$0x1]
        %v5820 = vlaneseq
        %v5821 = vshrl.u32 %v5820, 7
        %v5822 = vsub.s32 0, %v5821
        %v5823 = vrot.slane %v5818, %v5822
        %v5833 = vunpack.c.l.b16 %v5809
        %v5834 = vunpack.c.l.b16 %v5810
        %v5835 = vunpack.c.l.b16 %v5811
        %v5836 = vunpack.c.l.b16 %v5812
        %v5837 = vunpack.c.l.b16 %v5813
        %v5838 = vunpack.c.l.b16 %v5814
        %v5839 = vunpack.c.l.b16 %v5815
        %v5840 = vunpack.c.l.b16 %v5816
        %v5841 = vpack.c.b16 %v5834, %v5833
        %v5842 = vpack.c.b16 %v5836, %v5835
        %v5843 = vpack.c.b16 %v5838, %v5837
        %v5844 = vpack.c.b16 %v5840, %v5839
        %v5850 = vsel %vm1082, %v5804, 0
        %v5853 = vsel %vm1082, %v5805, 0
        %v5856 = vsel %vm1082, %v5806, 0
        %v5859 = vsel %vm1082, %v5807, 0
        %5861 = vmatprep.subr.bf16.mxu0 0
        %5862 = vmatpush1.bf16.msra.mxu0 %v5841
        %5863 = vmatprep.subr.bf16.mxu0 0
        %5864 = vmatpush1.bf16.msra.mxu0 %v5842
        %5865 = vmatprep.subr.bf16.mxu0 0
        %5866 = vmatpush1.bf16.msra.mxu0 %v5843
        %5867 = vmatprep.subr.bf16.mxu0 0
        %5868 = vmatpush1.bf16.msra.mxu0 %v5844
        %5869 = vmatprep.subr.bf16.mxu0 0
        %5870 = vmatpush1.bf16.msra.mxu0 0
        %5871 = vmatprep.subr.bf16.mxu0 0
        %5872 = vmatpush1.bf16.msra.mxu0 0
        %5873 = vmatprep.subr.bf16.mxu0 0
        %5874 = vmatpush1.bf16.msra.mxu0 0
        %5875 = vmatprep.subr.bf16.mxu0 0
        %5876 = vmatpush1.bf16.msra.mxu0 0
        %5877 = vmatprep.subr.bf16.mxu0 0
        %5878 = vmatpush1.bf16.msra.mxu0 0
        %5879 = vmatprep.subr.bf16.mxu0 0
        %5880 = vmatpush1.bf16.msra.mxu0 0
        %5881 = vmatprep.subr.bf16.mxu0 0
        %5882 = vmatpush1.bf16.msra.mxu0 0
        %5883 = vmatprep.subr.bf16.mxu0 0
        %5884 = vmatpush1.bf16.msra.mxu0 0
        %5885 = vmatprep.subr.bf16.mxu0 0
        %5886 = vmatpush1.bf16.msra.mxu0 0
        %5887 = vmatprep.subr.bf16.mxu0 0
        %5888 = vmatpush1.bf16.msra.mxu0 0
        %5889 = vmatprep.subr.bf16.mxu0 0
        %5890 = vmatpush1.bf16.msra.mxu0 0
        %5891 = vmatprep.subr.bf16.mxu0 0
        %5892 = vmatpush1.bf16.msra.mxu0 0
        %5893 = vmatprep.mubr.bf16.mxu0 0
        %5894 = vmatmul.mubr.bf16.gmra.mrb[0].mxu0 %v5850
        %v5895 = vpop.f32.mrb[0].mxu0
        %v5896 = vadd.f32 %v5823, %v5895
        %v5897 = vpop.f32.mrb[0].mxu0
        %v5898 = vpop.f32.mrb[0].mxu0
        %v5899 = vadd.f32 %v5823, %v5898
        %v5900 = vpop.f32.mrb[0].mxu0
        %5901 = vmatprep.mubr.bf16.mxu0 0
        %5902 = vmatmul.mubr.bf16.gmra.mrb[0].mxu0 %v5853
        %v5903 = vpop.f32.mrb[0].mxu0
        %v5904 = vadd.f32 %v5823, %v5903
        %v5905 = vpop.f32.mrb[0].mxu0
        %v5906 = vpop.f32.mrb[0].mxu0
        %v5907 = vadd.f32 %v5823, %v5906
        %v5908 = vpop.f32.mrb[0].mxu0
        %5909 = vmatprep.mubr.bf16.mxu0 0
        %5910 = vmatmul.mubr.bf16.gmra.mrb[0].mxu0 %v5856
        %v5911 = vpop.f32.mrb[0].mxu0
        %v5912 = vadd.f32 %v5823, %v5911
        %v5913 = vpop.f32.mrb[0].mxu0
        %v5914 = vpop.f32.mrb[0].mxu0
        %v5915 = vadd.f32 %v5823, %v5914
        %v5916 = vpop.f32.mrb[0].mxu0
        %5917 = vmatprep.mubr.bf16.mxu0 0
        %5918 = vmatmul.mubr.bf16.gmra.mrb[0].mxu0 %v5859
        %v5919 = vpop.f32.mrb[0].mxu0
        %v5920 = vadd.f32 %v5823, %v5919
        %v5921 = vpop.f32.mrb[0].mxu0
        %v5922 = vpop.f32.mrb[0].mxu0
        %v5923 = vadd.f32 %v5823, %v5922
        %v5924 = vpop.f32.mrb[0].mxu0
        %5925 = vdwg.mxu0
        %v5926 = vadd.f32 %v5682, %v5896
        %v5927 = vadd.f32 %v5683, %v5899
        %v5928 = vadd.f32 %v5684, %v5904
        %v5929 = vadd.f32 %v5685, %v5907
        %v5930 = vadd.f32 %v5686, %v5912
        %v5931 = vadd.f32 %v5687, %v5915
        %v5932 = vadd.f32 %v5688, %v5920
        %v5933 = vadd.f32 %v5689, %v5923
        %v5934 = vsel %vm658, %v5926, 0.0
        %5935 = vadd.xlane.f32.xlu0 %v5934
        %v5936 = vpop.xlane.xlu0 %5935
        %v5937 = vsel %vm658, %v5927, 0.0
        %5938 = vadd.xlane.f32.xlu0 %v5937
        %v5939 = vpop.xlane.xlu0 %5938
        %v5940 = vsel %vm658, %v5928, 0.0
        %5941 = vadd.xlane.f32.xlu0 %v5940
        %v5942 = vpop.xlane.xlu0 %5941
        %v5943 = vsel %vm658, %v5929, 0.0
        %5944 = vadd.xlane.f32.xlu0 %v5943
        %v5945 = vpop.xlane.xlu0 %5944
        %v5946 = vsel %vm658, %v5930, 0.0
        %5947 = vadd.xlane.f32.xlu0 %v5946
        %v5948 = vpop.xlane.xlu0 %5947
        %v5949 = vsel %vm658, %v5931, 0.0
        %5950 = vadd.xlane.f32.xlu0 %v5949
        %v5951 = vpop.xlane.xlu0 %5950
        %v5952 = vsel %vm658, %v5932, 0.0
        %5953 = vadd.xlane.f32.xlu0 %v5952
        %v5954 = vpop.xlane.xlu0 %5953
        %v5955 = vsel %vm658, %v5933, 0.0
        %5956 = vadd.xlane.f32.xlu0 %v5955
        %v5957 = vpop.xlane.xlu0 %5956
        %v5958 = vmul.f32 %v5936, %v2861
        %v5959 = vmul.f32 %v5939, %v2861
        %v5960 = vmul.f32 %v5942, %v2861
        %v5961 = vmul.f32 %v5945, %v2861
        %v5962 = vmul.f32 %v5948, %v2861
        %v5963 = vmul.f32 %v5951, %v2861
        %v5964 = vmul.f32 %v5954, %v2861
        %v5965 = vmul.f32 %v5957, %v2861
        %v5966 = vsub.f32 %v5926, %v5958
        %v5967 = vsub.f32 %v5927, %v5959
        %v5968 = vsub.f32 %v5928, %v5960
        %v5969 = vsub.f32 %v5929, %v5961
        %v5970 = vsub.f32 %v5930, %v5962
        %v5971 = vsub.f32 %v5931, %v5963
        %v5972 = vsub.f32 %v5932, %v5964
        %v5973 = vsub.f32 %v5933, %v5965
        %v5974 = vmul.f32 %v5966, %v5966
        %v5975 = vmul.f32 %v5967, %v5967
        %v5976 = vmul.f32 %v5968, %v5968
        %v5977 = vmul.f32 %v5969, %v5969
        %v5978 = vmul.f32 %v5970, %v5970
        %v5979 = vmul.f32 %v5971, %v5971
        %v5980 = vmul.f32 %v5972, %v5972
        %v5981 = vmul.f32 %v5973, %v5973
        %v5982 = vsel %vm658, %v5974, 0.0
        %5983 = vadd.xlane.f32.xlu0 %v5982
        %v5984 = vpop.xlane.xlu0 %5983
        %v5985 = vsel %vm658, %v5975, 0.0
        %5986 = vadd.xlane.f32.xlu0 %v5985
        %v5987 = vpop.xlane.xlu0 %5986
        %v5988 = vsel %vm658, %v5976, 0.0
        %5989 = vadd.xlane.f32.xlu0 %v5988
        %v5990 = vpop.xlane.xlu0 %5989
        %v5991 = vsel %vm658, %v5977, 0.0
        %5992 = vadd.xlane.f32.xlu0 %v5991
        %v5993 = vpop.xlane.xlu0 %5992
        %v5994 = vsel %vm658, %v5978, 0.0
        %5995 = vadd.xlane.f32.xlu0 %v5994
        %v5996 = vpop.xlane.xlu0 %5995
        %v5997 = vsel %vm658, %v5979, 0.0
        %5998 = vadd.xlane.f32.xlu0 %v5997
        %v5999 = vpop.xlane.xlu0 %5998
        %v6000 = vsel %vm658, %v5980, 0.0
        %6001 = vadd.xlane.f32.xlu0 %v6000
        %v6002 = vpop.xlane.xlu0 %6001
        %v6003 = vsel %vm658, %v5981, 0.0
        %6004 = vadd.xlane.f32.xlu0 %v6003
        %v6005 = vpop.xlane.xlu0 %6004
        %v6006 = vmul.f32 %v5984, %v2861
        %v6007 = vmul.f32 %v5987, %v2861
        %v6008 = vmul.f32 %v5990, %v2861
        %v6009 = vmul.f32 %v5993, %v2861
        %v6010 = vmul.f32 %v5996, %v2861
        %v6011 = vmul.f32 %v5999, %v2861
        %v6012 = vmul.f32 %v6002, %v2861
        %v6013 = vmul.f32 %v6005, %v2861
        %v6014 = vadd.f32 %v6006, 1e-05
        %v6015 = vadd.f32 %v6007, 1e-05
        %v6016 = vadd.f32 %v6008, 1e-05
        %v6017 = vadd.f32 %v6009, 1e-05
        %v6018 = vadd.f32 %v6010, 1e-05
        %v6019 = vadd.f32 %v6011, 1e-05
        %v6020 = vadd.f32 %v6012, 1e-05
        %v6021 = vadd.f32 %v6013, 1e-05
        %v6022 = vrsqrt.pop %v6014
        %v6023 = vrsqrt.pop %v6015
        %v6024 = vrsqrt.pop %v6016
        %v6025 = vrsqrt.pop %v6017
        %v6026 = vrsqrt.pop %v6018
        %v6027 = vrsqrt.pop %v6019
        %v6028 = vrsqrt.pop %v6020
        %v6029 = vrsqrt.pop %v6021
        %v6030 = vmul.f32 %v5966, %v6022
        %v6031 = vmul.f32 %v5967, %v6023
        %v6032 = vmul.f32 %v5968, %v6024
        %v6033 = vmul.f32 %v5969, %v6025
        %v6034 = vmul.f32 %v5970, %v6026
        %v6035 = vmul.f32 %v5971, %v6027
        %v6036 = vmul.f32 %v5972, %v6028
        %v6037 = vmul.f32 %v5973, %v6029
        %s6038 = scalar_lea.vmem %s16, 1
        %v6039 = vld [vmem:[%s6038] sm:$0x1]
        %v6041 = vlaneseq
        %v6042 = vshrl.u32 %v6041, 7
        %v6043 = vsub.s32 0, %v6042
        %v6044 = vrot.slane %v6039, %v6043
        %v6046 = vmul.f32 %v6030, %v6044
        %v6047 = vmul.f32 %v6031, %v6044
        %v6048 = vmul.f32 %v6032, %v6044
        %v6049 = vmul.f32 %v6033, %v6044
        %v6050 = vmul.f32 %v6034, %v6044
        %v6051 = vmul.f32 %v6035, %v6044
        %v6052 = vmul.f32 %v6036, %v6044
        %v6053 = vmul.f32 %v6037, %v6044
        %s6054 = scalar_lea.vmem %s17, 1
        %v6055 = vld [vmem:[%s6054] sm:$0x1]
        %v6057 = vlaneseq
        %v6058 = vshrl.u32 %v6057, 7
        %v6059 = vsub.s32 0, %v6058
        %v6060 = vrot.slane %v6055, %v6059
        %v6062 = vadd.f32 %v6046, %v6060
        %v6063 = vadd.f32 %v6047, %v6060
        %v6064 = vadd.f32 %v6048, %v6060
        %v6065 = vadd.f32 %v6049, %v6060
        %v6066 = vadd.f32 %v6050, %v6060
        %v6067 = vadd.f32 %v6051, %v6060
        %v6068 = vadd.f32 %v6052, %v6060
        %v6069 = vadd.f32 %v6053, %v6060
        %6070 = vst.msk [vmem:[%s612] sm:$0xff] %vm658, %v6062
        %6071 = vst.msk [vmem:[%s612 + $0x8] sm:$0xff] %vm658, %v6063
        %6072 = vst.msk [vmem:[%s612 + $0x10] sm:$0xff] %vm658, %v6064
        %6073 = vst.msk [vmem:[%s612 + $0x18] sm:$0xff] %vm658, %v6065
        %6074 = vst.msk [vmem:[%s612 + $0x20] sm:$0xff] %vm658, %v6066
        %6075 = vst.msk [vmem:[%s612 + $0x28] sm:$0xff] %vm658, %v6067
        %6076 = vst.msk [vmem:[%s612 + $0x30] sm:$0xff] %vm658, %v6068
        %6077 = vst.msk [vmem:[%s612 + $0x38] sm:$0xff] %vm658, %v6069
        %s6078 = smul.u32 8, %s30
        %p6079 = scmp.lt.s32.totalorder %s6078, 15
        %s6080 = scalar_select %p6079, %s6078, 15
        %s6081 = smul.addr %s6080, 8
        %s6082 = scalar_lea.vmem %s18, %s6081
        // Predicated region
        $region97: #{tpu_custom_call.1} parent=91 // pred_check
          %p6083 = pneg %p436
        $region98: #{tpu_custom_call.1} parent=91 // pred_check_branch
          %6085 = sbr.rel (%p6083) target = $region100
        $region99: #{tpu_custom_call.1} parent=91 // pred_region
          %s6086 = smul.u32 8, %s30
        $region100: #{tpu_custom_call.1} parent=91 // pred_fallthru
          _
      $region92: #{tpu_custom_call.1} parent=5 // pred_fallthru
        _
      %p6087 = scmp.le.s32.totalorder 2, %s25
      // Predicated region
      $region101: #{tpu_custom_call.1} parent=5 // pred_check
        %p6088 = pneg %p6087
      $region102: #{tpu_custom_call.1} parent=5 // pred_check_branch
        %6090 = sbr.rel (%p6088) target = $region104
      $region103: #{tpu_custom_call.1} parent=5 // pred_region
        %s6091 = ssub.s32 %s25, 2
        // Predicated region
        $region105: #{tpu_custom_call.1} parent=103 // pred_check
          %p6092 = pneg %p442
        $region106: #{tpu_custom_call.1} parent=103 // pred_check_branch
          %6094 = sbr.rel (%p6092) target = $region108
        $region107: #{tpu_custom_call.1} parent=103 // pred_region
          %s6095 = smul.u32 8, %s31
          %p6096 = scmp.lt.s32.totalorder %s6095, 15
          %s6097 = scalar_select %p6096, %s6095, 15
          %s6098 = smul.addr %s6097, 8
          %s6099 = scalar_lea.vmem %s18, %s6098
        $region108: #{tpu_custom_call.1} parent=103 // pred_fallthru
          _
      $region104: #{tpu_custom_call.1} parent=5 // pred_fallthru
        _
    $region6: #{tpu_custom_call.1} parent=1 // loop_footer
      %s29 = sadd.s32 1, %s25
    $region7: #{tpu_custom_call.1} parent=1 // loop_footer_branch
      %24 = sbr.rel target = $region3
    $region8: #{tpu_custom_call.1} parent=1 // loop_exit
      _
    %6100 = vsyncpa [#allocation4], 1
    %s6101 = scalar_lea.sflag [#allocation4], 1
    %6102 = vsyncpa %s6101, 1

</llo_original>
